<compile_context>
chip_gen: v7x
topology: tpu7x:2x2x1
jax: 0.10.0
libtpu: 0.0.40
codegen_flags: <defaults>
</compile_context>

<pallas_src>
import math
import copy
import numpy as np

import jax
import jax.numpy as jnp
from jax.experimental import pallas as pl
from jax.experimental.pallas import tpu as pltpu

OUT_H = 608 // 4          # 152
OUT_W = 1088 // 4         # 272
HW = OUT_H * OUT_W        # 41344
HM_ROWS = HW // 128       # 323 (lane-dense heatmap layout)
assert HM_ROWS * 128 == HW

MAX_OBJS = 128
EMB_DIM = 256
NID = 537
NID_PAD = 640             # pad to a multiple of 128 for MXU / lane density
EMB_SCALE = math.sqrt(2.0) * math.log(NID - 1)

LOG_LO = math.log(1e-4)
LOG_HI = math.log(1.0 - 1e-4)


# ----------------------------------------------------------------------------
# Host-side ground-truth encoding (numpy), mirroring the reference module.
# ----------------------------------------------------------------------------
def gaussian_radius(det_size, min_overlap=0.7):
    height, width = det_size
    a1 = 1.0
    b1 = height + width
    c1 = width * height * (1 - min_overlap) / (1 + min_overlap)
    sq1 = np.sqrt(b1 ** 2 - 4 * a1 * c1)
    r1 = (b1 + sq1) / 2
    a2 = 4.0
    b2 = 2 * (height + width)
    c2 = (1 - min_overlap) * width * height
    sq2 = np.sqrt(b2 ** 2 - 4 * a2 * c2)
    r2 = (b2 + sq2) / 2
    a3 = 4 * min_overlap
    b3 = -2 * min_overlap * (height + width)
    c3 = (min_overlap - 1) * width * height
    sq3 = np.sqrt(b3 ** 2 - 4 * a3 * c3)
    r3 = (b3 + sq3) / 2
    return min(r1, r2, r3)


def gaussian2D(shape, sigma=1):
    m, n = [(ss - 1.0) / 2.0 for ss in shape]
    y, x = np.ogrid[-m:m + 1, -n:n + 1]
    h = np.exp(-(x * x + y * y) / (2 * sigma * sigma))
    h[h < np.finfo(h.dtype).eps * h.max()] = 0
    return h


def draw_umich_gaussian(heatmap, center, radius, k=1):
    diameter = 2 * radius + 1
    gaussian = gaussian2D((diameter, diameter), sigma=diameter / 6)
    x, y = int(center[0]), int(center[1])
    height, width = heatmap.shape[0:2]
    left, right = min(x, radius), min(width - x, radius + 1)
    top, bottom = min(y, radius), min(height - y, radius + 1)
    masked_heatmap = heatmap[y - top:y + bottom, x - left:x + right]
    masked_gaussian = gaussian[radius - top:radius + bottom,
                               radius - left:radius + right]
    if min(masked_gaussian.shape) > 0 and min(masked_heatmap.shape) > 0:
        np.maximum(masked_heatmap, masked_gaussian * k, out=masked_heatmap)
    return heatmap


def encode_targets(ann, ann_next):
    """ann / ann_next: (N, 8) rows of [cx, cy, w, h, cls_id, track_id, v, vis]."""
    num_classes = 1
    hm = np.zeros((num_classes, OUT_H, OUT_W), dtype=np.float16)
    wh = np.zeros((MAX_OBJS, 8), dtype=np.float16)
    v = np.zeros((MAX_OBJS,), dtype=np.float16)
    ind = np.zeros((MAX_OBJS,), dtype=np.int64)
    reg_mask = np.zeros((MAX_OBJS,), dtype=np.uint8)
    ids = np.zeros((MAX_OBJS,), dtype=np.int64)

    num_objs = ann.shape[0]
    for k in range(min(num_objs, MAX_OBJS)):
        label = ann[k].astype(np.float32).copy()
        bbox = label[0:4].copy()
        cls_id = int(label[-4])
        bbox[[0, 2]] = bbox[[0, 2]] * OUT_W
        bbox[[1, 3]] = bbox[[1, 3]] * OUT_H
        bbox_amodal = copy.deepcopy(bbox)
        bbox_amodal[0] = bbox_amodal[0] - bbox_amodal[2] / 2.0
        bbox_amodal[1] = bbox_amodal[1] - bbox_amodal[3] / 2.0
        bbox_amodal[2] = bbox_amodal[0] + bbox_amodal[2]
        bbox_amodal[3] = bbox_amodal[1] + bbox_amodal[3]
        bbox[0] = np.clip(bbox[0], 0, OUT_W - 1)
        bbox[1] = np.clip(bbox[1], 0, OUT_H - 1)
        h = bbox[3]
        w = bbox[2]
        p_id = label[-3]
        radiu0 = gaussian_radius((math.ceil(h), math.ceil(w)))
        radius = max(0, int(radiu0))
        ct = np.array([bbox[0], bbox[1]], dtype=np.float16)
        ct_int = ct.astype(np.int32)
        draw_umich_gaussian(hm[cls_id], ct_int, radius)
        for t1_row in ann_next:
            t1 = t1_row.astype(np.float32).copy()
            if p_id == t1[-3]:
                bbox_t1 = t1[0:4].copy()
                bbox_t1[[0, 2]] = bbox_t1[[0, 2]] * OUT_W
                bbox_t1[[1, 3]] = bbox_t1[[1, 3]] * OUT_H
                bbox_amodal_t1 = copy.deepcopy(bbox_t1)
                bbox_amodal_t1[0] = bbox_amodal_t1[0] - bbox_amodal_t1[2] / 2.0
                bbox_amodal_t1[1] = bbox_amodal_t1[1] - bbox_amodal_t1[3] / 2.0
                bbox_amodal_t1[2] = bbox_amodal_t1[0] + bbox_amodal_t1[2]
                bbox_amodal_t1[3] = bbox_amodal_t1[1] + bbox_amodal_t1[3]
                bbox_t1[0] = np.clip(bbox_t1[0], 0, OUT_W - 1)
                bbox_t1[1] = np.clip(bbox_t1[1], 0, OUT_H - 1)
                h_t1 = bbox_t1[3]
                w_t1 = bbox_t1[2]
                if (h > 0 and w > 0) and (h_t1 > 0 and w_t1 > 0):
                    ind[k] = int(ct_int[1]) * OUT_W + int(ct_int[0])
                    wh[k] = (ct_int[0] - bbox_amodal[0], bbox_amodal[2] - ct_int[0],
                             ct_int[1] - bbox_amodal[1], bbox_amodal[3] - ct_int[1],
                             ct_int[0] - bbox_amodal_t1[0], bbox_amodal_t1[2] - ct_int[0],
                             ct_int[1] - bbox_amodal_t1[1], bbox_amodal_t1[3] - ct_int[1])
                    reg_mask[k] = 1
                    ids[k] = int(p_id)
                    v[k] = label[-2]
                    break
    return hm[0], wh, v, ind, reg_mask, ids


def build_targets(annotations1, annotations2, batch_size):
    hm_all = np.zeros((batch_size, HM_ROWS, 128), np.float32)
    wht_all = np.zeros((batch_size, 8, MAX_OBJS), np.float32)
    vt_all = np.zeros((batch_size, 1, MAX_OBJS), np.float32)
    mask_all = np.zeros((batch_size, 1, MAX_OBJS), np.float32)
    ids_all = np.zeros((batch_size, 1, MAX_OBJS), np.int32)
    ind_all = np.zeros((batch_size, MAX_OBJS), np.int32)
    valid = np.zeros((batch_size,), np.float32)
    for j in range(batch_size):
        a1 = np.asarray(annotations1[j])
        a1 = a1[a1[:, 4] != -1]
        a2 = np.asarray(annotations2[j])
        a2 = a2[a2[:, 4] != -1]
        if a1.shape[0] == 0:
            continue                      # reference appends zeros for this item
        valid[j] = 1.0
        hm, wh, v, ind, reg_mask, ids = encode_targets(a1, a2)
        hm_all[j] = hm.astype(np.float32).reshape(HM_ROWS, 128)
        wht_all[j] = wh.astype(np.float32).T
        vt_all[j, 0] = v.astype(np.float32)
        mask_all[j, 0] = reg_mask.astype(np.float32)
        ids_all[j, 0] = ids.astype(np.int32)
        ind_all[j] = ind.astype(np.int32)
    return hm_all, wht_all, vt_all, mask_all, ids_all, ind_all, valid


# ----------------------------------------------------------------------------
# Fused Pallas kernel: focal + masked smooth-L1 reg/vis + weighted ID CE.
# One grid step == one batch item.
# ----------------------------------------------------------------------------
def _fused_loss_kernel(cls_ref, hm_ref, regp_ref, wht_ref, visp_ref, vt_ref,
                       mask_ref, ids_ref, idh_ref, w_ref, b_ref, out_ref):
    # ---- CenterNet focal loss over the full heatmap (lane-dense 323x128) ----
    x = cls_ref[0]                              # raw classification logits
    gt = hm_ref[0]
    t = jnp.exp(-jnp.abs(x))                    # shared transcendental
    log1p_t = jnp.log(1.0 + t)
    # log(clamp(sigmoid(x), 1e-4, 1-1e-4)) == clamp(logsigmoid(x), log 1e-4, log(1-1e-4))
    log_p = jnp.clip(jnp.minimum(x, 0.0) - log1p_t, LOG_LO, LOG_HI)
    log_1mp = jnp.clip(jnp.minimum(-x, 0.0) - log1p_t, LOG_LO, LOG_HI)
    sig_abs = 1.0 / (1.0 + t)
    p = jnp.clip(jnp.where(x >= 0.0, sig_abs, 1.0 - sig_abs), 1e-4, 1.0 - 1e-4)

    pos = (gt == 1.0).astype(jnp.float32)
    neg = (gt < 1.0).astype(jnp.float32)
    one_m_gt2 = (1.0 - gt) * (1.0 - gt)
    neg_w = one_m_gt2 * one_m_gt2
    pos_loss = log_p * (1.0 - p) * (1.0 - p) * pos
    neg_loss = log_1mp * p * p * neg_w * neg
    num_pos = jnp.sum(pos)
    pos_sum = jnp.sum(pos_loss)
    neg_sum = jnp.sum(neg_loss)
    focal = jnp.where(num_pos == 0.0, -neg_sum,
                      -(pos_sum + neg_sum) / jnp.maximum(num_pos, 1.0))

    # ---- masked smooth-L1 regression / visibility losses (lane-dense) ----
    mask = mask_ref[0]                          # (1, 128)
    num = jnp.sum(mask)
    inv_num = 1.0 / (num + 1e-4)

    def masked_smooth_l1(pred, tgt):
        d = pred * mask - tgt * mask
        ad = jnp.abs(d)
        return jnp.sum(jnp.where(ad < 1.0, 0.5 * d * d, ad - 0.5))

    # TODO(synk): RegLoss_whv source not provided; using CenterNet-style masked
    # smooth-L1 normalized by num positives (the extra `v` argument is unused).
    reg_loss = masked_smooth_l1(regp_ref[0], wht_ref[0]) * inv_num

    vp = 1.0 / (1.0 + jnp.exp(-visp_ref[0]))
    vp = jnp.clip(vp, 1e-4, 1.0 - 1e-4)
    # TODO(synk): RegLoss_weighted source not provided; using the same masked smooth-L1.
    vis_loss = masked_smooth_l1(vp, vt_ref[0]) * inv_num

    # ---- weighted ID cross-entropy via max-subtracted logsumexp ----
    idh = idh_ref[0]                                           # (256, 128) f32
    sumsq = jnp.sum(idh * idh, axis=0, keepdims=True)          # (1, 128)
    inv_norm = jax.lax.rsqrt(jnp.maximum(sumsq, 1e-24))        # == 1/max(||x||,1e-12)
    idh_n = (EMB_SCALE * inv_norm) * idh                       # (256, 128)
    logits = jnp.dot(w_ref[...], idh_n.astype(jnp.bfloat16),
                     preferred_element_type=jnp.float32) + b_ref[...]   # (640, 128)
    col_max = jnp.max(logits, axis=0, keepdims=True)           # (1, 128)
    lse = col_max + jnp.log(jnp.sum(jnp.exp(logits - col_max),
                                    axis=0, keepdims=True))    # (1, 128)
    rows = jax.lax.broadcasted_iota(jnp.int32, logits.shape, 0)
    tgt_logit = jnp.sum(jnp.where(rows == ids_ref[0], logits, 0.0),
                        axis=0, keepdims=True)                 # (1, 128)
    id_w = mask * vt_ref[0]                                    # id_weight = v on masked rows
    id_loss = jnp.sum(id_w * (lse - tgt_logit)) / jnp.maximum(num, 1.0)

    # ---- single lane-dense output block: losses live in lanes 0..3 ----
    lane = jax.lax.broadcasted_iota(jnp.int32, (8, 128), 1)
    out_ref[0] = (jnp.where(lane == 0, focal, 0.0)
                  + jnp.where(lane == 1, reg_loss, 0.0)
                  + jnp.where(lane == 2, vis_loss, 0.0)
                  + jnp.where(lane == 3, id_loss, 0.0))


def _loss_call(cls_lanes, hm, regp, wht, visp, vt, mask, ids, idh, w_pad, b_pad):
    B = cls_lanes.shape[0]

    def per_item(*tail):
        zeros = (0,) * len(tail)
        return pl.BlockSpec((1,) + tuple(tail), lambda b: (b,) + zeros)

    return pl.pallas_call(
        _fused_loss_kernel,
        out_shape=jax.ShapeDtypeStruct((B, 8, 128), jnp.float32),
        grid=(B,),
        in_specs=[
            per_item(HM_ROWS, 128),      # classification logits (lane-dense)
            per_item(HM_ROWS, 128),      # heatmap target
            per_item(8, 128),            # gathered regression predictions
            per_item(8, 128),            # wh targets
            per_item(1, 128),            # gathered vis logits
            per_item(1, 128),            # v targets
            per_item(1, 128),            # reg_mask
            per_item(1, 128),            # ids (int32)
            per_item(EMB_DIM, 128),      # gathered id embeddings
            pl.BlockSpec((NID_PAD, EMB_DIM), lambda b: (0, 0)),  # classifier W (bf16, resident)
            pl.BlockSpec((NID_PAD, 1), lambda b: (0, 0)),        # classifier bias (padded)
        ],
        out_specs=pl.BlockSpec((1, 8, 128), lambda b: (b, 0, 0)),
        compiler_params=pltpu.CompilerParams(
            dimension_semantics=("parallel",)),
    )(cls_lanes, hm, regp, wht, visp, vt, mask, ids, idh, w_pad, b_pad)


# ----------------------------------------------------------------------------
# Jitted device wrapper: batched gathers + single fused kernel + final means.
# ----------------------------------------------------------------------------
@jax.jit
def _device_loss(classifications, regressions, viss, identis,
                 hm, wht, vt, mask, ids, ind, valid,
                 classifier_w, classifier_b):
    B = classifications.shape[0]
    cls_lanes = classifications[..., 0].reshape(B, HM_ROWS, 128)
    idx3 = ind[:, None, :]
    regp = jnp.take_along_axis(regressions, idx3, axis=2)           # (B, 8, 128)
    visp = jnp.take_along_axis(viss[..., 0], ind, axis=1)[:, None, :]  # (B, 1, 128)
    idh = jnp.take_along_axis(identis, idx3, axis=2)                # (B, 256, 128)

    w_pad = jnp.zeros((NID_PAD, EMB_DIM), jnp.bfloat16)
    w_pad = w_pad.at[:NID, :].set(classifier_w.astype(jnp.bfloat16))
    b_pad = jnp.full((NID_PAD, 1), -1e30, jnp.float32)
    b_pad = b_pad.at[:NID, 0].set(classifier_b.astype(jnp.float32))

    out = _loss_call(cls_lanes, hm, regp, wht, visp, vt, mask, ids, idh,
                     w_pad, b_pad)                                   # (B, 8, 128)
    losses = out[:, 0, :4] * valid[:, None]                          # (B, 4)
    # Reference returns cls/reg/vis losses in fp16, id loss in fp32.
    cls_mean = jnp.mean(losses[:, 0].astype(jnp.float16), keepdims=True)
    reg_mean = jnp.mean(losses[:, 1].astype(jnp.float16), keepdims=True)
    vis_mean = jnp.mean(losses[:, 2].astype(jnp.float16), keepdims=True)
    id_mean = jnp.mean(losses[:, 3], keepdims=True)
    return cls_mean, reg_mean, vis_mean, id_mean


def total_loss(classifications, regressions, viss, identis,
               annotations1, annotations2, s_det, s_id,
               classifier_w, classifier_b):
    B = classifications.shape[0]
    hm, wht, vt, mask, ids, ind, valid = build_targets(annotations1, annotations2, B)
    cls_m, reg_m, vis_m, id_m = _device_loss(
        classifications, regressions, viss, identis,
        jnp.asarray(hm), jnp.asarray(wht), jnp.asarray(vt), jnp.asarray(mask),
        jnp.asarray(ids), jnp.asarray(ind), jnp.asarray(valid),
        classifier_w, classifier_b)
    return cls_m, reg_m, vis_m, id_m, s_det, s_id


# ----------------------------------------------------------------------------
if __name__ == "__main__":
    key = jax.random.PRNGKey(0)
    B = 2
    k1, k2, k3, k4, k5 = jax.random.split(key, 5)

    classifications = jax.random.normal(k1, (B, HW, 1), jnp.float32)
    regressions = jax.random.normal(k2, (B, 8, HW), jnp.float32)
    viss = jax.random.normal(k3, (B, HW, 1), jnp.float32)
    identis = jax.random.normal(k4, (B, EMB_DIM, HW), jnp.float32)

    # Deterministic classifier params (nn.Linear(256, 537) equivalent).
    classifier_w = (jax.random.normal(k5, (NID, EMB_DIM), jnp.float32)
                    * (1.0 / math.sqrt(EMB_DIM)))
    classifier_b = jnp.zeros((NID,), jnp.float32)

    # annotation rows: [cx, cy, w, h, cls_id, track_id, v, visibility];
    # padding rows have cls_id == -1 (column 4) and are filtered out.
    ann1 = np.full((B, 4, 8), -1.0, dtype=np.float32)
    ann2 = np.full((B, 4, 8), -1.0, dtype=np.float32)
    ann1[0, 0] = [0.30, 0.40, 0.10, 0.20, 0, 5, 0.9, 0.9]
    ann1[0, 1] = [0.60, 0.50, 0.08, 0.15, 0, 7, 0.7, 0.7]
    ann2[0, 0] = [0.32, 0.41, 0.10, 0.20, 0, 5, 0.9, 0.9]
    ann2[0, 1] = [0.58, 0.52, 0.08, 0.15, 0, 7, 0.6, 0.6]
    ann1[1, 0] = [0.50, 0.50, 0.12, 0.25, 0, 10, 0.8, 0.8]
    ann1[1, 1] = [0.20, 0.70, 0.06, 0.10, 0, 12, 0.5, 0.5]
    ann2[1, 0] = [0.51, 0.49, 0.12, 0.25, 0, 10, 0.8, 0.8]   # only track 10 matches

    s_det = jnp.asarray(-1.85, jnp.float32)
    s_id = jnp.asarray(-1.05, jnp.float32)

    out = total_loss(classifications, regressions, viss, identis,
                     ann1, ann2, s_det, s_id, classifier_w, classifier_b)
    out = jax.block_until_ready(out)
    print("KERNEL_OK")
</pallas_src>

<mosaic_0001>
module attributes {stable_mosaic.version = 11 : i64} {
  func.func @_fused_loss_kernel(%arg0: i32, %arg1: memref<1x323x128xf32, #tpu.memory_space<vmem>>, %arg2: memref<1x323x128xf32, #tpu.memory_space<vmem>>, %arg3: memref<1x8x128xf32, #tpu.memory_space<vmem>>, %arg4: memref<1x8x128xf32, #tpu.memory_space<vmem>>, %arg5: memref<1x1x128xf32, #tpu.memory_space<vmem>>, %arg6: memref<1x1x128xf32, #tpu.memory_space<vmem>>, %arg7: memref<1x1x128xf32, #tpu.memory_space<vmem>>, %arg8: memref<1x1x128xi32, #tpu.memory_space<vmem>>, %arg9: memref<1x256x128xf32, #tpu.memory_space<vmem>>, %arg10: memref<640x256xbf16, #tpu.memory_space<vmem>>, %arg11: memref<640x1xf32, #tpu.memory_space<vmem>>, %arg12: memref<1x8x128xf32, #tpu.memory_space<vmem>>) attributes {dimension_semantics = [#tpu.dimension_semantics<parallel>], iteration_bounds = array<i64: 2>, scalar_prefetch = 0 : i64, scratch_operands = 0 : i64, tpu.core_type = #tpu.core_type<tc>, window_params = [{transform_indices = @transform_0, window_bounds = array<i64: 1, 323, 128>}, {transform_indices = @transform_1, window_bounds = array<i64: 1, 323, 128>}, {transform_indices = @transform_2, window_bounds = array<i64: 1, 8, 128>}, {transform_indices = @transform_3, window_bounds = array<i64: 1, 8, 128>}, {transform_indices = @transform_4, window_bounds = array<i64: 1, 1, 128>}, {transform_indices = @transform_5, window_bounds = array<i64: 1, 1, 128>}, {transform_indices = @transform_6, window_bounds = array<i64: 1, 1, 128>}, {transform_indices = @transform_7, window_bounds = array<i64: 1, 1, 128>}, {transform_indices = @transform_8, window_bounds = array<i64: 1, 256, 128>}, {pipeline_mode = #tpu.pipeline_mode<synchronous>, transform_indices = @transform_9, window_bounds = array<i64: 640, 256>}, {pipeline_mode = #tpu.pipeline_mode<synchronous>, transform_indices = @transform_10, window_bounds = array<i64: 640, 1>}, {transform_indices = @transform_11, window_bounds = array<i64: 1, 8, 128>}]} {
    %c0 = arith.constant 0 : index
    %c0_0 = arith.constant 0 : index
    %c0_1 = arith.constant 0 : index
    %0 = vector.load %arg1[%c0, %c0_0, %c0_1] : memref<1x323x128xf32, #tpu.memory_space<vmem>>, vector<1x323x128xf32>
    %1 = vector.shape_cast %0 : vector<1x323x128xf32> to vector<323x128xf32>
    %c0_2 = arith.constant 0 : index
    %c0_3 = arith.constant 0 : index
    %c0_4 = arith.constant 0 : index
    %2 = vector.load %arg2[%c0_2, %c0_3, %c0_4] : memref<1x323x128xf32, #tpu.memory_space<vmem>>, vector<1x323x128xf32>
    %3 = vector.shape_cast %2 : vector<1x323x128xf32> to vector<323x128xf32>
    %4 = math.absf %1 : vector<323x128xf32>
    %cst = arith.constant 0.000000e+00 : f32
    %5 = vector.broadcast %cst : f32 to vector<323x128xf32>
    %6 = arith.subf %5, %4 : vector<323x128xf32>
    %7 = math.exp %6 : vector<323x128xf32>
    %cst_5 = arith.constant 1.000000e+00 : f32
    %8 = vector.broadcast %cst_5 : f32 to vector<323x128xf32>
    %9 = arith.addf %8, %7 : vector<323x128xf32>
    %10 = math.log %9 : vector<323x128xf32>
    %cst_6 = arith.constant 0.000000e+00 : f32
    %11 = vector.broadcast %cst_6 : f32 to vector<323x128xf32>
    %12 = arith.minimumf %1, %11 : vector<323x128xf32>
    %13 = arith.subf %12, %10 : vector<323x128xf32>
    %cst_7 = arith.constant -9.21034049 : f32
    %cst_8 = arith.constant -1.000050e-04 : f32
    %14 = vector.broadcast %cst_7 : f32 to vector<323x128xf32>
    %15 = arith.maximumf %14, %13 : vector<323x128xf32>
    %16 = vector.broadcast %cst_8 : f32 to vector<323x128xf32>
    %17 = arith.minimumf %16, %15 : vector<323x128xf32>
    %cst_9 = arith.constant 0.000000e+00 : f32
    %18 = vector.broadcast %cst_9 : f32 to vector<323x128xf32>
    %19 = arith.subf %18, %1 : vector<323x128xf32>
    %cst_10 = arith.constant 0.000000e+00 : f32
    %20 = vector.broadcast %cst_10 : f32 to vector<323x128xf32>
    %21 = arith.minimumf %19, %20 : vector<323x128xf32>
    %22 = arith.subf %21, %10 : vector<323x128xf32>
    %cst_11 = arith.constant -9.21034049 : f32
    %cst_12 = arith.constant -1.000050e-04 : f32
    %23 = vector.broadcast %cst_11 : f32 to vector<323x128xf32>
    %24 = arith.maximumf %23, %22 : vector<323x128xf32>
    %25 = vector.broadcast %cst_12 : f32 to vector<323x128xf32>
    %26 = arith.minimumf %25, %24 : vector<323x128xf32>
    %cst_13 = arith.constant 1.000000e+00 : f32
    %27 = vector.broadcast %cst_13 : f32 to vector<323x128xf32>
    %28 = arith.addf %27, %7 : vector<323x128xf32>
    %cst_14 = arith.constant 1.000000e+00 : f32
    %29 = vector.broadcast %cst_14 : f32 to vector<323x128xf32>
    %30 = arith.divf %29, %28 : vector<323x128xf32>
    %cst_15 = arith.constant 0.000000e+00 : f32
    %31 = vector.broadcast %cst_15 : f32 to vector<323x128xf32>
    %32 = arith.cmpf oge, %1, %31 : vector<323x128xf32>
    %cst_16 = arith.constant 1.000000e+00 : f32
    %33 = vector.broadcast %cst_16 : f32 to vector<323x128xf32>
    %34 = arith.subf %33, %30 : vector<323x128xf32>
    %35 = arith.select %32, %30, %34 : vector<323x128xi1>, vector<323x128xf32>
    %cst_17 = arith.constant 9.99999974E-5 : f32
    %cst_18 = arith.constant 0.999899983 : f32
    %36 = vector.broadcast %cst_17 : f32 to vector<323x128xf32>
    %37 = arith.maximumf %36, %35 : vector<323x128xf32>
    %38 = vector.broadcast %cst_18 : f32 to vector<323x128xf32>
    %39 = arith.minimumf %38, %37 : vector<323x128xf32>
    %cst_19 = arith.constant 1.000000e+00 : f32
    %40 = vector.broadcast %cst_19 : f32 to vector<323x128xf32>
    %41 = arith.cmpf oeq, %3, %40 : vector<323x128xf32>
    %42 = arith.extui %41 : vector<323x128xi1> to vector<323x128xi32>
    %43 = arith.sitofp %42 : vector<323x128xi32> to vector<323x128xf32>
    %cst_20 = arith.constant 1.000000e+00 : f32
    %44 = vector.broadcast %cst_20 : f32 to vector<323x128xf32>
    %45 = arith.cmpf olt, %3, %44 : vector<323x128xf32>
    %46 = arith.extui %45 : vector<323x128xi1> to vector<323x128xi32>
    %47 = arith.sitofp %46 : vector<323x128xi32> to vector<323x128xf32>
    %cst_21 = arith.constant 1.000000e+00 : f32
    %48 = vector.broadcast %cst_21 : f32 to vector<323x128xf32>
    %49 = arith.subf %48, %3 : vector<323x128xf32>
    %cst_22 = arith.constant 1.000000e+00 : f32
    %50 = vector.broadcast %cst_22 : f32 to vector<323x128xf32>
    %51 = arith.subf %50, %3 : vector<323x128xf32>
    %52 = arith.mulf %49, %51 : vector<323x128xf32>
    %53 = arith.mulf %52, %52 : vector<323x128xf32>
    %cst_23 = arith.constant 1.000000e+00 : f32
    %54 = vector.broadcast %cst_23 : f32 to vector<323x128xf32>
    %55 = arith.subf %54, %39 : vector<323x128xf32>
    %56 = arith.mulf %17, %55 : vector<323x128xf32>
    %cst_24 = arith.constant 1.000000e+00 : f32
    %57 = vector.broadcast %cst_24 : f32 to vector<323x128xf32>
    %58 = arith.subf %57, %39 : vector<323x128xf32>
    %59 = arith.mulf %56, %58 : vector<323x128xf32>
    %60 = arith.mulf %59, %43 : vector<323x128xf32>
    %61 = arith.mulf %26, %39 : vector<323x128xf32>
    %62 = arith.mulf %61, %39 : vector<323x128xf32>
    %63 = arith.mulf %62, %53 : vector<323x128xf32>
    %64 = arith.mulf %63, %47 : vector<323x128xf32>
    %65 = vector.shape_cast %43 : vector<323x128xf32> to vector<1x323x128xf32>
    %cst_25 = arith.constant dense<0.000000e+00> : vector<1xf32>
    %66 = vector.multi_reduction <add>, %65, %cst_25 [1, 2] : vector<1x323x128xf32> to vector<1xf32>
    %67 = vector.shape_cast %66 : vector<1xf32> to vector<1x1x1xf32>
    %68 = vector.extract %67[0, 0, 0] : f32 from vector<1x1x1xf32>
    %69 = vector.shape_cast %60 : vector<323x128xf32> to vector<1x323x128xf32>
    %cst_26 = arith.constant dense<0.000000e+00> : vector<1xf32>
    %70 = vector.multi_reduction <add>, %69, %cst_26 [1, 2] : vector<1x323x128xf32> to vector<1xf32>
    %71 = vector.shape_cast %70 : vector<1xf32> to vector<1x1x1xf32>
    %72 = vector.extract %71[0, 0, 0] : f32 from vector<1x1x1xf32>
    %73 = vector.shape_cast %64 : vector<323x128xf32> to vector<1x323x128xf32>
    %cst_27 = arith.constant dense<0.000000e+00> : vector<1xf32>
    %74 = vector.multi_reduction <add>, %73, %cst_27 [1, 2] : vector<1x323x128xf32> to vector<1xf32>
    %75 = vector.shape_cast %74 : vector<1xf32> to vector<1x1x1xf32>
    %76 = vector.extract %75[0, 0, 0] : f32 from vector<1x1x1xf32>
    %cst_28 = arith.constant 0.000000e+00 : f32
    %77 = arith.cmpf oeq, %68, %cst_28 : f32
    %cst_29 = arith.constant 0.000000e+00 : f32
    %78 = arith.subf %cst_29, %76 : f32
    %79 = arith.addf %72, %76 : f32
    %cst_30 = arith.constant 0.000000e+00 : f32
    %80 = arith.subf %cst_30, %79 : f32
    %cst_31 = arith.constant 1.000000e+00 : f32
    %81 = arith.maximumf %68, %cst_31 : f32
    %82 = arith.divf %80, %81 : f32
    %83 = arith.select %77, %78, %82 : f32
    %c0_32 = arith.constant 0 : index
    %c0_33 = arith.constant 0 : index
    %c0_34 = arith.constant 0 : index
    %84 = vector.load %arg7[%c0_32, %c0_33, %c0_34] : memref<1x1x128xf32, #tpu.memory_space<vmem>>, vector<1x1x128xf32>
    %85 = vector.shape_cast %84 : vector<1x1x128xf32> to vector<1x128xf32>
    %86 = vector.shape_cast %85 : vector<1x128xf32> to vector<1x1x128xf32>
    %cst_35 = arith.constant dense<0.000000e+00> : vector<1xf32>
    %87 = vector.multi_reduction <add>, %86, %cst_35 [1, 2] : vector<1x1x128xf32> to vector<1xf32>
    %88 = vector.shape_cast %87 : vector<1xf32> to vector<1x1x1xf32>
    %89 = vector.extract %88[0, 0, 0] : f32 from vector<1x1x1xf32>
    %cst_36 = arith.constant 9.99999974E-5 : f32
    %90 = arith.addf %89, %cst_36 : f32
    %cst_37 = arith.constant 1.000000e+00 : f32
    %91 = arith.divf %cst_37, %90 : f32
    %c0_38 = arith.constant 0 : index
    %c0_39 = arith.constant 0 : index
    %c0_40 = arith.constant 0 : index
    %92 = vector.load %arg3[%c0_38, %c0_39, %c0_40] : memref<1x8x128xf32, #tpu.memory_space<vmem>>, vector<1x8x128xf32>
    %93 = vector.shape_cast %92 : vector<1x8x128xf32> to vector<8x128xf32>
    %c0_41 = arith.constant 0 : index
    %c0_42 = arith.constant 0 : index
    %c0_43 = arith.constant 0 : index
    %94 = vector.load %arg4[%c0_41, %c0_42, %c0_43] : memref<1x8x128xf32, #tpu.memory_space<vmem>>, vector<1x8x128xf32>
    %95 = vector.shape_cast %94 : vector<1x8x128xf32> to vector<8x128xf32>
    %96 = vector.broadcast %85 : vector<1x128xf32> to vector<8x128xf32>
    %97 = arith.mulf %93, %96 : vector<8x128xf32>
    %98 = vector.broadcast %85 : vector<1x128xf32> to vector<8x128xf32>
    %99 = arith.mulf %95, %98 : vector<8x128xf32>
    %100 = arith.subf %97, %99 : vector<8x128xf32>
    %101 = math.absf %100 : vector<8x128xf32>
    %cst_44 = arith.constant 1.000000e+00 : f32
    %102 = vector.broadcast %cst_44 : f32 to vector<8x128xf32>
    %103 = arith.cmpf olt, %101, %102 : vector<8x128xf32>
    %cst_45 = arith.constant 5.000000e-01 : f32
    %104 = vector.broadcast %cst_45 : f32 to vector<8x128xf32>
    %105 = arith.mulf %104, %100 : vector<8x128xf32>
    %106 = arith.mulf %105, %100 : vector<8x128xf32>
    %cst_46 = arith.constant 5.000000e-01 : f32
    %107 = vector.broadcast %cst_46 : f32 to vector<8x128xf32>
    %108 = arith.subf %101, %107 : vector<8x128xf32>
    %109 = arith.select %103, %106, %108 : vector<8x128xi1>, vector<8x128xf32>
    %110 = vector.shape_cast %109 : vector<8x128xf32> to vector<1x8x128xf32>
    %cst_47 = arith.constant dense<0.000000e+00> : vector<1xf32>
    %111 = vector.multi_reduction <add>, %110, %cst_47 [1, 2] : vector<1x8x128xf32> to vector<1xf32>
    %112 = vector.shape_cast %111 : vector<1xf32> to vector<1x1x1xf32>
    %113 = vector.extract %112[0, 0, 0] : f32 from vector<1x1x1xf32>
    %114 = arith.mulf %113, %91 : f32
    %c0_48 = arith.constant 0 : index
    %c0_49 = arith.constant 0 : index
    %c0_50 = arith.constant 0 : index
    %115 = vector.load %arg5[%c0_48, %c0_49, %c0_50] : memref<1x1x128xf32, #tpu.memory_space<vmem>>, vector<1x1x128xf32>
    %116 = vector.shape_cast %115 : vector<1x1x128xf32> to vector<1x128xf32>
    %cst_51 = arith.constant 0.000000e+00 : f32
    %117 = vector.broadcast %cst_51 : f32 to vector<1x128xf32>
    %118 = arith.subf %117, %116 : vector<1x128xf32>
    %119 = math.exp %118 : vector<1x128xf32>
    %cst_52 = arith.constant 1.000000e+00 : f32
    %120 = vector.broadcast %cst_52 : f32 to vector<1x128xf32>
    %121 = arith.addf %120, %119 : vector<1x128xf32>
    %cst_53 = arith.constant 1.000000e+00 : f32
    %122 = vector.broadcast %cst_53 : f32 to vector<1x128xf32>
    %123 = arith.divf %122, %121 : vector<1x128xf32>
    %cst_54 = arith.constant 9.99999974E-5 : f32
    %cst_55 = arith.constant 0.999899983 : f32
    %124 = vector.broadcast %cst_54 : f32 to vector<1x128xf32>
    %125 = arith.maximumf %124, %123 : vector<1x128xf32>
    %126 = vector.broadcast %cst_55 : f32 to vector<1x128xf32>
    %127 = arith.minimumf %126, %125 : vector<1x128xf32>
    %c0_56 = arith.constant 0 : index
    %c0_57 = arith.constant 0 : index
    %c0_58 = arith.constant 0 : index
    %128 = vector.load %arg6[%c0_56, %c0_57, %c0_58] : memref<1x1x128xf32, #tpu.memory_space<vmem>>, vector<1x1x128xf32>
    %129 = vector.shape_cast %128 : vector<1x1x128xf32> to vector<1x128xf32>
    %130 = arith.mulf %127, %85 : vector<1x128xf32>
    %131 = arith.mulf %129, %85 : vector<1x128xf32>
    %132 = arith.subf %130, %131 : vector<1x128xf32>
    %133 = math.absf %132 : vector<1x128xf32>
    %cst_59 = arith.constant 1.000000e+00 : f32
    %134 = vector.broadcast %cst_59 : f32 to vector<1x128xf32>
    %135 = arith.cmpf olt, %133, %134 : vector<1x128xf32>
    %cst_60 = arith.constant 5.000000e-01 : f32
    %136 = vector.broadcast %cst_60 : f32 to vector<1x128xf32>
    %137 = arith.mulf %136, %132 : vector<1x128xf32>
    %138 = arith.mulf %137, %132 : vector<1x128xf32>
    %cst_61 = arith.constant 5.000000e-01 : f32
    %139 = vector.broadcast %cst_61 : f32 to vector<1x128xf32>
    %140 = arith.subf %133, %139 : vector<1x128xf32>
    %141 = arith.select %135, %138, %140 : vector<1x128xi1>, vector<1x128xf32>
    %142 = vector.shape_cast %141 : vector<1x128xf32> to vector<1x1x128xf32>
    %cst_62 = arith.constant dense<0.000000e+00> : vector<1xf32>
    %143 = vector.multi_reduction <add>, %142, %cst_62 [1, 2] : vector<1x1x128xf32> to vector<1xf32>
    %144 = vector.shape_cast %143 : vector<1xf32> to vector<1x1x1xf32>
    %145 = vector.extract %144[0, 0, 0] : f32 from vector<1x1x1xf32>
    %146 = arith.mulf %145, %91 : f32
    %c0_63 = arith.constant 0 : index
    %c0_64 = arith.constant 0 : index
    %c0_65 = arith.constant 0 : index
    %147 = vector.load %arg9[%c0_63, %c0_64, %c0_65] : memref<1x256x128xf32, #tpu.memory_space<vmem>>, vector<1x256x128xf32>
    %148 = vector.shape_cast %147 : vector<1x256x128xf32> to vector<256x128xf32>
    %149 = arith.mulf %148, %148 : vector<256x128xf32>
    %cst_66 = arith.constant dense<0.000000e+00> : vector<128xf32>
    %150 = vector.multi_reduction <add>, %149, %cst_66 [0] : vector<256x128xf32> to vector<128xf32>
    %151 = vector.shape_cast %150 : vector<128xf32> to vector<1x128xf32>
    %cst_67 = arith.constant 1.000000e-24 : f32
    %152 = vector.broadcast %cst_67 : f32 to vector<1x128xf32>
    %153 = arith.maximumf %151, %152 : vector<1x128xf32>
    %154 = math.rsqrt %153 : vector<1x128xf32>
    %cst_68 = arith.constant 8.88710784 : f32
    %155 = vector.broadcast %cst_68 : f32 to vector<1x128xf32>
    %156 = arith.mulf %155, %154 : vector<1x128xf32>
    %157 = vector.broadcast %156 : vector<1x128xf32> to vector<256x128xf32>
    %158 = arith.mulf %157, %148 : vector<256x128xf32>
    %c0_69 = arith.constant 0 : index
    %c0_70 = arith.constant 0 : index
    %159 = vector.load %arg10[%c0_69, %c0_70] : memref<640x256xbf16, #tpu.memory_space<vmem>>, vector<640x256xbf16>
    %160 = arith.truncf %158 : vector<256x128xf32> to vector<256x128xbf16>
    %cst_71 = arith.constant dense<0.000000e+00> : vector<640x128xf32>
    %161 = tpu.matmul %159, %160, %cst_71 {dimension_numbers = #tpu.dot_dimension_numbers<[1], [0], [0], [1], [0, 0, 1, 1], [], []>} : vector<640x256xbf16>, vector<256x128xbf16>, vector<640x128xf32> -> vector<640x128xf32>
    %c0_72 = arith.constant 0 : index
    %c0_73 = arith.constant 0 : index
    %162 = vector.load %arg11[%c0_72, %c0_73] : memref<640x1xf32, #tpu.memory_space<vmem>>, vector<640x1xf32>
    %163 = vector.broadcast %162 : vector<640x1xf32> to vector<640x128xf32>
    %164 = arith.addf %161, %163 : vector<640x128xf32>
    %cst_74 = arith.constant dense<0xFF800000> : vector<128xf32>
    %165 = vector.multi_reduction <maximumf>, %164, %cst_74 [0] : vector<640x128xf32> to vector<128xf32>
    %166 = vector.shape_cast %165 : vector<128xf32> to vector<1x128xf32>
    %167 = vector.broadcast %166 : vector<1x128xf32> to vector<640x128xf32>
    %168 = arith.subf %164, %167 : vector<640x128xf32>
    %169 = math.exp %168 : vector<640x128xf32>
    %cst_75 = arith.constant dense<0.000000e+00> : vector<128xf32>
    %170 = vector.multi_reduction <add>, %169, %cst_75 [0] : vector<640x128xf32> to vector<128xf32>
    %171 = vector.shape_cast %170 : vector<128xf32> to vector<1x128xf32>
    %172 = math.log %171 : vector<1x128xf32>
    %173 = arith.addf %166, %172 : vector<1x128xf32>
    %174 = tpu.iota {dimensions = array<i32: 0>} : vector<640x128xi32>
    %c0_76 = arith.constant 0 : index
    %c0_77 = arith.constant 0 : index
    %c0_78 = arith.constant 0 : index
    %175 = vector.load %arg8[%c0_76, %c0_77, %c0_78] : memref<1x1x128xi32, #tpu.memory_space<vmem>>, vector<1x1x128xi32>
    %176 = vector.shape_cast %175 : vector<1x1x128xi32> to vector<1x128xi32>
    %177 = vector.broadcast %176 : vector<1x128xi32> to vector<640x128xi32>
    %178 = arith.cmpi eq, %174, %177 : vector<640x128xi32>
    %cst_79 = arith.constant 0.000000e+00 : f32
    %179 = vector.broadcast %cst_79 : f32 to vector<640x128xf32>
    %180 = arith.select %178, %164, %179 : vector<640x128xi1>, vector<640x128xf32>
    %cst_80 = arith.constant dense<0.000000e+00> : vector<128xf32>
    %181 = vector.multi_reduction <add>, %180, %cst_80 [0] : vector<640x128xf32> to vector<128xf32>
    %182 = vector.shape_cast %181 : vector<128xf32> to vector<1x128xf32>
    %c0_81 = arith.constant 0 : index
    %c0_82 = arith.constant 0 : index
    %c0_83 = arith.constant 0 : index
    %183 = vector.load %arg6[%c0_81, %c0_82, %c0_83] : memref<1x1x128xf32, #tpu.memory_space<vmem>>, vector<1x1x128xf32>
    %184 = vector.shape_cast %183 : vector<1x1x128xf32> to vector<1x128xf32>
    %185 = arith.mulf %85, %184 : vector<1x128xf32>
    %186 = arith.subf %173, %182 : vector<1x128xf32>
    %187 = arith.mulf %185, %186 : vector<1x128xf32>
    %188 = vector.shape_cast %187 : vector<1x128xf32> to vector<1x1x128xf32>
    %cst_84 = arith.constant dense<0.000000e+00> : vector<1xf32>
    %189 = vector.multi_reduction <add>, %188, %cst_84 [1, 2] : vector<1x1x128xf32> to vector<1xf32>
    %190 = vector.shape_cast %189 : vector<1xf32> to vector<1x1x1xf32>
    %191 = vector.extract %190[0, 0, 0] : f32 from vector<1x1x1xf32>
    %cst_85 = arith.constant 1.000000e+00 : f32
    %192 = arith.maximumf %89, %cst_85 : f32
    %193 = arith.divf %191, %192 : f32
    %194 = tpu.iota {dimensions = array<i32: 1>} : vector<8x128xi32>
    %c0_i32 = arith.constant 0 : i32
    %195 = vector.broadcast %c0_i32 : i32 to vector<8x128xi32>
    %196 = arith.cmpi eq, %194, %195 : vector<8x128xi32>
    %cst_86 = arith.constant 0.000000e+00 : f32
    %197 = vector.broadcast %83 : f32 to vector<8x128xf32>
    %198 = vector.broadcast %cst_86 : f32 to vector<8x128xf32>
    %199 = arith.select %196, %197, %198 : vector<8x128xi1>, vector<8x128xf32>
    %c1_i32 = arith.constant 1 : i32
    %200 = vector.broadcast %c1_i32 : i32 to vector<8x128xi32>
    %201 = arith.cmpi eq, %194, %200 : vector<8x128xi32>
    %cst_87 = arith.constant 0.000000e+00 : f32
    %202 = vector.broadcast %114 : f32 to vector<8x128xf32>
    %203 = vector.broadcast %cst_87 : f32 to vector<8x128xf32>
    %204 = arith.select %201, %202, %203 : vector<8x128xi1>, vector<8x128xf32>
    %205 = arith.addf %199, %204 : vector<8x128xf32>
    %c2_i32 = arith.constant 2 : i32
    %206 = vector.broadcast %c2_i32 : i32 to vector<8x128xi32>
    %207 = arith.cmpi eq, %194, %206 : vector<8x128xi32>
    %cst_88 = arith.constant 0.000000e+00 : f32
    %208 = vector.broadcast %146 : f32 to vector<8x128xf32>
    %209 = vector.broadcast %cst_88 : f32 to vector<8x128xf32>
    %210 = arith.select %207, %208, %209 : vector<8x128xi1>, vector<8x128xf32>
    %211 = arith.addf %205, %210 : vector<8x128xf32>
    %c3_i32 = arith.constant 3 : i32
    %212 = vector.broadcast %c3_i32 : i32 to vector<8x128xi32>
    %213 = arith.cmpi eq, %194, %212 : vector<8x128xi32>
    %cst_89 = arith.constant 0.000000e+00 : f32
    %214 = vector.broadcast %193 : f32 to vector<8x128xf32>
    %215 = vector.broadcast %cst_89 : f32 to vector<8x128xf32>
    %216 = arith.select %213, %214, %215 : vector<8x128xi1>, vector<8x128xf32>
    %217 = arith.addf %211, %216 : vector<8x128xf32>
    %c0_90 = arith.constant 0 : index
    %c0_91 = arith.constant 0 : index
    %c0_92 = arith.constant 0 : index
    %218 = vector.load %arg12[%c0_90, %c0_91, %c0_92] : memref<1x8x128xf32, #tpu.memory_space<vmem>>, vector<1x8x128xf32>
    %219 = vector.shape_cast %218 : vector<1x8x128xf32> to vector<8x128xf32>
    %220 = vector.shape_cast %217 : vector<8x128xf32> to vector<1x8x128xf32>
    tpu.vector_store %arg12[%c0_90, %c0_91, %c0_92], %220 {strides = array<i32>} : memref<1x8x128xf32, #tpu.memory_space<vmem>>, vector<1x8x128xf32>,
    return
  }
  func.func @transform_0(%arg0: i32) -> (i32, i32, i32) {
    %c0_i32 = arith.constant 0 : i32
    %c0_i32_0 = arith.constant 0 : i32
    %c0_i32_1 = arith.constant 0 : i32
    return %arg0, %c0_i32, %c0_i32_0 : i32, i32, i32
  }
  func.func @transform_1(%arg0: i32) -> (i32, i32, i32) {
    %c0_i32 = arith.constant 0 : i32
    %c0_i32_0 = arith.constant 0 : i32
    %c0_i32_1 = arith.constant 0 : i32
    return %arg0, %c0_i32, %c0_i32_0 : i32, i32, i32
  }
  func.func @transform_2(%arg0: i32) -> (i32, i32, i32) {
    %c0_i32 = arith.constant 0 : i32
    %c0_i32_0 = arith.constant 0 : i32
    %c0_i32_1 = arith.constant 0 : i32
    return %arg0, %c0_i32, %c0_i32_0 : i32, i32, i32
  }
  func.func @transform_3(%arg0: i32) -> (i32, i32, i32) {
    %c0_i32 = arith.constant 0 : i32
    %c0_i32_0 = arith.constant 0 : i32
    %c0_i32_1 = arith.constant 0 : i32
    return %arg0, %c0_i32, %c0_i32_0 : i32, i32, i32
  }
  func.func @transform_4(%arg0: i32) -> (i32, i32, i32) {
    %c0_i32 = arith.constant 0 : i32
    %c0_i32_0 = arith.constant 0 : i32
    %c0_i32_1 = arith.constant 0 : i32
    return %arg0, %c0_i32, %c0_i32_0 : i32, i32, i32
  }
  func.func @transform_5(%arg0: i32) -> (i32, i32, i32) {
    %c0_i32 = arith.constant 0 : i32
    %c0_i32_0 = arith.constant 0 : i32
    %c0_i32_1 = arith.constant 0 : i32
    return %arg0, %c0_i32, %c0_i32_0 : i32, i32, i32
  }
  func.func @transform_6(%arg0: i32) -> (i32, i32, i32) {
    %c0_i32 = arith.constant 0 : i32
    %c0_i32_0 = arith.constant 0 : i32
    %c0_i32_1 = arith.constant 0 : i32
    return %arg0, %c0_i32, %c0_i32_0 : i32, i32, i32
  }
  func.func @transform_7(%arg0: i32) -> (i32, i32, i32) {
    %c0_i32 = arith.constant 0 : i32
    %c0_i32_0 = arith.constant 0 : i32
    %c0_i32_1 = arith.constant 0 : i32
    return %arg0, %c0_i32, %c0_i32_0 : i32, i32, i32
  }
  func.func @transform_8(%arg0: i32) -> (i32, i32, i32) {
    %c0_i32 = arith.constant 0 : i32
    %c0_i32_0 = arith.constant 0 : i32
    %c0_i32_1 = arith.constant 0 : i32
    return %arg0, %c0_i32, %c0_i32_0 : i32, i32, i32
  }
  func.func @transform_9(%arg0: i32) -> (i32, i32) {
    %c0_i32 = arith.constant 0 : i32
    %c0_i32_0 = arith.constant 0 : i32
    %c0_i32_1 = arith.constant 0 : i32
    return %c0_i32, %c0_i32_0 : i32, i32
  }
  func.func @transform_10(%arg0: i32) -> (i32, i32) {
    %c0_i32 = arith.constant 0 : i32
    %c0_i32_0 = arith.constant 0 : i32
    %c0_i32_1 = arith.constant 0 : i32
    return %c0_i32, %c0_i32_0 : i32, i32
  }
  func.func @transform_11(%arg0: i32) -> (i32, i32, i32) {
    %c0_i32 = arith.constant 0 : i32
    %c0_i32_0 = arith.constant 0 : i32
    %c0_i32_1 = arith.constant 0 : i32
    return %arg0, %c0_i32, %c0_i32_0 : i32, i32, i32
  }
}

</mosaic_0001>

<llo_original>
// kernel: squeeze.7
$region0: #{squeeze.7}
  %s0 = inlined_call_operand.vmem [shape: f32[2,41344], index: 0, kind: input, shape index: {}]
  %s1 = inlined_call_operand.vmem [shape: f32[2,323,128], index: 1, kind: output, shape index: {}]
  $region1: #{squeeze.7} parent=0
    #allocation0 [shape = 'u8[1323008]{0}', space=vmem, size = 0x143000, scoped, tag = 'scoped mem for input reshape']
    %s3 = sshllo.u32 0, 2
    %s4 = smul.addr 2, 322
    %s5 = scalar_lea.vmem %s0, %s4
    %v6 = vld [vmem:[%s5] sm:%s3]
    %s7 = scalar_lea.vmem [#allocation0], 2576
    %8 = vst [vmem:[%s7] sm:%s3] %v6
    %s9 = smul.addr 2, 321
    %s10 = scalar_lea.vmem %s0, %s9
    %v11 = vld [vmem:[%s10] sm:%s3]
    %s12 = scalar_lea.vmem [#allocation0], 2568
    %13 = vst [vmem:[%s12] sm:%s3] %v11
    %s14 = smul.addr 2, 320
    %s15 = scalar_lea.vmem %s0, %s14
    %v16 = vld [vmem:[%s15] sm:%s3]
    %s17 = scalar_lea.vmem [#allocation0], 2560
    %18 = vst [vmem:[%s17] sm:%s3] %v16
    %s19 = smul.addr 2, 319
    %s20 = scalar_lea.vmem %s0, %s19
    %v21 = vld [vmem:[%s20] sm:%s3]
    %s22 = scalar_lea.vmem [#allocation0], 2552
    %23 = vst [vmem:[%s22] sm:%s3] %v21
    %s24 = smul.addr 2, 318
    %s25 = scalar_lea.vmem %s0, %s24
    %v26 = vld [vmem:[%s25] sm:%s3]
    %s27 = scalar_lea.vmem [#allocation0], 2544
    %28 = vst [vmem:[%s27] sm:%s3] %v26
    %s29 = smul.addr 2, 317
    %s30 = scalar_lea.vmem %s0, %s29
    %v31 = vld [vmem:[%s30] sm:%s3]
    %s32 = scalar_lea.vmem [#allocation0], 2536
    %33 = vst [vmem:[%s32] sm:%s3] %v31
    %s34 = smul.addr 2, 316
    %s35 = scalar_lea.vmem %s0, %s34
    %v36 = vld [vmem:[%s35] sm:%s3]
    %s37 = scalar_lea.vmem [#allocation0], 2528
    %38 = vst [vmem:[%s37] sm:%s3] %v36
    %s39 = smul.addr 2, 315
    %s40 = scalar_lea.vmem %s0, %s39
    %v41 = vld [vmem:[%s40] sm:%s3]
    %s42 = scalar_lea.vmem [#allocation0], 2520
    %43 = vst [vmem:[%s42] sm:%s3] %v41
    %s44 = smul.addr 2, 314
    %s45 = scalar_lea.vmem %s0, %s44
    %v46 = vld [vmem:[%s45] sm:%s3]
    %s47 = scalar_lea.vmem [#allocation0], 2512
    %48 = vst [vmem:[%s47] sm:%s3] %v46
    %s49 = smul.addr 2, 313
    %s50 = scalar_lea.vmem %s0, %s49
    %v51 = vld [vmem:[%s50] sm:%s3]
    %s52 = scalar_lea.vmem [#allocation0], 2504
    %53 = vst [vmem:[%s52] sm:%s3] %v51
    %s54 = smul.addr 2, 312
    %s55 = scalar_lea.vmem %s0, %s54
    %v56 = vld [vmem:[%s55] sm:%s3]
    %s57 = scalar_lea.vmem [#allocation0], 2496
    %58 = vst [vmem:[%s57] sm:%s3] %v56
    %s59 = smul.addr 2, 311
    %s60 = scalar_lea.vmem %s0, %s59
    %v61 = vld [vmem:[%s60] sm:%s3]
    %s62 = scalar_lea.vmem [#allocation0], 2488
    %63 = vst [vmem:[%s62] sm:%s3] %v61
    %s64 = smul.addr 2, 310
    %s65 = scalar_lea.vmem %s0, %s64
    %v66 = vld [vmem:[%s65] sm:%s3]
    %s67 = scalar_lea.vmem [#allocation0], 2480
    %68 = vst [vmem:[%s67] sm:%s3] %v66
    %s69 = smul.addr 2, 309
    %s70 = scalar_lea.vmem %s0, %s69
    %v71 = vld [vmem:[%s70] sm:%s3]
    %s72 = scalar_lea.vmem [#allocation0], 2472
    %73 = vst [vmem:[%s72] sm:%s3] %v71
    %s74 = smul.addr 2, 308
    %s75 = scalar_lea.vmem %s0, %s74
    %v76 = vld [vmem:[%s75] sm:%s3]
    %s77 = scalar_lea.vmem [#allocation0], 2464
    %78 = vst [vmem:[%s77] sm:%s3] %v76
    %s79 = smul.addr 2, 307
    %s80 = scalar_lea.vmem %s0, %s79
    %v81 = vld [vmem:[%s80] sm:%s3]
    %s82 = scalar_lea.vmem [#allocation0], 2456
    %83 = vst [vmem:[%s82] sm:%s3] %v81
    %s84 = smul.addr 2, 306
    %s85 = scalar_lea.vmem %s0, %s84
    %v86 = vld [vmem:[%s85] sm:%s3]
    %s87 = scalar_lea.vmem [#allocation0], 2448
    %88 = vst [vmem:[%s87] sm:%s3] %v86
    %s89 = smul.addr 2, 305
    %s90 = scalar_lea.vmem %s0, %s89
    %v91 = vld [vmem:[%s90] sm:%s3]
    %s92 = scalar_lea.vmem [#allocation0], 2440
    %93 = vst [vmem:[%s92] sm:%s3] %v91
    %s94 = smul.addr 2, 304
    %s95 = scalar_lea.vmem %s0, %s94
    %v96 = vld [vmem:[%s95] sm:%s3]
    %s97 = scalar_lea.vmem [#allocation0], 2432
    %98 = vst [vmem:[%s97] sm:%s3] %v96
    %s99 = smul.addr 2, 303
    %s100 = scalar_lea.vmem %s0, %s99
    %v101 = vld [vmem:[%s100] sm:%s3]
    %s102 = scalar_lea.vmem [#allocation0], 2424
    %103 = vst [vmem:[%s102] sm:%s3] %v101
    %s104 = smul.addr 2, 302
    %s105 = scalar_lea.vmem %s0, %s104
    %v106 = vld [vmem:[%s105] sm:%s3]
    %s107 = scalar_lea.vmem [#allocation0], 2416
    %108 = vst [vmem:[%s107] sm:%s3] %v106
    %s109 = smul.addr 2, 301
    %s110 = scalar_lea.vmem %s0, %s109
    %v111 = vld [vmem:[%s110] sm:%s3]
    %s112 = scalar_lea.vmem [#allocation0], 2408
    %113 = vst [vmem:[%s112] sm:%s3] %v111
    %s114 = smul.addr 2, 300
    %s115 = scalar_lea.vmem %s0, %s114
    %v116 = vld [vmem:[%s115] sm:%s3]
    %s117 = scalar_lea.vmem [#allocation0], 2400
    %118 = vst [vmem:[%s117] sm:%s3] %v116
    %s119 = smul.addr 2, 299
    %s120 = scalar_lea.vmem %s0, %s119
    %v121 = vld [vmem:[%s120] sm:%s3]
    %s122 = scalar_lea.vmem [#allocation0], 2392
    %123 = vst [vmem:[%s122] sm:%s3] %v121
    %s124 = smul.addr 2, 298
    %s125 = scalar_lea.vmem %s0, %s124
    %v126 = vld [vmem:[%s125] sm:%s3]
    %s127 = scalar_lea.vmem [#allocation0], 2384
    %128 = vst [vmem:[%s127] sm:%s3] %v126
    %s129 = smul.addr 2, 297
    %s130 = scalar_lea.vmem %s0, %s129
    %v131 = vld [vmem:[%s130] sm:%s3]
    %s132 = scalar_lea.vmem [#allocation0], 2376
    %133 = vst [vmem:[%s132] sm:%s3] %v131
    %s134 = smul.addr 2, 296
    %s135 = scalar_lea.vmem %s0, %s134
    %v136 = vld [vmem:[%s135] sm:%s3]
    %s137 = scalar_lea.vmem [#allocation0], 2368
    %138 = vst [vmem:[%s137] sm:%s3] %v136
    %s139 = smul.addr 2, 295
    %s140 = scalar_lea.vmem %s0, %s139
    %v141 = vld [vmem:[%s140] sm:%s3]
    %s142 = scalar_lea.vmem [#allocation0], 2360
    %143 = vst [vmem:[%s142] sm:%s3] %v141
    %s144 = smul.addr 2, 294
    %s145 = scalar_lea.vmem %s0, %s144
    %v146 = vld [vmem:[%s145] sm:%s3]
    %s147 = scalar_lea.vmem [#allocation0], 2352
    %148 = vst [vmem:[%s147] sm:%s3] %v146
    %s149 = smul.addr 2, 293
    %s150 = scalar_lea.vmem %s0, %s149
    %v151 = vld [vmem:[%s150] sm:%s3]
    %s152 = scalar_lea.vmem [#allocation0], 2344
    %153 = vst [vmem:[%s152] sm:%s3] %v151
    %s154 = smul.addr 2, 292
    %s155 = scalar_lea.vmem %s0, %s154
    %v156 = vld [vmem:[%s155] sm:%s3]
    %s157 = scalar_lea.vmem [#allocation0], 2336
    %158 = vst [vmem:[%s157] sm:%s3] %v156
    %s159 = smul.addr 2, 291
    %s160 = scalar_lea.vmem %s0, %s159
    %v161 = vld [vmem:[%s160] sm:%s3]
    %s162 = scalar_lea.vmem [#allocation0], 2328
    %163 = vst [vmem:[%s162] sm:%s3] %v161
    %s164 = smul.addr 2, 290
    %s165 = scalar_lea.vmem %s0, %s164
    %v166 = vld [vmem:[%s165] sm:%s3]
    %s167 = scalar_lea.vmem [#allocation0], 2320
    %168 = vst [vmem:[%s167] sm:%s3] %v166
    %s169 = smul.addr 2, 289
    %s170 = scalar_lea.vmem %s0, %s169
    %v171 = vld [vmem:[%s170] sm:%s3]
    %s172 = scalar_lea.vmem [#allocation0], 2312
    %173 = vst [vmem:[%s172] sm:%s3] %v171
    %s174 = smul.addr 2, 288
    %s175 = scalar_lea.vmem %s0, %s174
    %v176 = vld [vmem:[%s175] sm:%s3]
    %s177 = scalar_lea.vmem [#allocation0], 2304
    %178 = vst [vmem:[%s177] sm:%s3] %v176
    %s179 = smul.addr 2, 287
    %s180 = scalar_lea.vmem %s0, %s179
    %v181 = vld [vmem:[%s180] sm:%s3]
    %s182 = scalar_lea.vmem [#allocation0], 2296
    %183 = vst [vmem:[%s182] sm:%s3] %v181
    %s184 = smul.addr 2, 286
    %s185 = scalar_lea.vmem %s0, %s184
    %v186 = vld [vmem:[%s185] sm:%s3]
    %s187 = scalar_lea.vmem [#allocation0], 2288
    %188 = vst [vmem:[%s187] sm:%s3] %v186
    %s189 = smul.addr 2, 285
    %s190 = scalar_lea.vmem %s0, %s189
    %v191 = vld [vmem:[%s190] sm:%s3]
    %s192 = scalar_lea.vmem [#allocation0], 2280
    %193 = vst [vmem:[%s192] sm:%s3] %v191
    %s194 = smul.addr 2, 284
    %s195 = scalar_lea.vmem %s0, %s194
    %v196 = vld [vmem:[%s195] sm:%s3]
    %s197 = scalar_lea.vmem [#allocation0], 2272
    %198 = vst [vmem:[%s197] sm:%s3] %v196
    %s199 = smul.addr 2, 283
    %s200 = scalar_lea.vmem %s0, %s199
    %v201 = vld [vmem:[%s200] sm:%s3]
    %s202 = scalar_lea.vmem [#allocation0], 2264
    %203 = vst [vmem:[%s202] sm:%s3] %v201
    %s204 = smul.addr 2, 282
    %s205 = scalar_lea.vmem %s0, %s204
    %v206 = vld [vmem:[%s205] sm:%s3]
    %s207 = scalar_lea.vmem [#allocation0], 2256
    %208 = vst [vmem:[%s207] sm:%s3] %v206
    %s209 = smul.addr 2, 281
    %s210 = scalar_lea.vmem %s0, %s209
    %v211 = vld [vmem:[%s210] sm:%s3]
    %s212 = scalar_lea.vmem [#allocation0], 2248
    %213 = vst [vmem:[%s212] sm:%s3] %v211
    %s214 = smul.addr 2, 280
    %s215 = scalar_lea.vmem %s0, %s214
    %v216 = vld [vmem:[%s215] sm:%s3]
    %s217 = scalar_lea.vmem [#allocation0], 2240
    %218 = vst [vmem:[%s217] sm:%s3] %v216
    %s219 = smul.addr 2, 279
    %s220 = scalar_lea.vmem %s0, %s219
    %v221 = vld [vmem:[%s220] sm:%s3]
    %s222 = scalar_lea.vmem [#allocation0], 2232
    %223 = vst [vmem:[%s222] sm:%s3] %v221
    %s224 = smul.addr 2, 278
    %s225 = scalar_lea.vmem %s0, %s224
    %v226 = vld [vmem:[%s225] sm:%s3]
    %s227 = scalar_lea.vmem [#allocation0], 2224
    %228 = vst [vmem:[%s227] sm:%s3] %v226
    %s229 = smul.addr 2, 277
    %s230 = scalar_lea.vmem %s0, %s229
    %v231 = vld [vmem:[%s230] sm:%s3]
    %s232 = scalar_lea.vmem [#allocation0], 2216
    %233 = vst [vmem:[%s232] sm:%s3] %v231
    %s234 = smul.addr 2, 276
    %s235 = scalar_lea.vmem %s0, %s234
    %v236 = vld [vmem:[%s235] sm:%s3]
    %s237 = scalar_lea.vmem [#allocation0], 2208
    %238 = vst [vmem:[%s237] sm:%s3] %v236
    %s239 = smul.addr 2, 275
    %s240 = scalar_lea.vmem %s0, %s239
    %v241 = vld [vmem:[%s240] sm:%s3]
    %s242 = scalar_lea.vmem [#allocation0], 2200
    %243 = vst [vmem:[%s242] sm:%s3] %v241
    %s244 = smul.addr 2, 274
    %s245 = scalar_lea.vmem %s0, %s244
    %v246 = vld [vmem:[%s245] sm:%s3]
    %s247 = scalar_lea.vmem [#allocation0], 2192
    %248 = vst [vmem:[%s247] sm:%s3] %v246
    %s249 = smul.addr 2, 273
    %s250 = scalar_lea.vmem %s0, %s249
    %v251 = vld [vmem:[%s250] sm:%s3]
    %s252 = scalar_lea.vmem [#allocation0], 2184
    %253 = vst [vmem:[%s252] sm:%s3] %v251
    %s254 = smul.addr 2, 272
    %s255 = scalar_lea.vmem %s0, %s254
    %v256 = vld [vmem:[%s255] sm:%s3]
    %s257 = scalar_lea.vmem [#allocation0], 2176
    %258 = vst [vmem:[%s257] sm:%s3] %v256
    %s259 = smul.addr 2, 271
    %s260 = scalar_lea.vmem %s0, %s259
    %v261 = vld [vmem:[%s260] sm:%s3]
    %s262 = scalar_lea.vmem [#allocation0], 2168
    %263 = vst [vmem:[%s262] sm:%s3] %v261
    %s264 = smul.addr 2, 270
    %s265 = scalar_lea.vmem %s0, %s264
    %v266 = vld [vmem:[%s265] sm:%s3]
    %s267 = scalar_lea.vmem [#allocation0], 2160
    %268 = vst [vmem:[%s267] sm:%s3] %v266
    %s269 = smul.addr 2, 269
    %s270 = scalar_lea.vmem %s0, %s269
    %v271 = vld [vmem:[%s270] sm:%s3]
    %s272 = scalar_lea.vmem [#allocation0], 2152
    %273 = vst [vmem:[%s272] sm:%s3] %v271
    %s274 = smul.addr 2, 268
    %s275 = scalar_lea.vmem %s0, %s274
    %v276 = vld [vmem:[%s275] sm:%s3]
    %s277 = scalar_lea.vmem [#allocation0], 2144
    %278 = vst [vmem:[%s277] sm:%s3] %v276
    %s279 = smul.addr 2, 267
    %s280 = scalar_lea.vmem %s0, %s279
    %v281 = vld [vmem:[%s280] sm:%s3]
    %s282 = scalar_lea.vmem [#allocation0], 2136
    %283 = vst [vmem:[%s282] sm:%s3] %v281
    %s284 = smul.addr 2, 266
    %s285 = scalar_lea.vmem %s0, %s284
    %v286 = vld [vmem:[%s285] sm:%s3]
    %s287 = scalar_lea.vmem [#allocation0], 2128
    %288 = vst [vmem:[%s287] sm:%s3] %v286
    %s289 = smul.addr 2, 265
    %s290 = scalar_lea.vmem %s0, %s289
    %v291 = vld [vmem:[%s290] sm:%s3]
    %s292 = scalar_lea.vmem [#allocation0], 2120
    %293 = vst [vmem:[%s292] sm:%s3] %v291
    %s294 = smul.addr 2, 264
    %s295 = scalar_lea.vmem %s0, %s294
    %v296 = vld [vmem:[%s295] sm:%s3]
    %s297 = scalar_lea.vmem [#allocation0], 2112
    %298 = vst [vmem:[%s297] sm:%s3] %v296
    %s299 = smul.addr 2, 263
    %s300 = scalar_lea.vmem %s0, %s299
    %v301 = vld [vmem:[%s300] sm:%s3]
    %s302 = scalar_lea.vmem [#allocation0], 2104
    %303 = vst [vmem:[%s302] sm:%s3] %v301
    %s304 = smul.addr 2, 262
    %s305 = scalar_lea.vmem %s0, %s304
    %v306 = vld [vmem:[%s305] sm:%s3]
    %s307 = scalar_lea.vmem [#allocation0], 2096
    %308 = vst [vmem:[%s307] sm:%s3] %v306
    %s309 = smul.addr 2, 261
    %s310 = scalar_lea.vmem %s0, %s309
    %v311 = vld [vmem:[%s310] sm:%s3]
    %s312 = scalar_lea.vmem [#allocation0], 2088
    %313 = vst [vmem:[%s312] sm:%s3] %v311
    %s314 = smul.addr 2, 260
    %s315 = scalar_lea.vmem %s0, %s314
    %v316 = vld [vmem:[%s315] sm:%s3]
    %s317 = scalar_lea.vmem [#allocation0], 2080
    %318 = vst [vmem:[%s317] sm:%s3] %v316
    %s319 = smul.addr 2, 259
    %s320 = scalar_lea.vmem %s0, %s319
    %v321 = vld [vmem:[%s320] sm:%s3]
    %s322 = scalar_lea.vmem [#allocation0], 2072
    %323 = vst [vmem:[%s322] sm:%s3] %v321
    %s324 = smul.addr 2, 258
    %s325 = scalar_lea.vmem %s0, %s324
    %v326 = vld [vmem:[%s325] sm:%s3]
    %s327 = scalar_lea.vmem [#allocation0], 2064
    %328 = vst [vmem:[%s327] sm:%s3] %v326
    %s329 = smul.addr 2, 257
    %s330 = scalar_lea.vmem %s0, %s329
    %v331 = vld [vmem:[%s330] sm:%s3]
    %s332 = scalar_lea.vmem [#allocation0], 2056
    %333 = vst [vmem:[%s332] sm:%s3] %v331
    %s334 = smul.addr 2, 256
    %s335 = scalar_lea.vmem %s0, %s334
    %v336 = vld [vmem:[%s335] sm:%s3]
    %s337 = scalar_lea.vmem [#allocation0], 2048
    %338 = vst [vmem:[%s337] sm:%s3] %v336
    %s339 = smul.addr 2, 255
    %s340 = scalar_lea.vmem %s0, %s339
    %v341 = vld [vmem:[%s340] sm:%s3]
    %s342 = scalar_lea.vmem [#allocation0], 2040
    %343 = vst [vmem:[%s342] sm:%s3] %v341
    %s344 = smul.addr 2, 254
    %s345 = scalar_lea.vmem %s0, %s344
    %v346 = vld [vmem:[%s345] sm:%s3]
    %s347 = scalar_lea.vmem [#allocation0], 2032
    %348 = vst [vmem:[%s347] sm:%s3] %v346
    %s349 = smul.addr 2, 253
    %s350 = scalar_lea.vmem %s0, %s349
    %v351 = vld [vmem:[%s350] sm:%s3]
    %s352 = scalar_lea.vmem [#allocation0], 2024
    %353 = vst [vmem:[%s352] sm:%s3] %v351
    %s354 = smul.addr 2, 252
    %s355 = scalar_lea.vmem %s0, %s354
    %v356 = vld [vmem:[%s355] sm:%s3]
    %s357 = scalar_lea.vmem [#allocation0], 2016
    %358 = vst [vmem:[%s357] sm:%s3] %v356
    %s359 = smul.addr 2, 251
    %s360 = scalar_lea.vmem %s0, %s359
    %v361 = vld [vmem:[%s360] sm:%s3]
    %s362 = scalar_lea.vmem [#allocation0], 2008
    %363 = vst [vmem:[%s362] sm:%s3] %v361
    %s364 = smul.addr 2, 250
    %s365 = scalar_lea.vmem %s0, %s364
    %v366 = vld [vmem:[%s365] sm:%s3]
    %s367 = scalar_lea.vmem [#allocation0], 2000
    %368 = vst [vmem:[%s367] sm:%s3] %v366
    %s369 = smul.addr 2, 249
    %s370 = scalar_lea.vmem %s0, %s369
    %v371 = vld [vmem:[%s370] sm:%s3]
    %s372 = scalar_lea.vmem [#allocation0], 1992
    %373 = vst [vmem:[%s372] sm:%s3] %v371
    %s374 = smul.addr 2, 248
    %s375 = scalar_lea.vmem %s0, %s374
    %v376 = vld [vmem:[%s375] sm:%s3]
    %s377 = scalar_lea.vmem [#allocation0], 1984
    %378 = vst [vmem:[%s377] sm:%s3] %v376
    %s379 = smul.addr 2, 247
    %s380 = scalar_lea.vmem %s0, %s379
    %v381 = vld [vmem:[%s380] sm:%s3]
    %s382 = scalar_lea.vmem [#allocation0], 1976
    %383 = vst [vmem:[%s382] sm:%s3] %v381
    %s384 = smul.addr 2, 246
    %s385 = scalar_lea.vmem %s0, %s384
    %v386 = vld [vmem:[%s385] sm:%s3]
    %s387 = scalar_lea.vmem [#allocation0], 1968
    %388 = vst [vmem:[%s387] sm:%s3] %v386
    %s389 = smul.addr 2, 245
    %s390 = scalar_lea.vmem %s0, %s389
    %v391 = vld [vmem:[%s390] sm:%s3]
    %s392 = scalar_lea.vmem [#allocation0], 1960
    %393 = vst [vmem:[%s392] sm:%s3] %v391
    %s394 = smul.addr 2, 244
    %s395 = scalar_lea.vmem %s0, %s394
    %v396 = vld [vmem:[%s395] sm:%s3]
    %s397 = scalar_lea.vmem [#allocation0], 1952
    %398 = vst [vmem:[%s397] sm:%s3] %v396
    %s399 = smul.addr 2, 243
    %s400 = scalar_lea.vmem %s0, %s399
    %v401 = vld [vmem:[%s400] sm:%s3]
    %s402 = scalar_lea.vmem [#allocation0], 1944
    %403 = vst [vmem:[%s402] sm:%s3] %v401
    %s404 = smul.addr 2, 242
    %s405 = scalar_lea.vmem %s0, %s404
    %v406 = vld [vmem:[%s405] sm:%s3]
    %s407 = scalar_lea.vmem [#allocation0], 1936
    %408 = vst [vmem:[%s407] sm:%s3] %v406
    %s409 = smul.addr 2, 241
    %s410 = scalar_lea.vmem %s0, %s409
    %v411 = vld [vmem:[%s410] sm:%s3]
    %s412 = scalar_lea.vmem [#allocation0], 1928
    %413 = vst [vmem:[%s412] sm:%s3] %v411
    %s414 = smul.addr 2, 240
    %s415 = scalar_lea.vmem %s0, %s414
    %v416 = vld [vmem:[%s415] sm:%s3]
    %s417 = scalar_lea.vmem [#allocation0], 1920
    %418 = vst [vmem:[%s417] sm:%s3] %v416
    %s419 = smul.addr 2, 239
    %s420 = scalar_lea.vmem %s0, %s419
    %v421 = vld [vmem:[%s420] sm:%s3]
    %s422 = scalar_lea.vmem [#allocation0], 1912
    %423 = vst [vmem:[%s422] sm:%s3] %v421
    %s424 = smul.addr 2, 238
    %s425 = scalar_lea.vmem %s0, %s424
    %v426 = vld [vmem:[%s425] sm:%s3]
    %s427 = scalar_lea.vmem [#allocation0], 1904
    %428 = vst [vmem:[%s427] sm:%s3] %v426
    %s429 = smul.addr 2, 237
    %s430 = scalar_lea.vmem %s0, %s429
    %v431 = vld [vmem:[%s430] sm:%s3]
    %s432 = scalar_lea.vmem [#allocation0], 1896
    %433 = vst [vmem:[%s432] sm:%s3] %v431
    %s434 = smul.addr 2, 236
    %s435 = scalar_lea.vmem %s0, %s434
    %v436 = vld [vmem:[%s435] sm:%s3]
    %s437 = scalar_lea.vmem [#allocation0], 1888
    %438 = vst [vmem:[%s437] sm:%s3] %v436
    %s439 = smul.addr 2, 235
    %s440 = scalar_lea.vmem %s0, %s439
    %v441 = vld [vmem:[%s440] sm:%s3]
    %s442 = scalar_lea.vmem [#allocation0], 1880
    %443 = vst [vmem:[%s442] sm:%s3] %v441
    %s444 = smul.addr 2, 234
    %s445 = scalar_lea.vmem %s0, %s444
    %v446 = vld [vmem:[%s445] sm:%s3]
    %s447 = scalar_lea.vmem [#allocation0], 1872
    %448 = vst [vmem:[%s447] sm:%s3] %v446
    %s449 = smul.addr 2, 233
    %s450 = scalar_lea.vmem %s0, %s449
    %v451 = vld [vmem:[%s450] sm:%s3]
    %s452 = scalar_lea.vmem [#allocation0], 1864
    %453 = vst [vmem:[%s452] sm:%s3] %v451
    %s454 = smul.addr 2, 232
    %s455 = scalar_lea.vmem %s0, %s454
    %v456 = vld [vmem:[%s455] sm:%s3]
    %s457 = scalar_lea.vmem [#allocation0], 1856
    %458 = vst [vmem:[%s457] sm:%s3] %v456
    %s459 = smul.addr 2, 231
    %s460 = scalar_lea.vmem %s0, %s459
    %v461 = vld [vmem:[%s460] sm:%s3]
    %s462 = scalar_lea.vmem [#allocation0], 1848
    %463 = vst [vmem:[%s462] sm:%s3] %v461
    %s464 = smul.addr 2, 230
    %s465 = scalar_lea.vmem %s0, %s464
    %v466 = vld [vmem:[%s465] sm:%s3]
    %s467 = scalar_lea.vmem [#allocation0], 1840
    %468 = vst [vmem:[%s467] sm:%s3] %v466
    %s469 = smul.addr 2, 229
    %s470 = scalar_lea.vmem %s0, %s469
    %v471 = vld [vmem:[%s470] sm:%s3]
    %s472 = scalar_lea.vmem [#allocation0], 1832
    %473 = vst [vmem:[%s472] sm:%s3] %v471
    %s474 = smul.addr 2, 228
    %s475 = scalar_lea.vmem %s0, %s474
    %v476 = vld [vmem:[%s475] sm:%s3]
    %s477 = scalar_lea.vmem [#allocation0], 1824
    %478 = vst [vmem:[%s477] sm:%s3] %v476
    %s479 = smul.addr 2, 227
    %s480 = scalar_lea.vmem %s0, %s479
    %v481 = vld [vmem:[%s480] sm:%s3]
    %s482 = scalar_lea.vmem [#allocation0], 1816
    %483 = vst [vmem:[%s482] sm:%s3] %v481
    %s484 = smul.addr 2, 226
    %s485 = scalar_lea.vmem %s0, %s484
    %v486 = vld [vmem:[%s485] sm:%s3]
    %s487 = scalar_lea.vmem [#allocation0], 1808
    %488 = vst [vmem:[%s487] sm:%s3] %v486
    %s489 = smul.addr 2, 225
    %s490 = scalar_lea.vmem %s0, %s489
    %v491 = vld [vmem:[%s490] sm:%s3]
    %s492 = scalar_lea.vmem [#allocation0], 1800
    %493 = vst [vmem:[%s492] sm:%s3] %v491
    %s494 = smul.addr 2, 224
    %s495 = scalar_lea.vmem %s0, %s494
    %v496 = vld [vmem:[%s495] sm:%s3]
    %s497 = scalar_lea.vmem [#allocation0], 1792
    %498 = vst [vmem:[%s497] sm:%s3] %v496
    %s499 = smul.addr 2, 223
    %s500 = scalar_lea.vmem %s0, %s499
    %v501 = vld [vmem:[%s500] sm:%s3]
    %s502 = scalar_lea.vmem [#allocation0], 1784
    %503 = vst [vmem:[%s502] sm:%s3] %v501
    %s504 = smul.addr 2, 222
    %s505 = scalar_lea.vmem %s0, %s504
    %v506 = vld [vmem:[%s505] sm:%s3]
    %s507 = scalar_lea.vmem [#allocation0], 1776
    %508 = vst [vmem:[%s507] sm:%s3] %v506
    %s509 = smul.addr 2, 221
    %s510 = scalar_lea.vmem %s0, %s509
    %v511 = vld [vmem:[%s510] sm:%s3]
    %s512 = scalar_lea.vmem [#allocation0], 1768
    %513 = vst [vmem:[%s512] sm:%s3] %v511
    %s514 = smul.addr 2, 220
    %s515 = scalar_lea.vmem %s0, %s514
    %v516 = vld [vmem:[%s515] sm:%s3]
    %s517 = scalar_lea.vmem [#allocation0], 1760
    %518 = vst [vmem:[%s517] sm:%s3] %v516
    %s519 = smul.addr 2, 219
    %s520 = scalar_lea.vmem %s0, %s519
    %v521 = vld [vmem:[%s520] sm:%s3]
    %s522 = scalar_lea.vmem [#allocation0], 1752
    %523 = vst [vmem:[%s522] sm:%s3] %v521
    %s524 = smul.addr 2, 218
    %s525 = scalar_lea.vmem %s0, %s524
    %v526 = vld [vmem:[%s525] sm:%s3]
    %s527 = scalar_lea.vmem [#allocation0], 1744
    %528 = vst [vmem:[%s527] sm:%s3] %v526
    %s529 = smul.addr 2, 217
    %s530 = scalar_lea.vmem %s0, %s529
    %v531 = vld [vmem:[%s530] sm:%s3]
    %s532 = scalar_lea.vmem [#allocation0], 1736
    %533 = vst [vmem:[%s532] sm:%s3] %v531
    %s534 = smul.addr 2, 216
    %s535 = scalar_lea.vmem %s0, %s534
    %v536 = vld [vmem:[%s535] sm:%s3]
    %s537 = scalar_lea.vmem [#allocation0], 1728
    %538 = vst [vmem:[%s537] sm:%s3] %v536
    %s539 = smul.addr 2, 215
    %s540 = scalar_lea.vmem %s0, %s539
    %v541 = vld [vmem:[%s540] sm:%s3]
    %s542 = scalar_lea.vmem [#allocation0], 1720
    %543 = vst [vmem:[%s542] sm:%s3] %v541
    %s544 = smul.addr 2, 214
    %s545 = scalar_lea.vmem %s0, %s544
    %v546 = vld [vmem:[%s545] sm:%s3]
    %s547 = scalar_lea.vmem [#allocation0], 1712
    %548 = vst [vmem:[%s547] sm:%s3] %v546
    %s549 = smul.addr 2, 213
    %s550 = scalar_lea.vmem %s0, %s549
    %v551 = vld [vmem:[%s550] sm:%s3]
    %s552 = scalar_lea.vmem [#allocation0], 1704
    %553 = vst [vmem:[%s552] sm:%s3] %v551
    %s554 = smul.addr 2, 212
    %s555 = scalar_lea.vmem %s0, %s554
    %v556 = vld [vmem:[%s555] sm:%s3]
    %s557 = scalar_lea.vmem [#allocation0], 1696
    %558 = vst [vmem:[%s557] sm:%s3] %v556
    %s559 = smul.addr 2, 211
    %s560 = scalar_lea.vmem %s0, %s559
    %v561 = vld [vmem:[%s560] sm:%s3]
    %s562 = scalar_lea.vmem [#allocation0], 1688
    %563 = vst [vmem:[%s562] sm:%s3] %v561
    %s564 = smul.addr 2, 210
    %s565 = scalar_lea.vmem %s0, %s564
    %v566 = vld [vmem:[%s565] sm:%s3]
    %s567 = scalar_lea.vmem [#allocation0], 1680
    %568 = vst [vmem:[%s567] sm:%s3] %v566
    %s569 = smul.addr 2, 209
    %s570 = scalar_lea.vmem %s0, %s569
    %v571 = vld [vmem:[%s570] sm:%s3]
    %s572 = scalar_lea.vmem [#allocation0], 1672
    %573 = vst [vmem:[%s572] sm:%s3] %v571
    %s574 = smul.addr 2, 208
    %s575 = scalar_lea.vmem %s0, %s574
    %v576 = vld [vmem:[%s575] sm:%s3]
    %s577 = scalar_lea.vmem [#allocation0], 1664
    %578 = vst [vmem:[%s577] sm:%s3] %v576
    %s579 = smul.addr 2, 207
    %s580 = scalar_lea.vmem %s0, %s579
    %v581 = vld [vmem:[%s580] sm:%s3]
    %s582 = scalar_lea.vmem [#allocation0], 1656
    %583 = vst [vmem:[%s582] sm:%s3] %v581
    %s584 = smul.addr 2, 206
    %s585 = scalar_lea.vmem %s0, %s584
    %v586 = vld [vmem:[%s585] sm:%s3]
    %s587 = scalar_lea.vmem [#allocation0], 1648
    %588 = vst [vmem:[%s587] sm:%s3] %v586
    %s589 = smul.addr 2, 205
    %s590 = scalar_lea.vmem %s0, %s589
    %v591 = vld [vmem:[%s590] sm:%s3]
    %s592 = scalar_lea.vmem [#allocation0], 1640
    %593 = vst [vmem:[%s592] sm:%s3] %v591
    %s594 = smul.addr 2, 204
    %s595 = scalar_lea.vmem %s0, %s594
    %v596 = vld [vmem:[%s595] sm:%s3]
    %s597 = scalar_lea.vmem [#allocation0], 1632
    %598 = vst [vmem:[%s597] sm:%s3] %v596
    %s599 = smul.addr 2, 203
    %s600 = scalar_lea.vmem %s0, %s599
    %v601 = vld [vmem:[%s600] sm:%s3]
    %s602 = scalar_lea.vmem [#allocation0], 1624
    %603 = vst [vmem:[%s602] sm:%s3] %v601
    %s604 = smul.addr 2, 202
    %s605 = scalar_lea.vmem %s0, %s604
    %v606 = vld [vmem:[%s605] sm:%s3]
    %s607 = scalar_lea.vmem [#allocation0], 1616
    %608 = vst [vmem:[%s607] sm:%s3] %v606
    %s609 = smul.addr 2, 201
    %s610 = scalar_lea.vmem %s0, %s609
    %v611 = vld [vmem:[%s610] sm:%s3]
    %s612 = scalar_lea.vmem [#allocation0], 1608
    %613 = vst [vmem:[%s612] sm:%s3] %v611
    %s614 = smul.addr 2, 200
    %s615 = scalar_lea.vmem %s0, %s614
    %v616 = vld [vmem:[%s615] sm:%s3]
    %s617 = scalar_lea.vmem [#allocation0], 1600
    %618 = vst [vmem:[%s617] sm:%s3] %v616
    %s619 = smul.addr 2, 199
    %s620 = scalar_lea.vmem %s0, %s619
    %v621 = vld [vmem:[%s620] sm:%s3]
    %s622 = scalar_lea.vmem [#allocation0], 1592
    %623 = vst [vmem:[%s622] sm:%s3] %v621
    %s624 = smul.addr 2, 198
    %s625 = scalar_lea.vmem %s0, %s624
    %v626 = vld [vmem:[%s625] sm:%s3]
    %s627 = scalar_lea.vmem [#allocation0], 1584
    %628 = vst [vmem:[%s627] sm:%s3] %v626
    %s629 = smul.addr 2, 197
    %s630 = scalar_lea.vmem %s0, %s629
    %v631 = vld [vmem:[%s630] sm:%s3]
    %s632 = scalar_lea.vmem [#allocation0], 1576
    %633 = vst [vmem:[%s632] sm:%s3] %v631
    %s634 = smul.addr 2, 196
    %s635 = scalar_lea.vmem %s0, %s634
    %v636 = vld [vmem:[%s635] sm:%s3]
    %s637 = scalar_lea.vmem [#allocation0], 1568
    %638 = vst [vmem:[%s637] sm:%s3] %v636
    %s639 = smul.addr 2, 195
    %s640 = scalar_lea.vmem %s0, %s639
    %v641 = vld [vmem:[%s640] sm:%s3]
    %s642 = scalar_lea.vmem [#allocation0], 1560
    %643 = vst [vmem:[%s642] sm:%s3] %v641
    %s644 = smul.addr 2, 194
    %s645 = scalar_lea.vmem %s0, %s644
    %v646 = vld [vmem:[%s645] sm:%s3]
    %s647 = scalar_lea.vmem [#allocation0], 1552
    %648 = vst [vmem:[%s647] sm:%s3] %v646
    %s649 = smul.addr 2, 193
    %s650 = scalar_lea.vmem %s0, %s649
    %v651 = vld [vmem:[%s650] sm:%s3]
    %s652 = scalar_lea.vmem [#allocation0], 1544
    %653 = vst [vmem:[%s652] sm:%s3] %v651
    %s654 = smul.addr 2, 192
    %s655 = scalar_lea.vmem %s0, %s654
    %v656 = vld [vmem:[%s655] sm:%s3]
    %s657 = scalar_lea.vmem [#allocation0], 1536
    %658 = vst [vmem:[%s657] sm:%s3] %v656
    %s659 = smul.addr 2, 191
    %s660 = scalar_lea.vmem %s0, %s659
    %v661 = vld [vmem:[%s660] sm:%s3]
    %s662 = scalar_lea.vmem [#allocation0], 1528
    %663 = vst [vmem:[%s662] sm:%s3] %v661
    %s664 = smul.addr 2, 190
    %s665 = scalar_lea.vmem %s0, %s664
    %v666 = vld [vmem:[%s665] sm:%s3]
    %s667 = scalar_lea.vmem [#allocation0], 1520
    %668 = vst [vmem:[%s667] sm:%s3] %v666
    %s669 = smul.addr 2, 189
    %s670 = scalar_lea.vmem %s0, %s669
    %v671 = vld [vmem:[%s670] sm:%s3]
    %s672 = scalar_lea.vmem [#allocation0], 1512
    %673 = vst [vmem:[%s672] sm:%s3] %v671
    %s674 = smul.addr 2, 188
    %s675 = scalar_lea.vmem %s0, %s674
    %v676 = vld [vmem:[%s675] sm:%s3]
    %s677 = scalar_lea.vmem [#allocation0], 1504
    %678 = vst [vmem:[%s677] sm:%s3] %v676
    %s679 = smul.addr 2, 187
    %s680 = scalar_lea.vmem %s0, %s679
    %v681 = vld [vmem:[%s680] sm:%s3]
    %s682 = scalar_lea.vmem [#allocation0], 1496
    %683 = vst [vmem:[%s682] sm:%s3] %v681
    %s684 = smul.addr 2, 186
    %s685 = scalar_lea.vmem %s0, %s684
    %v686 = vld [vmem:[%s685] sm:%s3]
    %s687 = scalar_lea.vmem [#allocation0], 1488
    %688 = vst [vmem:[%s687] sm:%s3] %v686
    %s689 = smul.addr 2, 185
    %s690 = scalar_lea.vmem %s0, %s689
    %v691 = vld [vmem:[%s690] sm:%s3]
    %s692 = scalar_lea.vmem [#allocation0], 1480
    %693 = vst [vmem:[%s692] sm:%s3] %v691
    %s694 = smul.addr 2, 184
    %s695 = scalar_lea.vmem %s0, %s694
    %v696 = vld [vmem:[%s695] sm:%s3]
    %s697 = scalar_lea.vmem [#allocation0], 1472
    %698 = vst [vmem:[%s697] sm:%s3] %v696
    %s699 = smul.addr 2, 183
    %s700 = scalar_lea.vmem %s0, %s699
    %v701 = vld [vmem:[%s700] sm:%s3]
    %s702 = scalar_lea.vmem [#allocation0], 1464
    %703 = vst [vmem:[%s702] sm:%s3] %v701
    %s704 = smul.addr 2, 182
    %s705 = scalar_lea.vmem %s0, %s704
    %v706 = vld [vmem:[%s705] sm:%s3]
    %s707 = scalar_lea.vmem [#allocation0], 1456
    %708 = vst [vmem:[%s707] sm:%s3] %v706
    %s709 = smul.addr 2, 181
    %s710 = scalar_lea.vmem %s0, %s709
    %v711 = vld [vmem:[%s710] sm:%s3]
    %s712 = scalar_lea.vmem [#allocation0], 1448
    %713 = vst [vmem:[%s712] sm:%s3] %v711
    %s714 = smul.addr 2, 180
    %s715 = scalar_lea.vmem %s0, %s714
    %v716 = vld [vmem:[%s715] sm:%s3]
    %s717 = scalar_lea.vmem [#allocation0], 1440
    %718 = vst [vmem:[%s717] sm:%s3] %v716
    %s719 = smul.addr 2, 179
    %s720 = scalar_lea.vmem %s0, %s719
    %v721 = vld [vmem:[%s720] sm:%s3]
    %s722 = scalar_lea.vmem [#allocation0], 1432
    %723 = vst [vmem:[%s722] sm:%s3] %v721
    %s724 = smul.addr 2, 178
    %s725 = scalar_lea.vmem %s0, %s724
    %v726 = vld [vmem:[%s725] sm:%s3]
    %s727 = scalar_lea.vmem [#allocation0], 1424
    %728 = vst [vmem:[%s727] sm:%s3] %v726
    %s729 = smul.addr 2, 177
    %s730 = scalar_lea.vmem %s0, %s729
    %v731 = vld [vmem:[%s730] sm:%s3]
    %s732 = scalar_lea.vmem [#allocation0], 1416
    %733 = vst [vmem:[%s732] sm:%s3] %v731
    %s734 = smul.addr 2, 176
    %s735 = scalar_lea.vmem %s0, %s734
    %v736 = vld [vmem:[%s735] sm:%s3]
    %s737 = scalar_lea.vmem [#allocation0], 1408
    %738 = vst [vmem:[%s737] sm:%s3] %v736
    %s739 = smul.addr 2, 175
    %s740 = scalar_lea.vmem %s0, %s739
    %v741 = vld [vmem:[%s740] sm:%s3]
    %s742 = scalar_lea.vmem [#allocation0], 1400
    %743 = vst [vmem:[%s742] sm:%s3] %v741
    %s744 = smul.addr 2, 174
    %s745 = scalar_lea.vmem %s0, %s744
    %v746 = vld [vmem:[%s745] sm:%s3]
    %s747 = scalar_lea.vmem [#allocation0], 1392
    %748 = vst [vmem:[%s747] sm:%s3] %v746
    %s749 = smul.addr 2, 173
    %s750 = scalar_lea.vmem %s0, %s749
    %v751 = vld [vmem:[%s750] sm:%s3]
    %s752 = scalar_lea.vmem [#allocation0], 1384
    %753 = vst [vmem:[%s752] sm:%s3] %v751
    %s754 = smul.addr 2, 172
    %s755 = scalar_lea.vmem %s0, %s754
    %v756 = vld [vmem:[%s755] sm:%s3]
    %s757 = scalar_lea.vmem [#allocation0], 1376
    %758 = vst [vmem:[%s757] sm:%s3] %v756
    %s759 = smul.addr 2, 171
    %s760 = scalar_lea.vmem %s0, %s759
    %v761 = vld [vmem:[%s760] sm:%s3]
    %s762 = scalar_lea.vmem [#allocation0], 1368
    %763 = vst [vmem:[%s762] sm:%s3] %v761
    %s764 = smul.addr 2, 170
    %s765 = scalar_lea.vmem %s0, %s764
    %v766 = vld [vmem:[%s765] sm:%s3]
    %s767 = scalar_lea.vmem [#allocation0], 1360
    %768 = vst [vmem:[%s767] sm:%s3] %v766
    %s769 = smul.addr 2, 169
    %s770 = scalar_lea.vmem %s0, %s769
    %v771 = vld [vmem:[%s770] sm:%s3]
    %s772 = scalar_lea.vmem [#allocation0], 1352
    %773 = vst [vmem:[%s772] sm:%s3] %v771
    %s774 = smul.addr 2, 168
    %s775 = scalar_lea.vmem %s0, %s774
    %v776 = vld [vmem:[%s775] sm:%s3]
    %s777 = scalar_lea.vmem [#allocation0], 1344
    %778 = vst [vmem:[%s777] sm:%s3] %v776
    %s779 = smul.addr 2, 167
    %s780 = scalar_lea.vmem %s0, %s779
    %v781 = vld [vmem:[%s780] sm:%s3]
    %s782 = scalar_lea.vmem [#allocation0], 1336
    %783 = vst [vmem:[%s782] sm:%s3] %v781
    %s784 = smul.addr 2, 166
    %s785 = scalar_lea.vmem %s0, %s784
    %v786 = vld [vmem:[%s785] sm:%s3]
    %s787 = scalar_lea.vmem [#allocation0], 1328
    %788 = vst [vmem:[%s787] sm:%s3] %v786
    %s789 = smul.addr 2, 165
    %s790 = scalar_lea.vmem %s0, %s789
    %v791 = vld [vmem:[%s790] sm:%s3]
    %s792 = scalar_lea.vmem [#allocation0], 1320
    %793 = vst [vmem:[%s792] sm:%s3] %v791
    %s794 = smul.addr 2, 164
    %s795 = scalar_lea.vmem %s0, %s794
    %v796 = vld [vmem:[%s795] sm:%s3]
    %s797 = scalar_lea.vmem [#allocation0], 1312
    %798 = vst [vmem:[%s797] sm:%s3] %v796
    %s799 = smul.addr 2, 163
    %s800 = scalar_lea.vmem %s0, %s799
    %v801 = vld [vmem:[%s800] sm:%s3]
    %s802 = scalar_lea.vmem [#allocation0], 1304
    %803 = vst [vmem:[%s802] sm:%s3] %v801
    %s804 = smul.addr 2, 162
    %s805 = scalar_lea.vmem %s0, %s804
    %v806 = vld [vmem:[%s805] sm:%s3]
    %s807 = scalar_lea.vmem [#allocation0], 1296
    %808 = vst [vmem:[%s807] sm:%s3] %v806
    %s809 = smul.addr 2, 161
    %s810 = scalar_lea.vmem %s0, %s809
    %v811 = vld [vmem:[%s810] sm:%s3]
    %s812 = scalar_lea.vmem [#allocation0], 1288
    %813 = vst [vmem:[%s812] sm:%s3] %v811
    %s814 = smul.addr 2, 160
    %s815 = scalar_lea.vmem %s0, %s814
    %v816 = vld [vmem:[%s815] sm:%s3]
    %s817 = scalar_lea.vmem [#allocation0], 1280
    %818 = vst [vmem:[%s817] sm:%s3] %v816
    %s819 = smul.addr 2, 159
    %s820 = scalar_lea.vmem %s0, %s819
    %v821 = vld [vmem:[%s820] sm:%s3]
    %s822 = scalar_lea.vmem [#allocation0], 1272
    %823 = vst [vmem:[%s822] sm:%s3] %v821
    %s824 = smul.addr 2, 158
    %s825 = scalar_lea.vmem %s0, %s824
    %v826 = vld [vmem:[%s825] sm:%s3]
    %s827 = scalar_lea.vmem [#allocation0], 1264
    %828 = vst [vmem:[%s827] sm:%s3] %v826
    %s829 = smul.addr 2, 157
    %s830 = scalar_lea.vmem %s0, %s829
    %v831 = vld [vmem:[%s830] sm:%s3]
    %s832 = scalar_lea.vmem [#allocation0], 1256
    %833 = vst [vmem:[%s832] sm:%s3] %v831
    %s834 = smul.addr 2, 156
    %s835 = scalar_lea.vmem %s0, %s834
    %v836 = vld [vmem:[%s835] sm:%s3]
    %s837 = scalar_lea.vmem [#allocation0], 1248
    %838 = vst [vmem:[%s837] sm:%s3] %v836
    %s839 = smul.addr 2, 155
    %s840 = scalar_lea.vmem %s0, %s839
    %v841 = vld [vmem:[%s840] sm:%s3]
    %s842 = scalar_lea.vmem [#allocation0], 1240
    %843 = vst [vmem:[%s842] sm:%s3] %v841
    %s844 = smul.addr 2, 154
    %s845 = scalar_lea.vmem %s0, %s844
    %v846 = vld [vmem:[%s845] sm:%s3]
    %s847 = scalar_lea.vmem [#allocation0], 1232
    %848 = vst [vmem:[%s847] sm:%s3] %v846
    %s849 = smul.addr 2, 153
    %s850 = scalar_lea.vmem %s0, %s849
    %v851 = vld [vmem:[%s850] sm:%s3]
    %s852 = scalar_lea.vmem [#allocation0], 1224
    %853 = vst [vmem:[%s852] sm:%s3] %v851
    %s854 = smul.addr 2, 152
    %s855 = scalar_lea.vmem %s0, %s854
    %v856 = vld [vmem:[%s855] sm:%s3]
    %s857 = scalar_lea.vmem [#allocation0], 1216
    %858 = vst [vmem:[%s857] sm:%s3] %v856
    %s859 = smul.addr 2, 151
    %s860 = scalar_lea.vmem %s0, %s859
    %v861 = vld [vmem:[%s860] sm:%s3]
    %s862 = scalar_lea.vmem [#allocation0], 1208
    %863 = vst [vmem:[%s862] sm:%s3] %v861
    %s864 = smul.addr 2, 150
    %s865 = scalar_lea.vmem %s0, %s864
    %v866 = vld [vmem:[%s865] sm:%s3]
    %s867 = scalar_lea.vmem [#allocation0], 1200
    %868 = vst [vmem:[%s867] sm:%s3] %v866
    %s869 = smul.addr 2, 149
    %s870 = scalar_lea.vmem %s0, %s869
    %v871 = vld [vmem:[%s870] sm:%s3]
    %s872 = scalar_lea.vmem [#allocation0], 1192
    %873 = vst [vmem:[%s872] sm:%s3] %v871
    %s874 = smul.addr 2, 148
    %s875 = scalar_lea.vmem %s0, %s874
    %v876 = vld [vmem:[%s875] sm:%s3]
    %s877 = scalar_lea.vmem [#allocation0], 1184
    %878 = vst [vmem:[%s877] sm:%s3] %v876
    %s879 = smul.addr 2, 147
    %s880 = scalar_lea.vmem %s0, %s879
    %v881 = vld [vmem:[%s880] sm:%s3]
    %s882 = scalar_lea.vmem [#allocation0], 1176
    %883 = vst [vmem:[%s882] sm:%s3] %v881
    %s884 = smul.addr 2, 146
    %s885 = scalar_lea.vmem %s0, %s884
    %v886 = vld [vmem:[%s885] sm:%s3]
    %s887 = scalar_lea.vmem [#allocation0], 1168
    %888 = vst [vmem:[%s887] sm:%s3] %v886
    %s889 = smul.addr 2, 145
    %s890 = scalar_lea.vmem %s0, %s889
    %v891 = vld [vmem:[%s890] sm:%s3]
    %s892 = scalar_lea.vmem [#allocation0], 1160
    %893 = vst [vmem:[%s892] sm:%s3] %v891
    %s894 = smul.addr 2, 144
    %s895 = scalar_lea.vmem %s0, %s894
    %v896 = vld [vmem:[%s895] sm:%s3]
    %s897 = scalar_lea.vmem [#allocation0], 1152
    %898 = vst [vmem:[%s897] sm:%s3] %v896
    %s899 = smul.addr 2, 143
    %s900 = scalar_lea.vmem %s0, %s899
    %v901 = vld [vmem:[%s900] sm:%s3]
    %s902 = scalar_lea.vmem [#allocation0], 1144
    %903 = vst [vmem:[%s902] sm:%s3] %v901
    %s904 = smul.addr 2, 142
    %s905 = scalar_lea.vmem %s0, %s904
    %v906 = vld [vmem:[%s905] sm:%s3]
    %s907 = scalar_lea.vmem [#allocation0], 1136
    %908 = vst [vmem:[%s907] sm:%s3] %v906
    %s909 = smul.addr 2, 141
    %s910 = scalar_lea.vmem %s0, %s909
    %v911 = vld [vmem:[%s910] sm:%s3]
    %s912 = scalar_lea.vmem [#allocation0], 1128
    %913 = vst [vmem:[%s912] sm:%s3] %v911
    %s914 = smul.addr 2, 140
    %s915 = scalar_lea.vmem %s0, %s914
    %v916 = vld [vmem:[%s915] sm:%s3]
    %s917 = scalar_lea.vmem [#allocation0], 1120
    %918 = vst [vmem:[%s917] sm:%s3] %v916
    %s919 = smul.addr 2, 139
    %s920 = scalar_lea.vmem %s0, %s919
    %v921 = vld [vmem:[%s920] sm:%s3]
    %s922 = scalar_lea.vmem [#allocation0], 1112
    %923 = vst [vmem:[%s922] sm:%s3] %v921
    %s924 = smul.addr 2, 138
    %s925 = scalar_lea.vmem %s0, %s924
    %v926 = vld [vmem:[%s925] sm:%s3]
    %s927 = scalar_lea.vmem [#allocation0], 1104
    %928 = vst [vmem:[%s927] sm:%s3] %v926
    %s929 = smul.addr 2, 137
    %s930 = scalar_lea.vmem %s0, %s929
    %v931 = vld [vmem:[%s930] sm:%s3]
    %s932 = scalar_lea.vmem [#allocation0], 1096
    %933 = vst [vmem:[%s932] sm:%s3] %v931
    %s934 = smul.addr 2, 136
    %s935 = scalar_lea.vmem %s0, %s934
    %v936 = vld [vmem:[%s935] sm:%s3]
    %s937 = scalar_lea.vmem [#allocation0], 1088
    %938 = vst [vmem:[%s937] sm:%s3] %v936
    %s939 = smul.addr 2, 135
    %s940 = scalar_lea.vmem %s0, %s939
    %v941 = vld [vmem:[%s940] sm:%s3]
    %s942 = scalar_lea.vmem [#allocation0], 1080
    %943 = vst [vmem:[%s942] sm:%s3] %v941
    %s944 = smul.addr 2, 134
    %s945 = scalar_lea.vmem %s0, %s944
    %v946 = vld [vmem:[%s945] sm:%s3]
    %s947 = scalar_lea.vmem [#allocation0], 1072
    %948 = vst [vmem:[%s947] sm:%s3] %v946
    %s949 = smul.addr 2, 133
    %s950 = scalar_lea.vmem %s0, %s949
    %v951 = vld [vmem:[%s950] sm:%s3]
    %s952 = scalar_lea.vmem [#allocation0], 1064
    %953 = vst [vmem:[%s952] sm:%s3] %v951
    %s954 = smul.addr 2, 132
    %s955 = scalar_lea.vmem %s0, %s954
    %v956 = vld [vmem:[%s955] sm:%s3]
    %s957 = scalar_lea.vmem [#allocation0], 1056
    %958 = vst [vmem:[%s957] sm:%s3] %v956
    %s959 = smul.addr 2, 131
    %s960 = scalar_lea.vmem %s0, %s959
    %v961 = vld [vmem:[%s960] sm:%s3]
    %s962 = scalar_lea.vmem [#allocation0], 1048
    %963 = vst [vmem:[%s962] sm:%s3] %v961
    %s964 = smul.addr 2, 130
    %s965 = scalar_lea.vmem %s0, %s964
    %v966 = vld [vmem:[%s965] sm:%s3]
    %s967 = scalar_lea.vmem [#allocation0], 1040
    %968 = vst [vmem:[%s967] sm:%s3] %v966
    %s969 = smul.addr 2, 129
    %s970 = scalar_lea.vmem %s0, %s969
    %v971 = vld [vmem:[%s970] sm:%s3]
    %s972 = scalar_lea.vmem [#allocation0], 1032
    %973 = vst [vmem:[%s972] sm:%s3] %v971
    %s974 = smul.addr 2, 128
    %s975 = scalar_lea.vmem %s0, %s974
    %v976 = vld [vmem:[%s975] sm:%s3]
    %s977 = scalar_lea.vmem [#allocation0], 1024
    %978 = vst [vmem:[%s977] sm:%s3] %v976
    %s979 = smul.addr 2, 127
    %s980 = scalar_lea.vmem %s0, %s979
    %v981 = vld [vmem:[%s980] sm:%s3]
    %s982 = scalar_lea.vmem [#allocation0], 1016
    %983 = vst [vmem:[%s982] sm:%s3] %v981
    %s984 = smul.addr 2, 126
    %s985 = scalar_lea.vmem %s0, %s984
    %v986 = vld [vmem:[%s985] sm:%s3]
    %s987 = scalar_lea.vmem [#allocation0], 1008
    %988 = vst [vmem:[%s987] sm:%s3] %v986
    %s989 = smul.addr 2, 125
    %s990 = scalar_lea.vmem %s0, %s989
    %v991 = vld [vmem:[%s990] sm:%s3]
    %s992 = scalar_lea.vmem [#allocation0], 1000
    %993 = vst [vmem:[%s992] sm:%s3] %v991
    %s994 = smul.addr 2, 124
    %s995 = scalar_lea.vmem %s0, %s994
    %v996 = vld [vmem:[%s995] sm:%s3]
    %s997 = scalar_lea.vmem [#allocation0], 992
    %998 = vst [vmem:[%s997] sm:%s3] %v996
    %s999 = smul.addr 2, 123
    %s1000 = scalar_lea.vmem %s0, %s999
    %v1001 = vld [vmem:[%s1000] sm:%s3]
    %s1002 = scalar_lea.vmem [#allocation0], 984
    %1003 = vst [vmem:[%s1002] sm:%s3] %v1001
    %s1004 = smul.addr 2, 122
    %s1005 = scalar_lea.vmem %s0, %s1004
    %v1006 = vld [vmem:[%s1005] sm:%s3]
    %s1007 = scalar_lea.vmem [#allocation0], 976
    %1008 = vst [vmem:[%s1007] sm:%s3] %v1006
    %s1009 = smul.addr 2, 121
    %s1010 = scalar_lea.vmem %s0, %s1009
    %v1011 = vld [vmem:[%s1010] sm:%s3]
    %s1012 = scalar_lea.vmem [#allocation0], 968
    %1013 = vst [vmem:[%s1012] sm:%s3] %v1011
    %s1014 = smul.addr 2, 120
    %s1015 = scalar_lea.vmem %s0, %s1014
    %v1016 = vld [vmem:[%s1015] sm:%s3]
    %s1017 = scalar_lea.vmem [#allocation0], 960
    %1018 = vst [vmem:[%s1017] sm:%s3] %v1016
    %s1019 = smul.addr 2, 119
    %s1020 = scalar_lea.vmem %s0, %s1019
    %v1021 = vld [vmem:[%s1020] sm:%s3]
    %s1022 = scalar_lea.vmem [#allocation0], 952
    %1023 = vst [vmem:[%s1022] sm:%s3] %v1021
    %s1024 = smul.addr 2, 118
    %s1025 = scalar_lea.vmem %s0, %s1024
    %v1026 = vld [vmem:[%s1025] sm:%s3]
    %s1027 = scalar_lea.vmem [#allocation0], 944
    %1028 = vst [vmem:[%s1027] sm:%s3] %v1026
    %s1029 = smul.addr 2, 117
    %s1030 = scalar_lea.vmem %s0, %s1029
    %v1031 = vld [vmem:[%s1030] sm:%s3]
    %s1032 = scalar_lea.vmem [#allocation0], 936
    %1033 = vst [vmem:[%s1032] sm:%s3] %v1031
    %s1034 = smul.addr 2, 116
    %s1035 = scalar_lea.vmem %s0, %s1034
    %v1036 = vld [vmem:[%s1035] sm:%s3]
    %s1037 = scalar_lea.vmem [#allocation0], 928
    %1038 = vst [vmem:[%s1037] sm:%s3] %v1036
    %s1039 = smul.addr 2, 115
    %s1040 = scalar_lea.vmem %s0, %s1039
    %v1041 = vld [vmem:[%s1040] sm:%s3]
    %s1042 = scalar_lea.vmem [#allocation0], 920
    %1043 = vst [vmem:[%s1042] sm:%s3] %v1041
    %s1044 = smul.addr 2, 114
    %s1045 = scalar_lea.vmem %s0, %s1044
    %v1046 = vld [vmem:[%s1045] sm:%s3]
    %s1047 = scalar_lea.vmem [#allocation0], 912
    %1048 = vst [vmem:[%s1047] sm:%s3] %v1046
    %s1049 = smul.addr 2, 113
    %s1050 = scalar_lea.vmem %s0, %s1049
    %v1051 = vld [vmem:[%s1050] sm:%s3]
    %s1052 = scalar_lea.vmem [#allocation0], 904
    %1053 = vst [vmem:[%s1052] sm:%s3] %v1051
    %s1054 = smul.addr 2, 112
    %s1055 = scalar_lea.vmem %s0, %s1054
    %v1056 = vld [vmem:[%s1055] sm:%s3]
    %s1057 = scalar_lea.vmem [#allocation0], 896
    %1058 = vst [vmem:[%s1057] sm:%s3] %v1056
    %s1059 = smul.addr 2, 111
    %s1060 = scalar_lea.vmem %s0, %s1059
    %v1061 = vld [vmem:[%s1060] sm:%s3]
    %s1062 = scalar_lea.vmem [#allocation0], 888
    %1063 = vst [vmem:[%s1062] sm:%s3] %v1061
    %s1064 = smul.addr 2, 110
    %s1065 = scalar_lea.vmem %s0, %s1064
    %v1066 = vld [vmem:[%s1065] sm:%s3]
    %s1067 = scalar_lea.vmem [#allocation0], 880
    %1068 = vst [vmem:[%s1067] sm:%s3] %v1066
    %s1069 = smul.addr 2, 109
    %s1070 = scalar_lea.vmem %s0, %s1069
    %v1071 = vld [vmem:[%s1070] sm:%s3]
    %s1072 = scalar_lea.vmem [#allocation0], 872
    %1073 = vst [vmem:[%s1072] sm:%s3] %v1071
    %s1074 = smul.addr 2, 108
    %s1075 = scalar_lea.vmem %s0, %s1074
    %v1076 = vld [vmem:[%s1075] sm:%s3]
    %s1077 = scalar_lea.vmem [#allocation0], 864
    %1078 = vst [vmem:[%s1077] sm:%s3] %v1076
    %s1079 = smul.addr 2, 107
    %s1080 = scalar_lea.vmem %s0, %s1079
    %v1081 = vld [vmem:[%s1080] sm:%s3]
    %s1082 = scalar_lea.vmem [#allocation0], 856
    %1083 = vst [vmem:[%s1082] sm:%s3] %v1081
    %s1084 = smul.addr 2, 106
    %s1085 = scalar_lea.vmem %s0, %s1084
    %v1086 = vld [vmem:[%s1085] sm:%s3]
    %s1087 = scalar_lea.vmem [#allocation0], 848
    %1088 = vst [vmem:[%s1087] sm:%s3] %v1086
    %s1089 = smul.addr 2, 105
    %s1090 = scalar_lea.vmem %s0, %s1089
    %v1091 = vld [vmem:[%s1090] sm:%s3]
    %s1092 = scalar_lea.vmem [#allocation0], 840
    %1093 = vst [vmem:[%s1092] sm:%s3] %v1091
    %s1094 = smul.addr 2, 104
    %s1095 = scalar_lea.vmem %s0, %s1094
    %v1096 = vld [vmem:[%s1095] sm:%s3]
    %s1097 = scalar_lea.vmem [#allocation0], 832
    %1098 = vst [vmem:[%s1097] sm:%s3] %v1096
    %s1099 = smul.addr 2, 103
    %s1100 = scalar_lea.vmem %s0, %s1099
    %v1101 = vld [vmem:[%s1100] sm:%s3]
    %s1102 = scalar_lea.vmem [#allocation0], 824
    %1103 = vst [vmem:[%s1102] sm:%s3] %v1101
    %s1104 = smul.addr 2, 102
    %s1105 = scalar_lea.vmem %s0, %s1104
    %v1106 = vld [vmem:[%s1105] sm:%s3]
    %s1107 = scalar_lea.vmem [#allocation0], 816
    %1108 = vst [vmem:[%s1107] sm:%s3] %v1106
    %s1109 = smul.addr 2, 101
    %s1110 = scalar_lea.vmem %s0, %s1109
    %v1111 = vld [vmem:[%s1110] sm:%s3]
    %s1112 = scalar_lea.vmem [#allocation0], 808
    %1113 = vst [vmem:[%s1112] sm:%s3] %v1111
    %s1114 = smul.addr 2, 100
    %s1115 = scalar_lea.vmem %s0, %s1114
    %v1116 = vld [vmem:[%s1115] sm:%s3]
    %s1117 = scalar_lea.vmem [#allocation0], 800
    %1118 = vst [vmem:[%s1117] sm:%s3] %v1116
    %s1119 = smul.addr 2, 99
    %s1120 = scalar_lea.vmem %s0, %s1119
    %v1121 = vld [vmem:[%s1120] sm:%s3]
    %s1122 = scalar_lea.vmem [#allocation0], 792
    %1123 = vst [vmem:[%s1122] sm:%s3] %v1121
    %s1124 = smul.addr 2, 98
    %s1125 = scalar_lea.vmem %s0, %s1124
    %v1126 = vld [vmem:[%s1125] sm:%s3]
    %s1127 = scalar_lea.vmem [#allocation0], 784
    %1128 = vst [vmem:[%s1127] sm:%s3] %v1126
    %s1129 = smul.addr 2, 97
    %s1130 = scalar_lea.vmem %s0, %s1129
    %v1131 = vld [vmem:[%s1130] sm:%s3]
    %s1132 = scalar_lea.vmem [#allocation0], 776
    %1133 = vst [vmem:[%s1132] sm:%s3] %v1131
    %s1134 = smul.addr 2, 96
    %s1135 = scalar_lea.vmem %s0, %s1134
    %v1136 = vld [vmem:[%s1135] sm:%s3]
    %s1137 = scalar_lea.vmem [#allocation0], 768
    %1138 = vst [vmem:[%s1137] sm:%s3] %v1136
    %s1139 = smul.addr 2, 95
    %s1140 = scalar_lea.vmem %s0, %s1139
    %v1141 = vld [vmem:[%s1140] sm:%s3]
    %s1142 = scalar_lea.vmem [#allocation0], 760
    %1143 = vst [vmem:[%s1142] sm:%s3] %v1141
    %s1144 = smul.addr 2, 94
    %s1145 = scalar_lea.vmem %s0, %s1144
    %v1146 = vld [vmem:[%s1145] sm:%s3]
    %s1147 = scalar_lea.vmem [#allocation0], 752
    %1148 = vst [vmem:[%s1147] sm:%s3] %v1146
    %s1149 = smul.addr 2, 93
    %s1150 = scalar_lea.vmem %s0, %s1149
    %v1151 = vld [vmem:[%s1150] sm:%s3]
    %s1152 = scalar_lea.vmem [#allocation0], 744
    %1153 = vst [vmem:[%s1152] sm:%s3] %v1151
    %s1154 = smul.addr 2, 92
    %s1155 = scalar_lea.vmem %s0, %s1154
    %v1156 = vld [vmem:[%s1155] sm:%s3]
    %s1157 = scalar_lea.vmem [#allocation0], 736
    %1158 = vst [vmem:[%s1157] sm:%s3] %v1156
    %s1159 = smul.addr 2, 91
    %s1160 = scalar_lea.vmem %s0, %s1159
    %v1161 = vld [vmem:[%s1160] sm:%s3]
    %s1162 = scalar_lea.vmem [#allocation0], 728
    %1163 = vst [vmem:[%s1162] sm:%s3] %v1161
    %s1164 = smul.addr 2, 90
    %s1165 = scalar_lea.vmem %s0, %s1164
    %v1166 = vld [vmem:[%s1165] sm:%s3]
    %s1167 = scalar_lea.vmem [#allocation0], 720
    %1168 = vst [vmem:[%s1167] sm:%s3] %v1166
    %s1169 = smul.addr 2, 89
    %s1170 = scalar_lea.vmem %s0, %s1169
    %v1171 = vld [vmem:[%s1170] sm:%s3]
    %s1172 = scalar_lea.vmem [#allocation0], 712
    %1173 = vst [vmem:[%s1172] sm:%s3] %v1171
    %s1174 = smul.addr 2, 88
    %s1175 = scalar_lea.vmem %s0, %s1174
    %v1176 = vld [vmem:[%s1175] sm:%s3]
    %s1177 = scalar_lea.vmem [#allocation0], 704
    %1178 = vst [vmem:[%s1177] sm:%s3] %v1176
    %s1179 = smul.addr 2, 87
    %s1180 = scalar_lea.vmem %s0, %s1179
    %v1181 = vld [vmem:[%s1180] sm:%s3]
    %s1182 = scalar_lea.vmem [#allocation0], 696
    %1183 = vst [vmem:[%s1182] sm:%s3] %v1181
    %s1184 = smul.addr 2, 86
    %s1185 = scalar_lea.vmem %s0, %s1184
    %v1186 = vld [vmem:[%s1185] sm:%s3]
    %s1187 = scalar_lea.vmem [#allocation0], 688
    %1188 = vst [vmem:[%s1187] sm:%s3] %v1186
    %s1189 = smul.addr 2, 85
    %s1190 = scalar_lea.vmem %s0, %s1189
    %v1191 = vld [vmem:[%s1190] sm:%s3]
    %s1192 = scalar_lea.vmem [#allocation0], 680
    %1193 = vst [vmem:[%s1192] sm:%s3] %v1191
    %s1194 = smul.addr 2, 84
    %s1195 = scalar_lea.vmem %s0, %s1194
    %v1196 = vld [vmem:[%s1195] sm:%s3]
    %s1197 = scalar_lea.vmem [#allocation0], 672
    %1198 = vst [vmem:[%s1197] sm:%s3] %v1196
    %s1199 = smul.addr 2, 83
    %s1200 = scalar_lea.vmem %s0, %s1199
    %v1201 = vld [vmem:[%s1200] sm:%s3]
    %s1202 = scalar_lea.vmem [#allocation0], 664
    %1203 = vst [vmem:[%s1202] sm:%s3] %v1201
    %s1204 = smul.addr 2, 82
    %s1205 = scalar_lea.vmem %s0, %s1204
    %v1206 = vld [vmem:[%s1205] sm:%s3]
    %s1207 = scalar_lea.vmem [#allocation0], 656
    %1208 = vst [vmem:[%s1207] sm:%s3] %v1206
    %s1209 = smul.addr 2, 81
    %s1210 = scalar_lea.vmem %s0, %s1209
    %v1211 = vld [vmem:[%s1210] sm:%s3]
    %s1212 = scalar_lea.vmem [#allocation0], 648
    %1213 = vst [vmem:[%s1212] sm:%s3] %v1211
    %s1214 = smul.addr 2, 80
    %s1215 = scalar_lea.vmem %s0, %s1214
    %v1216 = vld [vmem:[%s1215] sm:%s3]
    %s1217 = scalar_lea.vmem [#allocation0], 640
    %1218 = vst [vmem:[%s1217] sm:%s3] %v1216
    %s1219 = smul.addr 2, 79
    %s1220 = scalar_lea.vmem %s0, %s1219
    %v1221 = vld [vmem:[%s1220] sm:%s3]
    %s1222 = scalar_lea.vmem [#allocation0], 632
    %1223 = vst [vmem:[%s1222] sm:%s3] %v1221
    %s1224 = smul.addr 2, 78
    %s1225 = scalar_lea.vmem %s0, %s1224
    %v1226 = vld [vmem:[%s1225] sm:%s3]
    %s1227 = scalar_lea.vmem [#allocation0], 624
    %1228 = vst [vmem:[%s1227] sm:%s3] %v1226
    %s1229 = smul.addr 2, 77
    %s1230 = scalar_lea.vmem %s0, %s1229
    %v1231 = vld [vmem:[%s1230] sm:%s3]
    %s1232 = scalar_lea.vmem [#allocation0], 616
    %1233 = vst [vmem:[%s1232] sm:%s3] %v1231
    %s1234 = smul.addr 2, 76
    %s1235 = scalar_lea.vmem %s0, %s1234
    %v1236 = vld [vmem:[%s1235] sm:%s3]
    %s1237 = scalar_lea.vmem [#allocation0], 608
    %1238 = vst [vmem:[%s1237] sm:%s3] %v1236
    %s1239 = smul.addr 2, 75
    %s1240 = scalar_lea.vmem %s0, %s1239
    %v1241 = vld [vmem:[%s1240] sm:%s3]
    %s1242 = scalar_lea.vmem [#allocation0], 600
    %1243 = vst [vmem:[%s1242] sm:%s3] %v1241
    %s1244 = smul.addr 2, 74
    %s1245 = scalar_lea.vmem %s0, %s1244
    %v1246 = vld [vmem:[%s1245] sm:%s3]
    %s1247 = scalar_lea.vmem [#allocation0], 592
    %1248 = vst [vmem:[%s1247] sm:%s3] %v1246
    %s1249 = smul.addr 2, 73
    %s1250 = scalar_lea.vmem %s0, %s1249
    %v1251 = vld [vmem:[%s1250] sm:%s3]
    %s1252 = scalar_lea.vmem [#allocation0], 584
    %1253 = vst [vmem:[%s1252] sm:%s3] %v1251
    %s1254 = smul.addr 2, 72
    %s1255 = scalar_lea.vmem %s0, %s1254
    %v1256 = vld [vmem:[%s1255] sm:%s3]
    %s1257 = scalar_lea.vmem [#allocation0], 576
    %1258 = vst [vmem:[%s1257] sm:%s3] %v1256
    %s1259 = smul.addr 2, 71
    %s1260 = scalar_lea.vmem %s0, %s1259
    %v1261 = vld [vmem:[%s1260] sm:%s3]
    %s1262 = scalar_lea.vmem [#allocation0], 568
    %1263 = vst [vmem:[%s1262] sm:%s3] %v1261
    %s1264 = smul.addr 2, 70
    %s1265 = scalar_lea.vmem %s0, %s1264
    %v1266 = vld [vmem:[%s1265] sm:%s3]
    %s1267 = scalar_lea.vmem [#allocation0], 560
    %1268 = vst [vmem:[%s1267] sm:%s3] %v1266
    %s1269 = smul.addr 2, 69
    %s1270 = scalar_lea.vmem %s0, %s1269
    %v1271 = vld [vmem:[%s1270] sm:%s3]
    %s1272 = scalar_lea.vmem [#allocation0], 552
    %1273 = vst [vmem:[%s1272] sm:%s3] %v1271
    %s1274 = smul.addr 2, 68
    %s1275 = scalar_lea.vmem %s0, %s1274
    %v1276 = vld [vmem:[%s1275] sm:%s3]
    %s1277 = scalar_lea.vmem [#allocation0], 544
    %1278 = vst [vmem:[%s1277] sm:%s3] %v1276
    %s1279 = smul.addr 2, 67
    %s1280 = scalar_lea.vmem %s0, %s1279
    %v1281 = vld [vmem:[%s1280] sm:%s3]
    %s1282 = scalar_lea.vmem [#allocation0], 536
    %1283 = vst [vmem:[%s1282] sm:%s3] %v1281
    %s1284 = smul.addr 2, 66
    %s1285 = scalar_lea.vmem %s0, %s1284
    %v1286 = vld [vmem:[%s1285] sm:%s3]
    %s1287 = scalar_lea.vmem [#allocation0], 528
    %1288 = vst [vmem:[%s1287] sm:%s3] %v1286
    %s1289 = smul.addr 2, 65
    %s1290 = scalar_lea.vmem %s0, %s1289
    %v1291 = vld [vmem:[%s1290] sm:%s3]
    %s1292 = scalar_lea.vmem [#allocation0], 520
    %1293 = vst [vmem:[%s1292] sm:%s3] %v1291
    %s1294 = smul.addr 2, 64
    %s1295 = scalar_lea.vmem %s0, %s1294
    %v1296 = vld [vmem:[%s1295] sm:%s3]
    %s1297 = scalar_lea.vmem [#allocation0], 512
    %1298 = vst [vmem:[%s1297] sm:%s3] %v1296
    %s1299 = smul.addr 2, 63
    %s1300 = scalar_lea.vmem %s0, %s1299
    %v1301 = vld [vmem:[%s1300] sm:%s3]
    %s1302 = scalar_lea.vmem [#allocation0], 504
    %1303 = vst [vmem:[%s1302] sm:%s3] %v1301
    %s1304 = smul.addr 2, 62
    %s1305 = scalar_lea.vmem %s0, %s1304
    %v1306 = vld [vmem:[%s1305] sm:%s3]
    %s1307 = scalar_lea.vmem [#allocation0], 496
    %1308 = vst [vmem:[%s1307] sm:%s3] %v1306
    %s1309 = smul.addr 2, 61
    %s1310 = scalar_lea.vmem %s0, %s1309
    %v1311 = vld [vmem:[%s1310] sm:%s3]
    %s1312 = scalar_lea.vmem [#allocation0], 488
    %1313 = vst [vmem:[%s1312] sm:%s3] %v1311
    %s1314 = smul.addr 2, 60
    %s1315 = scalar_lea.vmem %s0, %s1314
    %v1316 = vld [vmem:[%s1315] sm:%s3]
    %s1317 = scalar_lea.vmem [#allocation0], 480
    %1318 = vst [vmem:[%s1317] sm:%s3] %v1316
    %s1319 = smul.addr 2, 59
    %s1320 = scalar_lea.vmem %s0, %s1319
    %v1321 = vld [vmem:[%s1320] sm:%s3]
    %s1322 = scalar_lea.vmem [#allocation0], 472
    %1323 = vst [vmem:[%s1322] sm:%s3] %v1321
    %s1324 = smul.addr 2, 58
    %s1325 = scalar_lea.vmem %s0, %s1324
    %v1326 = vld [vmem:[%s1325] sm:%s3]
    %s1327 = scalar_lea.vmem [#allocation0], 464
    %1328 = vst [vmem:[%s1327] sm:%s3] %v1326
    %s1329 = smul.addr 2, 57
    %s1330 = scalar_lea.vmem %s0, %s1329
    %v1331 = vld [vmem:[%s1330] sm:%s3]
    %s1332 = scalar_lea.vmem [#allocation0], 456
    %1333 = vst [vmem:[%s1332] sm:%s3] %v1331
    %s1334 = smul.addr 2, 56
    %s1335 = scalar_lea.vmem %s0, %s1334
    %v1336 = vld [vmem:[%s1335] sm:%s3]
    %s1337 = scalar_lea.vmem [#allocation0], 448
    %1338 = vst [vmem:[%s1337] sm:%s3] %v1336
    %s1339 = smul.addr 2, 55
    %s1340 = scalar_lea.vmem %s0, %s1339
    %v1341 = vld [vmem:[%s1340] sm:%s3]
    %s1342 = scalar_lea.vmem [#allocation0], 440
    %1343 = vst [vmem:[%s1342] sm:%s3] %v1341
    %s1344 = smul.addr 2, 54
    %s1345 = scalar_lea.vmem %s0, %s1344
    %v1346 = vld [vmem:[%s1345] sm:%s3]
    %s1347 = scalar_lea.vmem [#allocation0], 432
    %1348 = vst [vmem:[%s1347] sm:%s3] %v1346
    %s1349 = smul.addr 2, 53
    %s1350 = scalar_lea.vmem %s0, %s1349
    %v1351 = vld [vmem:[%s1350] sm:%s3]
    %s1352 = scalar_lea.vmem [#allocation0], 424
    %1353 = vst [vmem:[%s1352] sm:%s3] %v1351
    %s1354 = smul.addr 2, 52
    %s1355 = scalar_lea.vmem %s0, %s1354
    %v1356 = vld [vmem:[%s1355] sm:%s3]
    %s1357 = scalar_lea.vmem [#allocation0], 416
    %1358 = vst [vmem:[%s1357] sm:%s3] %v1356
    %s1359 = smul.addr 2, 51
    %s1360 = scalar_lea.vmem %s0, %s1359
    %v1361 = vld [vmem:[%s1360] sm:%s3]
    %s1362 = scalar_lea.vmem [#allocation0], 408
    %1363 = vst [vmem:[%s1362] sm:%s3] %v1361
    %s1364 = smul.addr 2, 50
    %s1365 = scalar_lea.vmem %s0, %s1364
    %v1366 = vld [vmem:[%s1365] sm:%s3]
    %s1367 = scalar_lea.vmem [#allocation0], 400
    %1368 = vst [vmem:[%s1367] sm:%s3] %v1366
    %s1369 = smul.addr 2, 49
    %s1370 = scalar_lea.vmem %s0, %s1369
    %v1371 = vld [vmem:[%s1370] sm:%s3]
    %s1372 = scalar_lea.vmem [#allocation0], 392
    %1373 = vst [vmem:[%s1372] sm:%s3] %v1371
    %s1374 = smul.addr 2, 48
    %s1375 = scalar_lea.vmem %s0, %s1374
    %v1376 = vld [vmem:[%s1375] sm:%s3]
    %s1377 = scalar_lea.vmem [#allocation0], 384
    %1378 = vst [vmem:[%s1377] sm:%s3] %v1376
    %s1379 = smul.addr 2, 47
    %s1380 = scalar_lea.vmem %s0, %s1379
    %v1381 = vld [vmem:[%s1380] sm:%s3]
    %s1382 = scalar_lea.vmem [#allocation0], 376
    %1383 = vst [vmem:[%s1382] sm:%s3] %v1381
    %s1384 = smul.addr 2, 46
    %s1385 = scalar_lea.vmem %s0, %s1384
    %v1386 = vld [vmem:[%s1385] sm:%s3]
    %s1387 = scalar_lea.vmem [#allocation0], 368
    %1388 = vst [vmem:[%s1387] sm:%s3] %v1386
    %s1389 = smul.addr 2, 45
    %s1390 = scalar_lea.vmem %s0, %s1389
    %v1391 = vld [vmem:[%s1390] sm:%s3]
    %s1392 = scalar_lea.vmem [#allocation0], 360
    %1393 = vst [vmem:[%s1392] sm:%s3] %v1391
    %s1394 = smul.addr 2, 44
    %s1395 = scalar_lea.vmem %s0, %s1394
    %v1396 = vld [vmem:[%s1395] sm:%s3]
    %s1397 = scalar_lea.vmem [#allocation0], 352
    %1398 = vst [vmem:[%s1397] sm:%s3] %v1396
    %s1399 = smul.addr 2, 43
    %s1400 = scalar_lea.vmem %s0, %s1399
    %v1401 = vld [vmem:[%s1400] sm:%s3]
    %s1402 = scalar_lea.vmem [#allocation0], 344
    %1403 = vst [vmem:[%s1402] sm:%s3] %v1401
    %s1404 = smul.addr 2, 42
    %s1405 = scalar_lea.vmem %s0, %s1404
    %v1406 = vld [vmem:[%s1405] sm:%s3]
    %s1407 = scalar_lea.vmem [#allocation0], 336
    %1408 = vst [vmem:[%s1407] sm:%s3] %v1406
    %s1409 = smul.addr 2, 41
    %s1410 = scalar_lea.vmem %s0, %s1409
    %v1411 = vld [vmem:[%s1410] sm:%s3]
    %s1412 = scalar_lea.vmem [#allocation0], 328
    %1413 = vst [vmem:[%s1412] sm:%s3] %v1411
    %s1414 = smul.addr 2, 40
    %s1415 = scalar_lea.vmem %s0, %s1414
    %v1416 = vld [vmem:[%s1415] sm:%s3]
    %s1417 = scalar_lea.vmem [#allocation0], 320
    %1418 = vst [vmem:[%s1417] sm:%s3] %v1416
    %s1419 = smul.addr 2, 39
    %s1420 = scalar_lea.vmem %s0, %s1419
    %v1421 = vld [vmem:[%s1420] sm:%s3]
    %s1422 = scalar_lea.vmem [#allocation0], 312
    %1423 = vst [vmem:[%s1422] sm:%s3] %v1421
    %s1424 = smul.addr 2, 38
    %s1425 = scalar_lea.vmem %s0, %s1424
    %v1426 = vld [vmem:[%s1425] sm:%s3]
    %s1427 = scalar_lea.vmem [#allocation0], 304
    %1428 = vst [vmem:[%s1427] sm:%s3] %v1426
    %s1429 = smul.addr 2, 37
    %s1430 = scalar_lea.vmem %s0, %s1429
    %v1431 = vld [vmem:[%s1430] sm:%s3]
    %s1432 = scalar_lea.vmem [#allocation0], 296
    %1433 = vst [vmem:[%s1432] sm:%s3] %v1431
    %s1434 = smul.addr 2, 36
    %s1435 = scalar_lea.vmem %s0, %s1434
    %v1436 = vld [vmem:[%s1435] sm:%s3]
    %s1437 = scalar_lea.vmem [#allocation0], 288
    %1438 = vst [vmem:[%s1437] sm:%s3] %v1436
    %s1439 = smul.addr 2, 35
    %s1440 = scalar_lea.vmem %s0, %s1439
    %v1441 = vld [vmem:[%s1440] sm:%s3]
    %s1442 = scalar_lea.vmem [#allocation0], 280
    %1443 = vst [vmem:[%s1442] sm:%s3] %v1441
    %s1444 = smul.addr 2, 34
    %s1445 = scalar_lea.vmem %s0, %s1444
    %v1446 = vld [vmem:[%s1445] sm:%s3]
    %s1447 = scalar_lea.vmem [#allocation0], 272
    %1448 = vst [vmem:[%s1447] sm:%s3] %v1446
    %s1449 = smul.addr 2, 33
    %s1450 = scalar_lea.vmem %s0, %s1449
    %v1451 = vld [vmem:[%s1450] sm:%s3]
    %s1452 = scalar_lea.vmem [#allocation0], 264
    %1453 = vst [vmem:[%s1452] sm:%s3] %v1451
    %s1454 = smul.addr 2, 32
    %s1455 = scalar_lea.vmem %s0, %s1454
    %v1456 = vld [vmem:[%s1455] sm:%s3]
    %s1457 = scalar_lea.vmem [#allocation0], 256
    %1458 = vst [vmem:[%s1457] sm:%s3] %v1456
    %s1459 = smul.addr 2, 31
    %s1460 = scalar_lea.vmem %s0, %s1459
    %v1461 = vld [vmem:[%s1460] sm:%s3]
    %s1462 = scalar_lea.vmem [#allocation0], 248
    %1463 = vst [vmem:[%s1462] sm:%s3] %v1461
    %s1464 = smul.addr 2, 30
    %s1465 = scalar_lea.vmem %s0, %s1464
    %v1466 = vld [vmem:[%s1465] sm:%s3]
    %s1467 = scalar_lea.vmem [#allocation0], 240
    %1468 = vst [vmem:[%s1467] sm:%s3] %v1466
    %s1469 = smul.addr 2, 29
    %s1470 = scalar_lea.vmem %s0, %s1469
    %v1471 = vld [vmem:[%s1470] sm:%s3]
    %s1472 = scalar_lea.vmem [#allocation0], 232
    %1473 = vst [vmem:[%s1472] sm:%s3] %v1471
    %s1474 = smul.addr 2, 28
    %s1475 = scalar_lea.vmem %s0, %s1474
    %v1476 = vld [vmem:[%s1475] sm:%s3]
    %s1477 = scalar_lea.vmem [#allocation0], 224
    %1478 = vst [vmem:[%s1477] sm:%s3] %v1476
    %s1479 = smul.addr 2, 27
    %s1480 = scalar_lea.vmem %s0, %s1479
    %v1481 = vld [vmem:[%s1480] sm:%s3]
    %s1482 = scalar_lea.vmem [#allocation0], 216
    %1483 = vst [vmem:[%s1482] sm:%s3] %v1481
    %s1484 = smul.addr 2, 26
    %s1485 = scalar_lea.vmem %s0, %s1484
    %v1486 = vld [vmem:[%s1485] sm:%s3]
    %s1487 = scalar_lea.vmem [#allocation0], 208
    %1488 = vst [vmem:[%s1487] sm:%s3] %v1486
    %s1489 = smul.addr 2, 25
    %s1490 = scalar_lea.vmem %s0, %s1489
    %v1491 = vld [vmem:[%s1490] sm:%s3]
    %s1492 = scalar_lea.vmem [#allocation0], 200
    %1493 = vst [vmem:[%s1492] sm:%s3] %v1491
    %s1494 = smul.addr 2, 24
    %s1495 = scalar_lea.vmem %s0, %s1494
    %v1496 = vld [vmem:[%s1495] sm:%s3]
    %s1497 = scalar_lea.vmem [#allocation0], 192
    %1498 = vst [vmem:[%s1497] sm:%s3] %v1496
    %s1499 = smul.addr 2, 23
    %s1500 = scalar_lea.vmem %s0, %s1499
    %v1501 = vld [vmem:[%s1500] sm:%s3]
    %s1502 = scalar_lea.vmem [#allocation0], 184
    %1503 = vst [vmem:[%s1502] sm:%s3] %v1501
    %s1504 = smul.addr 2, 22
    %s1505 = scalar_lea.vmem %s0, %s1504
    %v1506 = vld [vmem:[%s1505] sm:%s3]
    %s1507 = scalar_lea.vmem [#allocation0], 176
    %1508 = vst [vmem:[%s1507] sm:%s3] %v1506
    %s1509 = smul.addr 2, 21
    %s1510 = scalar_lea.vmem %s0, %s1509
    %v1511 = vld [vmem:[%s1510] sm:%s3]
    %s1512 = scalar_lea.vmem [#allocation0], 168
    %1513 = vst [vmem:[%s1512] sm:%s3] %v1511
    %s1514 = smul.addr 2, 20
    %s1515 = scalar_lea.vmem %s0, %s1514
    %v1516 = vld [vmem:[%s1515] sm:%s3]
    %s1517 = scalar_lea.vmem [#allocation0], 160
    %1518 = vst [vmem:[%s1517] sm:%s3] %v1516
    %s1519 = smul.addr 2, 19
    %s1520 = scalar_lea.vmem %s0, %s1519
    %v1521 = vld [vmem:[%s1520] sm:%s3]
    %s1522 = scalar_lea.vmem [#allocation0], 152
    %1523 = vst [vmem:[%s1522] sm:%s3] %v1521
    %s1524 = smul.addr 2, 18
    %s1525 = scalar_lea.vmem %s0, %s1524
    %v1526 = vld [vmem:[%s1525] sm:%s3]
    %s1527 = scalar_lea.vmem [#allocation0], 144
    %1528 = vst [vmem:[%s1527] sm:%s3] %v1526
    %s1529 = smul.addr 2, 17
    %s1530 = scalar_lea.vmem %s0, %s1529
    %v1531 = vld [vmem:[%s1530] sm:%s3]
    %s1532 = scalar_lea.vmem [#allocation0], 136
    %1533 = vst [vmem:[%s1532] sm:%s3] %v1531
    %s1534 = smul.addr 2, 16
    %s1535 = scalar_lea.vmem %s0, %s1534
    %v1536 = vld [vmem:[%s1535] sm:%s3]
    %s1537 = scalar_lea.vmem [#allocation0], 128
    %1538 = vst [vmem:[%s1537] sm:%s3] %v1536
    %s1539 = smul.addr 2, 15
    %s1540 = scalar_lea.vmem %s0, %s1539
    %v1541 = vld [vmem:[%s1540] sm:%s3]
    %s1542 = scalar_lea.vmem [#allocation0], 120
    %1543 = vst [vmem:[%s1542] sm:%s3] %v1541
    %s1544 = smul.addr 2, 14
    %s1545 = scalar_lea.vmem %s0, %s1544
    %v1546 = vld [vmem:[%s1545] sm:%s3]
    %s1547 = scalar_lea.vmem [#allocation0], 112
    %1548 = vst [vmem:[%s1547] sm:%s3] %v1546
    %s1549 = smul.addr 2, 13
    %s1550 = scalar_lea.vmem %s0, %s1549
    %v1551 = vld [vmem:[%s1550] sm:%s3]
    %s1552 = scalar_lea.vmem [#allocation0], 104
    %1553 = vst [vmem:[%s1552] sm:%s3] %v1551
    %s1554 = smul.addr 2, 12
    %s1555 = scalar_lea.vmem %s0, %s1554
    %v1556 = vld [vmem:[%s1555] sm:%s3]
    %s1557 = scalar_lea.vmem [#allocation0], 96
    %1558 = vst [vmem:[%s1557] sm:%s3] %v1556
    %s1559 = smul.addr 2, 11
    %s1560 = scalar_lea.vmem %s0, %s1559
    %v1561 = vld [vmem:[%s1560] sm:%s3]
    %s1562 = scalar_lea.vmem [#allocation0], 88
    %1563 = vst [vmem:[%s1562] sm:%s3] %v1561
    %s1564 = smul.addr 2, 10
    %s1565 = scalar_lea.vmem %s0, %s1564
    %v1566 = vld [vmem:[%s1565] sm:%s3]
    %s1567 = scalar_lea.vmem [#allocation0], 80
    %1568 = vst [vmem:[%s1567] sm:%s3] %v1566
    %s1569 = smul.addr 2, 9
    %s1570 = scalar_lea.vmem %s0, %s1569
    %v1571 = vld [vmem:[%s1570] sm:%s3]
    %s1572 = scalar_lea.vmem [#allocation0], 72
    %1573 = vst [vmem:[%s1572] sm:%s3] %v1571
    %s1574 = smul.addr 2, 8
    %s1575 = scalar_lea.vmem %s0, %s1574
    %v1576 = vld [vmem:[%s1575] sm:%s3]
    %s1577 = scalar_lea.vmem [#allocation0], 64
    %1578 = vst [vmem:[%s1577] sm:%s3] %v1576
    %s1579 = smul.addr 2, 7
    %s1580 = scalar_lea.vmem %s0, %s1579
    %v1581 = vld [vmem:[%s1580] sm:%s3]
    %s1582 = scalar_lea.vmem [#allocation0], 56
    %1583 = vst [vmem:[%s1582] sm:%s3] %v1581
    %s1584 = smul.addr 2, 6
    %s1585 = scalar_lea.vmem %s0, %s1584
    %v1586 = vld [vmem:[%s1585] sm:%s3]
    %s1587 = scalar_lea.vmem [#allocation0], 48
    %1588 = vst [vmem:[%s1587] sm:%s3] %v1586
    %s1589 = smul.addr 2, 5
    %s1590 = scalar_lea.vmem %s0, %s1589
    %v1591 = vld [vmem:[%s1590] sm:%s3]
    %s1592 = scalar_lea.vmem [#allocation0], 40
    %1593 = vst [vmem:[%s1592] sm:%s3] %v1591
    %s1594 = smul.addr 2, 4
    %s1595 = scalar_lea.vmem %s0, %s1594
    %v1596 = vld [vmem:[%s1595] sm:%s3]
    %s1597 = scalar_lea.vmem [#allocation0], 32
    %1598 = vst [vmem:[%s1597] sm:%s3] %v1596
    %s1599 = smul.addr 2, 3
    %s1600 = scalar_lea.vmem %s0, %s1599
    %v1601 = vld [vmem:[%s1600] sm:%s3]
    %s1602 = scalar_lea.vmem [#allocation0], 24
    %1603 = vst [vmem:[%s1602] sm:%s3] %v1601
    %s1604 = smul.addr 2, 2
    %s1605 = scalar_lea.vmem %s0, %s1604
    %v1606 = vld [vmem:[%s1605] sm:%s3]
    %s1607 = scalar_lea.vmem [#allocation0], 16
    %1608 = vst [vmem:[%s1607] sm:%s3] %v1606
    %s1609 = scalar_lea.vmem %s0, 2
    %v1610 = vld [vmem:[%s1609] sm:%s3]
    %s1611 = scalar_lea.vmem [#allocation0], 8
    %1612 = vst [vmem:[%s1611] sm:%s3] %v1610
    %v1613 = vld [vmem:[%s0] sm:%s3]
    %1614 = vst [vmem:[#allocation0] sm:%s3] %v1613
    %v1615 = vld [vmem:[#allocation0] sm:$0x3]
    %1616 = vst [vmem:[%s1] ss:$328 sm:$0x3] %v1615
    %s1617 = scalar_lea.vmem [#allocation0], 8
    %v1618 = vld [vmem:[%s1617] sm:$0x3]
    %s1619 = scalar_lea.vmem %s1, 1
    %1620 = vst [vmem:[%s1619] ss:$328 sm:$0x3] %v1618
    %s1621 = scalar_lea.vmem [#allocation0], 16
    %v1622 = vld [vmem:[%s1621] sm:$0x3]
    %s1623 = scalar_lea.vmem %s1, 2
    %1624 = vst [vmem:[%s1623] ss:$328 sm:$0x3] %v1622
    %s1625 = scalar_lea.vmem [#allocation0], 24
    %v1626 = vld [vmem:[%s1625] sm:$0x3]
    %s1627 = scalar_lea.vmem %s1, 3
    %1628 = vst [vmem:[%s1627] ss:$328 sm:$0x3] %v1626
    %s1629 = scalar_lea.vmem [#allocation0], 32
    %v1630 = vld [vmem:[%s1629] sm:$0x3]
    %s1631 = scalar_lea.vmem %s1, 4
    %1632 = vst [vmem:[%s1631] ss:$328 sm:$0x3] %v1630
    %s1633 = scalar_lea.vmem [#allocation0], 40
    %v1634 = vld [vmem:[%s1633] sm:$0x3]
    %s1635 = scalar_lea.vmem %s1, 5
    %1636 = vst [vmem:[%s1635] ss:$328 sm:$0x3] %v1634
    %s1637 = scalar_lea.vmem [#allocation0], 48
    %v1638 = vld [vmem:[%s1637] sm:$0x3]
    %s1639 = scalar_lea.vmem %s1, 6
    %1640 = vst [vmem:[%s1639] ss:$328 sm:$0x3] %v1638
    %s1641 = scalar_lea.vmem [#allocation0], 56
    %v1642 = vld [vmem:[%s1641] sm:$0x3]
    %s1643 = scalar_lea.vmem %s1, 7
    %1644 = vst [vmem:[%s1643] ss:$328 sm:$0x3] %v1642
    %s1645 = scalar_lea.vmem [#allocation0], 64
    %v1646 = vld [vmem:[%s1645] sm:$0x3]
    %s1647 = scalar_lea.vmem %s1, 8
    %1648 = vst [vmem:[%s1647] ss:$328 sm:$0x3] %v1646
    %s1649 = scalar_lea.vmem [#allocation0], 72
    %v1650 = vld [vmem:[%s1649] sm:$0x3]
    %s1651 = scalar_lea.vmem %s1, 9
    %1652 = vst [vmem:[%s1651] ss:$328 sm:$0x3] %v1650
    %s1653 = scalar_lea.vmem [#allocation0], 80
    %v1654 = vld [vmem:[%s1653] sm:$0x3]
    %s1655 = scalar_lea.vmem %s1, 10
    %1656 = vst [vmem:[%s1655] ss:$328 sm:$0x3] %v1654
    %s1657 = scalar_lea.vmem [#allocation0], 88
    %v1658 = vld [vmem:[%s1657] sm:$0x3]
    %s1659 = scalar_lea.vmem %s1, 11
    %1660 = vst [vmem:[%s1659] ss:$328 sm:$0x3] %v1658
    %s1661 = scalar_lea.vmem [#allocation0], 96
    %v1662 = vld [vmem:[%s1661] sm:$0x3]
    %s1663 = scalar_lea.vmem %s1, 12
    %1664 = vst [vmem:[%s1663] ss:$328 sm:$0x3] %v1662
    %s1665 = scalar_lea.vmem [#allocation0], 104
    %v1666 = vld [vmem:[%s1665] sm:$0x3]
    %s1667 = scalar_lea.vmem %s1, 13
    %1668 = vst [vmem:[%s1667] ss:$328 sm:$0x3] %v1666
    %s1669 = scalar_lea.vmem [#allocation0], 112
    %v1670 = vld [vmem:[%s1669] sm:$0x3]
    %s1671 = scalar_lea.vmem %s1, 14
    %1672 = vst [vmem:[%s1671] ss:$328 sm:$0x3] %v1670
    %s1673 = scalar_lea.vmem [#allocation0], 120
    %v1674 = vld [vmem:[%s1673] sm:$0x3]
    %s1675 = scalar_lea.vmem %s1, 15
    %1676 = vst [vmem:[%s1675] ss:$328 sm:$0x3] %v1674
    %s1677 = scalar_lea.vmem [#allocation0], 128
    %v1678 = vld [vmem:[%s1677] sm:$0x3]
    %s1679 = scalar_lea.vmem %s1, 16
    %1680 = vst [vmem:[%s1679] ss:$328 sm:$0x3] %v1678
    %s1681 = scalar_lea.vmem [#allocation0], 136
    %v1682 = vld [vmem:[%s1681] sm:$0x3]
    %s1683 = scalar_lea.vmem %s1, 17
    %1684 = vst [vmem:[%s1683] ss:$328 sm:$0x3] %v1682
    %s1685 = scalar_lea.vmem [#allocation0], 144
    %v1686 = vld [vmem:[%s1685] sm:$0x3]
    %s1687 = scalar_lea.vmem %s1, 18
    %1688 = vst [vmem:[%s1687] ss:$328 sm:$0x3] %v1686
    %s1689 = scalar_lea.vmem [#allocation0], 152
    %v1690 = vld [vmem:[%s1689] sm:$0x3]
    %s1691 = scalar_lea.vmem %s1, 19
    %1692 = vst [vmem:[%s1691] ss:$328 sm:$0x3] %v1690
    %s1693 = scalar_lea.vmem [#allocation0], 160
    %v1694 = vld [vmem:[%s1693] sm:$0x3]
    %s1695 = scalar_lea.vmem %s1, 20
    %1696 = vst [vmem:[%s1695] ss:$328 sm:$0x3] %v1694
    %s1697 = scalar_lea.vmem [#allocation0], 168
    %v1698 = vld [vmem:[%s1697] sm:$0x3]
    %s1699 = scalar_lea.vmem %s1, 21
    %1700 = vst [vmem:[%s1699] ss:$328 sm:$0x3] %v1698
    %s1701 = scalar_lea.vmem [#allocation0], 176
    %v1702 = vld [vmem:[%s1701] sm:$0x3]
    %s1703 = scalar_lea.vmem %s1, 22
    %1704 = vst [vmem:[%s1703] ss:$328 sm:$0x3] %v1702
    %s1705 = scalar_lea.vmem [#allocation0], 184
    %v1706 = vld [vmem:[%s1705] sm:$0x3]
    %s1707 = scalar_lea.vmem %s1, 23
    %1708 = vst [vmem:[%s1707] ss:$328 sm:$0x3] %v1706
    %s1709 = scalar_lea.vmem [#allocation0], 192
    %v1710 = vld [vmem:[%s1709] sm:$0x3]
    %s1711 = scalar_lea.vmem %s1, 24
    %1712 = vst [vmem:[%s1711] ss:$328 sm:$0x3] %v1710
    %s1713 = scalar_lea.vmem [#allocation0], 200
    %v1714 = vld [vmem:[%s1713] sm:$0x3]
    %s1715 = scalar_lea.vmem %s1, 25
    %1716 = vst [vmem:[%s1715] ss:$328 sm:$0x3] %v1714
    %s1717 = scalar_lea.vmem [#allocation0], 208
    %v1718 = vld [vmem:[%s1717] sm:$0x3]
    %s1719 = scalar_lea.vmem %s1, 26
    %1720 = vst [vmem:[%s1719] ss:$328 sm:$0x3] %v1718
    %s1721 = scalar_lea.vmem [#allocation0], 216
    %v1722 = vld [vmem:[%s1721] sm:$0x3]
    %s1723 = scalar_lea.vmem %s1, 27
    %1724 = vst [vmem:[%s1723] ss:$328 sm:$0x3] %v1722
    %s1725 = scalar_lea.vmem [#allocation0], 224
    %v1726 = vld [vmem:[%s1725] sm:$0x3]
    %s1727 = scalar_lea.vmem %s1, 28
    %1728 = vst [vmem:[%s1727] ss:$328 sm:$0x3] %v1726
    %s1729 = scalar_lea.vmem [#allocation0], 232
    %v1730 = vld [vmem:[%s1729] sm:$0x3]
    %s1731 = scalar_lea.vmem %s1, 29
    %1732 = vst [vmem:[%s1731] ss:$328 sm:$0x3] %v1730
    %s1733 = scalar_lea.vmem [#allocation0], 240
    %v1734 = vld [vmem:[%s1733] sm:$0x3]
    %s1735 = scalar_lea.vmem %s1, 30
    %1736 = vst [vmem:[%s1735] ss:$328 sm:$0x3] %v1734
    %s1737 = scalar_lea.vmem [#allocation0], 248
    %v1738 = vld [vmem:[%s1737] sm:$0x3]
    %s1739 = scalar_lea.vmem %s1, 31
    %1740 = vst [vmem:[%s1739] ss:$328 sm:$0x3] %v1738
    %s1741 = scalar_lea.vmem [#allocation0], 256
    %v1742 = vld [vmem:[%s1741] sm:$0x3]
    %s1743 = scalar_lea.vmem %s1, 32
    %1744 = vst [vmem:[%s1743] ss:$328 sm:$0x3] %v1742
    %s1745 = scalar_lea.vmem [#allocation0], 264
    %v1746 = vld [vmem:[%s1745] sm:$0x3]
    %s1747 = scalar_lea.vmem %s1, 33
    %1748 = vst [vmem:[%s1747] ss:$328 sm:$0x3] %v1746
    %s1749 = scalar_lea.vmem [#allocation0], 272
    %v1750 = vld [vmem:[%s1749] sm:$0x3]
    %s1751 = scalar_lea.vmem %s1, 34
    %1752 = vst [vmem:[%s1751] ss:$328 sm:$0x3] %v1750
    %s1753 = scalar_lea.vmem [#allocation0], 280
    %v1754 = vld [vmem:[%s1753] sm:$0x3]
    %s1755 = scalar_lea.vmem %s1, 35
    %1756 = vst [vmem:[%s1755] ss:$328 sm:$0x3] %v1754
    %s1757 = scalar_lea.vmem [#allocation0], 288
    %v1758 = vld [vmem:[%s1757] sm:$0x3]
    %s1759 = scalar_lea.vmem %s1, 36
    %1760 = vst [vmem:[%s1759] ss:$328 sm:$0x3] %v1758
    %s1761 = scalar_lea.vmem [#allocation0], 296
    %v1762 = vld [vmem:[%s1761] sm:$0x3]
    %s1763 = scalar_lea.vmem %s1, 37
    %1764 = vst [vmem:[%s1763] ss:$328 sm:$0x3] %v1762
    %s1765 = scalar_lea.vmem [#allocation0], 304
    %v1766 = vld [vmem:[%s1765] sm:$0x3]
    %s1767 = scalar_lea.vmem %s1, 38
    %1768 = vst [vmem:[%s1767] ss:$328 sm:$0x3] %v1766
    %s1769 = scalar_lea.vmem [#allocation0], 312
    %v1770 = vld [vmem:[%s1769] sm:$0x3]
    %s1771 = scalar_lea.vmem %s1, 39
    %1772 = vst [vmem:[%s1771] ss:$328 sm:$0x3] %v1770
    %s1773 = scalar_lea.vmem [#allocation0], 320
    %v1774 = vld [vmem:[%s1773] sm:$0x3]
    %s1775 = scalar_lea.vmem %s1, 40
    %1776 = vst [vmem:[%s1775] ss:$328 sm:$0x3] %v1774
    %s1777 = scalar_lea.vmem [#allocation0], 328
    %v1778 = vld [vmem:[%s1777] sm:$0x3]
    %s1779 = scalar_lea.vmem %s1, 41
    %1780 = vst [vmem:[%s1779] ss:$328 sm:$0x3] %v1778
    %s1781 = scalar_lea.vmem [#allocation0], 336
    %v1782 = vld [vmem:[%s1781] sm:$0x3]
    %s1783 = scalar_lea.vmem %s1, 42
    %1784 = vst [vmem:[%s1783] ss:$328 sm:$0x3] %v1782
    %s1785 = scalar_lea.vmem [#allocation0], 344
    %v1786 = vld [vmem:[%s1785] sm:$0x3]
    %s1787 = scalar_lea.vmem %s1, 43
    %1788 = vst [vmem:[%s1787] ss:$328 sm:$0x3] %v1786
    %s1789 = scalar_lea.vmem [#allocation0], 352
    %v1790 = vld [vmem:[%s1789] sm:$0x3]
    %s1791 = scalar_lea.vmem %s1, 44
    %1792 = vst [vmem:[%s1791] ss:$328 sm:$0x3] %v1790
    %s1793 = scalar_lea.vmem [#allocation0], 360
    %v1794 = vld [vmem:[%s1793] sm:$0x3]
    %s1795 = scalar_lea.vmem %s1, 45
    %1796 = vst [vmem:[%s1795] ss:$328 sm:$0x3] %v1794
    %s1797 = scalar_lea.vmem [#allocation0], 368
    %v1798 = vld [vmem:[%s1797] sm:$0x3]
    %s1799 = scalar_lea.vmem %s1, 46
    %1800 = vst [vmem:[%s1799] ss:$328 sm:$0x3] %v1798
    %s1801 = scalar_lea.vmem [#allocation0], 376
    %v1802 = vld [vmem:[%s1801] sm:$0x3]
    %s1803 = scalar_lea.vmem %s1, 47
    %1804 = vst [vmem:[%s1803] ss:$328 sm:$0x3] %v1802
    %s1805 = scalar_lea.vmem [#allocation0], 384
    %v1806 = vld [vmem:[%s1805] sm:$0x3]
    %s1807 = scalar_lea.vmem %s1, 48
    %1808 = vst [vmem:[%s1807] ss:$328 sm:$0x3] %v1806
    %s1809 = scalar_lea.vmem [#allocation0], 392
    %v1810 = vld [vmem:[%s1809] sm:$0x3]
    %s1811 = scalar_lea.vmem %s1, 49
    %1812 = vst [vmem:[%s1811] ss:$328 sm:$0x3] %v1810
    %s1813 = scalar_lea.vmem [#allocation0], 400
    %v1814 = vld [vmem:[%s1813] sm:$0x3]
    %s1815 = scalar_lea.vmem %s1, 50
    %1816 = vst [vmem:[%s1815] ss:$328 sm:$0x3] %v1814
    %s1817 = scalar_lea.vmem [#allocation0], 408
    %v1818 = vld [vmem:[%s1817] sm:$0x3]
    %s1819 = scalar_lea.vmem %s1, 51
    %1820 = vst [vmem:[%s1819] ss:$328 sm:$0x3] %v1818
    %s1821 = scalar_lea.vmem [#allocation0], 416
    %v1822 = vld [vmem:[%s1821] sm:$0x3]
    %s1823 = scalar_lea.vmem %s1, 52
    %1824 = vst [vmem:[%s1823] ss:$328 sm:$0x3] %v1822
    %s1825 = scalar_lea.vmem [#allocation0], 424
    %v1826 = vld [vmem:[%s1825] sm:$0x3]
    %s1827 = scalar_lea.vmem %s1, 53
    %1828 = vst [vmem:[%s1827] ss:$328 sm:$0x3] %v1826
    %s1829 = scalar_lea.vmem [#allocation0], 432
    %v1830 = vld [vmem:[%s1829] sm:$0x3]
    %s1831 = scalar_lea.vmem %s1, 54
    %1832 = vst [vmem:[%s1831] ss:$328 sm:$0x3] %v1830
    %s1833 = scalar_lea.vmem [#allocation0], 440
    %v1834 = vld [vmem:[%s1833] sm:$0x3]
    %s1835 = scalar_lea.vmem %s1, 55
    %1836 = vst [vmem:[%s1835] ss:$328 sm:$0x3] %v1834
    %s1837 = scalar_lea.vmem [#allocation0], 448
    %v1838 = vld [vmem:[%s1837] sm:$0x3]
    %s1839 = scalar_lea.vmem %s1, 56
    %1840 = vst [vmem:[%s1839] ss:$328 sm:$0x3] %v1838
    %s1841 = scalar_lea.vmem [#allocation0], 456
    %v1842 = vld [vmem:[%s1841] sm:$0x3]
    %s1843 = scalar_lea.vmem %s1, 57
    %1844 = vst [vmem:[%s1843] ss:$328 sm:$0x3] %v1842
    %s1845 = scalar_lea.vmem [#allocation0], 464
    %v1846 = vld [vmem:[%s1845] sm:$0x3]
    %s1847 = scalar_lea.vmem %s1, 58
    %1848 = vst [vmem:[%s1847] ss:$328 sm:$0x3] %v1846
    %s1849 = scalar_lea.vmem [#allocation0], 472
    %v1850 = vld [vmem:[%s1849] sm:$0x3]
    %s1851 = scalar_lea.vmem %s1, 59
    %1852 = vst [vmem:[%s1851] ss:$328 sm:$0x3] %v1850
    %s1853 = scalar_lea.vmem [#allocation0], 480
    %v1854 = vld [vmem:[%s1853] sm:$0x3]
    %s1855 = scalar_lea.vmem %s1, 60
    %1856 = vst [vmem:[%s1855] ss:$328 sm:$0x3] %v1854
    %s1857 = scalar_lea.vmem [#allocation0], 488
    %v1858 = vld [vmem:[%s1857] sm:$0x3]
    %s1859 = scalar_lea.vmem %s1, 61
    %1860 = vst [vmem:[%s1859] ss:$328 sm:$0x3] %v1858
    %s1861 = scalar_lea.vmem [#allocation0], 496
    %v1862 = vld [vmem:[%s1861] sm:$0x3]
    %s1863 = scalar_lea.vmem %s1, 62
    %1864 = vst [vmem:[%s1863] ss:$328 sm:$0x3] %v1862
    %s1865 = scalar_lea.vmem [#allocation0], 504
    %v1866 = vld [vmem:[%s1865] sm:$0x3]
    %s1867 = scalar_lea.vmem %s1, 63
    %1868 = vst [vmem:[%s1867] ss:$328 sm:$0x3] %v1866
    %s1869 = scalar_lea.vmem [#allocation0], 512
    %v1870 = vld [vmem:[%s1869] sm:$0x3]
    %s1871 = scalar_lea.vmem %s1, 64
    %1872 = vst [vmem:[%s1871] ss:$328 sm:$0x3] %v1870
    %s1873 = scalar_lea.vmem [#allocation0], 520
    %v1874 = vld [vmem:[%s1873] sm:$0x3]
    %s1875 = scalar_lea.vmem %s1, 65
    %1876 = vst [vmem:[%s1875] ss:$328 sm:$0x3] %v1874
    %s1877 = scalar_lea.vmem [#allocation0], 528
    %v1878 = vld [vmem:[%s1877] sm:$0x3]
    %s1879 = scalar_lea.vmem %s1, 66
    %1880 = vst [vmem:[%s1879] ss:$328 sm:$0x3] %v1878
    %s1881 = scalar_lea.vmem [#allocation0], 536
    %v1882 = vld [vmem:[%s1881] sm:$0x3]
    %s1883 = scalar_lea.vmem %s1, 67
    %1884 = vst [vmem:[%s1883] ss:$328 sm:$0x3] %v1882
    %s1885 = scalar_lea.vmem [#allocation0], 544
    %v1886 = vld [vmem:[%s1885] sm:$0x3]
    %s1887 = scalar_lea.vmem %s1, 68
    %1888 = vst [vmem:[%s1887] ss:$328 sm:$0x3] %v1886
    %s1889 = scalar_lea.vmem [#allocation0], 552
    %v1890 = vld [vmem:[%s1889] sm:$0x3]
    %s1891 = scalar_lea.vmem %s1, 69
    %1892 = vst [vmem:[%s1891] ss:$328 sm:$0x3] %v1890
    %s1893 = scalar_lea.vmem [#allocation0], 560
    %v1894 = vld [vmem:[%s1893] sm:$0x3]
    %s1895 = scalar_lea.vmem %s1, 70
    %1896 = vst [vmem:[%s1895] ss:$328 sm:$0x3] %v1894
    %s1897 = scalar_lea.vmem [#allocation0], 568
    %v1898 = vld [vmem:[%s1897] sm:$0x3]
    %s1899 = scalar_lea.vmem %s1, 71
    %1900 = vst [vmem:[%s1899] ss:$328 sm:$0x3] %v1898
    %s1901 = scalar_lea.vmem [#allocation0], 576
    %v1902 = vld [vmem:[%s1901] sm:$0x3]
    %s1903 = scalar_lea.vmem %s1, 72
    %1904 = vst [vmem:[%s1903] ss:$328 sm:$0x3] %v1902
    %s1905 = scalar_lea.vmem [#allocation0], 584
    %v1906 = vld [vmem:[%s1905] sm:$0x3]
    %s1907 = scalar_lea.vmem %s1, 73
    %1908 = vst [vmem:[%s1907] ss:$328 sm:$0x3] %v1906
    %s1909 = scalar_lea.vmem [#allocation0], 592
    %v1910 = vld [vmem:[%s1909] sm:$0x3]
    %s1911 = scalar_lea.vmem %s1, 74
    %1912 = vst [vmem:[%s1911] ss:$328 sm:$0x3] %v1910
    %s1913 = scalar_lea.vmem [#allocation0], 600
    %v1914 = vld [vmem:[%s1913] sm:$0x3]
    %s1915 = scalar_lea.vmem %s1, 75
    %1916 = vst [vmem:[%s1915] ss:$328 sm:$0x3] %v1914
    %s1917 = scalar_lea.vmem [#allocation0], 608
    %v1918 = vld [vmem:[%s1917] sm:$0x3]
    %s1919 = scalar_lea.vmem %s1, 76
    %1920 = vst [vmem:[%s1919] ss:$328 sm:$0x3] %v1918
    %s1921 = scalar_lea.vmem [#allocation0], 616
    %v1922 = vld [vmem:[%s1921] sm:$0x3]
    %s1923 = scalar_lea.vmem %s1, 77
    %1924 = vst [vmem:[%s1923] ss:$328 sm:$0x3] %v1922
    %s1925 = scalar_lea.vmem [#allocation0], 624
    %v1926 = vld [vmem:[%s1925] sm:$0x3]
    %s1927 = scalar_lea.vmem %s1, 78
    %1928 = vst [vmem:[%s1927] ss:$328 sm:$0x3] %v1926
    %s1929 = scalar_lea.vmem [#allocation0], 632
    %v1930 = vld [vmem:[%s1929] sm:$0x3]
    %s1931 = scalar_lea.vmem %s1, 79
    %1932 = vst [vmem:[%s1931] ss:$328 sm:$0x3] %v1930
    %s1933 = scalar_lea.vmem [#allocation0], 640
    %v1934 = vld [vmem:[%s1933] sm:$0x3]
    %s1935 = scalar_lea.vmem %s1, 80
    %1936 = vst [vmem:[%s1935] ss:$328 sm:$0x3] %v1934
    %s1937 = scalar_lea.vmem [#allocation0], 648
    %v1938 = vld [vmem:[%s1937] sm:$0x3]
    %s1939 = scalar_lea.vmem %s1, 81
    %1940 = vst [vmem:[%s1939] ss:$328 sm:$0x3] %v1938
    %s1941 = scalar_lea.vmem [#allocation0], 656
    %v1942 = vld [vmem:[%s1941] sm:$0x3]
    %s1943 = scalar_lea.vmem %s1, 82
    %1944 = vst [vmem:[%s1943] ss:$328 sm:$0x3] %v1942
    %s1945 = scalar_lea.vmem [#allocation0], 664
    %v1946 = vld [vmem:[%s1945] sm:$0x3]
    %s1947 = scalar_lea.vmem %s1, 83
    %1948 = vst [vmem:[%s1947] ss:$328 sm:$0x3] %v1946
    %s1949 = scalar_lea.vmem [#allocation0], 672
    %v1950 = vld [vmem:[%s1949] sm:$0x3]
    %s1951 = scalar_lea.vmem %s1, 84
    %1952 = vst [vmem:[%s1951] ss:$328 sm:$0x3] %v1950
    %s1953 = scalar_lea.vmem [#allocation0], 680
    %v1954 = vld [vmem:[%s1953] sm:$0x3]
    %s1955 = scalar_lea.vmem %s1, 85
    %1956 = vst [vmem:[%s1955] ss:$328 sm:$0x3] %v1954
    %s1957 = scalar_lea.vmem [#allocation0], 688
    %v1958 = vld [vmem:[%s1957] sm:$0x3]
    %s1959 = scalar_lea.vmem %s1, 86
    %1960 = vst [vmem:[%s1959] ss:$328 sm:$0x3] %v1958
    %s1961 = scalar_lea.vmem [#allocation0], 696
    %v1962 = vld [vmem:[%s1961] sm:$0x3]
    %s1963 = scalar_lea.vmem %s1, 87
    %1964 = vst [vmem:[%s1963] ss:$328 sm:$0x3] %v1962
    %s1965 = scalar_lea.vmem [#allocation0], 704
    %v1966 = vld [vmem:[%s1965] sm:$0x3]
    %s1967 = scalar_lea.vmem %s1, 88
    %1968 = vst [vmem:[%s1967] ss:$328 sm:$0x3] %v1966
    %s1969 = scalar_lea.vmem [#allocation0], 712
    %v1970 = vld [vmem:[%s1969] sm:$0x3]
    %s1971 = scalar_lea.vmem %s1, 89
    %1972 = vst [vmem:[%s1971] ss:$328 sm:$0x3] %v1970
    %s1973 = scalar_lea.vmem [#allocation0], 720
    %v1974 = vld [vmem:[%s1973] sm:$0x3]
    %s1975 = scalar_lea.vmem %s1, 90
    %1976 = vst [vmem:[%s1975] ss:$328 sm:$0x3] %v1974
    %s1977 = scalar_lea.vmem [#allocation0], 728
    %v1978 = vld [vmem:[%s1977] sm:$0x3]
    %s1979 = scalar_lea.vmem %s1, 91
    %1980 = vst [vmem:[%s1979] ss:$328 sm:$0x3] %v1978
    %s1981 = scalar_lea.vmem [#allocation0], 736
    %v1982 = vld [vmem:[%s1981] sm:$0x3]
    %s1983 = scalar_lea.vmem %s1, 92
    %1984 = vst [vmem:[%s1983] ss:$328 sm:$0x3] %v1982
    %s1985 = scalar_lea.vmem [#allocation0], 744
    %v1986 = vld [vmem:[%s1985] sm:$0x3]
    %s1987 = scalar_lea.vmem %s1, 93
    %1988 = vst [vmem:[%s1987] ss:$328 sm:$0x3] %v1986
    %s1989 = scalar_lea.vmem [#allocation0], 752
    %v1990 = vld [vmem:[%s1989] sm:$0x3]
    %s1991 = scalar_lea.vmem %s1, 94
    %1992 = vst [vmem:[%s1991] ss:$328 sm:$0x3] %v1990
    %s1993 = scalar_lea.vmem [#allocation0], 760
    %v1994 = vld [vmem:[%s1993] sm:$0x3]
    %s1995 = scalar_lea.vmem %s1, 95
    %1996 = vst [vmem:[%s1995] ss:$328 sm:$0x3] %v1994
    %s1997 = scalar_lea.vmem [#allocation0], 768
    %v1998 = vld [vmem:[%s1997] sm:$0x3]
    %s1999 = scalar_lea.vmem %s1, 96
    %2000 = vst [vmem:[%s1999] ss:$328 sm:$0x3] %v1998
    %s2001 = scalar_lea.vmem [#allocation0], 776
    %v2002 = vld [vmem:[%s2001] sm:$0x3]
    %s2003 = scalar_lea.vmem %s1, 97
    %2004 = vst [vmem:[%s2003] ss:$328 sm:$0x3] %v2002
    %s2005 = scalar_lea.vmem [#allocation0], 784
    %v2006 = vld [vmem:[%s2005] sm:$0x3]
    %s2007 = scalar_lea.vmem %s1, 98
    %2008 = vst [vmem:[%s2007] ss:$328 sm:$0x3] %v2006
    %s2009 = scalar_lea.vmem [#allocation0], 792
    %v2010 = vld [vmem:[%s2009] sm:$0x3]
    %s2011 = scalar_lea.vmem %s1, 99
    %2012 = vst [vmem:[%s2011] ss:$328 sm:$0x3] %v2010
    %s2013 = scalar_lea.vmem [#allocation0], 800
    %v2014 = vld [vmem:[%s2013] sm:$0x3]
    %s2015 = scalar_lea.vmem %s1, 100
    %2016 = vst [vmem:[%s2015] ss:$328 sm:$0x3] %v2014
    %s2017 = scalar_lea.vmem [#allocation0], 808
    %v2018 = vld [vmem:[%s2017] sm:$0x3]
    %s2019 = scalar_lea.vmem %s1, 101
    %2020 = vst [vmem:[%s2019] ss:$328 sm:$0x3] %v2018
    %s2021 = scalar_lea.vmem [#allocation0], 816
    %v2022 = vld [vmem:[%s2021] sm:$0x3]
    %s2023 = scalar_lea.vmem %s1, 102
    %2024 = vst [vmem:[%s2023] ss:$328 sm:$0x3] %v2022
    %s2025 = scalar_lea.vmem [#allocation0], 824
    %v2026 = vld [vmem:[%s2025] sm:$0x3]
    %s2027 = scalar_lea.vmem %s1, 103
    %2028 = vst [vmem:[%s2027] ss:$328 sm:$0x3] %v2026
    %s2029 = scalar_lea.vmem [#allocation0], 832
    %v2030 = vld [vmem:[%s2029] sm:$0x3]
    %s2031 = scalar_lea.vmem %s1, 104
    %2032 = vst [vmem:[%s2031] ss:$328 sm:$0x3] %v2030
    %s2033 = scalar_lea.vmem [#allocation0], 840
    %v2034 = vld [vmem:[%s2033] sm:$0x3]
    %s2035 = scalar_lea.vmem %s1, 105
    %2036 = vst [vmem:[%s2035] ss:$328 sm:$0x3] %v2034
    %s2037 = scalar_lea.vmem [#allocation0], 848
    %v2038 = vld [vmem:[%s2037] sm:$0x3]
    %s2039 = scalar_lea.vmem %s1, 106
    %2040 = vst [vmem:[%s2039] ss:$328 sm:$0x3] %v2038
    %s2041 = scalar_lea.vmem [#allocation0], 856
    %v2042 = vld [vmem:[%s2041] sm:$0x3]
    %s2043 = scalar_lea.vmem %s1, 107
    %2044 = vst [vmem:[%s2043] ss:$328 sm:$0x3] %v2042
    %s2045 = scalar_lea.vmem [#allocation0], 864
    %v2046 = vld [vmem:[%s2045] sm:$0x3]
    %s2047 = scalar_lea.vmem %s1, 108
    %2048 = vst [vmem:[%s2047] ss:$328 sm:$0x3] %v2046
    %s2049 = scalar_lea.vmem [#allocation0], 872
    %v2050 = vld [vmem:[%s2049] sm:$0x3]
    %s2051 = scalar_lea.vmem %s1, 109
    %2052 = vst [vmem:[%s2051] ss:$328 sm:$0x3] %v2050
    %s2053 = scalar_lea.vmem [#allocation0], 880
    %v2054 = vld [vmem:[%s2053] sm:$0x3]
    %s2055 = scalar_lea.vmem %s1, 110
    %2056 = vst [vmem:[%s2055] ss:$328 sm:$0x3] %v2054
    %s2057 = scalar_lea.vmem [#allocation0], 888
    %v2058 = vld [vmem:[%s2057] sm:$0x3]
    %s2059 = scalar_lea.vmem %s1, 111
    %2060 = vst [vmem:[%s2059] ss:$328 sm:$0x3] %v2058
    %s2061 = scalar_lea.vmem [#allocation0], 896
    %v2062 = vld [vmem:[%s2061] sm:$0x3]
    %s2063 = scalar_lea.vmem %s1, 112
    %2064 = vst [vmem:[%s2063] ss:$328 sm:$0x3] %v2062
    %s2065 = scalar_lea.vmem [#allocation0], 904
    %v2066 = vld [vmem:[%s2065] sm:$0x3]
    %s2067 = scalar_lea.vmem %s1, 113
    %2068 = vst [vmem:[%s2067] ss:$328 sm:$0x3] %v2066
    %s2069 = scalar_lea.vmem [#allocation0], 912
    %v2070 = vld [vmem:[%s2069] sm:$0x3]
    %s2071 = scalar_lea.vmem %s1, 114
    %2072 = vst [vmem:[%s2071] ss:$328 sm:$0x3] %v2070
    %s2073 = scalar_lea.vmem [#allocation0], 920
    %v2074 = vld [vmem:[%s2073] sm:$0x3]
    %s2075 = scalar_lea.vmem %s1, 115
    %2076 = vst [vmem:[%s2075] ss:$328 sm:$0x3] %v2074
    %s2077 = scalar_lea.vmem [#allocation0], 928
    %v2078 = vld [vmem:[%s2077] sm:$0x3]
    %s2079 = scalar_lea.vmem %s1, 116
    %2080 = vst [vmem:[%s2079] ss:$328 sm:$0x3] %v2078
    %s2081 = scalar_lea.vmem [#allocation0], 936
    %v2082 = vld [vmem:[%s2081] sm:$0x3]
    %s2083 = scalar_lea.vmem %s1, 117
    %2084 = vst [vmem:[%s2083] ss:$328 sm:$0x3] %v2082
    %s2085 = scalar_lea.vmem [#allocation0], 944
    %v2086 = vld [vmem:[%s2085] sm:$0x3]
    %s2087 = scalar_lea.vmem %s1, 118
    %2088 = vst [vmem:[%s2087] ss:$328 sm:$0x3] %v2086
    %s2089 = scalar_lea.vmem [#allocation0], 952
    %v2090 = vld [vmem:[%s2089] sm:$0x3]
    %s2091 = scalar_lea.vmem %s1, 119
    %2092 = vst [vmem:[%s2091] ss:$328 sm:$0x3] %v2090
    %s2093 = scalar_lea.vmem [#allocation0], 960
    %v2094 = vld [vmem:[%s2093] sm:$0x3]
    %s2095 = scalar_lea.vmem %s1, 120
    %2096 = vst [vmem:[%s2095] ss:$328 sm:$0x3] %v2094
    %s2097 = scalar_lea.vmem [#allocation0], 968
    %v2098 = vld [vmem:[%s2097] sm:$0x3]
    %s2099 = scalar_lea.vmem %s1, 121
    %2100 = vst [vmem:[%s2099] ss:$328 sm:$0x3] %v2098
    %s2101 = scalar_lea.vmem [#allocation0], 976
    %v2102 = vld [vmem:[%s2101] sm:$0x3]
    %s2103 = scalar_lea.vmem %s1, 122
    %2104 = vst [vmem:[%s2103] ss:$328 sm:$0x3] %v2102
    %s2105 = scalar_lea.vmem [#allocation0], 984
    %v2106 = vld [vmem:[%s2105] sm:$0x3]
    %s2107 = scalar_lea.vmem %s1, 123
    %2108 = vst [vmem:[%s2107] ss:$328 sm:$0x3] %v2106
    %s2109 = scalar_lea.vmem [#allocation0], 992
    %v2110 = vld [vmem:[%s2109] sm:$0x3]
    %s2111 = scalar_lea.vmem %s1, 124
    %2112 = vst [vmem:[%s2111] ss:$328 sm:$0x3] %v2110
    %s2113 = scalar_lea.vmem [#allocation0], 1000
    %v2114 = vld [vmem:[%s2113] sm:$0x3]
    %s2115 = scalar_lea.vmem %s1, 125
    %2116 = vst [vmem:[%s2115] ss:$328 sm:$0x3] %v2114
    %s2117 = scalar_lea.vmem [#allocation0], 1008
    %v2118 = vld [vmem:[%s2117] sm:$0x3]
    %s2119 = scalar_lea.vmem %s1, 126
    %2120 = vst [vmem:[%s2119] ss:$328 sm:$0x3] %v2118
    %s2121 = scalar_lea.vmem [#allocation0], 1016
    %v2122 = vld [vmem:[%s2121] sm:$0x3]
    %s2123 = scalar_lea.vmem %s1, 127
    %2124 = vst [vmem:[%s2123] ss:$328 sm:$0x3] %v2122
    %s2125 = scalar_lea.vmem [#allocation0], 1024
    %v2126 = vld [vmem:[%s2125] sm:$0x3]
    %s2127 = scalar_lea.vmem %s1, 128
    %2128 = vst [vmem:[%s2127] ss:$328 sm:$0x3] %v2126
    %s2129 = scalar_lea.vmem [#allocation0], 1032
    %v2130 = vld [vmem:[%s2129] sm:$0x3]
    %s2131 = scalar_lea.vmem %s1, 129
    %2132 = vst [vmem:[%s2131] ss:$328 sm:$0x3] %v2130
    %s2133 = scalar_lea.vmem [#allocation0], 1040
    %v2134 = vld [vmem:[%s2133] sm:$0x3]
    %s2135 = scalar_lea.vmem %s1, 130
    %2136 = vst [vmem:[%s2135] ss:$328 sm:$0x3] %v2134
    %s2137 = scalar_lea.vmem [#allocation0], 1048
    %v2138 = vld [vmem:[%s2137] sm:$0x3]
    %s2139 = scalar_lea.vmem %s1, 131
    %2140 = vst [vmem:[%s2139] ss:$328 sm:$0x3] %v2138
    %s2141 = scalar_lea.vmem [#allocation0], 1056
    %v2142 = vld [vmem:[%s2141] sm:$0x3]
    %s2143 = scalar_lea.vmem %s1, 132
    %2144 = vst [vmem:[%s2143] ss:$328 sm:$0x3] %v2142
    %s2145 = scalar_lea.vmem [#allocation0], 1064
    %v2146 = vld [vmem:[%s2145] sm:$0x3]
    %s2147 = scalar_lea.vmem %s1, 133
    %2148 = vst [vmem:[%s2147] ss:$328 sm:$0x3] %v2146
    %s2149 = scalar_lea.vmem [#allocation0], 1072
    %v2150 = vld [vmem:[%s2149] sm:$0x3]
    %s2151 = scalar_lea.vmem %s1, 134
    %2152 = vst [vmem:[%s2151] ss:$328 sm:$0x3] %v2150
    %s2153 = scalar_lea.vmem [#allocation0], 1080
    %v2154 = vld [vmem:[%s2153] sm:$0x3]
    %s2155 = scalar_lea.vmem %s1, 135
    %2156 = vst [vmem:[%s2155] ss:$328 sm:$0x3] %v2154
    %s2157 = scalar_lea.vmem [#allocation0], 1088
    %v2158 = vld [vmem:[%s2157] sm:$0x3]
    %s2159 = scalar_lea.vmem %s1, 136
    %2160 = vst [vmem:[%s2159] ss:$328 sm:$0x3] %v2158
    %s2161 = scalar_lea.vmem [#allocation0], 1096
    %v2162 = vld [vmem:[%s2161] sm:$0x3]
    %s2163 = scalar_lea.vmem %s1, 137
    %2164 = vst [vmem:[%s2163] ss:$328 sm:$0x3] %v2162
    %s2165 = scalar_lea.vmem [#allocation0], 1104
    %v2166 = vld [vmem:[%s2165] sm:$0x3]
    %s2167 = scalar_lea.vmem %s1, 138
    %2168 = vst [vmem:[%s2167] ss:$328 sm:$0x3] %v2166
    %s2169 = scalar_lea.vmem [#allocation0], 1112
    %v2170 = vld [vmem:[%s2169] sm:$0x3]
    %s2171 = scalar_lea.vmem %s1, 139
    %2172 = vst [vmem:[%s2171] ss:$328 sm:$0x3] %v2170
    %s2173 = scalar_lea.vmem [#allocation0], 1120
    %v2174 = vld [vmem:[%s2173] sm:$0x3]
    %s2175 = scalar_lea.vmem %s1, 140
    %2176 = vst [vmem:[%s2175] ss:$328 sm:$0x3] %v2174
    %s2177 = scalar_lea.vmem [#allocation0], 1128
    %v2178 = vld [vmem:[%s2177] sm:$0x3]
    %s2179 = scalar_lea.vmem %s1, 141
    %2180 = vst [vmem:[%s2179] ss:$328 sm:$0x3] %v2178
    %s2181 = scalar_lea.vmem [#allocation0], 1136
    %v2182 = vld [vmem:[%s2181] sm:$0x3]
    %s2183 = scalar_lea.vmem %s1, 142
    %2184 = vst [vmem:[%s2183] ss:$328 sm:$0x3] %v2182
    %s2185 = scalar_lea.vmem [#allocation0], 1144
    %v2186 = vld [vmem:[%s2185] sm:$0x3]
    %s2187 = scalar_lea.vmem %s1, 143
    %2188 = vst [vmem:[%s2187] ss:$328 sm:$0x3] %v2186
    %s2189 = scalar_lea.vmem [#allocation0], 1152
    %v2190 = vld [vmem:[%s2189] sm:$0x3]
    %s2191 = scalar_lea.vmem %s1, 144
    %2192 = vst [vmem:[%s2191] ss:$328 sm:$0x3] %v2190
    %s2193 = scalar_lea.vmem [#allocation0], 1160
    %v2194 = vld [vmem:[%s2193] sm:$0x3]
    %s2195 = scalar_lea.vmem %s1, 145
    %2196 = vst [vmem:[%s2195] ss:$328 sm:$0x3] %v2194
    %s2197 = scalar_lea.vmem [#allocation0], 1168
    %v2198 = vld [vmem:[%s2197] sm:$0x3]
    %s2199 = scalar_lea.vmem %s1, 146
    %2200 = vst [vmem:[%s2199] ss:$328 sm:$0x3] %v2198
    %s2201 = scalar_lea.vmem [#allocation0], 1176
    %v2202 = vld [vmem:[%s2201] sm:$0x3]
    %s2203 = scalar_lea.vmem %s1, 147
    %2204 = vst [vmem:[%s2203] ss:$328 sm:$0x3] %v2202
    %s2205 = scalar_lea.vmem [#allocation0], 1184
    %v2206 = vld [vmem:[%s2205] sm:$0x3]
    %s2207 = scalar_lea.vmem %s1, 148
    %2208 = vst [vmem:[%s2207] ss:$328 sm:$0x3] %v2206
    %s2209 = scalar_lea.vmem [#allocation0], 1192
    %v2210 = vld [vmem:[%s2209] sm:$0x3]
    %s2211 = scalar_lea.vmem %s1, 149
    %2212 = vst [vmem:[%s2211] ss:$328 sm:$0x3] %v2210
    %s2213 = scalar_lea.vmem [#allocation0], 1200
    %v2214 = vld [vmem:[%s2213] sm:$0x3]
    %s2215 = scalar_lea.vmem %s1, 150
    %2216 = vst [vmem:[%s2215] ss:$328 sm:$0x3] %v2214
    %s2217 = scalar_lea.vmem [#allocation0], 1208
    %v2218 = vld [vmem:[%s2217] sm:$0x3]
    %s2219 = scalar_lea.vmem %s1, 151
    %2220 = vst [vmem:[%s2219] ss:$328 sm:$0x3] %v2218
    %s2221 = scalar_lea.vmem [#allocation0], 1216
    %v2222 = vld [vmem:[%s2221] sm:$0x3]
    %s2223 = scalar_lea.vmem %s1, 152
    %2224 = vst [vmem:[%s2223] ss:$328 sm:$0x3] %v2222
    %s2225 = scalar_lea.vmem [#allocation0], 1224
    %v2226 = vld [vmem:[%s2225] sm:$0x3]
    %s2227 = scalar_lea.vmem %s1, 153
    %2228 = vst [vmem:[%s2227] ss:$328 sm:$0x3] %v2226
    %s2229 = scalar_lea.vmem [#allocation0], 1232
    %v2230 = vld [vmem:[%s2229] sm:$0x3]
    %s2231 = scalar_lea.vmem %s1, 154
    %2232 = vst [vmem:[%s2231] ss:$328 sm:$0x3] %v2230
    %s2233 = scalar_lea.vmem [#allocation0], 1240
    %v2234 = vld [vmem:[%s2233] sm:$0x3]
    %s2235 = scalar_lea.vmem %s1, 155
    %2236 = vst [vmem:[%s2235] ss:$328 sm:$0x3] %v2234
    %s2237 = scalar_lea.vmem [#allocation0], 1248
    %v2238 = vld [vmem:[%s2237] sm:$0x3]
    %s2239 = scalar_lea.vmem %s1, 156
    %2240 = vst [vmem:[%s2239] ss:$328 sm:$0x3] %v2238
    %s2241 = scalar_lea.vmem [#allocation0], 1256
    %v2242 = vld [vmem:[%s2241] sm:$0x3]
    %s2243 = scalar_lea.vmem %s1, 157
    %2244 = vst [vmem:[%s2243] ss:$328 sm:$0x3] %v2242
    %s2245 = scalar_lea.vmem [#allocation0], 1264
    %v2246 = vld [vmem:[%s2245] sm:$0x3]
    %s2247 = scalar_lea.vmem %s1, 158
    %2248 = vst [vmem:[%s2247] ss:$328 sm:$0x3] %v2246
    %s2249 = scalar_lea.vmem [#allocation0], 1272
    %v2250 = vld [vmem:[%s2249] sm:$0x3]
    %s2251 = scalar_lea.vmem %s1, 159
    %2252 = vst [vmem:[%s2251] ss:$328 sm:$0x3] %v2250
    %s2253 = scalar_lea.vmem [#allocation0], 1280
    %v2254 = vld [vmem:[%s2253] sm:$0x3]
    %s2255 = scalar_lea.vmem %s1, 160
    %2256 = vst [vmem:[%s2255] ss:$328 sm:$0x3] %v2254
    %s2257 = scalar_lea.vmem [#allocation0], 1288
    %v2258 = vld [vmem:[%s2257] sm:$0x3]
    %s2259 = scalar_lea.vmem %s1, 161
    %2260 = vst [vmem:[%s2259] ss:$328 sm:$0x3] %v2258
    %s2261 = scalar_lea.vmem [#allocation0], 1296
    %v2262 = vld [vmem:[%s2261] sm:$0x3]
    %s2263 = scalar_lea.vmem %s1, 162
    %2264 = vst [vmem:[%s2263] ss:$328 sm:$0x3] %v2262
    %s2265 = scalar_lea.vmem [#allocation0], 1304
    %v2266 = vld [vmem:[%s2265] sm:$0x3]
    %s2267 = scalar_lea.vmem %s1, 163
    %2268 = vst [vmem:[%s2267] ss:$328 sm:$0x3] %v2266
    %s2269 = scalar_lea.vmem [#allocation0], 1312
    %v2270 = vld [vmem:[%s2269] sm:$0x3]
    %s2271 = scalar_lea.vmem %s1, 164
    %2272 = vst [vmem:[%s2271] ss:$328 sm:$0x3] %v2270
    %s2273 = scalar_lea.vmem [#allocation0], 1320
    %v2274 = vld [vmem:[%s2273] sm:$0x3]
    %s2275 = scalar_lea.vmem %s1, 165
    %2276 = vst [vmem:[%s2275] ss:$328 sm:$0x3] %v2274
    %s2277 = scalar_lea.vmem [#allocation0], 1328
    %v2278 = vld [vmem:[%s2277] sm:$0x3]
    %s2279 = scalar_lea.vmem %s1, 166
    %2280 = vst [vmem:[%s2279] ss:$328 sm:$0x3] %v2278
    %s2281 = scalar_lea.vmem [#allocation0], 1336
    %v2282 = vld [vmem:[%s2281] sm:$0x3]
    %s2283 = scalar_lea.vmem %s1, 167
    %2284 = vst [vmem:[%s2283] ss:$328 sm:$0x3] %v2282
    %s2285 = scalar_lea.vmem [#allocation0], 1344
    %v2286 = vld [vmem:[%s2285] sm:$0x3]
    %s2287 = scalar_lea.vmem %s1, 168
    %2288 = vst [vmem:[%s2287] ss:$328 sm:$0x3] %v2286
    %s2289 = scalar_lea.vmem [#allocation0], 1352
    %v2290 = vld [vmem:[%s2289] sm:$0x3]
    %s2291 = scalar_lea.vmem %s1, 169
    %2292 = vst [vmem:[%s2291] ss:$328 sm:$0x3] %v2290
    %s2293 = scalar_lea.vmem [#allocation0], 1360
    %v2294 = vld [vmem:[%s2293] sm:$0x3]
    %s2295 = scalar_lea.vmem %s1, 170
    %2296 = vst [vmem:[%s2295] ss:$328 sm:$0x3] %v2294
    %s2297 = scalar_lea.vmem [#allocation0], 1368
    %v2298 = vld [vmem:[%s2297] sm:$0x3]
    %s2299 = scalar_lea.vmem %s1, 171
    %2300 = vst [vmem:[%s2299] ss:$328 sm:$0x3] %v2298
    %s2301 = scalar_lea.vmem [#allocation0], 1376
    %v2302 = vld [vmem:[%s2301] sm:$0x3]
    %s2303 = scalar_lea.vmem %s1, 172
    %2304 = vst [vmem:[%s2303] ss:$328 sm:$0x3] %v2302
    %s2305 = scalar_lea.vmem [#allocation0], 1384
    %v2306 = vld [vmem:[%s2305] sm:$0x3]
    %s2307 = scalar_lea.vmem %s1, 173
    %2308 = vst [vmem:[%s2307] ss:$328 sm:$0x3] %v2306
    %s2309 = scalar_lea.vmem [#allocation0], 1392
    %v2310 = vld [vmem:[%s2309] sm:$0x3]
    %s2311 = scalar_lea.vmem %s1, 174
    %2312 = vst [vmem:[%s2311] ss:$328 sm:$0x3] %v2310
    %s2313 = scalar_lea.vmem [#allocation0], 1400
    %v2314 = vld [vmem:[%s2313] sm:$0x3]
    %s2315 = scalar_lea.vmem %s1, 175
    %2316 = vst [vmem:[%s2315] ss:$328 sm:$0x3] %v2314
    %s2317 = scalar_lea.vmem [#allocation0], 1408
    %v2318 = vld [vmem:[%s2317] sm:$0x3]
    %s2319 = scalar_lea.vmem %s1, 176
    %2320 = vst [vmem:[%s2319] ss:$328 sm:$0x3] %v2318
    %s2321 = scalar_lea.vmem [#allocation0], 1416
    %v2322 = vld [vmem:[%s2321] sm:$0x3]
    %s2323 = scalar_lea.vmem %s1, 177
    %2324 = vst [vmem:[%s2323] ss:$328 sm:$0x3] %v2322
    %s2325 = scalar_lea.vmem [#allocation0], 1424
    %v2326 = vld [vmem:[%s2325] sm:$0x3]
    %s2327 = scalar_lea.vmem %s1, 178
    %2328 = vst [vmem:[%s2327] ss:$328 sm:$0x3] %v2326
    %s2329 = scalar_lea.vmem [#allocation0], 1432
    %v2330 = vld [vmem:[%s2329] sm:$0x3]
    %s2331 = scalar_lea.vmem %s1, 179
    %2332 = vst [vmem:[%s2331] ss:$328 sm:$0x3] %v2330
    %s2333 = scalar_lea.vmem [#allocation0], 1440
    %v2334 = vld [vmem:[%s2333] sm:$0x3]
    %s2335 = scalar_lea.vmem %s1, 180
    %2336 = vst [vmem:[%s2335] ss:$328 sm:$0x3] %v2334
    %s2337 = scalar_lea.vmem [#allocation0], 1448
    %v2338 = vld [vmem:[%s2337] sm:$0x3]
    %s2339 = scalar_lea.vmem %s1, 181
    %2340 = vst [vmem:[%s2339] ss:$328 sm:$0x3] %v2338
    %s2341 = scalar_lea.vmem [#allocation0], 1456
    %v2342 = vld [vmem:[%s2341] sm:$0x3]
    %s2343 = scalar_lea.vmem %s1, 182
    %2344 = vst [vmem:[%s2343] ss:$328 sm:$0x3] %v2342
    %s2345 = scalar_lea.vmem [#allocation0], 1464
    %v2346 = vld [vmem:[%s2345] sm:$0x3]
    %s2347 = scalar_lea.vmem %s1, 183
    %2348 = vst [vmem:[%s2347] ss:$328 sm:$0x3] %v2346
    %s2349 = scalar_lea.vmem [#allocation0], 1472
    %v2350 = vld [vmem:[%s2349] sm:$0x3]
    %s2351 = scalar_lea.vmem %s1, 184
    %2352 = vst [vmem:[%s2351] ss:$328 sm:$0x3] %v2350
    %s2353 = scalar_lea.vmem [#allocation0], 1480
    %v2354 = vld [vmem:[%s2353] sm:$0x3]
    %s2355 = scalar_lea.vmem %s1, 185
    %2356 = vst [vmem:[%s2355] ss:$328 sm:$0x3] %v2354
    %s2357 = scalar_lea.vmem [#allocation0], 1488
    %v2358 = vld [vmem:[%s2357] sm:$0x3]
    %s2359 = scalar_lea.vmem %s1, 186
    %2360 = vst [vmem:[%s2359] ss:$328 sm:$0x3] %v2358
    %s2361 = scalar_lea.vmem [#allocation0], 1496
    %v2362 = vld [vmem:[%s2361] sm:$0x3]
    %s2363 = scalar_lea.vmem %s1, 187
    %2364 = vst [vmem:[%s2363] ss:$328 sm:$0x3] %v2362
    %s2365 = scalar_lea.vmem [#allocation0], 1504
    %v2366 = vld [vmem:[%s2365] sm:$0x3]
    %s2367 = scalar_lea.vmem %s1, 188
    %2368 = vst [vmem:[%s2367] ss:$328 sm:$0x3] %v2366
    %s2369 = scalar_lea.vmem [#allocation0], 1512
    %v2370 = vld [vmem:[%s2369] sm:$0x3]
    %s2371 = scalar_lea.vmem %s1, 189
    %2372 = vst [vmem:[%s2371] ss:$328 sm:$0x3] %v2370
    %s2373 = scalar_lea.vmem [#allocation0], 1520
    %v2374 = vld [vmem:[%s2373] sm:$0x3]
    %s2375 = scalar_lea.vmem %s1, 190
    %2376 = vst [vmem:[%s2375] ss:$328 sm:$0x3] %v2374
    %s2377 = scalar_lea.vmem [#allocation0], 1528
    %v2378 = vld [vmem:[%s2377] sm:$0x3]
    %s2379 = scalar_lea.vmem %s1, 191
    %2380 = vst [vmem:[%s2379] ss:$328 sm:$0x3] %v2378
    %s2381 = scalar_lea.vmem [#allocation0], 1536
    %v2382 = vld [vmem:[%s2381] sm:$0x3]
    %s2383 = scalar_lea.vmem %s1, 192
    %2384 = vst [vmem:[%s2383] ss:$328 sm:$0x3] %v2382
    %s2385 = scalar_lea.vmem [#allocation0], 1544
    %v2386 = vld [vmem:[%s2385] sm:$0x3]
    %s2387 = scalar_lea.vmem %s1, 193
    %2388 = vst [vmem:[%s2387] ss:$328 sm:$0x3] %v2386
    %s2389 = scalar_lea.vmem [#allocation0], 1552
    %v2390 = vld [vmem:[%s2389] sm:$0x3]
    %s2391 = scalar_lea.vmem %s1, 194
    %2392 = vst [vmem:[%s2391] ss:$328 sm:$0x3] %v2390
    %s2393 = scalar_lea.vmem [#allocation0], 1560
    %v2394 = vld [vmem:[%s2393] sm:$0x3]
    %s2395 = scalar_lea.vmem %s1, 195
    %2396 = vst [vmem:[%s2395] ss:$328 sm:$0x3] %v2394
    %s2397 = scalar_lea.vmem [#allocation0], 1568
    %v2398 = vld [vmem:[%s2397] sm:$0x3]
    %s2399 = scalar_lea.vmem %s1, 196
    %2400 = vst [vmem:[%s2399] ss:$328 sm:$0x3] %v2398
    %s2401 = scalar_lea.vmem [#allocation0], 1576
    %v2402 = vld [vmem:[%s2401] sm:$0x3]
    %s2403 = scalar_lea.vmem %s1, 197
    %2404 = vst [vmem:[%s2403] ss:$328 sm:$0x3] %v2402
    %s2405 = scalar_lea.vmem [#allocation0], 1584
    %v2406 = vld [vmem:[%s2405] sm:$0x3]
    %s2407 = scalar_lea.vmem %s1, 198
    %2408 = vst [vmem:[%s2407] ss:$328 sm:$0x3] %v2406
    %s2409 = scalar_lea.vmem [#allocation0], 1592
    %v2410 = vld [vmem:[%s2409] sm:$0x3]
    %s2411 = scalar_lea.vmem %s1, 199
    %2412 = vst [vmem:[%s2411] ss:$328 sm:$0x3] %v2410
    %s2413 = scalar_lea.vmem [#allocation0], 1600
    %v2414 = vld [vmem:[%s2413] sm:$0x3]
    %s2415 = scalar_lea.vmem %s1, 200
    %2416 = vst [vmem:[%s2415] ss:$328 sm:$0x3] %v2414
    %s2417 = scalar_lea.vmem [#allocation0], 1608
    %v2418 = vld [vmem:[%s2417] sm:$0x3]
    %s2419 = scalar_lea.vmem %s1, 201
    %2420 = vst [vmem:[%s2419] ss:$328 sm:$0x3] %v2418
    %s2421 = scalar_lea.vmem [#allocation0], 1616
    %v2422 = vld [vmem:[%s2421] sm:$0x3]
    %s2423 = scalar_lea.vmem %s1, 202
    %2424 = vst [vmem:[%s2423] ss:$328 sm:$0x3] %v2422
    %s2425 = scalar_lea.vmem [#allocation0], 1624
    %v2426 = vld [vmem:[%s2425] sm:$0x3]
    %s2427 = scalar_lea.vmem %s1, 203
    %2428 = vst [vmem:[%s2427] ss:$328 sm:$0x3] %v2426
    %s2429 = scalar_lea.vmem [#allocation0], 1632
    %v2430 = vld [vmem:[%s2429] sm:$0x3]
    %s2431 = scalar_lea.vmem %s1, 204
    %2432 = vst [vmem:[%s2431] ss:$328 sm:$0x3] %v2430
    %s2433 = scalar_lea.vmem [#allocation0], 1640
    %v2434 = vld [vmem:[%s2433] sm:$0x3]
    %s2435 = scalar_lea.vmem %s1, 205
    %2436 = vst [vmem:[%s2435] ss:$328 sm:$0x3] %v2434
    %s2437 = scalar_lea.vmem [#allocation0], 1648
    %v2438 = vld [vmem:[%s2437] sm:$0x3]
    %s2439 = scalar_lea.vmem %s1, 206
    %2440 = vst [vmem:[%s2439] ss:$328 sm:$0x3] %v2438
    %s2441 = scalar_lea.vmem [#allocation0], 1656
    %v2442 = vld [vmem:[%s2441] sm:$0x3]
    %s2443 = scalar_lea.vmem %s1, 207
    %2444 = vst [vmem:[%s2443] ss:$328 sm:$0x3] %v2442
    %s2445 = scalar_lea.vmem [#allocation0], 1664
    %v2446 = vld [vmem:[%s2445] sm:$0x3]
    %s2447 = scalar_lea.vmem %s1, 208
    %2448 = vst [vmem:[%s2447] ss:$328 sm:$0x3] %v2446
    %s2449 = scalar_lea.vmem [#allocation0], 1672
    %v2450 = vld [vmem:[%s2449] sm:$0x3]
    %s2451 = scalar_lea.vmem %s1, 209
    %2452 = vst [vmem:[%s2451] ss:$328 sm:$0x3] %v2450
    %s2453 = scalar_lea.vmem [#allocation0], 1680
    %v2454 = vld [vmem:[%s2453] sm:$0x3]
    %s2455 = scalar_lea.vmem %s1, 210
    %2456 = vst [vmem:[%s2455] ss:$328 sm:$0x3] %v2454
    %s2457 = scalar_lea.vmem [#allocation0], 1688
    %v2458 = vld [vmem:[%s2457] sm:$0x3]
    %s2459 = scalar_lea.vmem %s1, 211
    %2460 = vst [vmem:[%s2459] ss:$328 sm:$0x3] %v2458
    %s2461 = scalar_lea.vmem [#allocation0], 1696
    %v2462 = vld [vmem:[%s2461] sm:$0x3]
    %s2463 = scalar_lea.vmem %s1, 212
    %2464 = vst [vmem:[%s2463] ss:$328 sm:$0x3] %v2462
    %s2465 = scalar_lea.vmem [#allocation0], 1704
    %v2466 = vld [vmem:[%s2465] sm:$0x3]
    %s2467 = scalar_lea.vmem %s1, 213
    %2468 = vst [vmem:[%s2467] ss:$328 sm:$0x3] %v2466
    %s2469 = scalar_lea.vmem [#allocation0], 1712
    %v2470 = vld [vmem:[%s2469] sm:$0x3]
    %s2471 = scalar_lea.vmem %s1, 214
    %2472 = vst [vmem:[%s2471] ss:$328 sm:$0x3] %v2470
    %s2473 = scalar_lea.vmem [#allocation0], 1720
    %v2474 = vld [vmem:[%s2473] sm:$0x3]
    %s2475 = scalar_lea.vmem %s1, 215
    %2476 = vst [vmem:[%s2475] ss:$328 sm:$0x3] %v2474
    %s2477 = scalar_lea.vmem [#allocation0], 1728
    %v2478 = vld [vmem:[%s2477] sm:$0x3]
    %s2479 = scalar_lea.vmem %s1, 216
    %2480 = vst [vmem:[%s2479] ss:$328 sm:$0x3] %v2478
    %s2481 = scalar_lea.vmem [#allocation0], 1736
    %v2482 = vld [vmem:[%s2481] sm:$0x3]
    %s2483 = scalar_lea.vmem %s1, 217
    %2484 = vst [vmem:[%s2483] ss:$328 sm:$0x3] %v2482
    %s2485 = scalar_lea.vmem [#allocation0], 1744
    %v2486 = vld [vmem:[%s2485] sm:$0x3]
    %s2487 = scalar_lea.vmem %s1, 218
    %2488 = vst [vmem:[%s2487] ss:$328 sm:$0x3] %v2486
    %s2489 = scalar_lea.vmem [#allocation0], 1752
    %v2490 = vld [vmem:[%s2489] sm:$0x3]
    %s2491 = scalar_lea.vmem %s1, 219
    %2492 = vst [vmem:[%s2491] ss:$328 sm:$0x3] %v2490
    %s2493 = scalar_lea.vmem [#allocation0], 1760
    %v2494 = vld [vmem:[%s2493] sm:$0x3]
    %s2495 = scalar_lea.vmem %s1, 220
    %2496 = vst [vmem:[%s2495] ss:$328 sm:$0x3] %v2494
    %s2497 = scalar_lea.vmem [#allocation0], 1768
    %v2498 = vld [vmem:[%s2497] sm:$0x3]
    %s2499 = scalar_lea.vmem %s1, 221
    %2500 = vst [vmem:[%s2499] ss:$328 sm:$0x3] %v2498
    %s2501 = scalar_lea.vmem [#allocation0], 1776
    %v2502 = vld [vmem:[%s2501] sm:$0x3]
    %s2503 = scalar_lea.vmem %s1, 222
    %2504 = vst [vmem:[%s2503] ss:$328 sm:$0x3] %v2502
    %s2505 = scalar_lea.vmem [#allocation0], 1784
    %v2506 = vld [vmem:[%s2505] sm:$0x3]
    %s2507 = scalar_lea.vmem %s1, 223
    %2508 = vst [vmem:[%s2507] ss:$328 sm:$0x3] %v2506
    %s2509 = scalar_lea.vmem [#allocation0], 1792
    %v2510 = vld [vmem:[%s2509] sm:$0x3]
    %s2511 = scalar_lea.vmem %s1, 224
    %2512 = vst [vmem:[%s2511] ss:$328 sm:$0x3] %v2510
    %s2513 = scalar_lea.vmem [#allocation0], 1800
    %v2514 = vld [vmem:[%s2513] sm:$0x3]
    %s2515 = scalar_lea.vmem %s1, 225
    %2516 = vst [vmem:[%s2515] ss:$328 sm:$0x3] %v2514
    %s2517 = scalar_lea.vmem [#allocation0], 1808
    %v2518 = vld [vmem:[%s2517] sm:$0x3]
    %s2519 = scalar_lea.vmem %s1, 226
    %2520 = vst [vmem:[%s2519] ss:$328 sm:$0x3] %v2518
    %s2521 = scalar_lea.vmem [#allocation0], 1816
    %v2522 = vld [vmem:[%s2521] sm:$0x3]
    %s2523 = scalar_lea.vmem %s1, 227
    %2524 = vst [vmem:[%s2523] ss:$328 sm:$0x3] %v2522
    %s2525 = scalar_lea.vmem [#allocation0], 1824
    %v2526 = vld [vmem:[%s2525] sm:$0x3]
    %s2527 = scalar_lea.vmem %s1, 228
    %2528 = vst [vmem:[%s2527] ss:$328 sm:$0x3] %v2526
    %s2529 = scalar_lea.vmem [#allocation0], 1832
    %v2530 = vld [vmem:[%s2529] sm:$0x3]
    %s2531 = scalar_lea.vmem %s1, 229
    %2532 = vst [vmem:[%s2531] ss:$328 sm:$0x3] %v2530
    %s2533 = scalar_lea.vmem [#allocation0], 1840
    %v2534 = vld [vmem:[%s2533] sm:$0x3]
    %s2535 = scalar_lea.vmem %s1, 230
    %2536 = vst [vmem:[%s2535] ss:$328 sm:$0x3] %v2534
    %s2537 = scalar_lea.vmem [#allocation0], 1848
    %v2538 = vld [vmem:[%s2537] sm:$0x3]
    %s2539 = scalar_lea.vmem %s1, 231
    %2540 = vst [vmem:[%s2539] ss:$328 sm:$0x3] %v2538
    %s2541 = scalar_lea.vmem [#allocation0], 1856
    %v2542 = vld [vmem:[%s2541] sm:$0x3]
    %s2543 = scalar_lea.vmem %s1, 232
    %2544 = vst [vmem:[%s2543] ss:$328 sm:$0x3] %v2542
    %s2545 = scalar_lea.vmem [#allocation0], 1864
    %v2546 = vld [vmem:[%s2545] sm:$0x3]
    %s2547 = scalar_lea.vmem %s1, 233
    %2548 = vst [vmem:[%s2547] ss:$328 sm:$0x3] %v2546
    %s2549 = scalar_lea.vmem [#allocation0], 1872
    %v2550 = vld [vmem:[%s2549] sm:$0x3]
    %s2551 = scalar_lea.vmem %s1, 234
    %2552 = vst [vmem:[%s2551] ss:$328 sm:$0x3] %v2550
    %s2553 = scalar_lea.vmem [#allocation0], 1880
    %v2554 = vld [vmem:[%s2553] sm:$0x3]
    %s2555 = scalar_lea.vmem %s1, 235
    %2556 = vst [vmem:[%s2555] ss:$328 sm:$0x3] %v2554
    %s2557 = scalar_lea.vmem [#allocation0], 1888
    %v2558 = vld [vmem:[%s2557] sm:$0x3]
    %s2559 = scalar_lea.vmem %s1, 236
    %2560 = vst [vmem:[%s2559] ss:$328 sm:$0x3] %v2558
    %s2561 = scalar_lea.vmem [#allocation0], 1896
    %v2562 = vld [vmem:[%s2561] sm:$0x3]
    %s2563 = scalar_lea.vmem %s1, 237
    %2564 = vst [vmem:[%s2563] ss:$328 sm:$0x3] %v2562
    %s2565 = scalar_lea.vmem [#allocation0], 1904
    %v2566 = vld [vmem:[%s2565] sm:$0x3]
    %s2567 = scalar_lea.vmem %s1, 238
    %2568 = vst [vmem:[%s2567] ss:$328 sm:$0x3] %v2566
    %s2569 = scalar_lea.vmem [#allocation0], 1912
    %v2570 = vld [vmem:[%s2569] sm:$0x3]
    %s2571 = scalar_lea.vmem %s1, 239
    %2572 = vst [vmem:[%s2571] ss:$328 sm:$0x3] %v2570
    %s2573 = scalar_lea.vmem [#allocation0], 1920
    %v2574 = vld [vmem:[%s2573] sm:$0x3]
    %s2575 = scalar_lea.vmem %s1, 240
    %2576 = vst [vmem:[%s2575] ss:$328 sm:$0x3] %v2574
    %s2577 = scalar_lea.vmem [#allocation0], 1928
    %v2578 = vld [vmem:[%s2577] sm:$0x3]
    %s2579 = scalar_lea.vmem %s1, 241
    %2580 = vst [vmem:[%s2579] ss:$328 sm:$0x3] %v2578
    %s2581 = scalar_lea.vmem [#allocation0], 1936
    %v2582 = vld [vmem:[%s2581] sm:$0x3]
    %s2583 = scalar_lea.vmem %s1, 242
    %2584 = vst [vmem:[%s2583] ss:$328 sm:$0x3] %v2582
    %s2585 = scalar_lea.vmem [#allocation0], 1944
    %v2586 = vld [vmem:[%s2585] sm:$0x3]
    %s2587 = scalar_lea.vmem %s1, 243
    %2588 = vst [vmem:[%s2587] ss:$328 sm:$0x3] %v2586
    %s2589 = scalar_lea.vmem [#allocation0], 1952
    %v2590 = vld [vmem:[%s2589] sm:$0x3]
    %s2591 = scalar_lea.vmem %s1, 244
    %2592 = vst [vmem:[%s2591] ss:$328 sm:$0x3] %v2590
    %s2593 = scalar_lea.vmem [#allocation0], 1960
    %v2594 = vld [vmem:[%s2593] sm:$0x3]
    %s2595 = scalar_lea.vmem %s1, 245
    %2596 = vst [vmem:[%s2595] ss:$328 sm:$0x3] %v2594
    %s2597 = scalar_lea.vmem [#allocation0], 1968
    %v2598 = vld [vmem:[%s2597] sm:$0x3]
    %s2599 = scalar_lea.vmem %s1, 246
    %2600 = vst [vmem:[%s2599] ss:$328 sm:$0x3] %v2598
    %s2601 = scalar_lea.vmem [#allocation0], 1976
    %v2602 = vld [vmem:[%s2601] sm:$0x3]
    %s2603 = scalar_lea.vmem %s1, 247
    %2604 = vst [vmem:[%s2603] ss:$328 sm:$0x3] %v2602
    %s2605 = scalar_lea.vmem [#allocation0], 1984
    %v2606 = vld [vmem:[%s2605] sm:$0x3]
    %s2607 = scalar_lea.vmem %s1, 248
    %2608 = vst [vmem:[%s2607] ss:$328 sm:$0x3] %v2606
    %s2609 = scalar_lea.vmem [#allocation0], 1992
    %v2610 = vld [vmem:[%s2609] sm:$0x3]
    %s2611 = scalar_lea.vmem %s1, 249
    %2612 = vst [vmem:[%s2611] ss:$328 sm:$0x3] %v2610
    %s2613 = scalar_lea.vmem [#allocation0], 2000
    %v2614 = vld [vmem:[%s2613] sm:$0x3]
    %s2615 = scalar_lea.vmem %s1, 250
    %2616 = vst [vmem:[%s2615] ss:$328 sm:$0x3] %v2614
    %s2617 = scalar_lea.vmem [#allocation0], 2008
    %v2618 = vld [vmem:[%s2617] sm:$0x3]
    %s2619 = scalar_lea.vmem %s1, 251
    %2620 = vst [vmem:[%s2619] ss:$328 sm:$0x3] %v2618
    %s2621 = scalar_lea.vmem [#allocation0], 2016
    %v2622 = vld [vmem:[%s2621] sm:$0x3]
    %s2623 = scalar_lea.vmem %s1, 252
    %2624 = vst [vmem:[%s2623] ss:$328 sm:$0x3] %v2622
    %s2625 = scalar_lea.vmem [#allocation0], 2024
    %v2626 = vld [vmem:[%s2625] sm:$0x3]
    %s2627 = scalar_lea.vmem %s1, 253
    %2628 = vst [vmem:[%s2627] ss:$328 sm:$0x3] %v2626
    %s2629 = scalar_lea.vmem [#allocation0], 2032
    %v2630 = vld [vmem:[%s2629] sm:$0x3]
    %s2631 = scalar_lea.vmem %s1, 254
    %2632 = vst [vmem:[%s2631] ss:$328 sm:$0x3] %v2630
    %s2633 = scalar_lea.vmem [#allocation0], 2040
    %v2634 = vld [vmem:[%s2633] sm:$0x3]
    %s2635 = scalar_lea.vmem %s1, 255
    %2636 = vst [vmem:[%s2635] ss:$328 sm:$0x3] %v2634
    %s2637 = scalar_lea.vmem [#allocation0], 2048
    %v2638 = vld [vmem:[%s2637] sm:$0x3]
    %s2639 = scalar_lea.vmem %s1, 256
    %2640 = vst [vmem:[%s2639] ss:$328 sm:$0x3] %v2638
    %s2641 = scalar_lea.vmem [#allocation0], 2056
    %v2642 = vld [vmem:[%s2641] sm:$0x3]
    %s2643 = scalar_lea.vmem %s1, 257
    %2644 = vst [vmem:[%s2643] ss:$328 sm:$0x3] %v2642
    %s2645 = scalar_lea.vmem [#allocation0], 2064
    %v2646 = vld [vmem:[%s2645] sm:$0x3]
    %s2647 = scalar_lea.vmem %s1, 258
    %2648 = vst [vmem:[%s2647] ss:$328 sm:$0x3] %v2646
    %s2649 = scalar_lea.vmem [#allocation0], 2072
    %v2650 = vld [vmem:[%s2649] sm:$0x3]
    %s2651 = scalar_lea.vmem %s1, 259
    %2652 = vst [vmem:[%s2651] ss:$328 sm:$0x3] %v2650
    %s2653 = scalar_lea.vmem [#allocation0], 2080
    %v2654 = vld [vmem:[%s2653] sm:$0x3]
    %s2655 = scalar_lea.vmem %s1, 260
    %2656 = vst [vmem:[%s2655] ss:$328 sm:$0x3] %v2654
    %s2657 = scalar_lea.vmem [#allocation0], 2088
    %v2658 = vld [vmem:[%s2657] sm:$0x3]
    %s2659 = scalar_lea.vmem %s1, 261
    %2660 = vst [vmem:[%s2659] ss:$328 sm:$0x3] %v2658
    %s2661 = scalar_lea.vmem [#allocation0], 2096
    %v2662 = vld [vmem:[%s2661] sm:$0x3]
    %s2663 = scalar_lea.vmem %s1, 262
    %2664 = vst [vmem:[%s2663] ss:$328 sm:$0x3] %v2662
    %s2665 = scalar_lea.vmem [#allocation0], 2104
    %v2666 = vld [vmem:[%s2665] sm:$0x3]
    %s2667 = scalar_lea.vmem %s1, 263
    %2668 = vst [vmem:[%s2667] ss:$328 sm:$0x3] %v2666
    %s2669 = scalar_lea.vmem [#allocation0], 2112
    %v2670 = vld [vmem:[%s2669] sm:$0x3]
    %s2671 = scalar_lea.vmem %s1, 264
    %2672 = vst [vmem:[%s2671] ss:$328 sm:$0x3] %v2670
    %s2673 = scalar_lea.vmem [#allocation0], 2120
    %v2674 = vld [vmem:[%s2673] sm:$0x3]
    %s2675 = scalar_lea.vmem %s1, 265
    %2676 = vst [vmem:[%s2675] ss:$328 sm:$0x3] %v2674
    %s2677 = scalar_lea.vmem [#allocation0], 2128
    %v2678 = vld [vmem:[%s2677] sm:$0x3]
    %s2679 = scalar_lea.vmem %s1, 266
    %2680 = vst [vmem:[%s2679] ss:$328 sm:$0x3] %v2678
    %s2681 = scalar_lea.vmem [#allocation0], 2136
    %v2682 = vld [vmem:[%s2681] sm:$0x3]
    %s2683 = scalar_lea.vmem %s1, 267
    %2684 = vst [vmem:[%s2683] ss:$328 sm:$0x3] %v2682
    %s2685 = scalar_lea.vmem [#allocation0], 2144
    %v2686 = vld [vmem:[%s2685] sm:$0x3]
    %s2687 = scalar_lea.vmem %s1, 268
    %2688 = vst [vmem:[%s2687] ss:$328 sm:$0x3] %v2686
    %s2689 = scalar_lea.vmem [#allocation0], 2152
    %v2690 = vld [vmem:[%s2689] sm:$0x3]
    %s2691 = scalar_lea.vmem %s1, 269
    %2692 = vst [vmem:[%s2691] ss:$328 sm:$0x3] %v2690
    %s2693 = scalar_lea.vmem [#allocation0], 2160
    %v2694 = vld [vmem:[%s2693] sm:$0x3]
    %s2695 = scalar_lea.vmem %s1, 270
    %2696 = vst [vmem:[%s2695] ss:$328 sm:$0x3] %v2694
    %s2697 = scalar_lea.vmem [#allocation0], 2168
    %v2698 = vld [vmem:[%s2697] sm:$0x3]
    %s2699 = scalar_lea.vmem %s1, 271
    %2700 = vst [vmem:[%s2699] ss:$328 sm:$0x3] %v2698
    %s2701 = scalar_lea.vmem [#allocation0], 2176
    %v2702 = vld [vmem:[%s2701] sm:$0x3]
    %s2703 = scalar_lea.vmem %s1, 272
    %2704 = vst [vmem:[%s2703] ss:$328 sm:$0x3] %v2702
    %s2705 = scalar_lea.vmem [#allocation0], 2184
    %v2706 = vld [vmem:[%s2705] sm:$0x3]
    %s2707 = scalar_lea.vmem %s1, 273
    %2708 = vst [vmem:[%s2707] ss:$328 sm:$0x3] %v2706
    %s2709 = scalar_lea.vmem [#allocation0], 2192
    %v2710 = vld [vmem:[%s2709] sm:$0x3]
    %s2711 = scalar_lea.vmem %s1, 274
    %2712 = vst [vmem:[%s2711] ss:$328 sm:$0x3] %v2710
    %s2713 = scalar_lea.vmem [#allocation0], 2200
    %v2714 = vld [vmem:[%s2713] sm:$0x3]
    %s2715 = scalar_lea.vmem %s1, 275
    %2716 = vst [vmem:[%s2715] ss:$328 sm:$0x3] %v2714
    %s2717 = scalar_lea.vmem [#allocation0], 2208
    %v2718 = vld [vmem:[%s2717] sm:$0x3]
    %s2719 = scalar_lea.vmem %s1, 276
    %2720 = vst [vmem:[%s2719] ss:$328 sm:$0x3] %v2718
    %s2721 = scalar_lea.vmem [#allocation0], 2216
    %v2722 = vld [vmem:[%s2721] sm:$0x3]
    %s2723 = scalar_lea.vmem %s1, 277
    %2724 = vst [vmem:[%s2723] ss:$328 sm:$0x3] %v2722
    %s2725 = scalar_lea.vmem [#allocation0], 2224
    %v2726 = vld [vmem:[%s2725] sm:$0x3]
    %s2727 = scalar_lea.vmem %s1, 278
    %2728 = vst [vmem:[%s2727] ss:$328 sm:$0x3] %v2726
    %s2729 = scalar_lea.vmem [#allocation0], 2232
    %v2730 = vld [vmem:[%s2729] sm:$0x3]
    %s2731 = scalar_lea.vmem %s1, 279
    %2732 = vst [vmem:[%s2731] ss:$328 sm:$0x3] %v2730
    %s2733 = scalar_lea.vmem [#allocation0], 2240
    %v2734 = vld [vmem:[%s2733] sm:$0x3]
    %s2735 = scalar_lea.vmem %s1, 280
    %2736 = vst [vmem:[%s2735] ss:$328 sm:$0x3] %v2734
    %s2737 = scalar_lea.vmem [#allocation0], 2248
    %v2738 = vld [vmem:[%s2737] sm:$0x3]
    %s2739 = scalar_lea.vmem %s1, 281
    %2740 = vst [vmem:[%s2739] ss:$328 sm:$0x3] %v2738
    %s2741 = scalar_lea.vmem [#allocation0], 2256
    %v2742 = vld [vmem:[%s2741] sm:$0x3]
    %s2743 = scalar_lea.vmem %s1, 282
    %2744 = vst [vmem:[%s2743] ss:$328 sm:$0x3] %v2742
    %s2745 = scalar_lea.vmem [#allocation0], 2264
    %v2746 = vld [vmem:[%s2745] sm:$0x3]
    %s2747 = scalar_lea.vmem %s1, 283
    %2748 = vst [vmem:[%s2747] ss:$328 sm:$0x3] %v2746
    %s2749 = scalar_lea.vmem [#allocation0], 2272
    %v2750 = vld [vmem:[%s2749] sm:$0x3]
    %s2751 = scalar_lea.vmem %s1, 284
    %2752 = vst [vmem:[%s2751] ss:$328 sm:$0x3] %v2750
    %s2753 = scalar_lea.vmem [#allocation0], 2280
    %v2754 = vld [vmem:[%s2753] sm:$0x3]
    %s2755 = scalar_lea.vmem %s1, 285
    %2756 = vst [vmem:[%s2755] ss:$328 sm:$0x3] %v2754
    %s2757 = scalar_lea.vmem [#allocation0], 2288
    %v2758 = vld [vmem:[%s2757] sm:$0x3]
    %s2759 = scalar_lea.vmem %s1, 286
    %2760 = vst [vmem:[%s2759] ss:$328 sm:$0x3] %v2758
    %s2761 = scalar_lea.vmem [#allocation0], 2296
    %v2762 = vld [vmem:[%s2761] sm:$0x3]
    %s2763 = scalar_lea.vmem %s1, 287
    %2764 = vst [vmem:[%s2763] ss:$328 sm:$0x3] %v2762
    %s2765 = scalar_lea.vmem [#allocation0], 2304
    %v2766 = vld [vmem:[%s2765] sm:$0x3]
    %s2767 = scalar_lea.vmem %s1, 288
    %2768 = vst [vmem:[%s2767] ss:$328 sm:$0x3] %v2766
    %s2769 = scalar_lea.vmem [#allocation0], 2312
    %v2770 = vld [vmem:[%s2769] sm:$0x3]
    %s2771 = scalar_lea.vmem %s1, 289
    %2772 = vst [vmem:[%s2771] ss:$328 sm:$0x3] %v2770
    %s2773 = scalar_lea.vmem [#allocation0], 2320
    %v2774 = vld [vmem:[%s2773] sm:$0x3]
    %s2775 = scalar_lea.vmem %s1, 290
    %2776 = vst [vmem:[%s2775] ss:$328 sm:$0x3] %v2774
    %s2777 = scalar_lea.vmem [#allocation0], 2328
    %v2778 = vld [vmem:[%s2777] sm:$0x3]
    %s2779 = scalar_lea.vmem %s1, 291
    %2780 = vst [vmem:[%s2779] ss:$328 sm:$0x3] %v2778
    %s2781 = scalar_lea.vmem [#allocation0], 2336
    %v2782 = vld [vmem:[%s2781] sm:$0x3]
    %s2783 = scalar_lea.vmem %s1, 292
    %2784 = vst [vmem:[%s2783] ss:$328 sm:$0x3] %v2782
    %s2785 = scalar_lea.vmem [#allocation0], 2344
    %v2786 = vld [vmem:[%s2785] sm:$0x3]
    %s2787 = scalar_lea.vmem %s1, 293
    %2788 = vst [vmem:[%s2787] ss:$328 sm:$0x3] %v2786
    %s2789 = scalar_lea.vmem [#allocation0], 2352
    %v2790 = vld [vmem:[%s2789] sm:$0x3]
    %s2791 = scalar_lea.vmem %s1, 294
    %2792 = vst [vmem:[%s2791] ss:$328 sm:$0x3] %v2790
    %s2793 = scalar_lea.vmem [#allocation0], 2360
    %v2794 = vld [vmem:[%s2793] sm:$0x3]
    %s2795 = scalar_lea.vmem %s1, 295
    %2796 = vst [vmem:[%s2795] ss:$328 sm:$0x3] %v2794
    %s2797 = scalar_lea.vmem [#allocation0], 2368
    %v2798 = vld [vmem:[%s2797] sm:$0x3]
    %s2799 = scalar_lea.vmem %s1, 296
    %2800 = vst [vmem:[%s2799] ss:$328 sm:$0x3] %v2798
    %s2801 = scalar_lea.vmem [#allocation0], 2376
    %v2802 = vld [vmem:[%s2801] sm:$0x3]
    %s2803 = scalar_lea.vmem %s1, 297
    %2804 = vst [vmem:[%s2803] ss:$328 sm:$0x3] %v2802
    %s2805 = scalar_lea.vmem [#allocation0], 2384
    %v2806 = vld [vmem:[%s2805] sm:$0x3]
    %s2807 = scalar_lea.vmem %s1, 298
    %2808 = vst [vmem:[%s2807] ss:$328 sm:$0x3] %v2806
    %s2809 = scalar_lea.vmem [#allocation0], 2392
    %v2810 = vld [vmem:[%s2809] sm:$0x3]
    %s2811 = scalar_lea.vmem %s1, 299
    %2812 = vst [vmem:[%s2811] ss:$328 sm:$0x3] %v2810
    %s2813 = scalar_lea.vmem [#allocation0], 2400
    %v2814 = vld [vmem:[%s2813] sm:$0x3]
    %s2815 = scalar_lea.vmem %s1, 300
    %2816 = vst [vmem:[%s2815] ss:$328 sm:$0x3] %v2814
    %s2817 = scalar_lea.vmem [#allocation0], 2408
    %v2818 = vld [vmem:[%s2817] sm:$0x3]
    %s2819 = scalar_lea.vmem %s1, 301
    %2820 = vst [vmem:[%s2819] ss:$328 sm:$0x3] %v2818
    %s2821 = scalar_lea.vmem [#allocation0], 2416
    %v2822 = vld [vmem:[%s2821] sm:$0x3]
    %s2823 = scalar_lea.vmem %s1, 302
    %2824 = vst [vmem:[%s2823] ss:$328 sm:$0x3] %v2822
    %s2825 = scalar_lea.vmem [#allocation0], 2424
    %v2826 = vld [vmem:[%s2825] sm:$0x3]
    %s2827 = scalar_lea.vmem %s1, 303
    %2828 = vst [vmem:[%s2827] ss:$328 sm:$0x3] %v2826
    %s2829 = scalar_lea.vmem [#allocation0], 2432
    %v2830 = vld [vmem:[%s2829] sm:$0x3]
    %s2831 = scalar_lea.vmem %s1, 304
    %2832 = vst [vmem:[%s2831] ss:$328 sm:$0x3] %v2830
    %s2833 = scalar_lea.vmem [#allocation0], 2440
    %v2834 = vld [vmem:[%s2833] sm:$0x3]
    %s2835 = scalar_lea.vmem %s1, 305
    %2836 = vst [vmem:[%s2835] ss:$328 sm:$0x3] %v2834
    %s2837 = scalar_lea.vmem [#allocation0], 2448
    %v2838 = vld [vmem:[%s2837] sm:$0x3]
    %s2839 = scalar_lea.vmem %s1, 306
    %2840 = vst [vmem:[%s2839] ss:$328 sm:$0x3] %v2838
    %s2841 = scalar_lea.vmem [#allocation0], 2456
    %v2842 = vld [vmem:[%s2841] sm:$0x3]
    %s2843 = scalar_lea.vmem %s1, 307
    %2844 = vst [vmem:[%s2843] ss:$328 sm:$0x3] %v2842
    %s2845 = scalar_lea.vmem [#allocation0], 2464
    %v2846 = vld [vmem:[%s2845] sm:$0x3]
    %s2847 = scalar_lea.vmem %s1, 308
    %2848 = vst [vmem:[%s2847] ss:$328 sm:$0x3] %v2846
    %s2849 = scalar_lea.vmem [#allocation0], 2472
    %v2850 = vld [vmem:[%s2849] sm:$0x3]
    %s2851 = scalar_lea.vmem %s1, 309
    %2852 = vst [vmem:[%s2851] ss:$328 sm:$0x3] %v2850
    %s2853 = scalar_lea.vmem [#allocation0], 2480
    %v2854 = vld [vmem:[%s2853] sm:$0x3]
    %s2855 = scalar_lea.vmem %s1, 310
    %2856 = vst [vmem:[%s2855] ss:$328 sm:$0x3] %v2854
    %s2857 = scalar_lea.vmem [#allocation0], 2488
    %v2858 = vld [vmem:[%s2857] sm:$0x3]
    %s2859 = scalar_lea.vmem %s1, 311
    %2860 = vst [vmem:[%s2859] ss:$328 sm:$0x3] %v2858
    %s2861 = scalar_lea.vmem [#allocation0], 2496
    %v2862 = vld [vmem:[%s2861] sm:$0x3]
    %s2863 = scalar_lea.vmem %s1, 312
    %2864 = vst [vmem:[%s2863] ss:$328 sm:$0x3] %v2862
    %s2865 = scalar_lea.vmem [#allocation0], 2504
    %v2866 = vld [vmem:[%s2865] sm:$0x3]
    %s2867 = scalar_lea.vmem %s1, 313
    %2868 = vst [vmem:[%s2867] ss:$328 sm:$0x3] %v2866
    %s2869 = scalar_lea.vmem [#allocation0], 2512
    %v2870 = vld [vmem:[%s2869] sm:$0x3]
    %s2871 = scalar_lea.vmem %s1, 314
    %2872 = vst [vmem:[%s2871] ss:$328 sm:$0x3] %v2870
    %s2873 = scalar_lea.vmem [#allocation0], 2520
    %v2874 = vld [vmem:[%s2873] sm:$0x3]
    %s2875 = scalar_lea.vmem %s1, 315
    %2876 = vst [vmem:[%s2875] ss:$328 sm:$0x3] %v2874
    %s2877 = scalar_lea.vmem [#allocation0], 2528
    %v2878 = vld [vmem:[%s2877] sm:$0x3]
    %s2879 = scalar_lea.vmem %s1, 316
    %2880 = vst [vmem:[%s2879] ss:$328 sm:$0x3] %v2878
    %s2881 = scalar_lea.vmem [#allocation0], 2536
    %v2882 = vld [vmem:[%s2881] sm:$0x3]
    %s2883 = scalar_lea.vmem %s1, 317
    %2884 = vst [vmem:[%s2883] ss:$328 sm:$0x3] %v2882
    %s2885 = scalar_lea.vmem [#allocation0], 2544
    %v2886 = vld [vmem:[%s2885] sm:$0x3]
    %s2887 = scalar_lea.vmem %s1, 318
    %2888 = vst [vmem:[%s2887] ss:$328 sm:$0x3] %v2886
    %s2889 = scalar_lea.vmem [#allocation0], 2552
    %v2890 = vld [vmem:[%s2889] sm:$0x3]
    %s2891 = scalar_lea.vmem %s1, 319
    %2892 = vst [vmem:[%s2891] ss:$328 sm:$0x3] %v2890
    %s2893 = scalar_lea.vmem [#allocation0], 2560
    %v2894 = vld [vmem:[%s2893] sm:$0x3]
    %s2895 = scalar_lea.vmem %s1, 320
    %2896 = vst [vmem:[%s2895] ss:$328 sm:$0x3] %v2894
    %s2897 = scalar_lea.vmem [#allocation0], 2568
    %v2898 = vld [vmem:[%s2897] sm:$0x3]
    %s2899 = scalar_lea.vmem %s1, 321
    %2900 = vst [vmem:[%s2899] ss:$328 sm:$0x3] %v2898
    %s2901 = scalar_lea.vmem [#allocation0], 2576
    %v2902 = vld [vmem:[%s2901] sm:$0x3]
    %s2903 = scalar_lea.vmem %s1, 322
    %2904 = vst [vmem:[%s2903] ss:$328 sm:$0x3] %v2902

// kernel: _device_loss.1
$region0: #{_device_loss.1}
  #allocation0 [shape = 'u32[]', space=smem, size = 0x4, offset = 0x4, fixed_abs, tag = 'smem constant byte address 0x4 - core index']
  #allocation1 [shape = 'u32[144,128]{1,0:T(1,128)}', space=vmem, size = 0x12000, scoped, tag = 'internal scratch']
  %s0 = inlined_call_operand.vmem [shape: f32[2,323,128], index: 0, kind: input, shape index: {}]
  %s1 = inlined_call_operand.vmem [shape: f32[2,323,128], index: 1, kind: input, shape index: {}]
  %s2 = inlined_call_operand.vmem [shape: f32[2,8,128], index: 2, kind: input, shape index: {}]
  %s3 = inlined_call_operand.vmem [shape: f32[2,8,128], index: 3, kind: input, shape index: {}]
  %s4 = inlined_call_operand.vmem [shape: f32[2,1,128], index: 4, kind: input, shape index: {}]
  %s5 = inlined_call_operand.vmem [shape: f32[2,1,128], index: 5, kind: input, shape index: {}]
  %s6 = inlined_call_operand.vmem [shape: f32[2,1,128], index: 6, kind: input, shape index: {}]
  %s7 = inlined_call_operand.vmem [shape: s32[2,1,128], index: 7, kind: input, shape index: {}]
  %s8 = inlined_call_operand.vmem [shape: f32[2,256,128], index: 8, kind: input, shape index: {}]
  %s9 = inlined_call_operand.vmem [shape: bf16[640,256], index: 9, kind: input, shape index: {}]
  %s10 = inlined_call_operand.vmem [shape: f32[640,1], index: 10, kind: input, shape index: {}]
  %s11 = inlined_call_operand.vmem [shape: f32[2,8,128], index: 11, kind: output, shape index: {}]
  %s12 = sld [smem:[#allocation0]]
  $region77: #{_device_loss.1} parent=0
    _
  %s14 = ssub.s32 1, %s12
  %s15 = scalar_select 0, %s14, %s12
  loop: start=0, step=1, limit=4
  $region2: #{_device_loss.1} parent=0 // loop_pre_header
    _
  $region3: #{_device_loss.1} parent=0 // loop_header
    %s17 = sphi 0, %s21
    %p18 = scmp.ge.s32.totalorder %s17, 4
    %s27 = sphi 0, %s29
    %s30 = sphi 0, %s27
    %s31 = sphi 0, %s30
    %s47 = sphi 0, %s31
    %s53 = sphi 0, %s55
    %s56 = sphi 0, %s53
    %s57 = sphi 0, %s56
    %s73 = sphi 0, %s57
    %s79 = sphi 0, %s81
    %s82 = sphi 0, %s79
    %s83 = sphi 0, %s82
    %s99 = sphi 0, %s83
    %s105 = sphi 0, %s107
    %s108 = sphi 0, %s105
    %s109 = sphi 0, %s108
    %s125 = sphi 0, %s109
    %s131 = sphi 0, %s133
    %s134 = sphi 0, %s131
    %s135 = sphi 0, %s134
    %s151 = sphi 0, %s135
    %s157 = sphi 0, %s159
    %s160 = sphi 0, %s157
    %s161 = sphi 0, %s160
    %s177 = sphi 0, %s161
    %s183 = sphi 0, %s185
    %s186 = sphi 0, %s183
    %s187 = sphi 0, %s186
    %s203 = sphi 0, %s187
    %s209 = sphi 0, %s211
    %s212 = sphi 0, %s209
    %s213 = sphi 0, %s212
    %s229 = sphi 0, %s213
    %s235 = sphi 0, %s237
    %s238 = sphi 0, %s235
    %s239 = sphi 0, %s238
    %s255 = sphi 0, %s239
    %s259 = sphi 0, %s259
    %s261 = sphi 0, %s259
    %s262 = sphi 0, %s261
    %s276 = sphi 0, %s262
    %s280 = sphi 0, %s280
    %s282 = sphi 0, %s280
    %s283 = sphi 0, %s282
    %s297 = sphi 0, %s283
    %s303 = sphi 0, %s305
    %s306 = sphi 0, %s303
    %s307 = sphi 0, %s306
    %s323 = sphi 0, %s307
  $region4: #{_device_loss.1} parent=0 // loop_header_branch
    %20 = sbr.rel (%p18) target = $region8
  $region5: #{_device_loss.1} parent=0 // loop_body
    %s22 = ssub.s32 %s17, 1
    %s23 = ssub.s32 %s17, 2
    %s24 = sadd.s32 %s17, 1
    %s25 = ssub.s32 %s17, %s24
    %p26 = scmp.eq.s32.totalorder %s25, 0
    %s28 = sadd.s32 %s27, 1
    %s29 = scalar_select %p26, %s27, %s28
    %p32 = pneg %p26
    %p33 = scmp.eq.s32.totalorder %s17, 1
    %p34 = por %p32, %p33
    %p35 = scmp.ne.s32.totalorder %s27, %s30
    %p36 = scmp.eq.s32.totalorder %s17, 0
    %p37 = por %p35, %p36
    %p38 = scmp.ne.s32.totalorder %s27, %s30
    %p39 = scmp.eq.s32.totalorder %s22, 1
    %p40 = por %p38, %p39
    %p41 = scmp.ne.s32.totalorder %s30, %s31
    %p42 = scmp.eq.s32.totalorder %s22, 0
    %p43 = por %p41, %p42
    %p44 = scmp.ne.s32.totalorder %s30, %s31
    %p45 = scmp.eq.s32.totalorder %s23, 1
    %p46 = por %p44, %p45
    %p48 = scmp.ne.s32.totalorder %s31, %s47
    %p49 = scmp.eq.s32.totalorder %s23, 0
    %p50 = por %p48, %p49
    %s51 = ssub.s32 %s17, %s24
    %p52 = scmp.eq.s32.totalorder %s51, 0
    %s54 = sadd.s32 %s53, 1
    %s55 = scalar_select %p52, %s53, %s54
    %p58 = pneg %p52
    %p59 = scmp.eq.s32.totalorder %s17, 1
    %p60 = por %p58, %p59
    %p61 = scmp.ne.s32.totalorder %s53, %s56
    %p62 = scmp.eq.s32.totalorder %s17, 0
    %p63 = por %p61, %p62
    %p64 = scmp.ne.s32.totalorder %s53, %s56
    %p65 = scmp.eq.s32.totalorder %s22, 1
    %p66 = por %p64, %p65
    %p67 = scmp.ne.s32.totalorder %s56, %s57
    %p68 = scmp.eq.s32.totalorder %s22, 0
    %p69 = por %p67, %p68
    %p70 = scmp.ne.s32.totalorder %s56, %s57
    %p71 = scmp.eq.s32.totalorder %s23, 1
    %p72 = por %p70, %p71
    %p74 = scmp.ne.s32.totalorder %s57, %s73
    %p75 = scmp.eq.s32.totalorder %s23, 0
    %p76 = por %p74, %p75
    %s77 = ssub.s32 %s17, %s24
    %p78 = scmp.eq.s32.totalorder %s77, 0
    %s80 = sadd.s32 %s79, 1
    %s81 = scalar_select %p78, %s79, %s80
    %p84 = pneg %p78
    %p85 = scmp.eq.s32.totalorder %s17, 1
    %p86 = por %p84, %p85
    %p87 = scmp.ne.s32.totalorder %s79, %s82
    %p88 = scmp.eq.s32.totalorder %s17, 0
    %p89 = por %p87, %p88
    %p90 = scmp.ne.s32.totalorder %s79, %s82
    %p91 = scmp.eq.s32.totalorder %s22, 1
    %p92 = por %p90, %p91
    %p93 = scmp.ne.s32.totalorder %s82, %s83
    %p94 = scmp.eq.s32.totalorder %s22, 0
    %p95 = por %p93, %p94
    %p96 = scmp.ne.s32.totalorder %s82, %s83
    %p97 = scmp.eq.s32.totalorder %s23, 1
    %p98 = por %p96, %p97
    %p100 = scmp.ne.s32.totalorder %s83, %s99
    %p101 = scmp.eq.s32.totalorder %s23, 0
    %p102 = por %p100, %p101
    %s103 = ssub.s32 %s17, %s24
    %p104 = scmp.eq.s32.totalorder %s103, 0
    %s106 = sadd.s32 %s105, 1
    %s107 = scalar_select %p104, %s105, %s106
    %p110 = pneg %p104
    %p111 = scmp.eq.s32.totalorder %s17, 1
    %p112 = por %p110, %p111
    %p113 = scmp.ne.s32.totalorder %s105, %s108
    %p114 = scmp.eq.s32.totalorder %s17, 0
    %p115 = por %p113, %p114
    %p116 = scmp.ne.s32.totalorder %s105, %s108
    %p117 = scmp.eq.s32.totalorder %s22, 1
    %p118 = por %p116, %p117
    %p119 = scmp.ne.s32.totalorder %s108, %s109
    %p120 = scmp.eq.s32.totalorder %s22, 0
    %p121 = por %p119, %p120
    %p122 = scmp.ne.s32.totalorder %s108, %s109
    %p123 = scmp.eq.s32.totalorder %s23, 1
    %p124 = por %p122, %p123
    %p126 = scmp.ne.s32.totalorder %s109, %s125
    %p127 = scmp.eq.s32.totalorder %s23, 0
    %p128 = por %p126, %p127
    %s129 = ssub.s32 %s17, %s24
    %p130 = scmp.eq.s32.totalorder %s129, 0
    %s132 = sadd.s32 %s131, 1
    %s133 = scalar_select %p130, %s131, %s132
    %p136 = pneg %p130
    %p137 = scmp.eq.s32.totalorder %s17, 1
    %p138 = por %p136, %p137
    %p139 = scmp.ne.s32.totalorder %s131, %s134
    %p140 = scmp.eq.s32.totalorder %s17, 0
    %p141 = por %p139, %p140
    %p142 = scmp.ne.s32.totalorder %s131, %s134
    %p143 = scmp.eq.s32.totalorder %s22, 1
    %p144 = por %p142, %p143
    %p145 = scmp.ne.s32.totalorder %s134, %s135
    %p146 = scmp.eq.s32.totalorder %s22, 0
    %p147 = por %p145, %p146
    %p148 = scmp.ne.s32.totalorder %s134, %s135
    %p149 = scmp.eq.s32.totalorder %s23, 1
    %p150 = por %p148, %p149
    %p152 = scmp.ne.s32.totalorder %s135, %s151
    %p153 = scmp.eq.s32.totalorder %s23, 0
    %p154 = por %p152, %p153
    %s155 = ssub.s32 %s17, %s24
    %p156 = scmp.eq.s32.totalorder %s155, 0
    %s158 = sadd.s32 %s157, 1
    %s159 = scalar_select %p156, %s157, %s158
    %p162 = pneg %p156
    %p163 = scmp.eq.s32.totalorder %s17, 1
    %p164 = por %p162, %p163
    %p165 = scmp.ne.s32.totalorder %s157, %s160
    %p166 = scmp.eq.s32.totalorder %s17, 0
    %p167 = por %p165, %p166
    %p168 = scmp.ne.s32.totalorder %s157, %s160
    %p169 = scmp.eq.s32.totalorder %s22, 1
    %p170 = por %p168, %p169
    %p171 = scmp.ne.s32.totalorder %s160, %s161
    %p172 = scmp.eq.s32.totalorder %s22, 0
    %p173 = por %p171, %p172
    %p174 = scmp.ne.s32.totalorder %s160, %s161
    %p175 = scmp.eq.s32.totalorder %s23, 1
    %p176 = por %p174, %p175
    %p178 = scmp.ne.s32.totalorder %s161, %s177
    %p179 = scmp.eq.s32.totalorder %s23, 0
    %p180 = por %p178, %p179
    %s181 = ssub.s32 %s17, %s24
    %p182 = scmp.eq.s32.totalorder %s181, 0
    %s184 = sadd.s32 %s183, 1
    %s185 = scalar_select %p182, %s183, %s184
    %p188 = pneg %p182
    %p189 = scmp.eq.s32.totalorder %s17, 1
    %p190 = por %p188, %p189
    %p191 = scmp.ne.s32.totalorder %s183, %s186
    %p192 = scmp.eq.s32.totalorder %s17, 0
    %p193 = por %p191, %p192
    %p194 = scmp.ne.s32.totalorder %s183, %s186
    %p195 = scmp.eq.s32.totalorder %s22, 1
    %p196 = por %p194, %p195
    %p197 = scmp.ne.s32.totalorder %s186, %s187
    %p198 = scmp.eq.s32.totalorder %s22, 0
    %p199 = por %p197, %p198
    %p200 = scmp.ne.s32.totalorder %s186, %s187
    %p201 = scmp.eq.s32.totalorder %s23, 1
    %p202 = por %p200, %p201
    %p204 = scmp.ne.s32.totalorder %s187, %s203
    %p205 = scmp.eq.s32.totalorder %s23, 0
    %p206 = por %p204, %p205
    %s207 = ssub.s32 %s17, %s24
    %p208 = scmp.eq.s32.totalorder %s207, 0
    %s210 = sadd.s32 %s209, 1
    %s211 = scalar_select %p208, %s209, %s210
    %p214 = pneg %p208
    %p215 = scmp.eq.s32.totalorder %s17, 1
    %p216 = por %p214, %p215
    %p217 = scmp.ne.s32.totalorder %s209, %s212
    %p218 = scmp.eq.s32.totalorder %s17, 0
    %p219 = por %p217, %p218
    %p220 = scmp.ne.s32.totalorder %s209, %s212
    %p221 = scmp.eq.s32.totalorder %s22, 1
    %p222 = por %p220, %p221
    %p223 = scmp.ne.s32.totalorder %s212, %s213
    %p224 = scmp.eq.s32.totalorder %s22, 0
    %p225 = por %p223, %p224
    %p226 = scmp.ne.s32.totalorder %s212, %s213
    %p227 = scmp.eq.s32.totalorder %s23, 1
    %p228 = por %p226, %p227
    %p230 = scmp.ne.s32.totalorder %s213, %s229
    %p231 = scmp.eq.s32.totalorder %s23, 0
    %p232 = por %p230, %p231
    %s233 = ssub.s32 %s17, %s24
    %p234 = scmp.eq.s32.totalorder %s233, 0
    %s236 = sadd.s32 %s235, 1
    %s237 = scalar_select %p234, %s235, %s236
    %p240 = pneg %p234
    %p241 = scmp.eq.s32.totalorder %s17, 1
    %p242 = por %p240, %p241
    %p243 = scmp.ne.s32.totalorder %s235, %s238
    %p244 = scmp.eq.s32.totalorder %s17, 0
    %p245 = por %p243, %p244
    %p246 = scmp.ne.s32.totalorder %s235, %s238
    %p247 = scmp.eq.s32.totalorder %s22, 1
    %p248 = por %p246, %p247
    %p249 = scmp.ne.s32.totalorder %s238, %s239
    %p250 = scmp.eq.s32.totalorder %s22, 0
    %p251 = por %p249, %p250
    %p252 = scmp.ne.s32.totalorder %s238, %s239
    %p253 = scmp.eq.s32.totalorder %s23, 1
    %p254 = por %p252, %p253
    %p256 = scmp.ne.s32.totalorder %s239, %s255
    %p257 = scmp.eq.s32.totalorder %s23, 0
    %p258 = por %p256, %p257
    %s260 = sadd.s32 %s259, 1
    %p263 = scmp.eq.s32.totalorder %s17, 1
    %p264 = scmp.ne.s32.totalorder %s259, %s261
    %p265 = scmp.eq.s32.totalorder %s17, 0
    %p266 = por %p264, %p265
    %p267 = scmp.ne.s32.totalorder %s259, %s261
    %p268 = scmp.eq.s32.totalorder %s22, 1
    %p269 = por %p267, %p268
    %p270 = scmp.ne.s32.totalorder %s261, %s262
    %p271 = scmp.eq.s32.totalorder %s22, 0
    %p272 = por %p270, %p271
    %p273 = scmp.ne.s32.totalorder %s261, %s262
    %p274 = scmp.eq.s32.totalorder %s23, 1
    %p275 = por %p273, %p274
    %p277 = scmp.ne.s32.totalorder %s262, %s276
    %p278 = scmp.eq.s32.totalorder %s23, 0
    %p279 = por %p277, %p278
    %s281 = sadd.s32 %s280, 1
    %p284 = scmp.eq.s32.totalorder %s17, 1
    %p285 = scmp.ne.s32.totalorder %s280, %s282
    %p286 = scmp.eq.s32.totalorder %s17, 0
    %p287 = por %p285, %p286
    %p288 = scmp.ne.s32.totalorder %s280, %s282
    %p289 = scmp.eq.s32.totalorder %s22, 1
    %p290 = por %p288, %p289
    %p291 = scmp.ne.s32.totalorder %s282, %s283
    %p292 = scmp.eq.s32.totalorder %s22, 0
    %p293 = por %p291, %p292
    %p294 = scmp.ne.s32.totalorder %s282, %s283
    %p295 = scmp.eq.s32.totalorder %s23, 1
    %p296 = por %p294, %p295
    %p298 = scmp.ne.s32.totalorder %s283, %s297
    %p299 = scmp.eq.s32.totalorder %s23, 0
    %p300 = por %p298, %p299
    %s301 = ssub.s32 %s17, %s24
    %p302 = scmp.eq.s32.totalorder %s301, 0
    %s304 = sadd.s32 %s303, 1
    %s305 = scalar_select %p302, %s303, %s304
    %p308 = pneg %p302
    %p309 = scmp.eq.s32.totalorder %s17, 1
    %p310 = por %p308, %p309
    %p311 = scmp.ne.s32.totalorder %s303, %s306
    %p312 = scmp.eq.s32.totalorder %s17, 0
    %p313 = por %p311, %p312
    %p314 = scmp.ne.s32.totalorder %s303, %s306
    %p315 = scmp.eq.s32.totalorder %s22, 1
    %p316 = por %p314, %p315
    %p317 = scmp.ne.s32.totalorder %s306, %s307
    %p318 = scmp.eq.s32.totalorder %s22, 0
    %p319 = por %p317, %p318
    %p320 = scmp.ne.s32.totalorder %s306, %s307
    %p321 = scmp.eq.s32.totalorder %s23, 1
    %p322 = por %p320, %p321
    %p324 = scmp.ne.s32.totalorder %s307, %s323
    %p325 = scmp.eq.s32.totalorder %s23, 0
    %p326 = por %p324, %p325
    %p327 = scmp.le.s32.totalorder 1, %s17
    %p328 = scmp.lt.s32.totalorder %s17, 3
    %p329 = pnand %p327, %p328
    %p330 = pneg %p329
    // Predicated region
    $region9: #{_device_loss.1} parent=5 // pred_check
      _
    $region10: #{_device_loss.1} parent=5 // pred_check_branch
      %332 = sbr.rel (%p329) target = $region12
    $region11: #{_device_loss.1} parent=5 // pred_region
      %s333 = ssub.s32 %s17, 1
      // Predicated region
      $region13: #{_device_loss.1} parent=11 // pred_check
        %p334 = pneg %p272
      $region14: #{_device_loss.1} parent=11 // pred_check_branch
        %336 = sbr.rel (%p334) target = $region16
      $region15: #{_device_loss.1} parent=11 // pred_region
        _
      $region16: #{_device_loss.1} parent=11 // pred_fallthru
        _
      // Predicated region
      $region17: #{_device_loss.1} parent=11 // pred_check
        %p337 = pneg %p293
      $region18: #{_device_loss.1} parent=11 // pred_check_branch
        %339 = sbr.rel (%p337) target = $region20
      $region19: #{_device_loss.1} parent=11 // pred_region
        _
      $region20: #{_device_loss.1} parent=11 // pred_fallthru
        _
    $region12: #{_device_loss.1} parent=5 // pred_fallthru
      _
    %p340 = scmp.lt.s32.totalorder %s17, 2
    // Predicated region
    $region21: #{_device_loss.1} parent=5 // pred_check
      %p341 = pneg %p340
    $region22: #{_device_loss.1} parent=5 // pred_check_branch
      %343 = sbr.rel (%p341) target = $region24
    $region23: #{_device_loss.1} parent=5 // pred_region
      // Predicated region
      $region25: #{_device_loss.1} parent=23 // pred_check
        %p344 = pneg %p37
      $region26: #{_device_loss.1} parent=23 // pred_check_branch
        %346 = sbr.rel (%p344) target = $region28
      $region27: #{_device_loss.1} parent=23 // pred_region
        %p347 = scmp.lt.s32.totalorder %s17, 1
        %s348 = scalar_select %p347, %s17, 1
        %s349 = smul.addr %s348, 41
        %s350 = smul.addr %s349, 8
        %s351 = scalar_lea.vmem %s0, %s350
      $region28: #{_device_loss.1} parent=23 // pred_fallthru
        _
      // Predicated region
      $region29: #{_device_loss.1} parent=23 // pred_check
        %p352 = pneg %p63
      $region30: #{_device_loss.1} parent=23 // pred_check_branch
        %354 = sbr.rel (%p352) target = $region32
      $region31: #{_device_loss.1} parent=23 // pred_region
        %p355 = scmp.lt.s32.totalorder %s17, 1
        %s356 = scalar_select %p355, %s17, 1
        %s357 = smul.addr %s356, 41
        %s358 = smul.addr %s357, 8
        %s359 = scalar_lea.vmem %s1, %s358
      $region32: #{_device_loss.1} parent=23 // pred_fallthru
        _
      // Predicated region
      $region33: #{_device_loss.1} parent=23 // pred_check
        %p360 = pneg %p89
      $region34: #{_device_loss.1} parent=23 // pred_check_branch
        %362 = sbr.rel (%p360) target = $region36
      $region35: #{_device_loss.1} parent=23 // pred_region
        %p363 = scmp.lt.s32.totalorder %s17, 1
        %s364 = scalar_select %p363, %s17, 1
        %s365 = smul.addr %s364, 8
        %s366 = scalar_lea.vmem %s2, %s365
      $region36: #{_device_loss.1} parent=23 // pred_fallthru
        _
      // Predicated region
      $region37: #{_device_loss.1} parent=23 // pred_check
        %p367 = pneg %p115
      $region38: #{_device_loss.1} parent=23 // pred_check_branch
        %369 = sbr.rel (%p367) target = $region40
      $region39: #{_device_loss.1} parent=23 // pred_region
        %p370 = scmp.lt.s32.totalorder %s17, 1
        %s371 = scalar_select %p370, %s17, 1
        %s372 = smul.addr %s371, 8
        %s373 = scalar_lea.vmem %s3, %s372
      $region40: #{_device_loss.1} parent=23 // pred_fallthru
        _
      // Predicated region
      $region41: #{_device_loss.1} parent=23 // pred_check
        %p374 = pneg %p141
      $region42: #{_device_loss.1} parent=23 // pred_check_branch
        %376 = sbr.rel (%p374) target = $region44
      $region43: #{_device_loss.1} parent=23 // pred_region
        %p377 = scmp.lt.s32.totalorder %s17, 1
        %s378 = scalar_select %p377, %s17, 1
        %s379 = scalar_lea.vmem %s4, %s378
      $region44: #{_device_loss.1} parent=23 // pred_fallthru
        _
      // Predicated region
      $region45: #{_device_loss.1} parent=23 // pred_check
        %p380 = pneg %p167
      $region46: #{_device_loss.1} parent=23 // pred_check_branch
        %382 = sbr.rel (%p380) target = $region48
      $region47: #{_device_loss.1} parent=23 // pred_region
        %p383 = scmp.lt.s32.totalorder %s17, 1
        %s384 = scalar_select %p383, %s17, 1
        %s385 = scalar_lea.vmem %s5, %s384
      $region48: #{_device_loss.1} parent=23 // pred_fallthru
        _
      // Predicated region
      $region49: #{_device_loss.1} parent=23 // pred_check
        %p386 = pneg %p193
      $region50: #{_device_loss.1} parent=23 // pred_check_branch
        %388 = sbr.rel (%p386) target = $region52
      $region51: #{_device_loss.1} parent=23 // pred_region
        %p389 = scmp.lt.s32.totalorder %s17, 1
        %s390 = scalar_select %p389, %s17, 1
        %s391 = scalar_lea.vmem %s6, %s390
      $region52: #{_device_loss.1} parent=23 // pred_fallthru
        _
      // Predicated region
      $region53: #{_device_loss.1} parent=23 // pred_check
        %p392 = pneg %p219
      $region54: #{_device_loss.1} parent=23 // pred_check_branch
        %394 = sbr.rel (%p392) target = $region56
      $region55: #{_device_loss.1} parent=23 // pred_region
        %p395 = scmp.lt.s32.totalorder %s17, 1
        %s396 = scalar_select %p395, %s17, 1
        %s397 = scalar_lea.vmem %s7, %s396
      $region56: #{_device_loss.1} parent=23 // pred_fallthru
        _
      // Predicated region
      $region57: #{_device_loss.1} parent=23 // pred_check
        %p398 = pneg %p245
      $region58: #{_device_loss.1} parent=23 // pred_check_branch
        %400 = sbr.rel (%p398) target = $region60
      $region59: #{_device_loss.1} parent=23 // pred_region
        %p401 = scmp.lt.s32.totalorder %s17, 1
        %s402 = scalar_select %p401, %s17, 1
        %s403 = smul.addr %s402, 32
        %s404 = smul.addr %s403, 8
        %s405 = scalar_lea.vmem %s8, %s404
      $region60: #{_device_loss.1} parent=23 // pred_fallthru
        _
    $region24: #{_device_loss.1} parent=5 // pred_fallthru
      _
    %p406 = scmp.le.s32.totalorder 1, %s17
    %p407 = scmp.lt.s32.totalorder %s17, 3
    %p408 = pnand %p406, %p407
    %p409 = pneg %p408
    // Predicated region
    $region61: #{_device_loss.1} parent=5 // pred_check
      _
    $region62: #{_device_loss.1} parent=5 // pred_check_branch
      %411 = sbr.rel (%p408) target = $region64
    $region63: #{_device_loss.1} parent=5 // pred_region
      %s412 = ssub.s32 %s17, 1
      %p413 = scmp.lt.s32.totalorder %s22, 1
      %s414 = scalar_select %p413, %s22, 1
      %s415 = smul.addr %s414, 41
      %s416 = smul.addr %s415, 8
      %s417 = scalar_lea.vmem %s0, %s416
      %p418 = pneg %p43
      %p419 = pneg %p40
      %p420 = scmp.lt.s32.totalorder %s22, 1
      %s421 = scalar_select %p420, %s22, 1
      %s422 = smul.addr %s421, 41
      %s423 = smul.addr %s422, 8
      %s424 = scalar_lea.vmem %s1, %s423
      %p425 = pneg %p69
      %p426 = pneg %p66
      %p427 = scmp.lt.s32.totalorder %s22, 1
      %s428 = scalar_select %p427, %s22, 1
      %s429 = smul.addr %s428, 8
      %s430 = scalar_lea.vmem %s2, %s429
      %p431 = pneg %p95
      %p432 = pneg %p92
      %p433 = scmp.lt.s32.totalorder %s22, 1
      %s434 = scalar_select %p433, %s22, 1
      %s435 = smul.addr %s434, 8
      %s436 = scalar_lea.vmem %s3, %s435
      %p437 = pneg %p121
      %p438 = pneg %p118
      %p439 = scmp.lt.s32.totalorder %s22, 1
      %s440 = scalar_select %p439, %s22, 1
      %s441 = scalar_lea.vmem %s4, %s440
      %p442 = pneg %p147
      %p443 = pneg %p144
      %p444 = scmp.lt.s32.totalorder %s22, 1
      %s445 = scalar_select %p444, %s22, 1
      %s446 = scalar_lea.vmem %s5, %s445
      %p447 = pneg %p173
      %p448 = pneg %p170
      %p449 = scmp.lt.s32.totalorder %s22, 1
      %s450 = scalar_select %p449, %s22, 1
      %s451 = scalar_lea.vmem %s6, %s450
      %p452 = pneg %p199
      %p453 = pneg %p196
      %p454 = scmp.lt.s32.totalorder %s22, 1
      %s455 = scalar_select %p454, %s22, 1
      %s456 = scalar_lea.vmem %s7, %s455
      %p457 = pneg %p225
      %p458 = pneg %p222
      %p459 = scmp.lt.s32.totalorder %s22, 1
      %s460 = scalar_select %p459, %s22, 1
      %s461 = smul.addr %s460, 32
      %s462 = smul.addr %s461, 8
      %s463 = scalar_lea.vmem %s8, %s462
      %p464 = pneg %p251
      %p465 = pneg %p248
      %p466 = pneg %p272
      %p467 = pneg %p269
      %p468 = pneg %p293
      %p469 = pneg %p290
      %p470 = pneg %p319
      %p471 = pneg %p316
      %p472 = scmp.lt.s32.totalorder %s22, 1
      %s473 = scalar_select %p472, %s22, 1
      %s474 = smul.addr %s473, 8
      %s475 = scalar_lea.vmem %s11, %s474
      %p476 = scmp.lt.s32.totalorder %s22, 1
      %s477 = scalar_select %p476, %s22, 1
      %s478 = smul.addr %s477, 41
      %s479 = smul.addr %s478, 8
      %s480 = scalar_lea.vmem %s0, %s479
      %p481 = scmp.lt.s32.totalorder %s22, 1
      %s482 = scalar_select %p481, %s22, 1
      %s483 = smul.addr %s482, 41
      %s484 = smul.addr %s483, 8
      %s485 = scalar_lea.vmem %s1, %s484
      %p486 = scmp.lt.s32.totalorder %s22, 1
      %s487 = scalar_select %p486, %s22, 1
      %s488 = smul.addr %s487, 8
      %s489 = scalar_lea.vmem %s2, %s488
      %p490 = scmp.lt.s32.totalorder %s22, 1
      %s491 = scalar_select %p490, %s22, 1
      %s492 = smul.addr %s491, 8
      %s493 = scalar_lea.vmem %s3, %s492
      %p494 = scmp.lt.s32.totalorder %s22, 1
      %s495 = scalar_select %p494, %s22, 1
      %s496 = scalar_lea.vmem %s4, %s495
      %p497 = scmp.lt.s32.totalorder %s22, 1
      %s498 = scalar_select %p497, %s22, 1
      %s499 = scalar_lea.vmem %s5, %s498
      %p500 = scmp.lt.s32.totalorder %s22, 1
      %s501 = scalar_select %p500, %s22, 1
      %s502 = scalar_lea.vmem %s6, %s501
      %p503 = scmp.lt.s32.totalorder %s22, 1
      %s504 = scalar_select %p503, %s22, 1
      %s505 = scalar_lea.vmem %s7, %s504
      %p506 = scmp.lt.s32.totalorder %s22, 1
      %s507 = scalar_select %p506, %s22, 1
      %s508 = smul.addr %s507, 32
      %s509 = smul.addr %s508, 8
      %s510 = scalar_lea.vmem %s8, %s509
      %p511 = scmp.lt.s32.totalorder %s22, 1
      %s512 = scalar_select %p511, %s22, 1
      %s513 = smul.addr %s512, 8
      %s514 = scalar_lea.vmem %s11, %s513
      %v516 = vld [vmem:[%s480] sm:$0xff]
      %v517 = vld [vmem:[%s480 + $0x8] sm:$0xff]
      %v518 = vld [vmem:[%s480 + $0x10] sm:$0xff]
      %v519 = vld [vmem:[%s480 + $0x18] sm:$0xff]
      %v520 = vld [vmem:[%s480 + $0x20] sm:$0xff]
      %v521 = vld [vmem:[%s480 + $0x28] sm:$0xff]
      %v522 = vld [vmem:[%s480 + $0x30] sm:$0xff]
      %v523 = vld [vmem:[%s480 + $0x38] sm:$0xff]
      %v524 = vld [vmem:[%s480 + $0x40] sm:$0xff]
      %v525 = vld [vmem:[%s480 + $0x48] sm:$0xff]
      %v526 = vld [vmem:[%s480 + $0x50] sm:$0xff]
      %v527 = vld [vmem:[%s480 + $0x58] sm:$0xff]
      %v528 = vld [vmem:[%s480 + $0x60] sm:$0xff]
      %v529 = vld [vmem:[%s480 + $0x68] sm:$0xff]
      %v530 = vld [vmem:[%s480 + $0x70] sm:$0xff]
      %v531 = vld [vmem:[%s480 + $0x78] sm:$0xff]
      %v532 = vld [vmem:[%s480 + $0x80] sm:$0xff]
      %v533 = vld [vmem:[%s480 + $0x88] sm:$0xff]
      %v534 = vld [vmem:[%s480 + $0x90] sm:$0xff]
      %v535 = vld [vmem:[%s480 + $0x98] sm:$0xff]
      %v536 = vld [vmem:[%s480 + $0xa0] sm:$0xff]
      %v537 = vld [vmem:[%s480 + $0xa8] sm:$0xff]
      %v538 = vld [vmem:[%s480 + $0xb0] sm:$0xff]
      %v539 = vld [vmem:[%s480 + $0xb8] sm:$0xff]
      %v540 = vld [vmem:[%s480 + $0xc0] sm:$0xff]
      %v541 = vld [vmem:[%s480 + $0xc8] sm:$0xff]
      %v542 = vld [vmem:[%s480 + $0xd0] sm:$0xff]
      %v543 = vld [vmem:[%s480 + $0xd8] sm:$0xff]
      %v544 = vld [vmem:[%s480 + $0xe0] sm:$0xff]
      %v545 = vld [vmem:[%s480 + $0xe8] sm:$0xff]
      %v546 = vld [vmem:[%s480 + $0xf0] sm:$0xff]
      %v547 = vld [vmem:[%s480 + $0xf8] sm:$0xff]
      %v548 = vld [vmem:[%s480 + $0x100] sm:$0xff]
      %v549 = vld [vmem:[%s480 + $0x108] sm:$0xff]
      %v550 = vld [vmem:[%s480 + $0x110] sm:$0xff]
      %v551 = vld [vmem:[%s480 + $0x118] sm:$0xff]
      %v552 = vld [vmem:[%s480 + $0x120] sm:$0xff]
      %v553 = vld [vmem:[%s480 + $0x128] sm:$0xff]
      %v554 = vld [vmem:[%s480 + $0x130] sm:$0xff]
      %v555 = vld [vmem:[%s480 + $0x138] sm:$0xff]
      %v556 = vld [vmem:[%s480 + $0x140] sm:$0x7]
      %v557 = vld [vmem:[%s485] sm:$0xff]
      %v558 = vld [vmem:[%s485 + $0x8] sm:$0xff]
      %v559 = vld [vmem:[%s485 + $0x10] sm:$0xff]
      %v560 = vld [vmem:[%s485 + $0x18] sm:$0xff]
      %v561 = vld [vmem:[%s485 + $0x20] sm:$0xff]
      %v562 = vld [vmem:[%s485 + $0x28] sm:$0xff]
      %v563 = vld [vmem:[%s485 + $0x30] sm:$0xff]
      %v564 = vld [vmem:[%s485 + $0x38] sm:$0xff]
      %v565 = vld [vmem:[%s485 + $0x40] sm:$0xff]
      %v566 = vld [vmem:[%s485 + $0x48] sm:$0xff]
      %v567 = vld [vmem:[%s485 + $0x50] sm:$0xff]
      %v568 = vld [vmem:[%s485 + $0x58] sm:$0xff]
      %v569 = vld [vmem:[%s485 + $0x60] sm:$0xff]
      %v570 = vld [vmem:[%s485 + $0x68] sm:$0xff]
      %v571 = vld [vmem:[%s485 + $0x70] sm:$0xff]
      %v572 = vld [vmem:[%s485 + $0x78] sm:$0xff]
      %v573 = vld [vmem:[%s485 + $0x80] sm:$0xff]
      %v574 = vld [vmem:[%s485 + $0x88] sm:$0xff]
      %v575 = vld [vmem:[%s485 + $0x90] sm:$0xff]
      %v576 = vld [vmem:[%s485 + $0x98] sm:$0xff]
      %v577 = vld [vmem:[%s485 + $0xa0] sm:$0xff]
      %v578 = vld [vmem:[%s485 + $0xa8] sm:$0xff]
      %v579 = vld [vmem:[%s485 + $0xb0] sm:$0xff]
      %v580 = vld [vmem:[%s485 + $0xb8] sm:$0xff]
      %v581 = vld [vmem:[%s485 + $0xc0] sm:$0xff]
      %v582 = vld [vmem:[%s485 + $0xc8] sm:$0xff]
      %v583 = vld [vmem:[%s485 + $0xd0] sm:$0xff]
      %v584 = vld [vmem:[%s485 + $0xd8] sm:$0xff]
      %v585 = vld [vmem:[%s485 + $0xe0] sm:$0xff]
      %v586 = vld [vmem:[%s485 + $0xe8] sm:$0xff]
      %v587 = vld [vmem:[%s485 + $0xf0] sm:$0xff]
      %v588 = vld [vmem:[%s485 + $0xf8] sm:$0xff]
      %v589 = vld [vmem:[%s485 + $0x100] sm:$0xff]
      %v590 = vld [vmem:[%s485 + $0x108] sm:$0xff]
      %v591 = vld [vmem:[%s485 + $0x110] sm:$0xff]
      %v592 = vld [vmem:[%s485 + $0x118] sm:$0xff]
      %v593 = vld [vmem:[%s485 + $0x120] sm:$0xff]
      %v594 = vld [vmem:[%s485 + $0x128] sm:$0xff]
      %v595 = vld [vmem:[%s485 + $0x130] sm:$0xff]
      %v596 = vld [vmem:[%s485 + $0x138] sm:$0xff]
      %v597 = vld [vmem:[%s485 + $0x140] sm:$0x7]
      %v598 = vand.u32 2147483647, %v516
      %v599 = vand.u32 2147483647, %v517
      %v600 = vand.u32 2147483647, %v518
      %v601 = vand.u32 2147483647, %v519
      %v602 = vand.u32 2147483647, %v520
      %v603 = vand.u32 2147483647, %v521
      %v604 = vand.u32 2147483647, %v522
      %v605 = vand.u32 2147483647, %v523
      %v606 = vand.u32 2147483647, %v524
      %v607 = vand.u32 2147483647, %v525
      %v608 = vand.u32 2147483647, %v526
      %v609 = vand.u32 2147483647, %v527
      %v610 = vand.u32 2147483647, %v528
      %v611 = vand.u32 2147483647, %v529
      %v612 = vand.u32 2147483647, %v530
      %v613 = vand.u32 2147483647, %v531
      %v614 = vand.u32 2147483647, %v532
      %v615 = vand.u32 2147483647, %v533
      %v616 = vand.u32 2147483647, %v534
      %v617 = vand.u32 2147483647, %v535
      %v618 = vand.u32 2147483647, %v536
      %v619 = vand.u32 2147483647, %v537
      %v620 = vand.u32 2147483647, %v538
      %v621 = vand.u32 2147483647, %v539
      %v622 = vand.u32 2147483647, %v540
      %v623 = vand.u32 2147483647, %v541
      %v624 = vand.u32 2147483647, %v542
      %v625 = vand.u32 2147483647, %v543
      %v626 = vand.u32 2147483647, %v544
      %v627 = vand.u32 2147483647, %v545
      %v628 = vand.u32 2147483647, %v546
      %v629 = vand.u32 2147483647, %v547
      %v630 = vand.u32 2147483647, %v548
      %v631 = vand.u32 2147483647, %v549
      %v632 = vand.u32 2147483647, %v550
      %v633 = vand.u32 2147483647, %v551
      %v634 = vand.u32 2147483647, %v552
      %v635 = vand.u32 2147483647, %v553
      %v636 = vand.u32 2147483647, %v554
      %v637 = vand.u32 2147483647, %v555
      %v638 = vand.u32 2147483647, %v556
      %v639 = vsub.f32 0.0, %v598
      %v640 = vsub.f32 0.0, %v599
      %v641 = vsub.f32 0.0, %v600
      %v642 = vsub.f32 0.0, %v601
      %v643 = vsub.f32 0.0, %v602
      %v644 = vsub.f32 0.0, %v603
      %v645 = vsub.f32 0.0, %v604
      %v646 = vsub.f32 0.0, %v605
      %v647 = vsub.f32 0.0, %v606
      %v648 = vsub.f32 0.0, %v607
      %v649 = vsub.f32 0.0, %v608
      %v650 = vsub.f32 0.0, %v609
      %v651 = vsub.f32 0.0, %v610
      %v652 = vsub.f32 0.0, %v611
      %v653 = vsub.f32 0.0, %v612
      %v654 = vsub.f32 0.0, %v613
      %v655 = vsub.f32 0.0, %v614
      %v656 = vsub.f32 0.0, %v615
      %v657 = vsub.f32 0.0, %v616
      %v658 = vsub.f32 0.0, %v617
      %v659 = vsub.f32 0.0, %v618
      %v660 = vsub.f32 0.0, %v619
      %v661 = vsub.f32 0.0, %v620
      %v662 = vsub.f32 0.0, %v621
      %v663 = vsub.f32 0.0, %v622
      %v664 = vsub.f32 0.0, %v623
      %v665 = vsub.f32 0.0, %v624
      %v666 = vsub.f32 0.0, %v625
      %v667 = vsub.f32 0.0, %v626
      %v668 = vsub.f32 0.0, %v627
      %v669 = vsub.f32 0.0, %v628
      %v670 = vsub.f32 0.0, %v629
      %v671 = vsub.f32 0.0, %v630
      %v672 = vsub.f32 0.0, %v631
      %v673 = vsub.f32 0.0, %v632
      %v674 = vsub.f32 0.0, %v633
      %v675 = vsub.f32 0.0, %v634
      %v676 = vsub.f32 0.0, %v635
      %v677 = vsub.f32 0.0, %v636
      %v678 = vsub.f32 0.0, %v637
      %v679 = vsub.f32 0.0, %v638
      %v680 = vmul.f32 %v639, 1.442695
      %v681 = vpow.pop %v680
      %v682 = vmul.f32 %v640, 1.442695
      %v683 = vpow.pop %v682
      %v684 = vmul.f32 %v641, 1.442695
      %v685 = vpow.pop %v684
      %v686 = vmul.f32 %v642, 1.442695
      %v687 = vpow.pop %v686
      %v688 = vmul.f32 %v643, 1.442695
      %v689 = vpow.pop %v688
      %v690 = vmul.f32 %v644, 1.442695
      %v691 = vpow.pop %v690
      %v692 = vmul.f32 %v645, 1.442695
      %v693 = vpow.pop %v692
      %v694 = vmul.f32 %v646, 1.442695
      %v695 = vpow.pop %v694
      %v696 = vmul.f32 %v647, 1.442695
      %v697 = vpow.pop %v696
      %v698 = vmul.f32 %v648, 1.442695
      %v699 = vpow.pop %v698
      %v700 = vmul.f32 %v649, 1.442695
      %v701 = vpow.pop %v700
      %v702 = vmul.f32 %v650, 1.442695
      %v703 = vpow.pop %v702
      %v704 = vmul.f32 %v651, 1.442695
      %v705 = vpow.pop %v704
      %v706 = vmul.f32 %v652, 1.442695
      %v707 = vpow.pop %v706
      %v708 = vmul.f32 %v653, 1.442695
      %v709 = vpow.pop %v708
      %v710 = vmul.f32 %v654, 1.442695
      %v711 = vpow.pop %v710
      %v712 = vmul.f32 %v655, 1.442695
      %v713 = vpow.pop %v712
      %v714 = vmul.f32 %v656, 1.442695
      %v715 = vpow.pop %v714
      %v716 = vmul.f32 %v657, 1.442695
      %v717 = vpow.pop %v716
      %v718 = vmul.f32 %v658, 1.442695
      %v719 = vpow.pop %v718
      %v720 = vmul.f32 %v659, 1.442695
      %v721 = vpow.pop %v720
      %v722 = vmul.f32 %v660, 1.442695
      %v723 = vpow.pop %v722
      %v724 = vmul.f32 %v661, 1.442695
      %v725 = vpow.pop %v724
      %v726 = vmul.f32 %v662, 1.442695
      %v727 = vpow.pop %v726
      %v728 = vmul.f32 %v663, 1.442695
      %v729 = vpow.pop %v728
      %v730 = vmul.f32 %v664, 1.442695
      %v731 = vpow.pop %v730
      %v732 = vmul.f32 %v665, 1.442695
      %v733 = vpow.pop %v732
      %v734 = vmul.f32 %v666, 1.442695
      %v735 = vpow.pop %v734
      %v736 = vmul.f32 %v667, 1.442695
      %v737 = vpow.pop %v736
      %v738 = vmul.f32 %v668, 1.442695
      %v739 = vpow.pop %v738
      %v740 = vmul.f32 %v669, 1.442695
      %v741 = vpow.pop %v740
      %v742 = vmul.f32 %v670, 1.442695
      %v743 = vpow.pop %v742
      %v744 = vmul.f32 %v671, 1.442695
      %v745 = vpow.pop %v744
      %v746 = vmul.f32 %v672, 1.442695
      %v747 = vpow.pop %v746
      %v748 = vmul.f32 %v673, 1.442695
      %v749 = vpow.pop %v748
      %v750 = vmul.f32 %v674, 1.442695
      %v751 = vpow.pop %v750
      %v752 = vmul.f32 %v675, 1.442695
      %v753 = vpow.pop %v752
      %v754 = vmul.f32 %v676, 1.442695
      %v755 = vpow.pop %v754
      %v756 = vmul.f32 %v677, 1.442695
      %v757 = vpow.pop %v756
      %v758 = vmul.f32 %v678, 1.442695
      %v759 = vpow.pop %v758
      %v760 = vmul.f32 %v679, 1.442695
      %v761 = vpow.pop %v760
      %v762 = vadd.f32 %v681, 1.0
      %v763 = vadd.f32 %v683, 1.0
      %v764 = vadd.f32 %v685, 1.0
      %v765 = vadd.f32 %v687, 1.0
      %v766 = vadd.f32 %v689, 1.0
      %v767 = vadd.f32 %v691, 1.0
      %v768 = vadd.f32 %v693, 1.0
      %v769 = vadd.f32 %v695, 1.0
      %v770 = vadd.f32 %v697, 1.0
      %v771 = vadd.f32 %v699, 1.0
      %v772 = vadd.f32 %v701, 1.0
      %v773 = vadd.f32 %v703, 1.0
      %v774 = vadd.f32 %v705, 1.0
      %v775 = vadd.f32 %v707, 1.0
      %v776 = vadd.f32 %v709, 1.0
      %v777 = vadd.f32 %v711, 1.0
      %v778 = vadd.f32 %v713, 1.0
      %v779 = vadd.f32 %v715, 1.0
      %v780 = vadd.f32 %v717, 1.0
      %v781 = vadd.f32 %v719, 1.0
      %v782 = vadd.f32 %v721, 1.0
      %v783 = vadd.f32 %v723, 1.0
      %v784 = vadd.f32 %v725, 1.0
      %v785 = vadd.f32 %v727, 1.0
      %v786 = vadd.f32 %v729, 1.0
      %v787 = vadd.f32 %v731, 1.0
      %v788 = vadd.f32 %v733, 1.0
      %v789 = vadd.f32 %v735, 1.0
      %v790 = vadd.f32 %v737, 1.0
      %v791 = vadd.f32 %v739, 1.0
      %v792 = vadd.f32 %v741, 1.0
      %v793 = vadd.f32 %v743, 1.0
      %v794 = vadd.f32 %v745, 1.0
      %v795 = vadd.f32 %v747, 1.0
      %v796 = vadd.f32 %v749, 1.0
      %v797 = vadd.f32 %v751, 1.0
      %v798 = vadd.f32 %v753, 1.0
      %v799 = vadd.f32 %v755, 1.0
      %v800 = vadd.f32 %v757, 1.0
      %v801 = vadd.f32 %v759, 1.0
      %v802 = vadd.f32 %v761, 1.0
      %v803 = vlog2.pop %v762
      %v804 = vmul.f32 %v803, 0.6931472
      %v805 = vlog2.pop %v763
      %v806 = vmul.f32 %v805, 0.6931472
      %v807 = vlog2.pop %v764
      %v808 = vmul.f32 %v807, 0.6931472
      %v809 = vlog2.pop %v765
      %v810 = vmul.f32 %v809, 0.6931472
      %v811 = vlog2.pop %v766
      %v812 = vmul.f32 %v811, 0.6931472
      %v813 = vlog2.pop %v767
      %v814 = vmul.f32 %v813, 0.6931472
      %v815 = vlog2.pop %v768
      %v816 = vmul.f32 %v815, 0.6931472
      %v817 = vlog2.pop %v769
      %v818 = vmul.f32 %v817, 0.6931472
      %v819 = vlog2.pop %v770
      %v820 = vmul.f32 %v819, 0.6931472
      %v821 = vlog2.pop %v771
      %v822 = vmul.f32 %v821, 0.6931472
      %v823 = vlog2.pop %v772
      %v824 = vmul.f32 %v823, 0.6931472
      %v825 = vlog2.pop %v773
      %v826 = vmul.f32 %v825, 0.6931472
      %v827 = vlog2.pop %v774
      %v828 = vmul.f32 %v827, 0.6931472
      %v829 = vlog2.pop %v775
      %v830 = vmul.f32 %v829, 0.6931472
      %v831 = vlog2.pop %v776
      %v832 = vmul.f32 %v831, 0.6931472
      %v833 = vlog2.pop %v777
      %v834 = vmul.f32 %v833, 0.6931472
      %v835 = vlog2.pop %v778
      %v836 = vmul.f32 %v835, 0.6931472
      %v837 = vlog2.pop %v779
      %v838 = vmul.f32 %v837, 0.6931472
      %v839 = vlog2.pop %v780
      %v840 = vmul.f32 %v839, 0.6931472
      %v841 = vlog2.pop %v781
      %v842 = vmul.f32 %v841, 0.6931472
      %v843 = vlog2.pop %v782
      %v844 = vmul.f32 %v843, 0.6931472
      %v845 = vlog2.pop %v783
      %v846 = vmul.f32 %v845, 0.6931472
      %v847 = vlog2.pop %v784
      %v848 = vmul.f32 %v847, 0.6931472
      %v849 = vlog2.pop %v785
      %v850 = vmul.f32 %v849, 0.6931472
      %v851 = vlog2.pop %v786
      %v852 = vmul.f32 %v851, 0.6931472
      %v853 = vlog2.pop %v787
      %v854 = vmul.f32 %v853, 0.6931472
      %v855 = vlog2.pop %v788
      %v856 = vmul.f32 %v855, 0.6931472
      %v857 = vlog2.pop %v789
      %v858 = vmul.f32 %v857, 0.6931472
      %v859 = vlog2.pop %v790
      %v860 = vmul.f32 %v859, 0.6931472
      %v861 = vlog2.pop %v791
      %v862 = vmul.f32 %v861, 0.6931472
      %v863 = vlog2.pop %v792
      %v864 = vmul.f32 %v863, 0.6931472
      %v865 = vlog2.pop %v793
      %v866 = vmul.f32 %v865, 0.6931472
      %v867 = vlog2.pop %v794
      %v868 = vmul.f32 %v867, 0.6931472
      %v869 = vlog2.pop %v795
      %v870 = vmul.f32 %v869, 0.6931472
      %v871 = vlog2.pop %v796
      %v872 = vmul.f32 %v871, 0.6931472
      %v873 = vlog2.pop %v797
      %v874 = vmul.f32 %v873, 0.6931472
      %v875 = vlog2.pop %v798
      %v876 = vmul.f32 %v875, 0.6931472
      %v877 = vlog2.pop %v799
      %v878 = vmul.f32 %v877, 0.6931472
      %v879 = vlog2.pop %v800
      %v880 = vmul.f32 %v879, 0.6931472
      %v881 = vlog2.pop %v801
      %v882 = vmul.f32 %v881, 0.6931472
      %v883 = vlog2.pop %v802
      %v884 = vmul.f32 %v883, 0.6931472
      %v885 = vmin.f32 %v516, 0.0
      %v886 = vmin.f32 %v517, 0.0
      %v887 = vmin.f32 %v518, 0.0
      %v888 = vmin.f32 %v519, 0.0
      %v889 = vmin.f32 %v520, 0.0
      %v890 = vmin.f32 %v521, 0.0
      %v891 = vmin.f32 %v522, 0.0
      %v892 = vmin.f32 %v523, 0.0
      %v893 = vmin.f32 %v524, 0.0
      %v894 = vmin.f32 %v525, 0.0
      %v895 = vmin.f32 %v526, 0.0
      %v896 = vmin.f32 %v527, 0.0
      %v897 = vmin.f32 %v528, 0.0
      %v898 = vmin.f32 %v529, 0.0
      %v899 = vmin.f32 %v530, 0.0
      %v900 = vmin.f32 %v531, 0.0
      %v901 = vmin.f32 %v532, 0.0
      %v902 = vmin.f32 %v533, 0.0
      %v903 = vmin.f32 %v534, 0.0
      %v904 = vmin.f32 %v535, 0.0
      %v905 = vmin.f32 %v536, 0.0
      %v906 = vmin.f32 %v537, 0.0
      %v907 = vmin.f32 %v538, 0.0
      %v908 = vmin.f32 %v539, 0.0
      %v909 = vmin.f32 %v540, 0.0
      %v910 = vmin.f32 %v541, 0.0
      %v911 = vmin.f32 %v542, 0.0
      %v912 = vmin.f32 %v543, 0.0
      %v913 = vmin.f32 %v544, 0.0
      %v914 = vmin.f32 %v545, 0.0
      %v915 = vmin.f32 %v546, 0.0
      %v916 = vmin.f32 %v547, 0.0
      %v917 = vmin.f32 %v548, 0.0
      %v918 = vmin.f32 %v549, 0.0
      %v919 = vmin.f32 %v550, 0.0
      %v920 = vmin.f32 %v551, 0.0
      %v921 = vmin.f32 %v552, 0.0
      %v922 = vmin.f32 %v553, 0.0
      %v923 = vmin.f32 %v554, 0.0
      %v924 = vmin.f32 %v555, 0.0
      %v925 = vmin.f32 %v556, 0.0
      %v926 = vsub.f32 %v885, %v804
      %v927 = vsub.f32 %v886, %v806
      %v928 = vsub.f32 %v887, %v808
      %v929 = vsub.f32 %v888, %v810
      %v930 = vsub.f32 %v889, %v812
      %v931 = vsub.f32 %v890, %v814
      %v932 = vsub.f32 %v891, %v816
      %v933 = vsub.f32 %v892, %v818
      %v934 = vsub.f32 %v893, %v820
      %v935 = vsub.f32 %v894, %v822
      %v936 = vsub.f32 %v895, %v824
      %v937 = vsub.f32 %v896, %v826
      %v938 = vsub.f32 %v897, %v828
      %v939 = vsub.f32 %v898, %v830
      %v940 = vsub.f32 %v899, %v832
      %v941 = vsub.f32 %v900, %v834
      %v942 = vsub.f32 %v901, %v836
      %v943 = vsub.f32 %v902, %v838
      %v944 = vsub.f32 %v903, %v840
      %v945 = vsub.f32 %v904, %v842
      %v946 = vsub.f32 %v905, %v844
      %v947 = vsub.f32 %v906, %v846
      %v948 = vsub.f32 %v907, %v848
      %v949 = vsub.f32 %v908, %v850
      %v950 = vsub.f32 %v909, %v852
      %v951 = vsub.f32 %v910, %v854
      %v952 = vsub.f32 %v911, %v856
      %v953 = vsub.f32 %v912, %v858
      %v954 = vsub.f32 %v913, %v860
      %v955 = vsub.f32 %v914, %v862
      %v956 = vsub.f32 %v915, %v864
      %v957 = vsub.f32 %v916, %v866
      %v958 = vsub.f32 %v917, %v868
      %v959 = vsub.f32 %v918, %v870
      %v960 = vsub.f32 %v919, %v872
      %v961 = vsub.f32 %v920, %v874
      %v962 = vsub.f32 %v921, %v876
      %v963 = vsub.f32 %v922, %v878
      %v964 = vsub.f32 %v923, %v880
      %v965 = vsub.f32 %v924, %v882
      %v966 = vsub.f32 %v925, %v884
      %v967 = vmax.f32 %v926, -9.2103405
      %v968 = vmax.f32 %v927, -9.2103405
      %v969 = vmax.f32 %v928, -9.2103405
      %v970 = vmax.f32 %v929, -9.2103405
      %v971 = vmax.f32 %v930, -9.2103405
      %v972 = vmax.f32 %v931, -9.2103405
      %v973 = vmax.f32 %v932, -9.2103405
      %v974 = vmax.f32 %v933, -9.2103405
      %v975 = vmax.f32 %v934, -9.2103405
      %v976 = vmax.f32 %v935, -9.2103405
      %v977 = vmax.f32 %v936, -9.2103405
      %v978 = vmax.f32 %v937, -9.2103405
      %v979 = vmax.f32 %v938, -9.2103405
      %v980 = vmax.f32 %v939, -9.2103405
      %v981 = vmax.f32 %v940, -9.2103405
      %v982 = vmax.f32 %v941, -9.2103405
      %v983 = vmax.f32 %v942, -9.2103405
      %v984 = vmax.f32 %v943, -9.2103405
      %v985 = vmax.f32 %v944, -9.2103405
      %v986 = vmax.f32 %v945, -9.2103405
      %v987 = vmax.f32 %v946, -9.2103405
      %v988 = vmax.f32 %v947, -9.2103405
      %v989 = vmax.f32 %v948, -9.2103405
      %v990 = vmax.f32 %v949, -9.2103405
      %v991 = vmax.f32 %v950, -9.2103405
      %v992 = vmax.f32 %v951, -9.2103405
      %v993 = vmax.f32 %v952, -9.2103405
      %v994 = vmax.f32 %v953, -9.2103405
      %v995 = vmax.f32 %v954, -9.2103405
      %v996 = vmax.f32 %v955, -9.2103405
      %v997 = vmax.f32 %v956, -9.2103405
      %v998 = vmax.f32 %v957, -9.2103405
      %v999 = vmax.f32 %v958, -9.2103405
      %v1000 = vmax.f32 %v959, -9.2103405
      %v1001 = vmax.f32 %v960, -9.2103405
      %v1002 = vmax.f32 %v961, -9.2103405
      %v1003 = vmax.f32 %v962, -9.2103405
      %v1004 = vmax.f32 %v963, -9.2103405
      %v1005 = vmax.f32 %v964, -9.2103405
      %v1006 = vmax.f32 %v965, -9.2103405
      %v1007 = vmax.f32 %v966, -9.2103405
      %v1008 = vmin.f32 %v967, -0.000100005
      %v1009 = vmin.f32 %v968, -0.000100005
      %v1010 = vmin.f32 %v969, -0.000100005
      %v1011 = vmin.f32 %v970, -0.000100005
      %v1012 = vmin.f32 %v971, -0.000100005
      %v1013 = vmin.f32 %v972, -0.000100005
      %v1014 = vmin.f32 %v973, -0.000100005
      %v1015 = vmin.f32 %v974, -0.000100005
      %v1016 = vmin.f32 %v975, -0.000100005
      %v1017 = vmin.f32 %v976, -0.000100005
      %v1018 = vmin.f32 %v977, -0.000100005
      %v1019 = vmin.f32 %v978, -0.000100005
      %v1020 = vmin.f32 %v979, -0.000100005
      %v1021 = vmin.f32 %v980, -0.000100005
      %v1022 = vmin.f32 %v981, -0.000100005
      %v1023 = vmin.f32 %v982, -0.000100005
      %v1024 = vmin.f32 %v983, -0.000100005
      %v1025 = vmin.f32 %v984, -0.000100005
      %v1026 = vmin.f32 %v985, -0.000100005
      %v1027 = vmin.f32 %v986, -0.000100005
      %v1028 = vmin.f32 %v987, -0.000100005
      %v1029 = vmin.f32 %v988, -0.000100005
      %v1030 = vmin.f32 %v989, -0.000100005
      %v1031 = vmin.f32 %v990, -0.000100005
      %v1032 = vmin.f32 %v991, -0.000100005
      %v1033 = vmin.f32 %v992, -0.000100005
      %v1034 = vmin.f32 %v993, -0.000100005
      %v1035 = vmin.f32 %v994, -0.000100005
      %v1036 = vmin.f32 %v995, -0.000100005
      %v1037 = vmin.f32 %v996, -0.000100005
      %v1038 = vmin.f32 %v997, -0.000100005
      %v1039 = vmin.f32 %v998, -0.000100005
      %v1040 = vmin.f32 %v999, -0.000100005
      %v1041 = vmin.f32 %v1000, -0.000100005
      %v1042 = vmin.f32 %v1001, -0.000100005
      %v1043 = vmin.f32 %v1002, -0.000100005
      %v1044 = vmin.f32 %v1003, -0.000100005
      %v1045 = vmin.f32 %v1004, -0.000100005
      %v1046 = vmin.f32 %v1005, -0.000100005
      %v1047 = vmin.f32 %v1006, -0.000100005
      %v1048 = vmin.f32 %v1007, -0.000100005
      %v1049 = vsub.f32 0.0, %v516
      %v1050 = vsub.f32 0.0, %v517
      %v1051 = vsub.f32 0.0, %v518
      %v1052 = vsub.f32 0.0, %v519
      %v1053 = vsub.f32 0.0, %v520
      %v1054 = vsub.f32 0.0, %v521
      %v1055 = vsub.f32 0.0, %v522
      %v1056 = vsub.f32 0.0, %v523
      %v1057 = vsub.f32 0.0, %v524
      %v1058 = vsub.f32 0.0, %v525
      %v1059 = vsub.f32 0.0, %v526
      %v1060 = vsub.f32 0.0, %v527
      %v1061 = vsub.f32 0.0, %v528
      %v1062 = vsub.f32 0.0, %v529
      %v1063 = vsub.f32 0.0, %v530
      %v1064 = vsub.f32 0.0, %v531
      %v1065 = vsub.f32 0.0, %v532
      %v1066 = vsub.f32 0.0, %v533
      %v1067 = vsub.f32 0.0, %v534
      %v1068 = vsub.f32 0.0, %v535
      %v1069 = vsub.f32 0.0, %v536
      %v1070 = vsub.f32 0.0, %v537
      %v1071 = vsub.f32 0.0, %v538
      %v1072 = vsub.f32 0.0, %v539
      %v1073 = vsub.f32 0.0, %v540
      %v1074 = vsub.f32 0.0, %v541
      %v1075 = vsub.f32 0.0, %v542
      %v1076 = vsub.f32 0.0, %v543
      %v1077 = vsub.f32 0.0, %v544
      %v1078 = vsub.f32 0.0, %v545
      %v1079 = vsub.f32 0.0, %v546
      %v1080 = vsub.f32 0.0, %v547
      %v1081 = vsub.f32 0.0, %v548
      %v1082 = vsub.f32 0.0, %v549
      %v1083 = vsub.f32 0.0, %v550
      %v1084 = vsub.f32 0.0, %v551
      %v1085 = vsub.f32 0.0, %v552
      %v1086 = vsub.f32 0.0, %v553
      %v1087 = vsub.f32 0.0, %v554
      %v1088 = vsub.f32 0.0, %v555
      %v1089 = vsub.f32 0.0, %v556
      %v1090 = vmin.f32 %v1049, 0.0
      %v1091 = vmin.f32 %v1050, 0.0
      %v1092 = vmin.f32 %v1051, 0.0
      %v1093 = vmin.f32 %v1052, 0.0
      %v1094 = vmin.f32 %v1053, 0.0
      %v1095 = vmin.f32 %v1054, 0.0
      %v1096 = vmin.f32 %v1055, 0.0
      %v1097 = vmin.f32 %v1056, 0.0
      %v1098 = vmin.f32 %v1057, 0.0
      %v1099 = vmin.f32 %v1058, 0.0
      %v1100 = vmin.f32 %v1059, 0.0
      %v1101 = vmin.f32 %v1060, 0.0
      %v1102 = vmin.f32 %v1061, 0.0
      %v1103 = vmin.f32 %v1062, 0.0
      %v1104 = vmin.f32 %v1063, 0.0
      %v1105 = vmin.f32 %v1064, 0.0
      %v1106 = vmin.f32 %v1065, 0.0
      %v1107 = vmin.f32 %v1066, 0.0
      %v1108 = vmin.f32 %v1067, 0.0
      %v1109 = vmin.f32 %v1068, 0.0
      %v1110 = vmin.f32 %v1069, 0.0
      %v1111 = vmin.f32 %v1070, 0.0
      %v1112 = vmin.f32 %v1071, 0.0
      %v1113 = vmin.f32 %v1072, 0.0
      %v1114 = vmin.f32 %v1073, 0.0
      %v1115 = vmin.f32 %v1074, 0.0
      %v1116 = vmin.f32 %v1075, 0.0
      %v1117 = vmin.f32 %v1076, 0.0
      %v1118 = vmin.f32 %v1077, 0.0
      %v1119 = vmin.f32 %v1078, 0.0
      %v1120 = vmin.f32 %v1079, 0.0
      %v1121 = vmin.f32 %v1080, 0.0
      %v1122 = vmin.f32 %v1081, 0.0
      %v1123 = vmin.f32 %v1082, 0.0
      %v1124 = vmin.f32 %v1083, 0.0
      %v1125 = vmin.f32 %v1084, 0.0
      %v1126 = vmin.f32 %v1085, 0.0
      %v1127 = vmin.f32 %v1086, 0.0
      %v1128 = vmin.f32 %v1087, 0.0
      %v1129 = vmin.f32 %v1088, 0.0
      %v1130 = vmin.f32 %v1089, 0.0
      %v1131 = vsub.f32 %v1090, %v804
      %v1132 = vsub.f32 %v1091, %v806
      %v1133 = vsub.f32 %v1092, %v808
      %v1134 = vsub.f32 %v1093, %v810
      %v1135 = vsub.f32 %v1094, %v812
      %v1136 = vsub.f32 %v1095, %v814
      %v1137 = vsub.f32 %v1096, %v816
      %v1138 = vsub.f32 %v1097, %v818
      %v1139 = vsub.f32 %v1098, %v820
      %v1140 = vsub.f32 %v1099, %v822
      %v1141 = vsub.f32 %v1100, %v824
      %v1142 = vsub.f32 %v1101, %v826
      %v1143 = vsub.f32 %v1102, %v828
      %v1144 = vsub.f32 %v1103, %v830
      %v1145 = vsub.f32 %v1104, %v832
      %v1146 = vsub.f32 %v1105, %v834
      %v1147 = vsub.f32 %v1106, %v836
      %v1148 = vsub.f32 %v1107, %v838
      %v1149 = vsub.f32 %v1108, %v840
      %v1150 = vsub.f32 %v1109, %v842
      %v1151 = vsub.f32 %v1110, %v844
      %v1152 = vsub.f32 %v1111, %v846
      %v1153 = vsub.f32 %v1112, %v848
      %v1154 = vsub.f32 %v1113, %v850
      %v1155 = vsub.f32 %v1114, %v852
      %v1156 = vsub.f32 %v1115, %v854
      %v1157 = vsub.f32 %v1116, %v856
      %v1158 = vsub.f32 %v1117, %v858
      %v1159 = vsub.f32 %v1118, %v860
      %v1160 = vsub.f32 %v1119, %v862
      %v1161 = vsub.f32 %v1120, %v864
      %v1162 = vsub.f32 %v1121, %v866
      %v1163 = vsub.f32 %v1122, %v868
      %v1164 = vsub.f32 %v1123, %v870
      %v1165 = vsub.f32 %v1124, %v872
      %v1166 = vsub.f32 %v1125, %v874
      %v1167 = vsub.f32 %v1126, %v876
      %v1168 = vsub.f32 %v1127, %v878
      %v1169 = vsub.f32 %v1128, %v880
      %v1170 = vsub.f32 %v1129, %v882
      %v1171 = vsub.f32 %v1130, %v884
      %v1172 = vmax.f32 %v1131, -9.2103405
      %v1173 = vmax.f32 %v1132, -9.2103405
      %v1174 = vmax.f32 %v1133, -9.2103405
      %v1175 = vmax.f32 %v1134, -9.2103405
      %v1176 = vmax.f32 %v1135, -9.2103405
      %v1177 = vmax.f32 %v1136, -9.2103405
      %v1178 = vmax.f32 %v1137, -9.2103405
      %v1179 = vmax.f32 %v1138, -9.2103405
      %v1180 = vmax.f32 %v1139, -9.2103405
      %v1181 = vmax.f32 %v1140, -9.2103405
      %v1182 = vmax.f32 %v1141, -9.2103405
      %v1183 = vmax.f32 %v1142, -9.2103405
      %v1184 = vmax.f32 %v1143, -9.2103405
      %v1185 = vmax.f32 %v1144, -9.2103405
      %v1186 = vmax.f32 %v1145, -9.2103405
      %v1187 = vmax.f32 %v1146, -9.2103405
      %v1188 = vmax.f32 %v1147, -9.2103405
      %v1189 = vmax.f32 %v1148, -9.2103405
      %v1190 = vmax.f32 %v1149, -9.2103405
      %v1191 = vmax.f32 %v1150, -9.2103405
      %v1192 = vmax.f32 %v1151, -9.2103405
      %v1193 = vmax.f32 %v1152, -9.2103405
      %v1194 = vmax.f32 %v1153, -9.2103405
      %v1195 = vmax.f32 %v1154, -9.2103405
      %v1196 = vmax.f32 %v1155, -9.2103405
      %v1197 = vmax.f32 %v1156, -9.2103405
      %v1198 = vmax.f32 %v1157, -9.2103405
      %v1199 = vmax.f32 %v1158, -9.2103405
      %v1200 = vmax.f32 %v1159, -9.2103405
      %v1201 = vmax.f32 %v1160, -9.2103405
      %v1202 = vmax.f32 %v1161, -9.2103405
      %v1203 = vmax.f32 %v1162, -9.2103405
      %v1204 = vmax.f32 %v1163, -9.2103405
      %v1205 = vmax.f32 %v1164, -9.2103405
      %v1206 = vmax.f32 %v1165, -9.2103405
      %v1207 = vmax.f32 %v1166, -9.2103405
      %v1208 = vmax.f32 %v1167, -9.2103405
      %v1209 = vmax.f32 %v1168, -9.2103405
      %v1210 = vmax.f32 %v1169, -9.2103405
      %v1211 = vmax.f32 %v1170, -9.2103405
      %v1212 = vmax.f32 %v1171, -9.2103405
      %v1213 = vmin.f32 %v1172, -0.000100005
      %v1214 = vmin.f32 %v1173, -0.000100005
      %v1215 = vmin.f32 %v1174, -0.000100005
      %v1216 = vmin.f32 %v1175, -0.000100005
      %v1217 = vmin.f32 %v1176, -0.000100005
      %v1218 = vmin.f32 %v1177, -0.000100005
      %v1219 = vmin.f32 %v1178, -0.000100005
      %v1220 = vmin.f32 %v1179, -0.000100005
      %v1221 = vmin.f32 %v1180, -0.000100005
      %v1222 = vmin.f32 %v1181, -0.000100005
      %v1223 = vmin.f32 %v1182, -0.000100005
      %v1224 = vmin.f32 %v1183, -0.000100005
      %v1225 = vmin.f32 %v1184, -0.000100005
      %v1226 = vmin.f32 %v1185, -0.000100005
      %v1227 = vmin.f32 %v1186, -0.000100005
      %v1228 = vmin.f32 %v1187, -0.000100005
      %v1229 = vmin.f32 %v1188, -0.000100005
      %v1230 = vmin.f32 %v1189, -0.000100005
      %v1231 = vmin.f32 %v1190, -0.000100005
      %v1232 = vmin.f32 %v1191, -0.000100005
      %v1233 = vmin.f32 %v1192, -0.000100005
      %v1234 = vmin.f32 %v1193, -0.000100005
      %v1235 = vmin.f32 %v1194, -0.000100005
      %v1236 = vmin.f32 %v1195, -0.000100005
      %v1237 = vmin.f32 %v1196, -0.000100005
      %v1238 = vmin.f32 %v1197, -0.000100005
      %v1239 = vmin.f32 %v1198, -0.000100005
      %v1240 = vmin.f32 %v1199, -0.000100005
      %v1241 = vmin.f32 %v1200, -0.000100005
      %v1242 = vmin.f32 %v1201, -0.000100005
      %v1243 = vmin.f32 %v1202, -0.000100005
      %v1244 = vmin.f32 %v1203, -0.000100005
      %v1245 = vmin.f32 %v1204, -0.000100005
      %v1246 = vmin.f32 %v1205, -0.000100005
      %v1247 = vmin.f32 %v1206, -0.000100005
      %v1248 = vmin.f32 %v1207, -0.000100005
      %v1249 = vmin.f32 %v1208, -0.000100005
      %v1250 = vmin.f32 %v1209, -0.000100005
      %v1251 = vmin.f32 %v1210, -0.000100005
      %v1252 = vmin.f32 %v1211, -0.000100005
      %v1253 = vmin.f32 %v1212, -0.000100005
      %v1254 = vrcp.pop %v762
      %v1255 = vmul.f32 1.0, %v1254
      %v1256 = vrcp.pop %v763
      %v1257 = vmul.f32 1.0, %v1256
      %v1258 = vrcp.pop %v764
      %v1259 = vmul.f32 1.0, %v1258
      %v1260 = vrcp.pop %v765
      %v1261 = vmul.f32 1.0, %v1260
      %v1262 = vrcp.pop %v766
      %v1263 = vmul.f32 1.0, %v1262
      %v1264 = vrcp.pop %v767
      %v1265 = vmul.f32 1.0, %v1264
      %v1266 = vrcp.pop %v768
      %v1267 = vmul.f32 1.0, %v1266
      %v1268 = vrcp.pop %v769
      %v1269 = vmul.f32 1.0, %v1268
      %v1270 = vrcp.pop %v770
      %v1271 = vmul.f32 1.0, %v1270
      %v1272 = vrcp.pop %v771
      %v1273 = vmul.f32 1.0, %v1272
      %v1274 = vrcp.pop %v772
      %v1275 = vmul.f32 1.0, %v1274
      %v1276 = vrcp.pop %v773
      %v1277 = vmul.f32 1.0, %v1276
      %v1278 = vrcp.pop %v774
      %v1279 = vmul.f32 1.0, %v1278
      %v1280 = vrcp.pop %v775
      %v1281 = vmul.f32 1.0, %v1280
      %v1282 = vrcp.pop %v776
      %v1283 = vmul.f32 1.0, %v1282
      %v1284 = vrcp.pop %v777
      %v1285 = vmul.f32 1.0, %v1284
      %v1286 = vrcp.pop %v778
      %v1287 = vmul.f32 1.0, %v1286
      %v1288 = vrcp.pop %v779
      %v1289 = vmul.f32 1.0, %v1288
      %v1290 = vrcp.pop %v780
      %v1291 = vmul.f32 1.0, %v1290
      %v1292 = vrcp.pop %v781
      %v1293 = vmul.f32 1.0, %v1292
      %v1294 = vrcp.pop %v782
      %v1295 = vmul.f32 1.0, %v1294
      %v1296 = vrcp.pop %v783
      %v1297 = vmul.f32 1.0, %v1296
      %v1298 = vrcp.pop %v784
      %v1299 = vmul.f32 1.0, %v1298
      %v1300 = vrcp.pop %v785
      %v1301 = vmul.f32 1.0, %v1300
      %v1302 = vrcp.pop %v786
      %v1303 = vmul.f32 1.0, %v1302
      %v1304 = vrcp.pop %v787
      %v1305 = vmul.f32 1.0, %v1304
      %v1306 = vrcp.pop %v788
      %v1307 = vmul.f32 1.0, %v1306
      %v1308 = vrcp.pop %v789
      %v1309 = vmul.f32 1.0, %v1308
      %v1310 = vrcp.pop %v790
      %v1311 = vmul.f32 1.0, %v1310
      %v1312 = vrcp.pop %v791
      %v1313 = vmul.f32 1.0, %v1312
      %v1314 = vrcp.pop %v792
      %v1315 = vmul.f32 1.0, %v1314
      %v1316 = vrcp.pop %v793
      %v1317 = vmul.f32 1.0, %v1316
      %v1318 = vrcp.pop %v794
      %v1319 = vmul.f32 1.0, %v1318
      %v1320 = vrcp.pop %v795
      %v1321 = vmul.f32 1.0, %v1320
      %v1322 = vrcp.pop %v796
      %v1323 = vmul.f32 1.0, %v1322
      %v1324 = vrcp.pop %v797
      %v1325 = vmul.f32 1.0, %v1324
      %v1326 = vrcp.pop %v798
      %v1327 = vmul.f32 1.0, %v1326
      %v1328 = vrcp.pop %v799
      %v1329 = vmul.f32 1.0, %v1328
      %v1330 = vrcp.pop %v800
      %v1331 = vmul.f32 1.0, %v1330
      %v1332 = vrcp.pop %v801
      %v1333 = vmul.f32 1.0, %v1332
      %v1334 = vrcp.pop %v802
      %v1335 = vmul.f32 1.0, %v1334
      %vm1336 = vcmp.ge.f32.partialorder %v516, 0.0
      %vm1337 = vcmp.ge.f32.partialorder %v517, 0.0
      %vm1338 = vcmp.ge.f32.partialorder %v518, 0.0
      %vm1339 = vcmp.ge.f32.partialorder %v519, 0.0
      %vm1340 = vcmp.ge.f32.partialorder %v520, 0.0
      %vm1341 = vcmp.ge.f32.partialorder %v521, 0.0
      %vm1342 = vcmp.ge.f32.partialorder %v522, 0.0
      %vm1343 = vcmp.ge.f32.partialorder %v523, 0.0
      %vm1344 = vcmp.ge.f32.partialorder %v524, 0.0
      %vm1345 = vcmp.ge.f32.partialorder %v525, 0.0
      %vm1346 = vcmp.ge.f32.partialorder %v526, 0.0
      %vm1347 = vcmp.ge.f32.partialorder %v527, 0.0
      %vm1348 = vcmp.ge.f32.partialorder %v528, 0.0
      %vm1349 = vcmp.ge.f32.partialorder %v529, 0.0
      %vm1350 = vcmp.ge.f32.partialorder %v530, 0.0
      %vm1351 = vcmp.ge.f32.partialorder %v531, 0.0
      %vm1352 = vcmp.ge.f32.partialorder %v532, 0.0
      %vm1353 = vcmp.ge.f32.partialorder %v533, 0.0
      %vm1354 = vcmp.ge.f32.partialorder %v534, 0.0
      %vm1355 = vcmp.ge.f32.partialorder %v535, 0.0
      %vm1356 = vcmp.ge.f32.partialorder %v536, 0.0
      %vm1357 = vcmp.ge.f32.partialorder %v537, 0.0
      %vm1358 = vcmp.ge.f32.partialorder %v538, 0.0
      %vm1359 = vcmp.ge.f32.partialorder %v539, 0.0
      %vm1360 = vcmp.ge.f32.partialorder %v540, 0.0
      %vm1361 = vcmp.ge.f32.partialorder %v541, 0.0
      %vm1362 = vcmp.ge.f32.partialorder %v542, 0.0
      %vm1363 = vcmp.ge.f32.partialorder %v543, 0.0
      %vm1364 = vcmp.ge.f32.partialorder %v544, 0.0
      %vm1365 = vcmp.ge.f32.partialorder %v545, 0.0
      %vm1366 = vcmp.ge.f32.partialorder %v546, 0.0
      %vm1367 = vcmp.ge.f32.partialorder %v547, 0.0
      %vm1368 = vcmp.ge.f32.partialorder %v548, 0.0
      %vm1369 = vcmp.ge.f32.partialorder %v549, 0.0
      %vm1370 = vcmp.ge.f32.partialorder %v550, 0.0
      %vm1371 = vcmp.ge.f32.partialorder %v551, 0.0
      %vm1372 = vcmp.ge.f32.partialorder %v552, 0.0
      %vm1373 = vcmp.ge.f32.partialorder %v553, 0.0
      %vm1374 = vcmp.ge.f32.partialorder %v554, 0.0
      %vm1375 = vcmp.ge.f32.partialorder %v555, 0.0
      %vm1376 = vcmp.ge.f32.partialorder %v556, 0.0
      %v1377 = vsub.f32 1.0, %v1255
      %v1378 = vsub.f32 1.0, %v1257
      %v1379 = vsub.f32 1.0, %v1259
      %v1380 = vsub.f32 1.0, %v1261
      %v1381 = vsub.f32 1.0, %v1263
      %v1382 = vsub.f32 1.0, %v1265
      %v1383 = vsub.f32 1.0, %v1267
      %v1384 = vsub.f32 1.0, %v1269
      %v1385 = vsub.f32 1.0, %v1271
      %v1386 = vsub.f32 1.0, %v1273
      %v1387 = vsub.f32 1.0, %v1275
      %v1388 = vsub.f32 1.0, %v1277
      %v1389 = vsub.f32 1.0, %v1279
      %v1390 = vsub.f32 1.0, %v1281
      %v1391 = vsub.f32 1.0, %v1283
      %v1392 = vsub.f32 1.0, %v1285
      %v1393 = vsub.f32 1.0, %v1287
      %v1394 = vsub.f32 1.0, %v1289
      %v1395 = vsub.f32 1.0, %v1291
      %v1396 = vsub.f32 1.0, %v1293
      %v1397 = vsub.f32 1.0, %v1295
      %v1398 = vsub.f32 1.0, %v1297
      %v1399 = vsub.f32 1.0, %v1299
      %v1400 = vsub.f32 1.0, %v1301
      %v1401 = vsub.f32 1.0, %v1303
      %v1402 = vsub.f32 1.0, %v1305
      %v1403 = vsub.f32 1.0, %v1307
      %v1404 = vsub.f32 1.0, %v1309
      %v1405 = vsub.f32 1.0, %v1311
      %v1406 = vsub.f32 1.0, %v1313
      %v1407 = vsub.f32 1.0, %v1315
      %v1408 = vsub.f32 1.0, %v1317
      %v1409 = vsub.f32 1.0, %v1319
      %v1410 = vsub.f32 1.0, %v1321
      %v1411 = vsub.f32 1.0, %v1323
      %v1412 = vsub.f32 1.0, %v1325
      %v1413 = vsub.f32 1.0, %v1327
      %v1414 = vsub.f32 1.0, %v1329
      %v1415 = vsub.f32 1.0, %v1331
      %v1416 = vsub.f32 1.0, %v1333
      %v1417 = vsub.f32 1.0, %v1335
      %v1418 = vsel %vm1336, %v1255, %v1377
      %v1419 = vsel %vm1337, %v1257, %v1378
      %v1420 = vsel %vm1338, %v1259, %v1379
      %v1421 = vsel %vm1339, %v1261, %v1380
      %v1422 = vsel %vm1340, %v1263, %v1381
      %v1423 = vsel %vm1341, %v1265, %v1382
      %v1424 = vsel %vm1342, %v1267, %v1383
      %v1425 = vsel %vm1343, %v1269, %v1384
      %v1426 = vsel %vm1344, %v1271, %v1385
      %v1427 = vsel %vm1345, %v1273, %v1386
      %v1428 = vsel %vm1346, %v1275, %v1387
      %v1429 = vsel %vm1347, %v1277, %v1388
      %v1430 = vsel %vm1348, %v1279, %v1389
      %v1431 = vsel %vm1349, %v1281, %v1390
      %v1432 = vsel %vm1350, %v1283, %v1391
      %v1433 = vsel %vm1351, %v1285, %v1392
      %v1434 = vsel %vm1352, %v1287, %v1393
      %v1435 = vsel %vm1353, %v1289, %v1394
      %v1436 = vsel %vm1354, %v1291, %v1395
      %v1437 = vsel %vm1355, %v1293, %v1396
      %v1438 = vsel %vm1356, %v1295, %v1397
      %v1439 = vsel %vm1357, %v1297, %v1398
      %v1440 = vsel %vm1358, %v1299, %v1399
      %v1441 = vsel %vm1359, %v1301, %v1400
      %v1442 = vsel %vm1360, %v1303, %v1401
      %v1443 = vsel %vm1361, %v1305, %v1402
      %v1444 = vsel %vm1362, %v1307, %v1403
      %v1445 = vsel %vm1363, %v1309, %v1404
      %v1446 = vsel %vm1364, %v1311, %v1405
      %v1447 = vsel %vm1365, %v1313, %v1406
      %v1448 = vsel %vm1366, %v1315, %v1407
      %v1449 = vsel %vm1367, %v1317, %v1408
      %v1450 = vsel %vm1368, %v1319, %v1409
      %v1451 = vsel %vm1369, %v1321, %v1410
      %v1452 = vsel %vm1370, %v1323, %v1411
      %v1453 = vsel %vm1371, %v1325, %v1412
      %v1454 = vsel %vm1372, %v1327, %v1413
      %v1455 = vsel %vm1373, %v1329, %v1414
      %v1456 = vsel %vm1374, %v1331, %v1415
      %v1457 = vsel %vm1375, %v1333, %v1416
      %v1458 = vsel %vm1376, %v1335, %v1417
      %v1459 = vmax.f32 %v1418, 0.0001
      %v1460 = vmax.f32 %v1419, 0.0001
      %v1461 = vmax.f32 %v1420, 0.0001
      %v1462 = vmax.f32 %v1421, 0.0001
      %v1463 = vmax.f32 %v1422, 0.0001
      %v1464 = vmax.f32 %v1423, 0.0001
      %v1465 = vmax.f32 %v1424, 0.0001
      %v1466 = vmax.f32 %v1425, 0.0001
      %v1467 = vmax.f32 %v1426, 0.0001
      %v1468 = vmax.f32 %v1427, 0.0001
      %v1469 = vmax.f32 %v1428, 0.0001
      %v1470 = vmax.f32 %v1429, 0.0001
      %v1471 = vmax.f32 %v1430, 0.0001
      %v1472 = vmax.f32 %v1431, 0.0001
      %v1473 = vmax.f32 %v1432, 0.0001
      %v1474 = vmax.f32 %v1433, 0.0001
      %v1475 = vmax.f32 %v1434, 0.0001
      %v1476 = vmax.f32 %v1435, 0.0001
      %v1477 = vmax.f32 %v1436, 0.0001
      %v1478 = vmax.f32 %v1437, 0.0001
      %v1479 = vmax.f32 %v1438, 0.0001
      %v1480 = vmax.f32 %v1439, 0.0001
      %v1481 = vmax.f32 %v1440, 0.0001
      %v1482 = vmax.f32 %v1441, 0.0001
      %v1483 = vmax.f32 %v1442, 0.0001
      %v1484 = vmax.f32 %v1443, 0.0001
      %v1485 = vmax.f32 %v1444, 0.0001
      %v1486 = vmax.f32 %v1445, 0.0001
      %v1487 = vmax.f32 %v1446, 0.0001
      %v1488 = vmax.f32 %v1447, 0.0001
      %v1489 = vmax.f32 %v1448, 0.0001
      %v1490 = vmax.f32 %v1449, 0.0001
      %v1491 = vmax.f32 %v1450, 0.0001
      %v1492 = vmax.f32 %v1451, 0.0001
      %v1493 = vmax.f32 %v1452, 0.0001
      %v1494 = vmax.f32 %v1453, 0.0001
      %v1495 = vmax.f32 %v1454, 0.0001
      %v1496 = vmax.f32 %v1455, 0.0001
      %v1497 = vmax.f32 %v1456, 0.0001
      %v1498 = vmax.f32 %v1457, 0.0001
      %v1499 = vmax.f32 %v1458, 0.0001
      %v1500 = vmin.f32 %v1459, 0.9999
      %v1501 = vmin.f32 %v1460, 0.9999
      %v1502 = vmin.f32 %v1461, 0.9999
      %v1503 = vmin.f32 %v1462, 0.9999
      %v1504 = vmin.f32 %v1463, 0.9999
      %v1505 = vmin.f32 %v1464, 0.9999
      %v1506 = vmin.f32 %v1465, 0.9999
      %v1507 = vmin.f32 %v1466, 0.9999
      %v1508 = vmin.f32 %v1467, 0.9999
      %v1509 = vmin.f32 %v1468, 0.9999
      %v1510 = vmin.f32 %v1469, 0.9999
      %v1511 = vmin.f32 %v1470, 0.9999
      %v1512 = vmin.f32 %v1471, 0.9999
      %v1513 = vmin.f32 %v1472, 0.9999
      %v1514 = vmin.f32 %v1473, 0.9999
      %v1515 = vmin.f32 %v1474, 0.9999
      %v1516 = vmin.f32 %v1475, 0.9999
      %v1517 = vmin.f32 %v1476, 0.9999
      %v1518 = vmin.f32 %v1477, 0.9999
      %v1519 = vmin.f32 %v1478, 0.9999
      %v1520 = vmin.f32 %v1479, 0.9999
      %v1521 = vmin.f32 %v1480, 0.9999
      %v1522 = vmin.f32 %v1481, 0.9999
      %v1523 = vmin.f32 %v1482, 0.9999
      %v1524 = vmin.f32 %v1483, 0.9999
      %v1525 = vmin.f32 %v1484, 0.9999
      %v1526 = vmin.f32 %v1485, 0.9999
      %v1527 = vmin.f32 %v1486, 0.9999
      %v1528 = vmin.f32 %v1487, 0.9999
      %v1529 = vmin.f32 %v1488, 0.9999
      %v1530 = vmin.f32 %v1489, 0.9999
      %v1531 = vmin.f32 %v1490, 0.9999
      %v1532 = vmin.f32 %v1491, 0.9999
      %v1533 = vmin.f32 %v1492, 0.9999
      %v1534 = vmin.f32 %v1493, 0.9999
      %v1535 = vmin.f32 %v1494, 0.9999
      %v1536 = vmin.f32 %v1495, 0.9999
      %v1537 = vmin.f32 %v1496, 0.9999
      %v1538 = vmin.f32 %v1497, 0.9999
      %v1539 = vmin.f32 %v1498, 0.9999
      %v1540 = vmin.f32 %v1499, 0.9999
      %vm1541 = vcmp.eq.f32.partialorder %v557, 1.0
      %vm1542 = vcmp.eq.f32.partialorder %v558, 1.0
      %vm1543 = vcmp.eq.f32.partialorder %v559, 1.0
      %vm1544 = vcmp.eq.f32.partialorder %v560, 1.0
      %vm1545 = vcmp.eq.f32.partialorder %v561, 1.0
      %vm1546 = vcmp.eq.f32.partialorder %v562, 1.0
      %vm1547 = vcmp.eq.f32.partialorder %v563, 1.0
      %vm1548 = vcmp.eq.f32.partialorder %v564, 1.0
      %vm1549 = vcmp.eq.f32.partialorder %v565, 1.0
      %vm1550 = vcmp.eq.f32.partialorder %v566, 1.0
      %vm1551 = vcmp.eq.f32.partialorder %v567, 1.0
      %vm1552 = vcmp.eq.f32.partialorder %v568, 1.0
      %vm1553 = vcmp.eq.f32.partialorder %v569, 1.0
      %vm1554 = vcmp.eq.f32.partialorder %v570, 1.0
      %vm1555 = vcmp.eq.f32.partialorder %v571, 1.0
      %vm1556 = vcmp.eq.f32.partialorder %v572, 1.0
      %vm1557 = vcmp.eq.f32.partialorder %v573, 1.0
      %vm1558 = vcmp.eq.f32.partialorder %v574, 1.0
      %vm1559 = vcmp.eq.f32.partialorder %v575, 1.0
      %vm1560 = vcmp.eq.f32.partialorder %v576, 1.0
      %vm1561 = vcmp.eq.f32.partialorder %v577, 1.0
      %vm1562 = vcmp.eq.f32.partialorder %v578, 1.0
      %vm1563 = vcmp.eq.f32.partialorder %v579, 1.0
      %vm1564 = vcmp.eq.f32.partialorder %v580, 1.0
      %vm1565 = vcmp.eq.f32.partialorder %v581, 1.0
      %vm1566 = vcmp.eq.f32.partialorder %v582, 1.0
      %vm1567 = vcmp.eq.f32.partialorder %v583, 1.0
      %vm1568 = vcmp.eq.f32.partialorder %v584, 1.0
      %vm1569 = vcmp.eq.f32.partialorder %v585, 1.0
      %vm1570 = vcmp.eq.f32.partialorder %v586, 1.0
      %vm1571 = vcmp.eq.f32.partialorder %v587, 1.0
      %vm1572 = vcmp.eq.f32.partialorder %v588, 1.0
      %vm1573 = vcmp.eq.f32.partialorder %v589, 1.0
      %vm1574 = vcmp.eq.f32.partialorder %v590, 1.0
      %vm1575 = vcmp.eq.f32.partialorder %v591, 1.0
      %vm1576 = vcmp.eq.f32.partialorder %v592, 1.0
      %vm1577 = vcmp.eq.f32.partialorder %v593, 1.0
      %vm1578 = vcmp.eq.f32.partialorder %v594, 1.0
      %vm1579 = vcmp.eq.f32.partialorder %v595, 1.0
      %vm1580 = vcmp.eq.f32.partialorder %v596, 1.0
      %vm1581 = vcmp.eq.f32.partialorder %v597, 1.0
      %v1582 = vsel %vm1541, 1, 0
      %v1583 = vsel %vm1542, 1, 0
      %v1584 = vsel %vm1543, 1, 0
      %v1585 = vsel %vm1544, 1, 0
      %v1586 = vsel %vm1545, 1, 0
      %v1587 = vsel %vm1546, 1, 0
      %v1588 = vsel %vm1547, 1, 0
      %v1589 = vsel %vm1548, 1, 0
      %v1590 = vsel %vm1549, 1, 0
      %v1591 = vsel %vm1550, 1, 0
      %v1592 = vsel %vm1551, 1, 0
      %v1593 = vsel %vm1552, 1, 0
      %v1594 = vsel %vm1553, 1, 0
      %v1595 = vsel %vm1554, 1, 0
      %v1596 = vsel %vm1555, 1, 0
      %v1597 = vsel %vm1556, 1, 0
      %v1598 = vsel %vm1557, 1, 0
      %v1599 = vsel %vm1558, 1, 0
      %v1600 = vsel %vm1559, 1, 0
      %v1601 = vsel %vm1560, 1, 0
      %v1602 = vsel %vm1561, 1, 0
      %v1603 = vsel %vm1562, 1, 0
      %v1604 = vsel %vm1563, 1, 0
      %v1605 = vsel %vm1564, 1, 0
      %v1606 = vsel %vm1565, 1, 0
      %v1607 = vsel %vm1566, 1, 0
      %v1608 = vsel %vm1567, 1, 0
      %v1609 = vsel %vm1568, 1, 0
      %v1610 = vsel %vm1569, 1, 0
      %v1611 = vsel %vm1570, 1, 0
      %v1612 = vsel %vm1571, 1, 0
      %v1613 = vsel %vm1572, 1, 0
      %v1614 = vsel %vm1573, 1, 0
      %v1615 = vsel %vm1574, 1, 0
      %v1616 = vsel %vm1575, 1, 0
      %v1617 = vsel %vm1576, 1, 0
      %v1618 = vsel %vm1577, 1, 0
      %v1619 = vsel %vm1578, 1, 0
      %v1620 = vsel %vm1579, 1, 0
      %v1621 = vsel %vm1580, 1, 0
      %v1622 = vsel %vm1581, 1, 0
      %v1623 = vcvt.s32.f32 %v1582
      %v1624 = vcvt.s32.f32 %v1583
      %v1625 = vcvt.s32.f32 %v1584
      %v1626 = vcvt.s32.f32 %v1585
      %v1627 = vcvt.s32.f32 %v1586
      %v1628 = vcvt.s32.f32 %v1587
      %v1629 = vcvt.s32.f32 %v1588
      %v1630 = vcvt.s32.f32 %v1589
      %v1631 = vcvt.s32.f32 %v1590
      %v1632 = vcvt.s32.f32 %v1591
      %v1633 = vcvt.s32.f32 %v1592
      %v1634 = vcvt.s32.f32 %v1593
      %v1635 = vcvt.s32.f32 %v1594
      %v1636 = vcvt.s32.f32 %v1595
      %v1637 = vcvt.s32.f32 %v1596
      %v1638 = vcvt.s32.f32 %v1597
      %v1639 = vcvt.s32.f32 %v1598
      %v1640 = vcvt.s32.f32 %v1599
      %v1641 = vcvt.s32.f32 %v1600
      %v1642 = vcvt.s32.f32 %v1601
      %v1643 = vcvt.s32.f32 %v1602
      %v1644 = vcvt.s32.f32 %v1603
      %v1645 = vcvt.s32.f32 %v1604
      %v1646 = vcvt.s32.f32 %v1605
      %v1647 = vcvt.s32.f32 %v1606
      %v1648 = vcvt.s32.f32 %v1607
      %v1649 = vcvt.s32.f32 %v1608
      %v1650 = vcvt.s32.f32 %v1609
      %v1651 = vcvt.s32.f32 %v1610
      %v1652 = vcvt.s32.f32 %v1611
      %v1653 = vcvt.s32.f32 %v1612
      %v1654 = vcvt.s32.f32 %v1613
      %v1655 = vcvt.s32.f32 %v1614
      %v1656 = vcvt.s32.f32 %v1615
      %v1657 = vcvt.s32.f32 %v1616
      %v1658 = vcvt.s32.f32 %v1617
      %v1659 = vcvt.s32.f32 %v1618
      %v1660 = vcvt.s32.f32 %v1619
      %v1661 = vcvt.s32.f32 %v1620
      %v1662 = vcvt.s32.f32 %v1621
      %v1663 = vcvt.s32.f32 %v1622
      %vm1664 = vcmp.lt.f32.partialorder %v557, 1.0
      %vm1665 = vcmp.lt.f32.partialorder %v558, 1.0
      %vm1666 = vcmp.lt.f32.partialorder %v559, 1.0
      %vm1667 = vcmp.lt.f32.partialorder %v560, 1.0
      %vm1668 = vcmp.lt.f32.partialorder %v561, 1.0
      %vm1669 = vcmp.lt.f32.partialorder %v562, 1.0
      %vm1670 = vcmp.lt.f32.partialorder %v563, 1.0
      %vm1671 = vcmp.lt.f32.partialorder %v564, 1.0
      %vm1672 = vcmp.lt.f32.partialorder %v565, 1.0
      %vm1673 = vcmp.lt.f32.partialorder %v566, 1.0
      %vm1674 = vcmp.lt.f32.partialorder %v567, 1.0
      %vm1675 = vcmp.lt.f32.partialorder %v568, 1.0
      %vm1676 = vcmp.lt.f32.partialorder %v569, 1.0
      %vm1677 = vcmp.lt.f32.partialorder %v570, 1.0
      %vm1678 = vcmp.lt.f32.partialorder %v571, 1.0
      %vm1679 = vcmp.lt.f32.partialorder %v572, 1.0
      %vm1680 = vcmp.lt.f32.partialorder %v573, 1.0
      %vm1681 = vcmp.lt.f32.partialorder %v574, 1.0
      %vm1682 = vcmp.lt.f32.partialorder %v575, 1.0
      %vm1683 = vcmp.lt.f32.partialorder %v576, 1.0
      %vm1684 = vcmp.lt.f32.partialorder %v577, 1.0
      %vm1685 = vcmp.lt.f32.partialorder %v578, 1.0
      %vm1686 = vcmp.lt.f32.partialorder %v579, 1.0
      %vm1687 = vcmp.lt.f32.partialorder %v580, 1.0
      %vm1688 = vcmp.lt.f32.partialorder %v581, 1.0
      %vm1689 = vcmp.lt.f32.partialorder %v582, 1.0
      %vm1690 = vcmp.lt.f32.partialorder %v583, 1.0
      %vm1691 = vcmp.lt.f32.partialorder %v584, 1.0
      %vm1692 = vcmp.lt.f32.partialorder %v585, 1.0
      %vm1693 = vcmp.lt.f32.partialorder %v586, 1.0
      %vm1694 = vcmp.lt.f32.partialorder %v587, 1.0
      %vm1695 = vcmp.lt.f32.partialorder %v588, 1.0
      %vm1696 = vcmp.lt.f32.partialorder %v589, 1.0
      %vm1697 = vcmp.lt.f32.partialorder %v590, 1.0
      %vm1698 = vcmp.lt.f32.partialorder %v591, 1.0
      %vm1699 = vcmp.lt.f32.partialorder %v592, 1.0
      %vm1700 = vcmp.lt.f32.partialorder %v593, 1.0
      %vm1701 = vcmp.lt.f32.partialorder %v594, 1.0
      %vm1702 = vcmp.lt.f32.partialorder %v595, 1.0
      %vm1703 = vcmp.lt.f32.partialorder %v596, 1.0
      %vm1704 = vcmp.lt.f32.partialorder %v597, 1.0
      %v1705 = vsel %vm1664, 1, 0
      %v1706 = vsel %vm1665, 1, 0
      %v1707 = vsel %vm1666, 1, 0
      %v1708 = vsel %vm1667, 1, 0
      %v1709 = vsel %vm1668, 1, 0
      %v1710 = vsel %vm1669, 1, 0
      %v1711 = vsel %vm1670, 1, 0
      %v1712 = vsel %vm1671, 1, 0
      %v1713 = vsel %vm1672, 1, 0
      %v1714 = vsel %vm1673, 1, 0
      %v1715 = vsel %vm1674, 1, 0
      %v1716 = vsel %vm1675, 1, 0
      %v1717 = vsel %vm1676, 1, 0
      %v1718 = vsel %vm1677, 1, 0
      %v1719 = vsel %vm1678, 1, 0
      %v1720 = vsel %vm1679, 1, 0
      %v1721 = vsel %vm1680, 1, 0
      %v1722 = vsel %vm1681, 1, 0
      %v1723 = vsel %vm1682, 1, 0
      %v1724 = vsel %vm1683, 1, 0
      %v1725 = vsel %vm1684, 1, 0
      %v1726 = vsel %vm1685, 1, 0
      %v1727 = vsel %vm1686, 1, 0
      %v1728 = vsel %vm1687, 1, 0
      %v1729 = vsel %vm1688, 1, 0
      %v1730 = vsel %vm1689, 1, 0
      %v1731 = vsel %vm1690, 1, 0
      %v1732 = vsel %vm1691, 1, 0
      %v1733 = vsel %vm1692, 1, 0
      %v1734 = vsel %vm1693, 1, 0
      %v1735 = vsel %vm1694, 1, 0
      %v1736 = vsel %vm1695, 1, 0
      %v1737 = vsel %vm1696, 1, 0
      %v1738 = vsel %vm1697, 1, 0
      %v1739 = vsel %vm1698, 1, 0
      %v1740 = vsel %vm1699, 1, 0
      %v1741 = vsel %vm1700, 1, 0
      %v1742 = vsel %vm1701, 1, 0
      %v1743 = vsel %vm1702, 1, 0
      %v1744 = vsel %vm1703, 1, 0
      %v1745 = vsel %vm1704, 1, 0
      %v1746 = vcvt.s32.f32 %v1705
      %v1747 = vcvt.s32.f32 %v1706
      %v1748 = vcvt.s32.f32 %v1707
      %v1749 = vcvt.s32.f32 %v1708
      %v1750 = vcvt.s32.f32 %v1709
      %v1751 = vcvt.s32.f32 %v1710
      %v1752 = vcvt.s32.f32 %v1711
      %v1753 = vcvt.s32.f32 %v1712
      %v1754 = vcvt.s32.f32 %v1713
      %v1755 = vcvt.s32.f32 %v1714
      %v1756 = vcvt.s32.f32 %v1715
      %v1757 = vcvt.s32.f32 %v1716
      %v1758 = vcvt.s32.f32 %v1717
      %v1759 = vcvt.s32.f32 %v1718
      %v1760 = vcvt.s32.f32 %v1719
      %v1761 = vcvt.s32.f32 %v1720
      %v1762 = vcvt.s32.f32 %v1721
      %v1763 = vcvt.s32.f32 %v1722
      %v1764 = vcvt.s32.f32 %v1723
      %v1765 = vcvt.s32.f32 %v1724
      %v1766 = vcvt.s32.f32 %v1725
      %v1767 = vcvt.s32.f32 %v1726
      %v1768 = vcvt.s32.f32 %v1727
      %v1769 = vcvt.s32.f32 %v1728
      %v1770 = vcvt.s32.f32 %v1729
      %v1771 = vcvt.s32.f32 %v1730
      %v1772 = vcvt.s32.f32 %v1731
      %v1773 = vcvt.s32.f32 %v1732
      %v1774 = vcvt.s32.f32 %v1733
      %v1775 = vcvt.s32.f32 %v1734
      %v1776 = vcvt.s32.f32 %v1735
      %v1777 = vcvt.s32.f32 %v1736
      %v1778 = vcvt.s32.f32 %v1737
      %v1779 = vcvt.s32.f32 %v1738
      %v1780 = vcvt.s32.f32 %v1739
      %v1781 = vcvt.s32.f32 %v1740
      %v1782 = vcvt.s32.f32 %v1741
      %v1783 = vcvt.s32.f32 %v1742
      %v1784 = vcvt.s32.f32 %v1743
      %v1785 = vcvt.s32.f32 %v1744
      %v1786 = vcvt.s32.f32 %v1745
      %v1787 = vsub.f32 1.0, %v557
      %v1788 = vsub.f32 1.0, %v558
      %v1789 = vsub.f32 1.0, %v559
      %v1790 = vsub.f32 1.0, %v560
      %v1791 = vsub.f32 1.0, %v561
      %v1792 = vsub.f32 1.0, %v562
      %v1793 = vsub.f32 1.0, %v563
      %v1794 = vsub.f32 1.0, %v564
      %v1795 = vsub.f32 1.0, %v565
      %v1796 = vsub.f32 1.0, %v566
      %v1797 = vsub.f32 1.0, %v567
      %v1798 = vsub.f32 1.0, %v568
      %v1799 = vsub.f32 1.0, %v569
      %v1800 = vsub.f32 1.0, %v570
      %v1801 = vsub.f32 1.0, %v571
      %v1802 = vsub.f32 1.0, %v572
      %v1803 = vsub.f32 1.0, %v573
      %v1804 = vsub.f32 1.0, %v574
      %v1805 = vsub.f32 1.0, %v575
      %v1806 = vsub.f32 1.0, %v576
      %v1807 = vsub.f32 1.0, %v577
      %v1808 = vsub.f32 1.0, %v578
      %v1809 = vsub.f32 1.0, %v579
      %v1810 = vsub.f32 1.0, %v580
      %v1811 = vsub.f32 1.0, %v581
      %v1812 = vsub.f32 1.0, %v582
      %v1813 = vsub.f32 1.0, %v583
      %v1814 = vsub.f32 1.0, %v584
      %v1815 = vsub.f32 1.0, %v585
      %v1816 = vsub.f32 1.0, %v586
      %v1817 = vsub.f32 1.0, %v587
      %v1818 = vsub.f32 1.0, %v588
      %v1819 = vsub.f32 1.0, %v589
      %v1820 = vsub.f32 1.0, %v590
      %v1821 = vsub.f32 1.0, %v591
      %v1822 = vsub.f32 1.0, %v592
      %v1823 = vsub.f32 1.0, %v593
      %v1824 = vsub.f32 1.0, %v594
      %v1825 = vsub.f32 1.0, %v595
      %v1826 = vsub.f32 1.0, %v596
      %v1827 = vsub.f32 1.0, %v597
      %v1828 = vmul.f32 %v1787, %v1787
      %v1829 = vmul.f32 %v1788, %v1788
      %v1830 = vmul.f32 %v1789, %v1789
      %v1831 = vmul.f32 %v1790, %v1790
      %v1832 = vmul.f32 %v1791, %v1791
      %v1833 = vmul.f32 %v1792, %v1792
      %v1834 = vmul.f32 %v1793, %v1793
      %v1835 = vmul.f32 %v1794, %v1794
      %v1836 = vmul.f32 %v1795, %v1795
      %v1837 = vmul.f32 %v1796, %v1796
      %v1838 = vmul.f32 %v1797, %v1797
      %v1839 = vmul.f32 %v1798, %v1798
      %v1840 = vmul.f32 %v1799, %v1799
      %v1841 = vmul.f32 %v1800, %v1800
      %v1842 = vmul.f32 %v1801, %v1801
      %v1843 = vmul.f32 %v1802, %v1802
      %v1844 = vmul.f32 %v1803, %v1803
      %v1845 = vmul.f32 %v1804, %v1804
      %v1846 = vmul.f32 %v1805, %v1805
      %v1847 = vmul.f32 %v1806, %v1806
      %v1848 = vmul.f32 %v1807, %v1807
      %v1849 = vmul.f32 %v1808, %v1808
      %v1850 = vmul.f32 %v1809, %v1809
      %v1851 = vmul.f32 %v1810, %v1810
      %v1852 = vmul.f32 %v1811, %v1811
      %v1853 = vmul.f32 %v1812, %v1812
      %v1854 = vmul.f32 %v1813, %v1813
      %v1855 = vmul.f32 %v1814, %v1814
      %v1856 = vmul.f32 %v1815, %v1815
      %v1857 = vmul.f32 %v1816, %v1816
      %v1858 = vmul.f32 %v1817, %v1817
      %v1859 = vmul.f32 %v1818, %v1818
      %v1860 = vmul.f32 %v1819, %v1819
      %v1861 = vmul.f32 %v1820, %v1820
      %v1862 = vmul.f32 %v1821, %v1821
      %v1863 = vmul.f32 %v1822, %v1822
      %v1864 = vmul.f32 %v1823, %v1823
      %v1865 = vmul.f32 %v1824, %v1824
      %v1866 = vmul.f32 %v1825, %v1825
      %v1867 = vmul.f32 %v1826, %v1826
      %v1868 = vmul.f32 %v1827, %v1827
      %v1869 = vmul.f32 %v1828, %v1828
      %v1870 = vmul.f32 %v1829, %v1829
      %v1871 = vmul.f32 %v1830, %v1830
      %v1872 = vmul.f32 %v1831, %v1831
      %v1873 = vmul.f32 %v1832, %v1832
      %v1874 = vmul.f32 %v1833, %v1833
      %v1875 = vmul.f32 %v1834, %v1834
      %v1876 = vmul.f32 %v1835, %v1835
      %v1877 = vmul.f32 %v1836, %v1836
      %v1878 = vmul.f32 %v1837, %v1837
      %v1879 = vmul.f32 %v1838, %v1838
      %v1880 = vmul.f32 %v1839, %v1839
      %v1881 = vmul.f32 %v1840, %v1840
      %v1882 = vmul.f32 %v1841, %v1841
      %v1883 = vmul.f32 %v1842, %v1842
      %v1884 = vmul.f32 %v1843, %v1843
      %v1885 = vmul.f32 %v1844, %v1844
      %v1886 = vmul.f32 %v1845, %v1845
      %v1887 = vmul.f32 %v1846, %v1846
      %v1888 = vmul.f32 %v1847, %v1847
      %v1889 = vmul.f32 %v1848, %v1848
      %v1890 = vmul.f32 %v1849, %v1849
      %v1891 = vmul.f32 %v1850, %v1850
      %v1892 = vmul.f32 %v1851, %v1851
      %v1893 = vmul.f32 %v1852, %v1852
      %v1894 = vmul.f32 %v1853, %v1853
      %v1895 = vmul.f32 %v1854, %v1854
      %v1896 = vmul.f32 %v1855, %v1855
      %v1897 = vmul.f32 %v1856, %v1856
      %v1898 = vmul.f32 %v1857, %v1857
      %v1899 = vmul.f32 %v1858, %v1858
      %v1900 = vmul.f32 %v1859, %v1859
      %v1901 = vmul.f32 %v1860, %v1860
      %v1902 = vmul.f32 %v1861, %v1861
      %v1903 = vmul.f32 %v1862, %v1862
      %v1904 = vmul.f32 %v1863, %v1863
      %v1905 = vmul.f32 %v1864, %v1864
      %v1906 = vmul.f32 %v1865, %v1865
      %v1907 = vmul.f32 %v1866, %v1866
      %v1908 = vmul.f32 %v1867, %v1867
      %v1909 = vmul.f32 %v1868, %v1868
      %v1910 = vsub.f32 1.0, %v1500
      %v1911 = vsub.f32 1.0, %v1501
      %v1912 = vsub.f32 1.0, %v1502
      %v1913 = vsub.f32 1.0, %v1503
      %v1914 = vsub.f32 1.0, %v1504
      %v1915 = vsub.f32 1.0, %v1505
      %v1916 = vsub.f32 1.0, %v1506
      %v1917 = vsub.f32 1.0, %v1507
      %v1918 = vsub.f32 1.0, %v1508
      %v1919 = vsub.f32 1.0, %v1509
      %v1920 = vsub.f32 1.0, %v1510
      %v1921 = vsub.f32 1.0, %v1511
      %v1922 = vsub.f32 1.0, %v1512
      %v1923 = vsub.f32 1.0, %v1513
      %v1924 = vsub.f32 1.0, %v1514
      %v1925 = vsub.f32 1.0, %v1515
      %v1926 = vsub.f32 1.0, %v1516
      %v1927 = vsub.f32 1.0, %v1517
      %v1928 = vsub.f32 1.0, %v1518
      %v1929 = vsub.f32 1.0, %v1519
      %v1930 = vsub.f32 1.0, %v1520
      %v1931 = vsub.f32 1.0, %v1521
      %v1932 = vsub.f32 1.0, %v1522
      %v1933 = vsub.f32 1.0, %v1523
      %v1934 = vsub.f32 1.0, %v1524
      %v1935 = vsub.f32 1.0, %v1525
      %v1936 = vsub.f32 1.0, %v1526
      %v1937 = vsub.f32 1.0, %v1527
      %v1938 = vsub.f32 1.0, %v1528
      %v1939 = vsub.f32 1.0, %v1529
      %v1940 = vsub.f32 1.0, %v1530
      %v1941 = vsub.f32 1.0, %v1531
      %v1942 = vsub.f32 1.0, %v1532
      %v1943 = vsub.f32 1.0, %v1533
      %v1944 = vsub.f32 1.0, %v1534
      %v1945 = vsub.f32 1.0, %v1535
      %v1946 = vsub.f32 1.0, %v1536
      %v1947 = vsub.f32 1.0, %v1537
      %v1948 = vsub.f32 1.0, %v1538
      %v1949 = vsub.f32 1.0, %v1539
      %v1950 = vsub.f32 1.0, %v1540
      %v1951 = vmul.f32 %v1008, %v1910
      %v1952 = vmul.f32 %v1009, %v1911
      %v1953 = vmul.f32 %v1010, %v1912
      %v1954 = vmul.f32 %v1011, %v1913
      %v1955 = vmul.f32 %v1012, %v1914
      %v1956 = vmul.f32 %v1013, %v1915
      %v1957 = vmul.f32 %v1014, %v1916
      %v1958 = vmul.f32 %v1015, %v1917
      %v1959 = vmul.f32 %v1016, %v1918
      %v1960 = vmul.f32 %v1017, %v1919
      %v1961 = vmul.f32 %v1018, %v1920
      %v1962 = vmul.f32 %v1019, %v1921
      %v1963 = vmul.f32 %v1020, %v1922
      %v1964 = vmul.f32 %v1021, %v1923
      %v1965 = vmul.f32 %v1022, %v1924
      %v1966 = vmul.f32 %v1023, %v1925
      %v1967 = vmul.f32 %v1024, %v1926
      %v1968 = vmul.f32 %v1025, %v1927
      %v1969 = vmul.f32 %v1026, %v1928
      %v1970 = vmul.f32 %v1027, %v1929
      %v1971 = vmul.f32 %v1028, %v1930
      %v1972 = vmul.f32 %v1029, %v1931
      %v1973 = vmul.f32 %v1030, %v1932
      %v1974 = vmul.f32 %v1031, %v1933
      %v1975 = vmul.f32 %v1032, %v1934
      %v1976 = vmul.f32 %v1033, %v1935
      %v1977 = vmul.f32 %v1034, %v1936
      %v1978 = vmul.f32 %v1035, %v1937
      %v1979 = vmul.f32 %v1036, %v1938
      %v1980 = vmul.f32 %v1037, %v1939
      %v1981 = vmul.f32 %v1038, %v1940
      %v1982 = vmul.f32 %v1039, %v1941
      %v1983 = vmul.f32 %v1040, %v1942
      %v1984 = vmul.f32 %v1041, %v1943
      %v1985 = vmul.f32 %v1042, %v1944
      %v1986 = vmul.f32 %v1043, %v1945
      %v1987 = vmul.f32 %v1044, %v1946
      %v1988 = vmul.f32 %v1045, %v1947
      %v1989 = vmul.f32 %v1046, %v1948
      %v1990 = vmul.f32 %v1047, %v1949
      %v1991 = vmul.f32 %v1048, %v1950
      %v1992 = vmul.f32 %v1951, %v1910
      %v1993 = vmul.f32 %v1952, %v1911
      %v1994 = vmul.f32 %v1953, %v1912
      %v1995 = vmul.f32 %v1954, %v1913
      %v1996 = vmul.f32 %v1955, %v1914
      %v1997 = vmul.f32 %v1956, %v1915
      %v1998 = vmul.f32 %v1957, %v1916
      %v1999 = vmul.f32 %v1958, %v1917
      %v2000 = vmul.f32 %v1959, %v1918
      %v2001 = vmul.f32 %v1960, %v1919
      %v2002 = vmul.f32 %v1961, %v1920
      %v2003 = vmul.f32 %v1962, %v1921
      %v2004 = vmul.f32 %v1963, %v1922
      %v2005 = vmul.f32 %v1964, %v1923
      %v2006 = vmul.f32 %v1965, %v1924
      %v2007 = vmul.f32 %v1966, %v1925
      %v2008 = vmul.f32 %v1967, %v1926
      %v2009 = vmul.f32 %v1968, %v1927
      %v2010 = vmul.f32 %v1969, %v1928
      %v2011 = vmul.f32 %v1970, %v1929
      %v2012 = vmul.f32 %v1971, %v1930
      %v2013 = vmul.f32 %v1972, %v1931
      %v2014 = vmul.f32 %v1973, %v1932
      %v2015 = vmul.f32 %v1974, %v1933
      %v2016 = vmul.f32 %v1975, %v1934
      %v2017 = vmul.f32 %v1976, %v1935
      %v2018 = vmul.f32 %v1977, %v1936
      %v2019 = vmul.f32 %v1978, %v1937
      %v2020 = vmul.f32 %v1979, %v1938
      %v2021 = vmul.f32 %v1980, %v1939
      %v2022 = vmul.f32 %v1981, %v1940
      %v2023 = vmul.f32 %v1982, %v1941
      %v2024 = vmul.f32 %v1983, %v1942
      %v2025 = vmul.f32 %v1984, %v1943
      %v2026 = vmul.f32 %v1985, %v1944
      %v2027 = vmul.f32 %v1986, %v1945
      %v2028 = vmul.f32 %v1987, %v1946
      %v2029 = vmul.f32 %v1988, %v1947
      %v2030 = vmul.f32 %v1989, %v1948
      %v2031 = vmul.f32 %v1990, %v1949
      %v2032 = vmul.f32 %v1991, %v1950
      %v2033 = vmul.f32 %v1992, %v1623
      %v2034 = vmul.f32 %v1993, %v1624
      %v2035 = vmul.f32 %v1994, %v1625
      %v2036 = vmul.f32 %v1995, %v1626
      %v2037 = vmul.f32 %v1996, %v1627
      %v2038 = vmul.f32 %v1997, %v1628
      %v2039 = vmul.f32 %v1998, %v1629
      %v2040 = vmul.f32 %v1999, %v1630
      %v2041 = vmul.f32 %v2000, %v1631
      %v2042 = vmul.f32 %v2001, %v1632
      %v2043 = vmul.f32 %v2002, %v1633
      %v2044 = vmul.f32 %v2003, %v1634
      %v2045 = vmul.f32 %v2004, %v1635
      %v2046 = vmul.f32 %v2005, %v1636
      %v2047 = vmul.f32 %v2006, %v1637
      %v2048 = vmul.f32 %v2007, %v1638
      %v2049 = vmul.f32 %v2008, %v1639
      %v2050 = vmul.f32 %v2009, %v1640
      %v2051 = vmul.f32 %v2010, %v1641
      %v2052 = vmul.f32 %v2011, %v1642
      %v2053 = vmul.f32 %v2012, %v1643
      %v2054 = vmul.f32 %v2013, %v1644
      %v2055 = vmul.f32 %v2014, %v1645
      %v2056 = vmul.f32 %v2015, %v1646
      %v2057 = vmul.f32 %v2016, %v1647
      %v2058 = vmul.f32 %v2017, %v1648
      %v2059 = vmul.f32 %v2018, %v1649
      %v2060 = vmul.f32 %v2019, %v1650
      %v2061 = vmul.f32 %v2020, %v1651
      %v2062 = vmul.f32 %v2021, %v1652
      %v2063 = vmul.f32 %v2022, %v1653
      %v2064 = vmul.f32 %v2023, %v1654
      %v2065 = vmul.f32 %v2024, %v1655
      %v2066 = vmul.f32 %v2025, %v1656
      %v2067 = vmul.f32 %v2026, %v1657
      %v2068 = vmul.f32 %v2027, %v1658
      %v2069 = vmul.f32 %v2028, %v1659
      %v2070 = vmul.f32 %v2029, %v1660
      %v2071 = vmul.f32 %v2030, %v1661
      %v2072 = vmul.f32 %v2031, %v1662
      %v2073 = vmul.f32 %v2032, %v1663
      %v2074 = vmul.f32 %v1213, %v1500
      %v2075 = vmul.f32 %v1214, %v1501
      %v2076 = vmul.f32 %v1215, %v1502
      %v2077 = vmul.f32 %v1216, %v1503
      %v2078 = vmul.f32 %v1217, %v1504
      %v2079 = vmul.f32 %v1218, %v1505
      %v2080 = vmul.f32 %v1219, %v1506
      %v2081 = vmul.f32 %v1220, %v1507
      %v2082 = vmul.f32 %v1221, %v1508
      %v2083 = vmul.f32 %v1222, %v1509
      %v2084 = vmul.f32 %v1223, %v1510
      %v2085 = vmul.f32 %v1224, %v1511
      %v2086 = vmul.f32 %v1225, %v1512
      %v2087 = vmul.f32 %v1226, %v1513
      %v2088 = vmul.f32 %v1227, %v1514
      %v2089 = vmul.f32 %v1228, %v1515
      %v2090 = vmul.f32 %v1229, %v1516
      %v2091 = vmul.f32 %v1230, %v1517
      %v2092 = vmul.f32 %v1231, %v1518
      %v2093 = vmul.f32 %v1232, %v1519
      %v2094 = vmul.f32 %v1233, %v1520
      %v2095 = vmul.f32 %v1234, %v1521
      %v2096 = vmul.f32 %v1235, %v1522
      %v2097 = vmul.f32 %v1236, %v1523
      %v2098 = vmul.f32 %v1237, %v1524
      %v2099 = vmul.f32 %v1238, %v1525
      %v2100 = vmul.f32 %v1239, %v1526
      %v2101 = vmul.f32 %v1240, %v1527
      %v2102 = vmul.f32 %v1241, %v1528
      %v2103 = vmul.f32 %v1242, %v1529
      %v2104 = vmul.f32 %v1243, %v1530
      %v2105 = vmul.f32 %v1244, %v1531
      %v2106 = vmul.f32 %v1245, %v1532
      %v2107 = vmul.f32 %v1246, %v1533
      %v2108 = vmul.f32 %v1247, %v1534
      %v2109 = vmul.f32 %v1248, %v1535
      %v2110 = vmul.f32 %v1249, %v1536
      %v2111 = vmul.f32 %v1250, %v1537
      %v2112 = vmul.f32 %v1251, %v1538
      %v2113 = vmul.f32 %v1252, %v1539
      %v2114 = vmul.f32 %v1253, %v1540
      %v2115 = vmul.f32 %v2074, %v1500
      %v2116 = vmul.f32 %v2075, %v1501
      %v2117 = vmul.f32 %v2076, %v1502
      %v2118 = vmul.f32 %v2077, %v1503
      %v2119 = vmul.f32 %v2078, %v1504
      %v2120 = vmul.f32 %v2079, %v1505
      %v2121 = vmul.f32 %v2080, %v1506
      %v2122 = vmul.f32 %v2081, %v1507
      %v2123 = vmul.f32 %v2082, %v1508
      %v2124 = vmul.f32 %v2083, %v1509
      %v2125 = vmul.f32 %v2084, %v1510
      %v2126 = vmul.f32 %v2085, %v1511
      %v2127 = vmul.f32 %v2086, %v1512
      %v2128 = vmul.f32 %v2087, %v1513
      %v2129 = vmul.f32 %v2088, %v1514
      %v2130 = vmul.f32 %v2089, %v1515
      %v2131 = vmul.f32 %v2090, %v1516
      %v2132 = vmul.f32 %v2091, %v1517
      %v2133 = vmul.f32 %v2092, %v1518
      %v2134 = vmul.f32 %v2093, %v1519
      %v2135 = vmul.f32 %v2094, %v1520
      %v2136 = vmul.f32 %v2095, %v1521
      %v2137 = vmul.f32 %v2096, %v1522
      %v2138 = vmul.f32 %v2097, %v1523
      %v2139 = vmul.f32 %v2098, %v1524
      %v2140 = vmul.f32 %v2099, %v1525
      %v2141 = vmul.f32 %v2100, %v1526
      %v2142 = vmul.f32 %v2101, %v1527
      %v2143 = vmul.f32 %v2102, %v1528
      %v2144 = vmul.f32 %v2103, %v1529
      %v2145 = vmul.f32 %v2104, %v1530
      %v2146 = vmul.f32 %v2105, %v1531
      %v2147 = vmul.f32 %v2106, %v1532
      %v2148 = vmul.f32 %v2107, %v1533
      %v2149 = vmul.f32 %v2108, %v1534
      %v2150 = vmul.f32 %v2109, %v1535
      %v2151 = vmul.f32 %v2110, %v1536
      %v2152 = vmul.f32 %v2111, %v1537
      %v2153 = vmul.f32 %v2112, %v1538
      %v2154 = vmul.f32 %v2113, %v1539
      %v2155 = vmul.f32 %v2114, %v1540
      %v2156 = vmul.f32 %v2115, %v1869
      %v2157 = vmul.f32 %v2116, %v1870
      %v2158 = vmul.f32 %v2117, %v1871
      %v2159 = vmul.f32 %v2118, %v1872
      %v2160 = vmul.f32 %v2119, %v1873
      %v2161 = vmul.f32 %v2120, %v1874
      %v2162 = vmul.f32 %v2121, %v1875
      %v2163 = vmul.f32 %v2122, %v1876
      %v2164 = vmul.f32 %v2123, %v1877
      %v2165 = vmul.f32 %v2124, %v1878
      %v2166 = vmul.f32 %v2125, %v1879
      %v2167 = vmul.f32 %v2126, %v1880
      %v2168 = vmul.f32 %v2127, %v1881
      %v2169 = vmul.f32 %v2128, %v1882
      %v2170 = vmul.f32 %v2129, %v1883
      %v2171 = vmul.f32 %v2130, %v1884
      %v2172 = vmul.f32 %v2131, %v1885
      %v2173 = vmul.f32 %v2132, %v1886
      %v2174 = vmul.f32 %v2133, %v1887
      %v2175 = vmul.f32 %v2134, %v1888
      %v2176 = vmul.f32 %v2135, %v1889
      %v2177 = vmul.f32 %v2136, %v1890
      %v2178 = vmul.f32 %v2137, %v1891
      %v2179 = vmul.f32 %v2138, %v1892
      %v2180 = vmul.f32 %v2139, %v1893
      %v2181 = vmul.f32 %v2140, %v1894
      %v2182 = vmul.f32 %v2141, %v1895
      %v2183 = vmul.f32 %v2142, %v1896
      %v2184 = vmul.f32 %v2143, %v1897
      %v2185 = vmul.f32 %v2144, %v1898
      %v2186 = vmul.f32 %v2145, %v1899
      %v2187 = vmul.f32 %v2146, %v1900
      %v2188 = vmul.f32 %v2147, %v1901
      %v2189 = vmul.f32 %v2148, %v1902
      %v2190 = vmul.f32 %v2149, %v1903
      %v2191 = vmul.f32 %v2150, %v1904
      %v2192 = vmul.f32 %v2151, %v1905
      %v2193 = vmul.f32 %v2152, %v1906
      %v2194 = vmul.f32 %v2153, %v1907
      %v2195 = vmul.f32 %v2154, %v1908
      %v2196 = vmul.f32 %v2155, %v1909
      %v2197 = vmul.f32 %v2156, %v1746
      %v2198 = vmul.f32 %v2157, %v1747
      %v2199 = vmul.f32 %v2158, %v1748
      %v2200 = vmul.f32 %v2159, %v1749
      %v2201 = vmul.f32 %v2160, %v1750
      %v2202 = vmul.f32 %v2161, %v1751
      %v2203 = vmul.f32 %v2162, %v1752
      %v2204 = vmul.f32 %v2163, %v1753
      %v2205 = vmul.f32 %v2164, %v1754
      %v2206 = vmul.f32 %v2165, %v1755
      %v2207 = vmul.f32 %v2166, %v1756
      %v2208 = vmul.f32 %v2167, %v1757
      %v2209 = vmul.f32 %v2168, %v1758
      %v2210 = vmul.f32 %v2169, %v1759
      %v2211 = vmul.f32 %v2170, %v1760
      %v2212 = vmul.f32 %v2171, %v1761
      %v2213 = vmul.f32 %v2172, %v1762
      %v2214 = vmul.f32 %v2173, %v1763
      %v2215 = vmul.f32 %v2174, %v1764
      %v2216 = vmul.f32 %v2175, %v1765
      %v2217 = vmul.f32 %v2176, %v1766
      %v2218 = vmul.f32 %v2177, %v1767
      %v2219 = vmul.f32 %v2178, %v1768
      %v2220 = vmul.f32 %v2179, %v1769
      %v2221 = vmul.f32 %v2180, %v1770
      %v2222 = vmul.f32 %v2181, %v1771
      %v2223 = vmul.f32 %v2182, %v1772
      %v2224 = vmul.f32 %v2183, %v1773
      %v2225 = vmul.f32 %v2184, %v1774
      %v2226 = vmul.f32 %v2185, %v1775
      %v2227 = vmul.f32 %v2186, %v1776
      %v2228 = vmul.f32 %v2187, %v1777
      %v2229 = vmul.f32 %v2188, %v1778
      %v2230 = vmul.f32 %v2189, %v1779
      %v2231 = vmul.f32 %v2190, %v1780
      %v2232 = vmul.f32 %v2191, %v1781
      %v2233 = vmul.f32 %v2192, %v1782
      %v2234 = vmul.f32 %v2193, %v1783
      %v2235 = vmul.f32 %v2194, %v1784
      %v2236 = vmul.f32 %v2195, %v1785
      %v2237 = vmul.f32 %v2196, %v1786
      %v2238 = vadd.f32 %v1623, %v1624
      %v2239 = vadd.f32 %v2238, %v1625
      %v2240 = vadd.f32 %v2239, %v1626
      %v2241 = vadd.f32 %v2240, %v1627
      %v2242 = vadd.f32 %v2241, %v1628
      %v2243 = vadd.f32 %v2242, %v1629
      %v2244 = vadd.f32 %v2243, %v1630
      %v2245 = vadd.f32 %v2244, %v1631
      %v2246 = vadd.f32 %v2245, %v1632
      %v2247 = vadd.f32 %v2246, %v1633
      %v2248 = vadd.f32 %v2247, %v1634
      %v2249 = vadd.f32 %v2248, %v1635
      %v2250 = vadd.f32 %v2249, %v1636
      %v2251 = vadd.f32 %v2250, %v1637
      %v2252 = vadd.f32 %v2251, %v1638
      %v2253 = vadd.f32 %v2252, %v1639
      %v2254 = vadd.f32 %v2253, %v1640
      %v2255 = vadd.f32 %v2254, %v1641
      %v2256 = vadd.f32 %v2255, %v1642
      %v2257 = vadd.f32 %v2256, %v1643
      %v2258 = vadd.f32 %v2257, %v1644
      %v2259 = vadd.f32 %v2258, %v1645
      %v2260 = vadd.f32 %v2259, %v1646
      %v2261 = vadd.f32 %v2260, %v1647
      %v2262 = vadd.f32 %v2261, %v1648
      %v2263 = vadd.f32 %v2262, %v1649
      %v2264 = vadd.f32 %v2263, %v1650
      %v2265 = vadd.f32 %v2264, %v1651
      %v2266 = vadd.f32 %v2265, %v1652
      %v2267 = vadd.f32 %v2266, %v1653
      %v2268 = vadd.f32 %v2267, %v1654
      %v2269 = vadd.f32 %v2268, %v1655
      %v2270 = vadd.f32 %v2269, %v1656
      %v2271 = vadd.f32 %v2270, %v1657
      %v2272 = vadd.f32 %v2271, %v1658
      %v2273 = vadd.f32 %v2272, %v1659
      %v2274 = vadd.f32 %v2273, %v1660
      %v2275 = vadd.f32 %v2274, %v1661
      %v2276 = vadd.f32 %v2275, %v1662
      %vm2277 = vcmask 1042432
      %v2278 = vsel %vm2277, %v1663, 0.0
      %v2279 = vadd.f32 %v2276, %v2278
      %2280 = vadd.xlane.f32.xlu0 %v2279
      %v2281 = vpop.xlane.xlu0 %2280
      %v2282 = vrot.slane %v2281, 4
      %v2283 = vadd.f32 %v2281, %v2282
      %v2284 = vrot.slane %v2283, 2
      %v2285 = vadd.f32 %v2283, %v2284
      %v2286 = vrot.slane %v2285, 1
      %v2287 = vadd.f32 %v2285, %v2286
      %s2288 = vtos %v2287
      %v2289 = vadd.f32 %v2033, %v2034
      %v2290 = vadd.f32 %v2289, %v2035
      %v2291 = vadd.f32 %v2290, %v2036
      %v2292 = vadd.f32 %v2291, %v2037
      %v2293 = vadd.f32 %v2292, %v2038
      %v2294 = vadd.f32 %v2293, %v2039
      %v2295 = vadd.f32 %v2294, %v2040
      %v2296 = vadd.f32 %v2295, %v2041
      %v2297 = vadd.f32 %v2296, %v2042
      %v2298 = vadd.f32 %v2297, %v2043
      %v2299 = vadd.f32 %v2298, %v2044
      %v2300 = vadd.f32 %v2299, %v2045
      %v2301 = vadd.f32 %v2300, %v2046
      %v2302 = vadd.f32 %v2301, %v2047
      %v2303 = vadd.f32 %v2302, %v2048
      %v2304 = vadd.f32 %v2303, %v2049
      %v2305 = vadd.f32 %v2304, %v2050
      %v2306 = vadd.f32 %v2305, %v2051
      %v2307 = vadd.f32 %v2306, %v2052
      %v2308 = vadd.f32 %v2307, %v2053
      %v2309 = vadd.f32 %v2308, %v2054
      %v2310 = vadd.f32 %v2309, %v2055
      %v2311 = vadd.f32 %v2310, %v2056
      %v2312 = vadd.f32 %v2311, %v2057
      %v2313 = vadd.f32 %v2312, %v2058
      %v2314 = vadd.f32 %v2313, %v2059
      %v2315 = vadd.f32 %v2314, %v2060
      %v2316 = vadd.f32 %v2315, %v2061
      %v2317 = vadd.f32 %v2316, %v2062
      %v2318 = vadd.f32 %v2317, %v2063
      %v2319 = vadd.f32 %v2318, %v2064
      %v2320 = vadd.f32 %v2319, %v2065
      %v2321 = vadd.f32 %v2320, %v2066
      %v2322 = vadd.f32 %v2321, %v2067
      %v2323 = vadd.f32 %v2322, %v2068
      %v2324 = vadd.f32 %v2323, %v2069
      %v2325 = vadd.f32 %v2324, %v2070
      %v2326 = vadd.f32 %v2325, %v2071
      %v2327 = vadd.f32 %v2326, %v2072
      %v2328 = vsel %vm2277, %v2073, 0.0
      %v2329 = vadd.f32 %v2327, %v2328
      %2330 = vadd.xlane.f32.xlu0 %v2329
      %v2331 = vpop.xlane.xlu0 %2330
      %v2332 = vrot.slane %v2331, 4
      %v2333 = vadd.f32 %v2331, %v2332
      %v2334 = vrot.slane %v2333, 2
      %v2335 = vadd.f32 %v2333, %v2334
      %v2336 = vrot.slane %v2335, 1
      %v2337 = vadd.f32 %v2335, %v2336
      %s2338 = vtos %v2337
      %v2339 = vadd.f32 %v2197, %v2198
      %v2340 = vadd.f32 %v2339, %v2199
      %v2341 = vadd.f32 %v2340, %v2200
      %v2342 = vadd.f32 %v2341, %v2201
      %v2343 = vadd.f32 %v2342, %v2202
      %v2344 = vadd.f32 %v2343, %v2203
      %v2345 = vadd.f32 %v2344, %v2204
      %v2346 = vadd.f32 %v2345, %v2205
      %v2347 = vadd.f32 %v2346, %v2206
      %v2348 = vadd.f32 %v2347, %v2207
      %v2349 = vadd.f32 %v2348, %v2208
      %v2350 = vadd.f32 %v2349, %v2209
      %v2351 = vadd.f32 %v2350, %v2210
      %v2352 = vadd.f32 %v2351, %v2211
      %v2353 = vadd.f32 %v2352, %v2212
      %v2354 = vadd.f32 %v2353, %v2213
      %v2355 = vadd.f32 %v2354, %v2214
      %v2356 = vadd.f32 %v2355, %v2215
      %v2357 = vadd.f32 %v2356, %v2216
      %v2358 = vadd.f32 %v2357, %v2217
      %v2359 = vadd.f32 %v2358, %v2218
      %v2360 = vadd.f32 %v2359, %v2219
      %v2361 = vadd.f32 %v2360, %v2220
      %v2362 = vadd.f32 %v2361, %v2221
      %v2363 = vadd.f32 %v2362, %v2222
      %v2364 = vadd.f32 %v2363, %v2223
      %v2365 = vadd.f32 %v2364, %v2224
      %v2366 = vadd.f32 %v2365, %v2225
      %v2367 = vadd.f32 %v2366, %v2226
      %v2368 = vadd.f32 %v2367, %v2227
      %v2369 = vadd.f32 %v2368, %v2228
      %v2370 = vadd.f32 %v2369, %v2229
      %v2371 = vadd.f32 %v2370, %v2230
      %v2372 = vadd.f32 %v2371, %v2231
      %v2373 = vadd.f32 %v2372, %v2232
      %v2374 = vadd.f32 %v2373, %v2233
      %v2375 = vadd.f32 %v2374, %v2234
      %v2376 = vadd.f32 %v2375, %v2235
      %v2377 = vadd.f32 %v2376, %v2236
      %v2378 = vsel %vm2277, %v2237, 0.0
      %v2379 = vadd.f32 %v2377, %v2378
      %2380 = vadd.xlane.f32.xlu0 %v2379
      %v2381 = vpop.xlane.xlu0 %2380
      %v2382 = vrot.slane %v2381, 4
      %v2383 = vadd.f32 %v2381, %v2382
      %v2384 = vrot.slane %v2383, 2
      %v2385 = vadd.f32 %v2383, %v2384
      %v2386 = vrot.slane %v2385, 1
      %v2387 = vadd.f32 %v2385, %v2386
      %s2388 = vtos %v2387
      %p2389 = scmp.eq.f32.partialorder %s2288, 0.0
      %s2390 = ssub.f32 0.0, %s2388
      %s2391 = sadd.f32 %s2338, %s2388
      %s2392 = ssub.f32 0.0, %s2391
      %s2393 = smax.f32 %s2288, 1.0
      %v2394 = vstv %s2393
      %v2395 = vrcp.pop %v2394
      %s2396 = vtos %v2395
      %s2397 = smul.f32 %s2392, %s2396
      %s2398 = scalar_select %p2389, %s2390, %s2397
      %v2399 = vld [vmem:[%s502] sm:$0x1]
      %vm2400 = vcmask 1040384
      %v2401 = vsel %vm2400, %v2399, 0.0
      %2402 = vadd.xlane.f32.xlu0 %v2401
      %v2403 = vpop.xlane.xlu0 %2402
      %v2404 = vrot.slane %v2403, 4
      %v2405 = vadd.f32 %v2403, %v2404
      %v2406 = vrot.slane %v2405, 2
      %v2407 = vadd.f32 %v2405, %v2406
      %v2408 = vrot.slane %v2407, 1
      %v2409 = vadd.f32 %v2407, %v2408
      %s2410 = vtos %v2409
      %s2411 = sadd.f32 %s2410, 0.0001
      %v2412 = vstv %s2411
      %v2413 = vrcp.pop %v2412
      %s2414 = vtos %v2413
      %v2415 = vld [vmem:[%s489] sm:$0xff]
      %v2416 = vld [vmem:[%s493] sm:$0xff]
      %v2418 = vlaneseq
      %v2419 = vshrl.u32 %v2418, 7
      %v2420 = vsub.s32 0, %v2419
      %v2421 = vrot.slane %v2399, %v2420
      %v2423 = vmul.f32 %v2415, %v2421
      %v2424 = vmul.f32 %v2416, %v2421
      %v2425 = vsub.f32 %v2423, %v2424
      %v2426 = vand.u32 2147483647, %v2425
      %vm2427 = vcmp.lt.f32.partialorder %v2426, 1.0
      %v2428 = vmul.f32 %v2425, 0.5
      %v2429 = vmul.f32 %v2428, %v2425
      %v2430 = vsub.f32 %v2426, 0.5
      %v2431 = vsel %vm2427, %v2429, %v2430
      %2432 = vadd.xlane.f32.xlu0 %v2431
      %v2433 = vpop.xlane.xlu0 %2432
      %v2434 = vrot.slane %v2433, 4
      %v2435 = vadd.f32 %v2433, %v2434
      %v2436 = vrot.slane %v2435, 2
      %v2437 = vadd.f32 %v2435, %v2436
      %v2438 = vrot.slane %v2437, 1
      %v2439 = vadd.f32 %v2437, %v2438
      %s2440 = vtos %v2439
      %s2441 = smul.f32 %s2440, %s2414
      %v2442 = vld [vmem:[%s496] sm:$0x1]
      %v2443 = vsub.f32 0.0, %v2442
      %v2444 = vmul.f32 %v2443, 1.442695
      %v2445 = vpow.pop %v2444
      %v2446 = vadd.f32 %v2445, 1.0
      %v2447 = vrcp.pop %v2446
      %v2448 = vmul.f32 1.0, %v2447
      %v2449 = vmax.f32 %v2448, 0.0001
      %v2450 = vmin.f32 %v2449, 0.9999
      %v2451 = vld [vmem:[%s499] sm:$0x1]
      %v2452 = vmul.f32 %v2450, %v2399
      %v2453 = vmul.f32 %v2451, %v2399
      %v2454 = vsub.f32 %v2452, %v2453
      %v2455 = vand.u32 2147483647, %v2454
      %vm2456 = vcmp.lt.f32.partialorder %v2455, 1.0
      %v2457 = vmul.f32 %v2454, 0.5
      %v2458 = vmul.f32 %v2457, %v2454
      %v2459 = vsub.f32 %v2455, 0.5
      %v2460 = vsel %vm2456, %v2458, %v2459
      %v2461 = vsel %vm2400, %v2460, 0.0
      %2462 = vadd.xlane.f32.xlu0 %v2461
      %v2463 = vpop.xlane.xlu0 %2462
      %v2464 = vrot.slane %v2463, 4
      %v2465 = vadd.f32 %v2463, %v2464
      %v2466 = vrot.slane %v2465, 2
      %v2467 = vadd.f32 %v2465, %v2466
      %v2468 = vrot.slane %v2467, 1
      %v2469 = vadd.f32 %v2467, %v2468
      %s2470 = vtos %v2469
      %s2471 = smul.f32 %s2470, %s2414
      %v2472 = vld [vmem:[%s510] sm:$0xff]
      %v2473 = vld [vmem:[%s510 + $0x8] sm:$0xff]
      %v2474 = vld [vmem:[%s510 + $0x10] sm:$0xff]
      %v2475 = vld [vmem:[%s510 + $0x18] sm:$0xff]
      %v2476 = vld [vmem:[%s510 + $0x20] sm:$0xff]
      %v2477 = vld [vmem:[%s510 + $0x28] sm:$0xff]
      %v2478 = vld [vmem:[%s510 + $0x30] sm:$0xff]
      %v2479 = vld [vmem:[%s510 + $0x38] sm:$0xff]
      %v2480 = vld [vmem:[%s510 + $0x40] sm:$0xff]
      %v2481 = vld [vmem:[%s510 + $0x48] sm:$0xff]
      %v2482 = vld [vmem:[%s510 + $0x50] sm:$0xff]
      %v2483 = vld [vmem:[%s510 + $0x58] sm:$0xff]
      %v2484 = vld [vmem:[%s510 + $0x60] sm:$0xff]
      %v2485 = vld [vmem:[%s510 + $0x68] sm:$0xff]
      %v2486 = vld [vmem:[%s510 + $0x70] sm:$0xff]
      %v2487 = vld [vmem:[%s510 + $0x78] sm:$0xff]
      %v2488 = vld [vmem:[%s510 + $0x80] sm:$0xff]
      %v2489 = vld [vmem:[%s510 + $0x88] sm:$0xff]
      %v2490 = vld [vmem:[%s510 + $0x90] sm:$0xff]
      %v2491 = vld [vmem:[%s510 + $0x98] sm:$0xff]
      %v2492 = vld [vmem:[%s510 + $0xa0] sm:$0xff]
      %v2493 = vld [vmem:[%s510 + $0xa8] sm:$0xff]
      %v2494 = vld [vmem:[%s510 + $0xb0] sm:$0xff]
      %v2495 = vld [vmem:[%s510 + $0xb8] sm:$0xff]
      %v2496 = vld [vmem:[%s510 + $0xc0] sm:$0xff]
      %v2497 = vld [vmem:[%s510 + $0xc8] sm:$0xff]
      %v2498 = vld [vmem:[%s510 + $0xd0] sm:$0xff]
      %v2499 = vld [vmem:[%s510 + $0xd8] sm:$0xff]
      %v2500 = vld [vmem:[%s510 + $0xe0] sm:$0xff]
      %v2501 = vld [vmem:[%s510 + $0xe8] sm:$0xff]
      %v2502 = vld [vmem:[%s510 + $0xf0] sm:$0xff]
      %v2503 = vld [vmem:[%s510 + $0xf8] sm:$0xff]
      %v2504 = vmul.f32 %v2472, %v2472
      %v2505 = vmul.f32 %v2473, %v2473
      %v2506 = vmul.f32 %v2474, %v2474
      %v2507 = vmul.f32 %v2475, %v2475
      %v2508 = vmul.f32 %v2476, %v2476
      %v2509 = vmul.f32 %v2477, %v2477
      %v2510 = vmul.f32 %v2478, %v2478
      %v2511 = vmul.f32 %v2479, %v2479
      %v2512 = vmul.f32 %v2480, %v2480
      %v2513 = vmul.f32 %v2481, %v2481
      %v2514 = vmul.f32 %v2482, %v2482
      %v2515 = vmul.f32 %v2483, %v2483
      %v2516 = vmul.f32 %v2484, %v2484
      %v2517 = vmul.f32 %v2485, %v2485
      %v2518 = vmul.f32 %v2486, %v2486
      %v2519 = vmul.f32 %v2487, %v2487
      %v2520 = vmul.f32 %v2488, %v2488
      %v2521 = vmul.f32 %v2489, %v2489
      %v2522 = vmul.f32 %v2490, %v2490
      %v2523 = vmul.f32 %v2491, %v2491
      %v2524 = vmul.f32 %v2492, %v2492
      %v2525 = vmul.f32 %v2493, %v2493
      %v2526 = vmul.f32 %v2494, %v2494
      %v2527 = vmul.f32 %v2495, %v2495
      %v2528 = vmul.f32 %v2496, %v2496
      %v2529 = vmul.f32 %v2497, %v2497
      %v2530 = vmul.f32 %v2498, %v2498
      %v2531 = vmul.f32 %v2499, %v2499
      %v2532 = vmul.f32 %v2500, %v2500
      %v2533 = vmul.f32 %v2501, %v2501
      %v2534 = vmul.f32 %v2502, %v2502
      %v2535 = vmul.f32 %v2503, %v2503
      %v2536 = vadd.f32 %v2504, %v2505
      %v2537 = vadd.f32 %v2536, %v2506
      %v2538 = vadd.f32 %v2537, %v2507
      %v2539 = vadd.f32 %v2538, %v2508
      %v2540 = vadd.f32 %v2539, %v2509
      %v2541 = vadd.f32 %v2540, %v2510
      %v2542 = vadd.f32 %v2541, %v2511
      %v2543 = vadd.f32 %v2542, %v2512
      %v2544 = vadd.f32 %v2543, %v2513
      %v2545 = vadd.f32 %v2544, %v2514
      %v2546 = vadd.f32 %v2545, %v2515
      %v2547 = vadd.f32 %v2546, %v2516
      %v2548 = vadd.f32 %v2547, %v2517
      %v2549 = vadd.f32 %v2548, %v2518
      %v2550 = vadd.f32 %v2549, %v2519
      %v2551 = vadd.f32 %v2550, %v2520
      %v2552 = vadd.f32 %v2551, %v2521
      %v2553 = vadd.f32 %v2552, %v2522
      %v2554 = vadd.f32 %v2553, %v2523
      %v2555 = vadd.f32 %v2554, %v2524
      %v2556 = vadd.f32 %v2555, %v2525
      %v2557 = vadd.f32 %v2556, %v2526
      %v2558 = vadd.f32 %v2557, %v2527
      %v2559 = vadd.f32 %v2558, %v2528
      %v2560 = vadd.f32 %v2559, %v2529
      %v2561 = vadd.f32 %v2560, %v2530
      %v2562 = vadd.f32 %v2561, %v2531
      %v2563 = vadd.f32 %v2562, %v2532
      %v2564 = vadd.f32 %v2563, %v2533
      %v2565 = vadd.f32 %v2564, %v2534
      %v2566 = vadd.f32 %v2565, %v2535
      %v2567 = vrot.slane %v2566, 4
      %v2568 = vadd.f32 %v2566, %v2567
      %v2569 = vrot.slane %v2568, 2
      %v2570 = vadd.f32 %v2568, %v2569
      %v2571 = vrot.slane %v2570, 1
      %v2572 = vadd.f32 %v2570, %v2571
      %v2573 = vmax.f32 %v2572, 1e-24
      %v2574 = vrsqrt.pop %v2573
      %v2575 = vmul.f32 %v2574, 8.887108
      %v2576 = vmul.f32 %v2575, %v2472
      %v2577 = vmul.f32 %v2575, %v2473
      %v2578 = vmul.f32 %v2575, %v2474
      %v2579 = vmul.f32 %v2575, %v2475
      %v2580 = vmul.f32 %v2575, %v2476
      %v2581 = vmul.f32 %v2575, %v2477
      %v2582 = vmul.f32 %v2575, %v2478
      %v2583 = vmul.f32 %v2575, %v2479
      %v2584 = vmul.f32 %v2575, %v2480
      %v2585 = vmul.f32 %v2575, %v2481
      %v2586 = vmul.f32 %v2575, %v2482
      %v2587 = vmul.f32 %v2575, %v2483
      %v2588 = vmul.f32 %v2575, %v2484
      %v2589 = vmul.f32 %v2575, %v2485
      %v2590 = vmul.f32 %v2575, %v2486
      %v2591 = vmul.f32 %v2575, %v2487
      %v2592 = vmul.f32 %v2575, %v2488
      %v2593 = vmul.f32 %v2575, %v2489
      %v2594 = vmul.f32 %v2575, %v2490
      %v2595 = vmul.f32 %v2575, %v2491
      %v2596 = vmul.f32 %v2575, %v2492
      %v2597 = vmul.f32 %v2575, %v2493
      %v2598 = vmul.f32 %v2575, %v2494
      %v2599 = vmul.f32 %v2575, %v2495
      %v2600 = vmul.f32 %v2575, %v2496
      %v2601 = vmul.f32 %v2575, %v2497
      %v2602 = vmul.f32 %v2575, %v2498
      %v2603 = vmul.f32 %v2575, %v2499
      %v2604 = vmul.f32 %v2575, %v2500
      %v2605 = vmul.f32 %v2575, %v2501
      %v2606 = vmul.f32 %v2575, %v2502
      %v2607 = vmul.f32 %v2575, %v2503
      %v2608 = vld [vmem:[%s9] sm:$0xff]
      %v2609 = vld [vmem:[%s9 + $0x8] sm:$0xff]
      %v2610 = vld [vmem:[%s9 + $0x10] sm:$0xff]
      %v2611 = vld [vmem:[%s9 + $0x18] sm:$0xff]
      %v2612 = vld [vmem:[%s9 + $0x20] sm:$0xff]
      %v2613 = vld [vmem:[%s9 + $0x28] sm:$0xff]
      %v2614 = vld [vmem:[%s9 + $0x30] sm:$0xff]
      %v2615 = vld [vmem:[%s9 + $0x38] sm:$0xff]
      %v2616 = vld [vmem:[%s9 + $0x40] sm:$0xff]
      %v2617 = vld [vmem:[%s9 + $0x48] sm:$0xff]
      %v2618 = vld [vmem:[%s9 + $0x50] sm:$0xff]
      %v2619 = vld [vmem:[%s9 + $0x58] sm:$0xff]
      %v2620 = vld [vmem:[%s9 + $0x60] sm:$0xff]
      %v2621 = vld [vmem:[%s9 + $0x68] sm:$0xff]
      %v2622 = vld [vmem:[%s9 + $0x70] sm:$0xff]
      %v2623 = vld [vmem:[%s9 + $0x78] sm:$0xff]
      %v2624 = vld [vmem:[%s9 + $0x80] sm:$0xff]
      %v2625 = vld [vmem:[%s9 + $0x88] sm:$0xff]
      %v2626 = vld [vmem:[%s9 + $0x90] sm:$0xff]
      %v2627 = vld [vmem:[%s9 + $0x98] sm:$0xff]
      %v2628 = vld [vmem:[%s9 + $0xa0] sm:$0xff]
      %v2629 = vld [vmem:[%s9 + $0xa8] sm:$0xff]
      %v2630 = vld [vmem:[%s9 + $0xb0] sm:$0xff]
      %v2631 = vld [vmem:[%s9 + $0xb8] sm:$0xff]
      %v2632 = vld [vmem:[%s9 + $0xc0] sm:$0xff]
      %v2633 = vld [vmem:[%s9 + $0xc8] sm:$0xff]
      %v2634 = vld [vmem:[%s9 + $0xd0] sm:$0xff]
      %v2635 = vld [vmem:[%s9 + $0xd8] sm:$0xff]
      %v2636 = vld [vmem:[%s9 + $0xe0] sm:$0xff]
      %v2637 = vld [vmem:[%s9 + $0xe8] sm:$0xff]
      %v2638 = vld [vmem:[%s9 + $0xf0] sm:$0xff]
      %v2639 = vld [vmem:[%s9 + $0xf8] sm:$0xff]
      %v2640 = vld [vmem:[%s9 + $0x100] sm:$0xff]
      %v2641 = vld [vmem:[%s9 + $0x108] sm:$0xff]
      %v2642 = vld [vmem:[%s9 + $0x110] sm:$0xff]
      %v2643 = vld [vmem:[%s9 + $0x118] sm:$0xff]
      %v2644 = vld [vmem:[%s9 + $0x120] sm:$0xff]
      %v2645 = vld [vmem:[%s9 + $0x128] sm:$0xff]
      %v2646 = vld [vmem:[%s9 + $0x130] sm:$0xff]
      %v2647 = vld [vmem:[%s9 + $0x138] sm:$0xff]
      %v2648 = vld [vmem:[%s9 + $0x140] sm:$0xff]
      %v2649 = vld [vmem:[%s9 + $0x148] sm:$0xff]
      %v2650 = vld [vmem:[%s9 + $0x150] sm:$0xff]
      %v2651 = vld [vmem:[%s9 + $0x158] sm:$0xff]
      %v2652 = vld [vmem:[%s9 + $0x160] sm:$0xff]
      %v2653 = vld [vmem:[%s9 + $0x168] sm:$0xff]
      %v2654 = vld [vmem:[%s9 + $0x170] sm:$0xff]
      %v2655 = vld [vmem:[%s9 + $0x178] sm:$0xff]
      %v2656 = vld [vmem:[%s9 + $0x180] sm:$0xff]
      %v2657 = vld [vmem:[%s9 + $0x188] sm:$0xff]
      %v2658 = vld [vmem:[%s9 + $0x190] sm:$0xff]
      %v2659 = vld [vmem:[%s9 + $0x198] sm:$0xff]
      %v2660 = vld [vmem:[%s9 + $0x1a0] sm:$0xff]
      %v2661 = vld [vmem:[%s9 + $0x1a8] sm:$0xff]
      %v2662 = vld [vmem:[%s9 + $0x1b0] sm:$0xff]
      %v2663 = vld [vmem:[%s9 + $0x1b8] sm:$0xff]
      %v2664 = vld [vmem:[%s9 + $0x1c0] sm:$0xff]
      %v2665 = vld [vmem:[%s9 + $0x1c8] sm:$0xff]
      %v2666 = vld [vmem:[%s9 + $0x1d0] sm:$0xff]
      %v2667 = vld [vmem:[%s9 + $0x1d8] sm:$0xff]
      %v2668 = vld [vmem:[%s9 + $0x1e0] sm:$0xff]
      %v2669 = vld [vmem:[%s9 + $0x1e8] sm:$0xff]
      %v2670 = vld [vmem:[%s9 + $0x1f0] sm:$0xff]
      %v2671 = vld [vmem:[%s9 + $0x1f8] sm:$0xff]
      %v2672 = vld [vmem:[%s9 + $0x200] sm:$0xff]
      %v2673 = vld [vmem:[%s9 + $0x208] sm:$0xff]
      %v2674 = vld [vmem:[%s9 + $0x210] sm:$0xff]
      %v2675 = vld [vmem:[%s9 + $0x218] sm:$0xff]
      %v2676 = vld [vmem:[%s9 + $0x220] sm:$0xff]
      %v2677 = vld [vmem:[%s9 + $0x228] sm:$0xff]
      %v2678 = vld [vmem:[%s9 + $0x230] sm:$0xff]
      %v2679 = vld [vmem:[%s9 + $0x238] sm:$0xff]
      %v2680 = vld [vmem:[%s9 + $0x240] sm:$0xff]
      %v2681 = vld [vmem:[%s9 + $0x248] sm:$0xff]
      %v2682 = vld [vmem:[%s9 + $0x250] sm:$0xff]
      %v2683 = vld [vmem:[%s9 + $0x258] sm:$0xff]
      %v2684 = vld [vmem:[%s9 + $0x260] sm:$0xff]
      %v2685 = vld [vmem:[%s9 + $0x268] sm:$0xff]
      %v2686 = vld [vmem:[%s9 + $0x270] sm:$0xff]
      %v2687 = vld [vmem:[%s9 + $0x278] sm:$0xff]
      %v2688 = vpack.c.bf16 %v2577, %v2576
      %v2689 = vpack.c.bf16 %v2579, %v2578
      %v2690 = vpack.c.bf16 %v2581, %v2580
      %v2691 = vpack.c.bf16 %v2583, %v2582
      %v2692 = vpack.c.bf16 %v2585, %v2584
      %v2693 = vpack.c.bf16 %v2587, %v2586
      %v2694 = vpack.c.bf16 %v2589, %v2588
      %v2695 = vpack.c.bf16 %v2591, %v2590
      %v2696 = vpack.c.bf16 %v2593, %v2592
      %v2697 = vpack.c.bf16 %v2595, %v2594
      %v2698 = vpack.c.bf16 %v2597, %v2596
      %v2699 = vpack.c.bf16 %v2599, %v2598
      %v2700 = vpack.c.bf16 %v2601, %v2600
      %v2701 = vpack.c.bf16 %v2603, %v2602
      %v2702 = vpack.c.bf16 %v2605, %v2604
      %v2703 = vpack.c.bf16 %v2607, %v2606
      %v2704 = vld [vmem:[%s10] sm:$0xff]
      %v2705 = vld [vmem:[%s10 + $0x8] sm:$0xff]
      %v2706 = vld [vmem:[%s10 + $0x10] sm:$0xff]
      %v2707 = vld [vmem:[%s10 + $0x18] sm:$0xff]
      %v2708 = vld [vmem:[%s10 + $0x20] sm:$0xff]
      %v2709 = vld [vmem:[%s10 + $0x28] sm:$0xff]
      %v2710 = vld [vmem:[%s10 + $0x30] sm:$0xff]
      %v2711 = vld [vmem:[%s10 + $0x38] sm:$0xff]
      %v2712 = vld [vmem:[%s10 + $0x40] sm:$0xff]
      %v2713 = vld [vmem:[%s10 + $0x48] sm:$0xff]
      %v2714 = vld [vmem:[%s10 + $0x50] sm:$0xff]
      %v2715 = vld [vmem:[%s10 + $0x58] sm:$0xff]
      %v2716 = vld [vmem:[%s10 + $0x60] sm:$0xff]
      %v2717 = vld [vmem:[%s10 + $0x68] sm:$0xff]
      %v2718 = vld [vmem:[%s10 + $0x70] sm:$0xff]
      %v2719 = vld [vmem:[%s10 + $0x78] sm:$0xff]
      %v2720 = vld [vmem:[%s10 + $0x80] sm:$0xff]
      %v2721 = vld [vmem:[%s10 + $0x88] sm:$0xff]
      %v2722 = vld [vmem:[%s10 + $0x90] sm:$0xff]
      %v2723 = vld [vmem:[%s10 + $0x98] sm:$0xff]
      %v2724 = vld [vmem:[%s10 + $0xa0] sm:$0xff]
      %v2725 = vld [vmem:[%s10 + $0xa8] sm:$0xff]
      %v2726 = vld [vmem:[%s10 + $0xb0] sm:$0xff]
      %v2727 = vld [vmem:[%s10 + $0xb8] sm:$0xff]
      %v2728 = vld [vmem:[%s10 + $0xc0] sm:$0xff]
      %v2729 = vld [vmem:[%s10 + $0xc8] sm:$0xff]
      %v2730 = vld [vmem:[%s10 + $0xd0] sm:$0xff]
      %v2731 = vld [vmem:[%s10 + $0xd8] sm:$0xff]
      %v2732 = vld [vmem:[%s10 + $0xe0] sm:$0xff]
      %v2733 = vld [vmem:[%s10 + $0xe8] sm:$0xff]
      %v2734 = vld [vmem:[%s10 + $0xf0] sm:$0xff]
      %v2735 = vld [vmem:[%s10 + $0xf8] sm:$0xff]
      %v2736 = vld [vmem:[%s10 + $0x100] sm:$0xff]
      %v2737 = vld [vmem:[%s10 + $0x108] sm:$0xff]
      %v2738 = vld [vmem:[%s10 + $0x110] sm:$0xff]
      %v2739 = vld [vmem:[%s10 + $0x118] sm:$0xff]
      %v2740 = vld [vmem:[%s10 + $0x120] sm:$0xff]
      %v2741 = vld [vmem:[%s10 + $0x128] sm:$0xff]
      %v2742 = vld [vmem:[%s10 + $0x130] sm:$0xff]
      %v2743 = vld [vmem:[%s10 + $0x138] sm:$0xff]
      %v2744 = vld [vmem:[%s10 + $0x140] sm:$0xff]
      %v2745 = vld [vmem:[%s10 + $0x148] sm:$0xff]
      %v2746 = vld [vmem:[%s10 + $0x150] sm:$0xff]
      %v2747 = vld [vmem:[%s10 + $0x158] sm:$0xff]
      %v2748 = vld [vmem:[%s10 + $0x160] sm:$0xff]
      %v2749 = vld [vmem:[%s10 + $0x168] sm:$0xff]
      %v2750 = vld [vmem:[%s10 + $0x170] sm:$0xff]
      %v2751 = vld [vmem:[%s10 + $0x178] sm:$0xff]
      %v2752 = vld [vmem:[%s10 + $0x180] sm:$0xff]
      %v2753 = vld [vmem:[%s10 + $0x188] sm:$0xff]
      %v2754 = vld [vmem:[%s10 + $0x190] sm:$0xff]
      %v2755 = vld [vmem:[%s10 + $0x198] sm:$0xff]
      %v2756 = vld [vmem:[%s10 + $0x1a0] sm:$0xff]
      %v2757 = vld [vmem:[%s10 + $0x1a8] sm:$0xff]
      %v2758 = vld [vmem:[%s10 + $0x1b0] sm:$0xff]
      %v2759 = vld [vmem:[%s10 + $0x1b8] sm:$0xff]
      %v2760 = vld [vmem:[%s10 + $0x1c0] sm:$0xff]
      %v2761 = vld [vmem:[%s10 + $0x1c8] sm:$0xff]
      %v2762 = vld [vmem:[%s10 + $0x1d0] sm:$0xff]
      %v2763 = vld [vmem:[%s10 + $0x1d8] sm:$0xff]
      %v2764 = vld [vmem:[%s10 + $0x1e0] sm:$0xff]
      %v2765 = vld [vmem:[%s10 + $0x1e8] sm:$0xff]
      %v2766 = vld [vmem:[%s10 + $0x1f0] sm:$0xff]
      %v2767 = vld [vmem:[%s10 + $0x1f8] sm:$0xff]
      %v2768 = vld [vmem:[%s10 + $0x200] sm:$0xff]
      %v2769 = vld [vmem:[%s10 + $0x208] sm:$0xff]
      %v2770 = vld [vmem:[%s10 + $0x210] sm:$0xff]
      %v2771 = vld [vmem:[%s10 + $0x218] sm:$0xff]
      %v2772 = vld [vmem:[%s10 + $0x220] sm:$0xff]
      %v2773 = vld [vmem:[%s10 + $0x228] sm:$0xff]
      %v2774 = vld [vmem:[%s10 + $0x230] sm:$0xff]
      %v2775 = vld [vmem:[%s10 + $0x238] sm:$0xff]
      %v2776 = vld [vmem:[%s10 + $0x240] sm:$0xff]
      %v2777 = vld [vmem:[%s10 + $0x248] sm:$0xff]
      %v2778 = vld [vmem:[%s10 + $0x250] sm:$0xff]
      %v2779 = vld [vmem:[%s10 + $0x258] sm:$0xff]
      %v2780 = vld [vmem:[%s10 + $0x260] sm:$0xff]
      %v2781 = vld [vmem:[%s10 + $0x268] sm:$0xff]
      %v2782 = vld [vmem:[%s10 + $0x270] sm:$0xff]
      %v2783 = vld [vmem:[%s10 + $0x278] sm:$0xff]
      %2785 = vset.pattern.permute.xlu0 0
      %2786 = vperm.xlu0 %2785, %v2704
      %v2787 = vpop.permute.xlu0 %2786
      %2790 = vset.pattern.permute.xlu0 0
      %2791 = vperm.xlu0 %2790, %v2705
      %v2792 = vpop.permute.xlu0 %2791
      %2795 = vset.pattern.permute.xlu0 0
      %2796 = vperm.xlu0 %2795, %v2706
      %v2797 = vpop.permute.xlu0 %2796
      %2800 = vset.pattern.permute.xlu0 0
      %2801 = vperm.xlu0 %2800, %v2707
      %v2802 = vpop.permute.xlu0 %2801
      %2805 = vset.pattern.permute.xlu0 0
      %2806 = vperm.xlu0 %2805, %v2708
      %v2807 = vpop.permute.xlu0 %2806
      %2810 = vset.pattern.permute.xlu0 0
      %2811 = vperm.xlu0 %2810, %v2709
      %v2812 = vpop.permute.xlu0 %2811
      %2815 = vset.pattern.permute.xlu0 0
      %2816 = vperm.xlu0 %2815, %v2710
      %v2817 = vpop.permute.xlu0 %2816
      %2820 = vset.pattern.permute.xlu0 0
      %2821 = vperm.xlu0 %2820, %v2711
      %v2822 = vpop.permute.xlu0 %2821
      %2825 = vset.pattern.permute.xlu0 0
      %2826 = vperm.xlu0 %2825, %v2712
      %v2827 = vpop.permute.xlu0 %2826
      %2830 = vset.pattern.permute.xlu0 0
      %2831 = vperm.xlu0 %2830, %v2713
      %v2832 = vpop.permute.xlu0 %2831
      %2835 = vset.pattern.permute.xlu0 0
      %2836 = vperm.xlu0 %2835, %v2714
      %v2837 = vpop.permute.xlu0 %2836
      %2840 = vset.pattern.permute.xlu0 0
      %2841 = vperm.xlu0 %2840, %v2715
      %v2842 = vpop.permute.xlu0 %2841
      %2845 = vset.pattern.permute.xlu0 0
      %2846 = vperm.xlu0 %2845, %v2716
      %v2847 = vpop.permute.xlu0 %2846
      %2850 = vset.pattern.permute.xlu0 0
      %2851 = vperm.xlu0 %2850, %v2717
      %v2852 = vpop.permute.xlu0 %2851
      %2855 = vset.pattern.permute.xlu0 0
      %2856 = vperm.xlu0 %2855, %v2718
      %v2857 = vpop.permute.xlu0 %2856
      %2860 = vset.pattern.permute.xlu0 0
      %2861 = vperm.xlu0 %2860, %v2719
      %v2862 = vpop.permute.xlu0 %2861
      %2865 = vset.pattern.permute.xlu0 0
      %2866 = vperm.xlu0 %2865, %v2720
      %v2867 = vpop.permute.xlu0 %2866
      %2870 = vset.pattern.permute.xlu0 0
      %2871 = vperm.xlu0 %2870, %v2721
      %v2872 = vpop.permute.xlu0 %2871
      %2875 = vset.pattern.permute.xlu0 0
      %2876 = vperm.xlu0 %2875, %v2722
      %v2877 = vpop.permute.xlu0 %2876
      %2880 = vset.pattern.permute.xlu0 0
      %2881 = vperm.xlu0 %2880, %v2723
      %v2882 = vpop.permute.xlu0 %2881
      %2885 = vset.pattern.permute.xlu0 0
      %2886 = vperm.xlu0 %2885, %v2724
      %v2887 = vpop.permute.xlu0 %2886
      %2890 = vset.pattern.permute.xlu0 0
      %2891 = vperm.xlu0 %2890, %v2725
      %v2892 = vpop.permute.xlu0 %2891
      %2895 = vset.pattern.permute.xlu0 0
      %2896 = vperm.xlu0 %2895, %v2726
      %v2897 = vpop.permute.xlu0 %2896
      %2900 = vset.pattern.permute.xlu0 0
      %2901 = vperm.xlu0 %2900, %v2727
      %v2902 = vpop.permute.xlu0 %2901
      %2905 = vset.pattern.permute.xlu0 0
      %2906 = vperm.xlu0 %2905, %v2728
      %v2907 = vpop.permute.xlu0 %2906
      %2910 = vset.pattern.permute.xlu0 0
      %2911 = vperm.xlu0 %2910, %v2729
      %v2912 = vpop.permute.xlu0 %2911
      %2915 = vset.pattern.permute.xlu0 0
      %2916 = vperm.xlu0 %2915, %v2730
      %v2917 = vpop.permute.xlu0 %2916
      %2920 = vset.pattern.permute.xlu0 0
      %2921 = vperm.xlu0 %2920, %v2731
      %v2922 = vpop.permute.xlu0 %2921
      %2925 = vset.pattern.permute.xlu0 0
      %2926 = vperm.xlu0 %2925, %v2732
      %v2927 = vpop.permute.xlu0 %2926
      %2930 = vset.pattern.permute.xlu0 0
      %2931 = vperm.xlu0 %2930, %v2733
      %v2932 = vpop.permute.xlu0 %2931
      %2935 = vset.pattern.permute.xlu0 0
      %2936 = vperm.xlu0 %2935, %v2734
      %v2937 = vpop.permute.xlu0 %2936
      %2940 = vset.pattern.permute.xlu0 0
      %2941 = vperm.xlu0 %2940, %v2735
      %v2942 = vpop.permute.xlu0 %2941
      %2945 = vset.pattern.permute.xlu0 0
      %2946 = vperm.xlu0 %2945, %v2736
      %v2947 = vpop.permute.xlu0 %2946
      %2950 = vset.pattern.permute.xlu0 0
      %2951 = vperm.xlu0 %2950, %v2737
      %v2952 = vpop.permute.xlu0 %2951
      %2955 = vset.pattern.permute.xlu0 0
      %2956 = vperm.xlu0 %2955, %v2738
      %v2957 = vpop.permute.xlu0 %2956
      %2960 = vset.pattern.permute.xlu0 0
      %2961 = vperm.xlu0 %2960, %v2739
      %v2962 = vpop.permute.xlu0 %2961
      %2965 = vset.pattern.permute.xlu0 0
      %2966 = vperm.xlu0 %2965, %v2740
      %v2967 = vpop.permute.xlu0 %2966
      %2970 = vset.pattern.permute.xlu0 0
      %2971 = vperm.xlu0 %2970, %v2741
      %v2972 = vpop.permute.xlu0 %2971
      %2975 = vset.pattern.permute.xlu0 0
      %2976 = vperm.xlu0 %2975, %v2742
      %v2977 = vpop.permute.xlu0 %2976
      %2980 = vset.pattern.permute.xlu0 0
      %2981 = vperm.xlu0 %2980, %v2743
      %v2982 = vpop.permute.xlu0 %2981
      %2985 = vset.pattern.permute.xlu0 0
      %2986 = vperm.xlu0 %2985, %v2744
      %v2987 = vpop.permute.xlu0 %2986
      %2990 = vset.pattern.permute.xlu0 0
      %2991 = vperm.xlu0 %2990, %v2745
      %v2992 = vpop.permute.xlu0 %2991
      %2995 = vset.pattern.permute.xlu0 0
      %2996 = vperm.xlu0 %2995, %v2746
      %v2997 = vpop.permute.xlu0 %2996
      %3000 = vset.pattern.permute.xlu0 0
      %3001 = vperm.xlu0 %3000, %v2747
      %v3002 = vpop.permute.xlu0 %3001
      %3005 = vset.pattern.permute.xlu0 0
      %3006 = vperm.xlu0 %3005, %v2748
      %v3007 = vpop.permute.xlu0 %3006
      %3010 = vset.pattern.permute.xlu0 0
      %3011 = vperm.xlu0 %3010, %v2749
      %v3012 = vpop.permute.xlu0 %3011
      %3015 = vset.pattern.permute.xlu0 0
      %3016 = vperm.xlu0 %3015, %v2750
      %v3017 = vpop.permute.xlu0 %3016
      %3020 = vset.pattern.permute.xlu0 0
      %3021 = vperm.xlu0 %3020, %v2751
      %v3022 = vpop.permute.xlu0 %3021
      %3025 = vset.pattern.permute.xlu0 0
      %3026 = vperm.xlu0 %3025, %v2752
      %v3027 = vpop.permute.xlu0 %3026
      %3030 = vset.pattern.permute.xlu0 0
      %3031 = vperm.xlu0 %3030, %v2753
      %v3032 = vpop.permute.xlu0 %3031
      %3035 = vset.pattern.permute.xlu0 0
      %3036 = vperm.xlu0 %3035, %v2754
      %v3037 = vpop.permute.xlu0 %3036
      %3040 = vset.pattern.permute.xlu0 0
      %3041 = vperm.xlu0 %3040, %v2755
      %v3042 = vpop.permute.xlu0 %3041
      %3045 = vset.pattern.permute.xlu0 0
      %3046 = vperm.xlu0 %3045, %v2756
      %v3047 = vpop.permute.xlu0 %3046
      %3050 = vset.pattern.permute.xlu0 0
      %3051 = vperm.xlu0 %3050, %v2757
      %v3052 = vpop.permute.xlu0 %3051
      %3055 = vset.pattern.permute.xlu0 0
      %3056 = vperm.xlu0 %3055, %v2758
      %v3057 = vpop.permute.xlu0 %3056
      %3060 = vset.pattern.permute.xlu0 0
      %3061 = vperm.xlu0 %3060, %v2759
      %v3062 = vpop.permute.xlu0 %3061
      %3065 = vset.pattern.permute.xlu0 0
      %3066 = vperm.xlu0 %3065, %v2760
      %v3067 = vpop.permute.xlu0 %3066
      %3070 = vset.pattern.permute.xlu0 0
      %3071 = vperm.xlu0 %3070, %v2761
      %v3072 = vpop.permute.xlu0 %3071
      %3075 = vset.pattern.permute.xlu0 0
      %3076 = vperm.xlu0 %3075, %v2762
      %v3077 = vpop.permute.xlu0 %3076
      %3080 = vset.pattern.permute.xlu0 0
      %3081 = vperm.xlu0 %3080, %v2763
      %v3082 = vpop.permute.xlu0 %3081
      %3085 = vset.pattern.permute.xlu0 0
      %3086 = vperm.xlu0 %3085, %v2764
      %v3087 = vpop.permute.xlu0 %3086
      %3090 = vset.pattern.permute.xlu0 0
      %3091 = vperm.xlu0 %3090, %v2765
      %v3092 = vpop.permute.xlu0 %3091
      %3095 = vset.pattern.permute.xlu0 0
      %3096 = vperm.xlu0 %3095, %v2766
      %v3097 = vpop.permute.xlu0 %3096
      %3100 = vset.pattern.permute.xlu0 0
      %3101 = vperm.xlu0 %3100, %v2767
      %v3102 = vpop.permute.xlu0 %3101
      %3105 = vset.pattern.permute.xlu0 0
      %3106 = vperm.xlu0 %3105, %v2768
      %v3107 = vpop.permute.xlu0 %3106
      %3110 = vset.pattern.permute.xlu0 0
      %3111 = vperm.xlu0 %3110, %v2769
      %v3112 = vpop.permute.xlu0 %3111
      %3115 = vset.pattern.permute.xlu0 0
      %3116 = vperm.xlu0 %3115, %v2770
      %v3117 = vpop.permute.xlu0 %3116
      %3120 = vset.pattern.permute.xlu0 0
      %3121 = vperm.xlu0 %3120, %v2771
      %v3122 = vpop.permute.xlu0 %3121
      %3125 = vset.pattern.permute.xlu0 0
      %3126 = vperm.xlu0 %3125, %v2772
      %v3127 = vpop.permute.xlu0 %3126
      %3130 = vset.pattern.permute.xlu0 0
      %3131 = vperm.xlu0 %3130, %v2773
      %v3132 = vpop.permute.xlu0 %3131
      %3135 = vset.pattern.permute.xlu0 0
      %3136 = vperm.xlu0 %3135, %v2774
      %v3137 = vpop.permute.xlu0 %3136
      %3140 = vset.pattern.permute.xlu0 0
      %3141 = vperm.xlu0 %3140, %v2775
      %v3142 = vpop.permute.xlu0 %3141
      %3145 = vset.pattern.permute.xlu0 0
      %3146 = vperm.xlu0 %3145, %v2776
      %v3147 = vpop.permute.xlu0 %3146
      %3150 = vset.pattern.permute.xlu0 0
      %3151 = vperm.xlu0 %3150, %v2777
      %v3152 = vpop.permute.xlu0 %3151
      %3155 = vset.pattern.permute.xlu0 0
      %3156 = vperm.xlu0 %3155, %v2778
      %v3157 = vpop.permute.xlu0 %3156
      %3160 = vset.pattern.permute.xlu0 0
      %3161 = vperm.xlu0 %3160, %v2779
      %v3162 = vpop.permute.xlu0 %3161
      %3165 = vset.pattern.permute.xlu0 0
      %3166 = vperm.xlu0 %3165, %v2780
      %v3167 = vpop.permute.xlu0 %3166
      %3170 = vset.pattern.permute.xlu0 0
      %3171 = vperm.xlu0 %3170, %v2781
      %v3172 = vpop.permute.xlu0 %3171
      %3175 = vset.pattern.permute.xlu0 0
      %3176 = vperm.xlu0 %3175, %v2782
      %v3177 = vpop.permute.xlu0 %3176
      %3180 = vset.pattern.permute.xlu0 0
      %3181 = vperm.xlu0 %3180, %v2783
      %v3182 = vpop.permute.xlu0 %3181
      %v3264 = vunpack.c.l.b16 %v2608
      %v3265 = vunpack.c.h.b16 %v2608
      %v3266 = vunpack.c.l.b16 %v2609
      %v3267 = vunpack.c.h.b16 %v2609
      %v3268 = vunpack.c.l.b16 %v2610
      %v3269 = vunpack.c.h.b16 %v2610
      %v3270 = vunpack.c.l.b16 %v2611
      %v3271 = vunpack.c.h.b16 %v2611
      %v3272 = vunpack.c.l.b16 %v2612
      %v3273 = vunpack.c.h.b16 %v2612
      %v3274 = vunpack.c.l.b16 %v2613
      %v3275 = vunpack.c.h.b16 %v2613
      %v3276 = vunpack.c.l.b16 %v2614
      %v3277 = vunpack.c.h.b16 %v2614
      %v3278 = vunpack.c.l.b16 %v2615
      %v3279 = vunpack.c.h.b16 %v2615
      %v3280 = vunpack.c.l.b16 %v2616
      %v3281 = vunpack.c.h.b16 %v2616
      %v3282 = vunpack.c.l.b16 %v2617
      %v3283 = vunpack.c.h.b16 %v2617
      %v3284 = vunpack.c.l.b16 %v2618
      %v3285 = vunpack.c.h.b16 %v2618
      %v3286 = vunpack.c.l.b16 %v2619
      %v3287 = vunpack.c.h.b16 %v2619
      %v3288 = vunpack.c.l.b16 %v2620
      %v3289 = vunpack.c.h.b16 %v2620
      %v3290 = vunpack.c.l.b16 %v2621
      %v3291 = vunpack.c.h.b16 %v2621
      %v3292 = vunpack.c.l.b16 %v2622
      %v3293 = vunpack.c.h.b16 %v2622
      %v3294 = vunpack.c.l.b16 %v2623
      %v3295 = vunpack.c.h.b16 %v2623
      %v3296 = vunpack.c.l.b16 %v2624
      %v3297 = vunpack.c.h.b16 %v2624
      %v3298 = vunpack.c.l.b16 %v2625
      %v3299 = vunpack.c.h.b16 %v2625
      %v3300 = vunpack.c.l.b16 %v2626
      %v3301 = vunpack.c.h.b16 %v2626
      %v3302 = vunpack.c.l.b16 %v2627
      %v3303 = vunpack.c.h.b16 %v2627
      %v3304 = vunpack.c.l.b16 %v2628
      %v3305 = vunpack.c.h.b16 %v2628
      %v3306 = vunpack.c.l.b16 %v2629
      %v3307 = vunpack.c.h.b16 %v2629
      %v3308 = vunpack.c.l.b16 %v2630
      %v3309 = vunpack.c.h.b16 %v2630
      %v3310 = vunpack.c.l.b16 %v2631
      %v3311 = vunpack.c.h.b16 %v2631
      %v3312 = vunpack.c.l.b16 %v2632
      %v3313 = vunpack.c.h.b16 %v2632
      %v3314 = vunpack.c.l.b16 %v2633
      %v3315 = vunpack.c.h.b16 %v2633
      %v3316 = vunpack.c.l.b16 %v2634
      %v3317 = vunpack.c.h.b16 %v2634
      %v3318 = vunpack.c.l.b16 %v2635
      %v3319 = vunpack.c.h.b16 %v2635
      %v3320 = vunpack.c.l.b16 %v2636
      %v3321 = vunpack.c.h.b16 %v2636
      %v3322 = vunpack.c.l.b16 %v2637
      %v3323 = vunpack.c.h.b16 %v2637
      %v3324 = vunpack.c.l.b16 %v2638
      %v3325 = vunpack.c.h.b16 %v2638
      %v3326 = vunpack.c.l.b16 %v2639
      %v3327 = vunpack.c.h.b16 %v2639
      %v3328 = vunpack.c.l.b16 %v2640
      %v3329 = vunpack.c.h.b16 %v2640
      %v3330 = vunpack.c.l.b16 %v2641
      %v3331 = vunpack.c.h.b16 %v2641
      %v3332 = vunpack.c.l.b16 %v2642
      %v3333 = vunpack.c.h.b16 %v2642
      %v3334 = vunpack.c.l.b16 %v2643
      %v3335 = vunpack.c.h.b16 %v2643
      %v3336 = vunpack.c.l.b16 %v2644
      %v3337 = vunpack.c.h.b16 %v2644
      %v3338 = vunpack.c.l.b16 %v2645
      %v3339 = vunpack.c.h.b16 %v2645
      %v3340 = vunpack.c.l.b16 %v2646
      %v3341 = vunpack.c.h.b16 %v2646
      %v3342 = vunpack.c.l.b16 %v2647
      %v3343 = vunpack.c.h.b16 %v2647
      %v3344 = vunpack.c.l.b16 %v2648
      %v3345 = vunpack.c.h.b16 %v2648
      %v3346 = vunpack.c.l.b16 %v2649
      %v3347 = vunpack.c.h.b16 %v2649
      %v3348 = vunpack.c.l.b16 %v2650
      %v3349 = vunpack.c.h.b16 %v2650
      %v3350 = vunpack.c.l.b16 %v2651
      %v3351 = vunpack.c.h.b16 %v2651
      %v3352 = vunpack.c.l.b16 %v2652
      %v3353 = vunpack.c.h.b16 %v2652
      %v3354 = vunpack.c.l.b16 %v2653
      %v3355 = vunpack.c.h.b16 %v2653
      %v3356 = vunpack.c.l.b16 %v2654
      %v3357 = vunpack.c.h.b16 %v2654
      %v3358 = vunpack.c.l.b16 %v2655
      %v3359 = vunpack.c.h.b16 %v2655
      %v3360 = vunpack.c.l.b16 %v2656
      %v3361 = vunpack.c.h.b16 %v2656
      %v3362 = vunpack.c.l.b16 %v2657
      %v3363 = vunpack.c.h.b16 %v2657
      %v3364 = vunpack.c.l.b16 %v2658
      %v3365 = vunpack.c.h.b16 %v2658
      %v3366 = vunpack.c.l.b16 %v2659
      %v3367 = vunpack.c.h.b16 %v2659
      %v3368 = vunpack.c.l.b16 %v2660
      %v3369 = vunpack.c.h.b16 %v2660
      %v3370 = vunpack.c.l.b16 %v2661
      %v3371 = vunpack.c.h.b16 %v2661
      %v3372 = vunpack.c.l.b16 %v2662
      %v3373 = vunpack.c.h.b16 %v2662
      %v3374 = vunpack.c.l.b16 %v2663
      %v3375 = vunpack.c.h.b16 %v2663
      %v3376 = vunpack.c.l.b16 %v2664
      %v3377 = vunpack.c.h.b16 %v2664
      %v3378 = vunpack.c.l.b16 %v2665
      %v3379 = vunpack.c.h.b16 %v2665
      %v3380 = vunpack.c.l.b16 %v2666
      %v3381 = vunpack.c.h.b16 %v2666
      %v3382 = vunpack.c.l.b16 %v2667
      %v3383 = vunpack.c.h.b16 %v2667
      %v3384 = vunpack.c.l.b16 %v2668
      %v3385 = vunpack.c.h.b16 %v2668
      %v3386 = vunpack.c.l.b16 %v2669
      %v3387 = vunpack.c.h.b16 %v2669
      %v3388 = vunpack.c.l.b16 %v2670
      %v3389 = vunpack.c.h.b16 %v2670
      %v3390 = vunpack.c.l.b16 %v2671
      %v3391 = vunpack.c.h.b16 %v2671
      %v3392 = vunpack.c.l.b16 %v2672
      %v3393 = vunpack.c.h.b16 %v2672
      %v3394 = vunpack.c.l.b16 %v2673
      %v3395 = vunpack.c.h.b16 %v2673
      %v3396 = vunpack.c.l.b16 %v2674
      %v3397 = vunpack.c.h.b16 %v2674
      %v3398 = vunpack.c.l.b16 %v2675
      %v3399 = vunpack.c.h.b16 %v2675
      %v3400 = vunpack.c.l.b16 %v2676
      %v3401 = vunpack.c.h.b16 %v2676
      %v3402 = vunpack.c.l.b16 %v2677
      %v3403 = vunpack.c.h.b16 %v2677
      %v3404 = vunpack.c.l.b16 %v2678
      %v3405 = vunpack.c.h.b16 %v2678
      %v3406 = vunpack.c.l.b16 %v2679
      %v3407 = vunpack.c.h.b16 %v2679
      %v3408 = vunpack.c.l.b16 %v2680
      %v3409 = vunpack.c.h.b16 %v2680
      %v3410 = vunpack.c.l.b16 %v2681
      %v3411 = vunpack.c.h.b16 %v2681
      %v3412 = vunpack.c.l.b16 %v2682
      %v3413 = vunpack.c.h.b16 %v2682
      %v3414 = vunpack.c.l.b16 %v2683
      %v3415 = vunpack.c.h.b16 %v2683
      %v3416 = vunpack.c.l.b16 %v2684
      %v3417 = vunpack.c.h.b16 %v2684
      %v3418 = vunpack.c.l.b16 %v2685
      %v3419 = vunpack.c.h.b16 %v2685
      %v3420 = vunpack.c.l.b16 %v2686
      %v3421 = vunpack.c.h.b16 %v2686
      %v3422 = vunpack.c.l.b16 %v2687
      %v3423 = vunpack.c.h.b16 %v2687
      %v3424 = vpack.c.b16 %v3266, %v3264
      %v3425 = vpack.c.b16 %v3267, %v3265
      %v3426 = vpack.c.b16 %v3270, %v3268
      %v3427 = vpack.c.b16 %v3271, %v3269
      %v3428 = vpack.c.b16 %v3274, %v3272
      %v3429 = vpack.c.b16 %v3275, %v3273
      %v3430 = vpack.c.b16 %v3278, %v3276
      %v3431 = vpack.c.b16 %v3279, %v3277
      %v3432 = vpack.c.b16 %v3282, %v3280
      %v3433 = vpack.c.b16 %v3283, %v3281
      %v3434 = vpack.c.b16 %v3286, %v3284
      %v3435 = vpack.c.b16 %v3287, %v3285
      %v3436 = vpack.c.b16 %v3290, %v3288
      %v3437 = vpack.c.b16 %v3291, %v3289
      %v3438 = vpack.c.b16 %v3294, %v3292
      %v3439 = vpack.c.b16 %v3295, %v3293
      %v3440 = vpack.c.b16 %v3298, %v3296
      %v3441 = vpack.c.b16 %v3299, %v3297
      %v3442 = vpack.c.b16 %v3302, %v3300
      %v3443 = vpack.c.b16 %v3303, %v3301
      %v3444 = vpack.c.b16 %v3306, %v3304
      %v3445 = vpack.c.b16 %v3307, %v3305
      %v3446 = vpack.c.b16 %v3310, %v3308
      %v3447 = vpack.c.b16 %v3311, %v3309
      %v3448 = vpack.c.b16 %v3314, %v3312
      %v3449 = vpack.c.b16 %v3315, %v3313
      %v3450 = vpack.c.b16 %v3318, %v3316
      %v3451 = vpack.c.b16 %v3319, %v3317
      %v3452 = vpack.c.b16 %v3322, %v3320
      %v3453 = vpack.c.b16 %v3323, %v3321
      %v3454 = vpack.c.b16 %v3326, %v3324
      %v3455 = vpack.c.b16 %v3327, %v3325
      %v3456 = vpack.c.b16 %v3330, %v3328
      %v3457 = vpack.c.b16 %v3331, %v3329
      %v3458 = vpack.c.b16 %v3334, %v3332
      %v3459 = vpack.c.b16 %v3335, %v3333
      %v3460 = vpack.c.b16 %v3338, %v3336
      %v3461 = vpack.c.b16 %v3339, %v3337
      %v3462 = vpack.c.b16 %v3342, %v3340
      %v3463 = vpack.c.b16 %v3343, %v3341
      %v3464 = vpack.c.b16 %v3346, %v3344
      %v3465 = vpack.c.b16 %v3347, %v3345
      %v3466 = vpack.c.b16 %v3350, %v3348
      %v3467 = vpack.c.b16 %v3351, %v3349
      %v3468 = vpack.c.b16 %v3354, %v3352
      %v3469 = vpack.c.b16 %v3355, %v3353
      %v3470 = vpack.c.b16 %v3358, %v3356
      %v3471 = vpack.c.b16 %v3359, %v3357
      %v3472 = vpack.c.b16 %v3362, %v3360
      %v3473 = vpack.c.b16 %v3363, %v3361
      %v3474 = vpack.c.b16 %v3366, %v3364
      %v3475 = vpack.c.b16 %v3367, %v3365
      %v3476 = vpack.c.b16 %v3370, %v3368
      %v3477 = vpack.c.b16 %v3371, %v3369
      %v3478 = vpack.c.b16 %v3374, %v3372
      %v3479 = vpack.c.b16 %v3375, %v3373
      %v3480 = vpack.c.b16 %v3378, %v3376
      %v3481 = vpack.c.b16 %v3379, %v3377
      %v3482 = vpack.c.b16 %v3382, %v3380
      %v3483 = vpack.c.b16 %v3383, %v3381
      %v3484 = vpack.c.b16 %v3386, %v3384
      %v3485 = vpack.c.b16 %v3387, %v3385
      %v3486 = vpack.c.b16 %v3390, %v3388
      %v3487 = vpack.c.b16 %v3391, %v3389
      %v3488 = vpack.c.b16 %v3394, %v3392
      %v3489 = vpack.c.b16 %v3395, %v3393
      %v3490 = vpack.c.b16 %v3398, %v3396
      %v3491 = vpack.c.b16 %v3399, %v3397
      %v3492 = vpack.c.b16 %v3402, %v3400
      %v3493 = vpack.c.b16 %v3403, %v3401
      %v3494 = vpack.c.b16 %v3406, %v3404
      %v3495 = vpack.c.b16 %v3407, %v3405
      %v3496 = vpack.c.b16 %v3410, %v3408
      %v3497 = vpack.c.b16 %v3411, %v3409
      %v3498 = vpack.c.b16 %v3414, %v3412
      %v3499 = vpack.c.b16 %v3415, %v3413
      %v3500 = vpack.c.b16 %v3418, %v3416
      %v3501 = vpack.c.b16 %v3419, %v3417
      %v3502 = vpack.c.b16 %v3422, %v3420
      %v3503 = vpack.c.b16 %v3423, %v3421
      %3584 = vmatprep.subr.bf16.mxu0 0
      %3585 = vmatpush1.bf16.msra.mxu0 %v2688
      %3586 = vmatprep.subr.bf16.mxu0 0
      %3587 = vmatpush1.bf16.msra.mxu0 %v2689
      %3588 = vmatprep.subr.bf16.mxu0 0
      %3589 = vmatpush1.bf16.msra.mxu0 %v2690
      %3590 = vmatprep.subr.bf16.mxu0 0
      %3591 = vmatpush1.bf16.msra.mxu0 %v2691
      %3592 = vmatprep.subr.bf16.mxu0 0
      %3593 = vmatpush1.bf16.msra.mxu0 %v2692
      %3594 = vmatprep.subr.bf16.mxu0 0
      %3595 = vmatpush1.bf16.msra.mxu0 %v2693
      %3596 = vmatprep.subr.bf16.mxu0 0
      %3597 = vmatpush1.bf16.msra.mxu0 %v2694
      %3598 = vmatprep.subr.bf16.mxu0 0
      %3599 = vmatpush1.bf16.msra.mxu0 %v2695
      %3600 = vmatprep.subr.bf16.mxu0 0
      %3601 = vmatpush1.bf16.msra.mxu0 %v2696
      %3602 = vmatprep.subr.bf16.mxu0 0
      %3603 = vmatpush1.bf16.msra.mxu0 %v2697
      %3604 = vmatprep.subr.bf16.mxu0 0
      %3605 = vmatpush1.bf16.msra.mxu0 %v2698
      %3606 = vmatprep.subr.bf16.mxu0 0
      %3607 = vmatpush1.bf16.msra.mxu0 %v2699
      %3608 = vmatprep.subr.bf16.mxu0 0
      %3609 = vmatpush1.bf16.msra.mxu0 %v2700
      %3610 = vmatprep.subr.bf16.mxu0 0
      %3611 = vmatpush1.bf16.msra.mxu0 %v2701
      %3612 = vmatprep.subr.bf16.mxu0 0
      %3613 = vmatpush1.bf16.msra.mxu0 %v2702
      %3614 = vmatprep.subr.bf16.mxu0 0
      %3615 = vmatpush1.bf16.msra.mxu0 %v2703
      %3616 = vmatprep.mubr.bf16.mxu0 %v3425
      %3617 = vmatmul.mubr.bf16.gmra.mrb[0].mxu0 %v3424
      %v3618 = vpop.f32.mrb[0].mxu0
      %v3619 = vadd.f32 %v2787, %v3618
      %v3620 = vpop.f32.mrb[0].mxu0
      %v3621 = vpop.f32.mrb[0].mxu0
      %v3622 = vadd.f32 %v2792, %v3621
      %v3623 = vpop.f32.mrb[0].mxu0
      %3624 = vmatprep.mubr.bf16.mxu0 %v3427
      %3625 = vmatmul.mubr.bf16.gmra.mrb[0].mxu0 %v3426
      %v3626 = vpop.f32.mrb[0].mxu0
      %v3627 = vadd.f32 %v2797, %v3626
      %v3628 = vpop.f32.mrb[0].mxu0
      %v3629 = vpop.f32.mrb[0].mxu0
      %v3630 = vadd.f32 %v2802, %v3629
      %v3631 = vpop.f32.mrb[0].mxu0
      %3632 = vmatprep.mubr.bf16.mxu0 %v3429
      %3633 = vmatmul.mubr.bf16.gmra.mrb[0].mxu0 %v3428
      %v3634 = vpop.f32.mrb[0].mxu0
      %v3635 = vadd.f32 %v2807, %v3634
      %v3636 = vpop.f32.mrb[0].mxu0
      %v3637 = vpop.f32.mrb[0].mxu0
      %v3638 = vadd.f32 %v2812, %v3637
      %v3639 = vpop.f32.mrb[0].mxu0
      %3640 = vmatprep.mubr.bf16.mxu0 %v3431
      %3641 = vmatmul.mubr.bf16.gmra.mrb[0].mxu0 %v3430
      %v3642 = vpop.f32.mrb[0].mxu0
      %v3643 = vadd.f32 %v2817, %v3642
      %v3644 = vpop.f32.mrb[0].mxu0
      %v3645 = vpop.f32.mrb[0].mxu0
      %v3646 = vadd.f32 %v2822, %v3645
      %v3647 = vpop.f32.mrb[0].mxu0
      %3648 = vmatprep.mubr.bf16.mxu0 %v3433
      %3649 = vmatmul.mubr.bf16.gmra.mrb[0].mxu0 %v3432
      %v3650 = vpop.f32.mrb[0].mxu0
      %v3651 = vadd.f32 %v2827, %v3650
      %v3652 = vpop.f32.mrb[0].mxu0
      %v3653 = vpop.f32.mrb[0].mxu0
      %v3654 = vadd.f32 %v2832, %v3653
      %v3655 = vpop.f32.mrb[0].mxu0
      %3656 = vmatprep.mubr.bf16.mxu0 %v3435
      %3657 = vmatmul.mubr.bf16.gmra.mrb[0].mxu0 %v3434
      %v3658 = vpop.f32.mrb[0].mxu0
      %v3659 = vadd.f32 %v2837, %v3658
      %v3660 = vpop.f32.mrb[0].mxu0
      %v3661 = vpop.f32.mrb[0].mxu0
      %v3662 = vadd.f32 %v2842, %v3661
      %v3663 = vpop.f32.mrb[0].mxu0
      %3664 = vmatprep.mubr.bf16.mxu0 %v3437
      %3665 = vmatmul.mubr.bf16.gmra.mrb[0].mxu0 %v3436
      %v3666 = vpop.f32.mrb[0].mxu0
      %v3667 = vadd.f32 %v2847, %v3666
      %v3668 = vpop.f32.mrb[0].mxu0
      %v3669 = vpop.f32.mrb[0].mxu0
      %v3670 = vadd.f32 %v2852, %v3669
      %v3671 = vpop.f32.mrb[0].mxu0
      %3672 = vmatprep.mubr.bf16.mxu0 %v3439
      %3673 = vmatmul.mubr.bf16.gmra.mrb[0].mxu0 %v3438
      %v3674 = vpop.f32.mrb[0].mxu0
      %v3675 = vadd.f32 %v2857, %v3674
      %v3676 = vpop.f32.mrb[0].mxu0
      %v3677 = vpop.f32.mrb[0].mxu0
      %v3678 = vadd.f32 %v2862, %v3677
      %v3679 = vpop.f32.mrb[0].mxu0
      %3680 = vmatprep.mubr.bf16.mxu0 %v3441
      %3681 = vmatmul.mubr.bf16.gmra.mrb[0].mxu0 %v3440
      %v3682 = vpop.f32.mrb[0].mxu0
      %v3683 = vadd.f32 %v2867, %v3682
      %v3684 = vpop.f32.mrb[0].mxu0
      %v3685 = vpop.f32.mrb[0].mxu0
      %v3686 = vadd.f32 %v2872, %v3685
      %v3687 = vpop.f32.mrb[0].mxu0
      %3688 = vmatprep.mubr.bf16.mxu0 %v3443
      %3689 = vmatmul.mubr.bf16.gmra.mrb[0].mxu0 %v3442
      %v3690 = vpop.f32.mrb[0].mxu0
      %v3691 = vadd.f32 %v2877, %v3690
      %v3692 = vpop.f32.mrb[0].mxu0
      %v3693 = vpop.f32.mrb[0].mxu0
      %v3694 = vadd.f32 %v2882, %v3693
      %v3695 = vpop.f32.mrb[0].mxu0
      %3696 = vmatprep.mubr.bf16.mxu0 %v3445
      %3697 = vmatmul.mubr.bf16.gmra.mrb[0].mxu0 %v3444
      %v3698 = vpop.f32.mrb[0].mxu0
      %v3699 = vadd.f32 %v2887, %v3698
      %v3700 = vpop.f32.mrb[0].mxu0
      %v3701 = vpop.f32.mrb[0].mxu0
      %v3702 = vadd.f32 %v2892, %v3701
      %v3703 = vpop.f32.mrb[0].mxu0
      %3704 = vmatprep.mubr.bf16.mxu0 %v3447
      %3705 = vmatmul.mubr.bf16.gmra.mrb[0].mxu0 %v3446
      %v3706 = vpop.f32.mrb[0].mxu0
      %v3707 = vadd.f32 %v2897, %v3706
      %v3708 = vpop.f32.mrb[0].mxu0
      %v3709 = vpop.f32.mrb[0].mxu0
      %v3710 = vadd.f32 %v2902, %v3709
      %v3711 = vpop.f32.mrb[0].mxu0
      %3712 = vmatprep.mubr.bf16.mxu0 %v3449
      %3713 = vmatmul.mubr.bf16.gmra.mrb[0].mxu0 %v3448
      %v3714 = vpop.f32.mrb[0].mxu0
      %v3715 = vadd.f32 %v2907, %v3714
      %v3716 = vpop.f32.mrb[0].mxu0
      %v3717 = vpop.f32.mrb[0].mxu0
      %v3718 = vadd.f32 %v2912, %v3717
      %v3719 = vpop.f32.mrb[0].mxu0
      %3720 = vmatprep.mubr.bf16.mxu0 %v3451
      %3721 = vmatmul.mubr.bf16.gmra.mrb[0].mxu0 %v3450
      %v3722 = vpop.f32.mrb[0].mxu0
      %v3723 = vadd.f32 %v2917, %v3722
      %v3724 = vpop.f32.mrb[0].mxu0
      %v3725 = vpop.f32.mrb[0].mxu0
      %v3726 = vadd.f32 %v2922, %v3725
      %v3727 = vpop.f32.mrb[0].mxu0
      %3728 = vmatprep.mubr.bf16.mxu0 %v3453
      %3729 = vmatmul.mubr.bf16.gmra.mrb[0].mxu0 %v3452
      %v3730 = vpop.f32.mrb[0].mxu0
      %v3731 = vadd.f32 %v2927, %v3730
      %v3732 = vpop.f32.mrb[0].mxu0
      %v3733 = vpop.f32.mrb[0].mxu0
      %v3734 = vadd.f32 %v2932, %v3733
      %v3735 = vpop.f32.mrb[0].mxu0
      %3736 = vmatprep.mubr.bf16.mxu0 %v3455
      %3737 = vmatmul.mubr.bf16.gmra.mrb[0].mxu0 %v3454
      %v3738 = vpop.f32.mrb[0].mxu0
      %v3739 = vadd.f32 %v2937, %v3738
      %v3740 = vpop.f32.mrb[0].mxu0
      %v3741 = vpop.f32.mrb[0].mxu0
      %v3742 = vadd.f32 %v2942, %v3741
      %v3743 = vpop.f32.mrb[0].mxu0
      %3744 = vmatprep.mubr.bf16.mxu0 %v3457
      %3745 = vmatmul.mubr.bf16.gmra.mrb[0].mxu0 %v3456
      %v3746 = vpop.f32.mrb[0].mxu0
      %v3747 = vadd.f32 %v2947, %v3746
      %v3748 = vpop.f32.mrb[0].mxu0
      %v3749 = vpop.f32.mrb[0].mxu0
      %v3750 = vadd.f32 %v2952, %v3749
      %v3751 = vpop.f32.mrb[0].mxu0
      %3752 = vmatprep.mubr.bf16.mxu0 %v3459
      %3753 = vmatmul.mubr.bf16.gmra.mrb[0].mxu0 %v3458
      %v3754 = vpop.f32.mrb[0].mxu0
      %v3755 = vadd.f32 %v2957, %v3754
      %v3756 = vpop.f32.mrb[0].mxu0
      %v3757 = vpop.f32.mrb[0].mxu0
      %v3758 = vadd.f32 %v2962, %v3757
      %v3759 = vpop.f32.mrb[0].mxu0
      %3760 = vmatprep.mubr.bf16.mxu0 %v3461
      %3761 = vmatmul.mubr.bf16.gmra.mrb[0].mxu0 %v3460
      %v3762 = vpop.f32.mrb[0].mxu0
      %v3763 = vadd.f32 %v2967, %v3762
      %v3764 = vpop.f32.mrb[0].mxu0
      %v3765 = vpop.f32.mrb[0].mxu0
      %v3766 = vadd.f32 %v2972, %v3765
      %v3767 = vpop.f32.mrb[0].mxu0
      %3768 = vmatprep.mubr.bf16.mxu0 %v3463
      %3769 = vmatmul.mubr.bf16.gmra.mrb[0].mxu0 %v3462
      %v3770 = vpop.f32.mrb[0].mxu0
      %v3771 = vadd.f32 %v2977, %v3770
      %v3772 = vpop.f32.mrb[0].mxu0
      %v3773 = vpop.f32.mrb[0].mxu0
      %v3774 = vadd.f32 %v2982, %v3773
      %v3775 = vpop.f32.mrb[0].mxu0
      %3776 = vmatprep.mubr.bf16.mxu0 %v3465
      %3777 = vmatmul.mubr.bf16.gmra.mrb[0].mxu0 %v3464
      %v3778 = vpop.f32.mrb[0].mxu0
      %v3779 = vadd.f32 %v2987, %v3778
      %v3780 = vpop.f32.mrb[0].mxu0
      %v3781 = vpop.f32.mrb[0].mxu0
      %v3782 = vadd.f32 %v2992, %v3781
      %v3783 = vpop.f32.mrb[0].mxu0
      %3784 = vmatprep.mubr.bf16.mxu0 %v3467
      %3785 = vmatmul.mubr.bf16.gmra.mrb[0].mxu0 %v3466
      %v3786 = vpop.f32.mrb[0].mxu0
      %v3787 = vadd.f32 %v2997, %v3786
      %v3788 = vpop.f32.mrb[0].mxu0
      %v3789 = vpop.f32.mrb[0].mxu0
      %v3790 = vadd.f32 %v3002, %v3789
      %v3791 = vpop.f32.mrb[0].mxu0
      %3792 = vmatprep.mubr.bf16.mxu0 %v3469
      %3793 = vmatmul.mubr.bf16.gmra.mrb[0].mxu0 %v3468
      %v3794 = vpop.f32.mrb[0].mxu0
      %v3795 = vadd.f32 %v3007, %v3794
      %v3796 = vpop.f32.mrb[0].mxu0
      %v3797 = vpop.f32.mrb[0].mxu0
      %v3798 = vadd.f32 %v3012, %v3797
      %v3799 = vpop.f32.mrb[0].mxu0
      %3800 = vmatprep.mubr.bf16.mxu0 %v3471
      %3801 = vmatmul.mubr.bf16.gmra.mrb[0].mxu0 %v3470
      %v3802 = vpop.f32.mrb[0].mxu0
      %v3803 = vadd.f32 %v3017, %v3802
      %v3804 = vpop.f32.mrb[0].mxu0
      %v3805 = vpop.f32.mrb[0].mxu0
      %v3806 = vadd.f32 %v3022, %v3805
      %v3807 = vpop.f32.mrb[0].mxu0
      %3808 = vmatprep.mubr.bf16.mxu0 %v3473
      %3809 = vmatmul.mubr.bf16.gmra.mrb[0].mxu0 %v3472
      %v3810 = vpop.f32.mrb[0].mxu0
      %v3811 = vadd.f32 %v3027, %v3810
      %v3812 = vpop.f32.mrb[0].mxu0
      %v3813 = vpop.f32.mrb[0].mxu0
      %v3814 = vadd.f32 %v3032, %v3813
      %v3815 = vpop.f32.mrb[0].mxu0
      %3816 = vmatprep.mubr.bf16.mxu0 %v3475
      %3817 = vmatmul.mubr.bf16.gmra.mrb[0].mxu0 %v3474
      %v3818 = vpop.f32.mrb[0].mxu0
      %v3819 = vadd.f32 %v3037, %v3818
      %v3820 = vpop.f32.mrb[0].mxu0
      %v3821 = vpop.f32.mrb[0].mxu0
      %v3822 = vadd.f32 %v3042, %v3821
      %v3823 = vpop.f32.mrb[0].mxu0
      %3824 = vmatprep.mubr.bf16.mxu0 %v3477
      %3825 = vmatmul.mubr.bf16.gmra.mrb[0].mxu0 %v3476
      %v3826 = vpop.f32.mrb[0].mxu0
      %v3827 = vadd.f32 %v3047, %v3826
      %v3828 = vpop.f32.mrb[0].mxu0
      %v3829 = vpop.f32.mrb[0].mxu0
      %v3830 = vadd.f32 %v3052, %v3829
      %v3831 = vpop.f32.mrb[0].mxu0
      %3832 = vmatprep.mubr.bf16.mxu0 %v3479
      %3833 = vmatmul.mubr.bf16.gmra.mrb[0].mxu0 %v3478
      %v3834 = vpop.f32.mrb[0].mxu0
      %v3835 = vadd.f32 %v3057, %v3834
      %v3836 = vpop.f32.mrb[0].mxu0
      %v3837 = vpop.f32.mrb[0].mxu0
      %v3838 = vadd.f32 %v3062, %v3837
      %v3839 = vpop.f32.mrb[0].mxu0
      %3840 = vmatprep.mubr.bf16.mxu0 %v3481
      %3841 = vmatmul.mubr.bf16.gmra.mrb[0].mxu0 %v3480
      %v3842 = vpop.f32.mrb[0].mxu0
      %v3843 = vadd.f32 %v3067, %v3842
      %v3844 = vpop.f32.mrb[0].mxu0
      %v3845 = vpop.f32.mrb[0].mxu0
      %v3846 = vadd.f32 %v3072, %v3845
      %v3847 = vpop.f32.mrb[0].mxu0
      %3848 = vmatprep.mubr.bf16.mxu0 %v3483
      %3849 = vmatmul.mubr.bf16.gmra.mrb[0].mxu0 %v3482
      %v3850 = vpop.f32.mrb[0].mxu0
      %v3851 = vadd.f32 %v3077, %v3850
      %v3852 = vpop.f32.mrb[0].mxu0
      %v3853 = vpop.f32.mrb[0].mxu0
      %v3854 = vadd.f32 %v3082, %v3853
      %v3855 = vpop.f32.mrb[0].mxu0
      %3856 = vmatprep.mubr.bf16.mxu0 %v3485
      %3857 = vmatmul.mubr.bf16.gmra.mrb[0].mxu0 %v3484
      %v3858 = vpop.f32.mrb[0].mxu0
      %v3859 = vadd.f32 %v3087, %v3858
      %v3860 = vpop.f32.mrb[0].mxu0
      %v3861 = vpop.f32.mrb[0].mxu0
      %v3862 = vadd.f32 %v3092, %v3861
      %v3863 = vpop.f32.mrb[0].mxu0
      %3864 = vmatprep.mubr.bf16.mxu0 %v3487
      %3865 = vmatmul.mubr.bf16.gmra.mrb[0].mxu0 %v3486
      %v3866 = vpop.f32.mrb[0].mxu0
      %v3867 = vadd.f32 %v3097, %v3866
      %v3868 = vpop.f32.mrb[0].mxu0
      %v3869 = vpop.f32.mrb[0].mxu0
      %v3870 = vadd.f32 %v3102, %v3869
      %v3871 = vpop.f32.mrb[0].mxu0
      %3872 = vmatprep.mubr.bf16.mxu0 %v3489
      %3873 = vmatmul.mubr.bf16.gmra.mrb[0].mxu0 %v3488
      %v3874 = vpop.f32.mrb[0].mxu0
      %v3875 = vadd.f32 %v3107, %v3874
      %v3876 = vpop.f32.mrb[0].mxu0
      %v3877 = vpop.f32.mrb[0].mxu0
      %v3878 = vadd.f32 %v3112, %v3877
      %v3879 = vpop.f32.mrb[0].mxu0
      %3880 = vmatprep.mubr.bf16.mxu0 %v3491
      %3881 = vmatmul.mubr.bf16.gmra.mrb[0].mxu0 %v3490
      %v3882 = vpop.f32.mrb[0].mxu0
      %v3883 = vadd.f32 %v3117, %v3882
      %v3884 = vpop.f32.mrb[0].mxu0
      %v3885 = vpop.f32.mrb[0].mxu0
      %v3886 = vadd.f32 %v3122, %v3885
      %v3887 = vpop.f32.mrb[0].mxu0
      %3888 = vmatprep.mubr.bf16.mxu0 %v3493
      %3889 = vmatmul.mubr.bf16.gmra.mrb[0].mxu0 %v3492
      %v3890 = vpop.f32.mrb[0].mxu0
      %v3891 = vadd.f32 %v3127, %v3890
      %v3892 = vpop.f32.mrb[0].mxu0
      %v3893 = vpop.f32.mrb[0].mxu0
      %v3894 = vadd.f32 %v3132, %v3893
      %v3895 = vpop.f32.mrb[0].mxu0
      %3896 = vmatprep.mubr.bf16.mxu0 %v3495
      %3897 = vmatmul.mubr.bf16.gmra.mrb[0].mxu0 %v3494
      %v3898 = vpop.f32.mrb[0].mxu0
      %v3899 = vadd.f32 %v3137, %v3898
      %v3900 = vpop.f32.mrb[0].mxu0
      %v3901 = vpop.f32.mrb[0].mxu0
      %v3902 = vadd.f32 %v3142, %v3901
      %v3903 = vpop.f32.mrb[0].mxu0
      %3904 = vmatprep.mubr.bf16.mxu0 %v3497
      %3905 = vmatmul.mubr.bf16.gmra.mrb[0].mxu0 %v3496
      %v3906 = vpop.f32.mrb[0].mxu0
      %v3907 = vadd.f32 %v3147, %v3906
      %v3908 = vpop.f32.mrb[0].mxu0
      %v3909 = vpop.f32.mrb[0].mxu0
      %v3910 = vadd.f32 %v3152, %v3909
      %v3911 = vpop.f32.mrb[0].mxu0
      %3912 = vmatprep.mubr.bf16.mxu0 %v3499
      %3913 = vmatmul.mubr.bf16.gmra.mrb[0].mxu0 %v3498
      %v3914 = vpop.f32.mrb[0].mxu0
      %v3915 = vadd.f32 %v3157, %v3914
      %v3916 = vpop.f32.mrb[0].mxu0
      %v3917 = vpop.f32.mrb[0].mxu0
      %v3918 = vadd.f32 %v3162, %v3917
      %v3919 = vpop.f32.mrb[0].mxu0
      %3920 = vmatprep.mubr.bf16.mxu0 %v3501
      %3921 = vmatmul.mubr.bf16.gmra.mrb[0].mxu0 %v3500
      %v3922 = vpop.f32.mrb[0].mxu0
      %v3923 = vadd.f32 %v3167, %v3922
      %v3924 = vpop.f32.mrb[0].mxu0
      %v3925 = vpop.f32.mrb[0].mxu0
      %v3926 = vadd.f32 %v3172, %v3925
      %v3927 = vpop.f32.mrb[0].mxu0
      %3928 = vmatprep.mubr.bf16.mxu0 %v3503
      %3929 = vmatmul.mubr.bf16.gmra.mrb[0].mxu0 %v3502
      %v3930 = vpop.f32.mrb[0].mxu0
      %v3931 = vadd.f32 %v3177, %v3930
      %v3932 = vpop.f32.mrb[0].mxu0
      %v3933 = vpop.f32.mrb[0].mxu0
      %v3934 = vadd.f32 %v3182, %v3933
      %v3935 = vpop.f32.mrb[0].mxu0
      %3936 = vdwg.mxu0
      %v3937 = vmax.f32 %v3619, %v3635
      %v3938 = vmax.f32 %v3622, %v3638
      %v3939 = vmax.f32 %v3627, %v3643
      %v3940 = vmax.f32 %v3630, %v3646
      %v3941 = vmax.f32 %v3937, %v3651
      %v3942 = vmax.f32 %v3938, %v3654
      %v3943 = vmax.f32 %v3939, %v3659
      %v3944 = vmax.f32 %v3940, %v3662
      %v3945 = vmax.f32 %v3941, %v3667
      %v3946 = vmax.f32 %v3942, %v3670
      %v3947 = vmax.f32 %v3943, %v3675
      %v3948 = vmax.f32 %v3944, %v3678
      %v3949 = vmax.f32 %v3945, %v3683
      %v3950 = vmax.f32 %v3946, %v3686
      %v3951 = vmax.f32 %v3947, %v3691
      %v3952 = vmax.f32 %v3948, %v3694
      %v3953 = vmax.f32 %v3949, %v3699
      %v3954 = vmax.f32 %v3950, %v3702
      %v3955 = vmax.f32 %v3951, %v3707
      %v3956 = vmax.f32 %v3952, %v3710
      %v3957 = vmax.f32 %v3953, %v3715
      %v3958 = vmax.f32 %v3954, %v3718
      %v3959 = vmax.f32 %v3955, %v3723
      %v3960 = vmax.f32 %v3956, %v3726
      %v3961 = vmax.f32 %v3957, %v3731
      %v3962 = vmax.f32 %v3958, %v3734
      %v3963 = vmax.f32 %v3959, %v3739
      %v3964 = vmax.f32 %v3960, %v3742
      %v3965 = vmax.f32 %v3961, %v3747
      %v3966 = vmax.f32 %v3962, %v3750
      %v3967 = vmax.f32 %v3963, %v3755
      %v3968 = vmax.f32 %v3964, %v3758
      %v3969 = vmax.f32 %v3965, %v3763
      %v3970 = vmax.f32 %v3966, %v3766
      %v3971 = vmax.f32 %v3967, %v3771
      %v3972 = vmax.f32 %v3968, %v3774
      %v3973 = vmax.f32 %v3969, %v3779
      %v3974 = vmax.f32 %v3970, %v3782
      %v3975 = vmax.f32 %v3971, %v3787
      %v3976 = vmax.f32 %v3972, %v3790
      %v3977 = vmax.f32 %v3973, %v3795
      %v3978 = vmax.f32 %v3974, %v3798
      %v3979 = vmax.f32 %v3975, %v3803
      %v3980 = vmax.f32 %v3976, %v3806
      %v3981 = vmax.f32 %v3977, %v3811
      %v3982 = vmax.f32 %v3978, %v3814
      %v3983 = vmax.f32 %v3979, %v3819
      %v3984 = vmax.f32 %v3980, %v3822
      %v3985 = vmax.f32 %v3981, %v3827
      %v3986 = vmax.f32 %v3982, %v3830
      %v3987 = vmax.f32 %v3983, %v3835
      %v3988 = vmax.f32 %v3984, %v3838
      %v3989 = vmax.f32 %v3985, %v3843
      %v3990 = vmax.f32 %v3986, %v3846
      %v3991 = vmax.f32 %v3987, %v3851
      %v3992 = vmax.f32 %v3988, %v3854
      %v3993 = vmax.f32 %v3989, %v3859
      %v3994 = vmax.f32 %v3990, %v3862
      %v3995 = vmax.f32 %v3991, %v3867
      %v3996 = vmax.f32 %v3992, %v3870
      %v3997 = vmax.f32 %v3993, %v3875
      %v3998 = vmax.f32 %v3994, %v3878
      %v3999 = vmax.f32 %v3995, %v3883
      %v4000 = vmax.f32 %v3996, %v3886
      %v4001 = vmax.f32 %v3997, %v3891
      %v4002 = vmax.f32 %v3998, %v3894
      %v4003 = vmax.f32 %v3999, %v3899
      %v4004 = vmax.f32 %v4000, %v3902
      %v4005 = vmax.f32 %v4001, %v3907
      %v4006 = vmax.f32 %v4002, %v3910
      %v4007 = vmax.f32 %v4003, %v3915
      %v4008 = vmax.f32 %v4004, %v3918
      %v4009 = vmax.f32 %v4005, %v3923
      %v4010 = vmax.f32 %v4006, %v3926
      %v4011 = vmax.f32 %v4007, %v3931
      %v4012 = vmax.f32 %v4008, %v3934
      %v4013 = vmax.f32 %v4009, %v4010
      %v4014 = vmax.f32 %v4011, %v4012
      %v4015 = vmax.f32 %v4013, %v4014
      %v4016 = vrot.slane %v4015, 4
      %v4017 = vmax.f32 %v4015, %v4016
      %v4018 = vrot.slane %v4017, 2
      %v4019 = vmax.f32 %v4017, %v4018
      %v4020 = vrot.slane %v4019, 1
      %v4021 = vmax.f32 %v4019, %v4020
      %v4022 = vsub.f32 %v3619, %v4021
      %v4023 = vsub.f32 %v3622, %v4021
      %v4024 = vsub.f32 %v3627, %v4021
      %v4025 = vsub.f32 %v3630, %v4021
      %v4026 = vsub.f32 %v3635, %v4021
      %v4027 = vsub.f32 %v3638, %v4021
      %v4028 = vsub.f32 %v3643, %v4021
      %v4029 = vsub.f32 %v3646, %v4021
      %v4030 = vsub.f32 %v3651, %v4021
      %v4031 = vsub.f32 %v3654, %v4021
      %v4032 = vsub.f32 %v3659, %v4021
      %v4033 = vsub.f32 %v3662, %v4021
      %v4034 = vsub.f32 %v3667, %v4021
      %v4035 = vsub.f32 %v3670, %v4021
      %v4036 = vsub.f32 %v3675, %v4021
      %v4037 = vsub.f32 %v3678, %v4021
      %v4038 = vsub.f32 %v3683, %v4021
      %v4039 = vsub.f32 %v3686, %v4021
      %v4040 = vsub.f32 %v3691, %v4021
      %v4041 = vsub.f32 %v3694, %v4021
      %v4042 = vsub.f32 %v3699, %v4021
      %v4043 = vsub.f32 %v3702, %v4021
      %v4044 = vsub.f32 %v3707, %v4021
      %v4045 = vsub.f32 %v3710, %v4021
      %v4046 = vsub.f32 %v3715, %v4021
      %v4047 = vsub.f32 %v3718, %v4021
      %v4048 = vsub.f32 %v3723, %v4021
      %v4049 = vsub.f32 %v3726, %v4021
      %v4050 = vsub.f32 %v3731, %v4021
      %v4051 = vsub.f32 %v3734, %v4021
      %v4052 = vsub.f32 %v3739, %v4021
      %v4053 = vsub.f32 %v3742, %v4021
      %v4054 = vsub.f32 %v3747, %v4021
      %v4055 = vsub.f32 %v3750, %v4021
      %v4056 = vsub.f32 %v3755, %v4021
      %v4057 = vsub.f32 %v3758, %v4021
      %v4058 = vsub.f32 %v3763, %v4021
      %v4059 = vsub.f32 %v3766, %v4021
      %v4060 = vsub.f32 %v3771, %v4021
      %v4061 = vsub.f32 %v3774, %v4021
      %v4062 = vsub.f32 %v3779, %v4021
      %v4063 = vsub.f32 %v3782, %v4021
      %v4064 = vsub.f32 %v3787, %v4021
      %v4065 = vsub.f32 %v3790, %v4021
      %v4066 = vsub.f32 %v3795, %v4021
      %v4067 = vsub.f32 %v3798, %v4021
      %v4068 = vsub.f32 %v3803, %v4021
      %v4069 = vsub.f32 %v3806, %v4021
      %v4070 = vsub.f32 %v3811, %v4021
      %v4071 = vsub.f32 %v3814, %v4021
      %v4072 = vsub.f32 %v3819, %v4021
      %v4073 = vsub.f32 %v3822, %v4021
      %v4074 = vsub.f32 %v3827, %v4021
      %v4075 = vsub.f32 %v3830, %v4021
      %v4076 = vsub.f32 %v3835, %v4021
      %v4077 = vsub.f32 %v3838, %v4021
      %v4078 = vsub.f32 %v3843, %v4021
      %v4079 = vsub.f32 %v3846, %v4021
      %v4080 = vsub.f32 %v3851, %v4021
      %v4081 = vsub.f32 %v3854, %v4021
      %v4082 = vsub.f32 %v3859, %v4021
      %v4083 = vsub.f32 %v3862, %v4021
      %v4084 = vsub.f32 %v3867, %v4021
      %v4085 = vsub.f32 %v3870, %v4021
      %v4086 = vsub.f32 %v3875, %v4021
      %v4087 = vsub.f32 %v3878, %v4021
      %v4088 = vsub.f32 %v3883, %v4021
      %v4089 = vsub.f32 %v3886, %v4021
      %v4090 = vsub.f32 %v3891, %v4021
      %v4091 = vsub.f32 %v3894, %v4021
      %v4092 = vsub.f32 %v3899, %v4021
      %v4093 = vsub.f32 %v3902, %v4021
      %v4094 = vsub.f32 %v3907, %v4021
      %v4095 = vsub.f32 %v3910, %v4021
      %v4096 = vsub.f32 %v3915, %v4021
      %v4097 = vsub.f32 %v3918, %v4021
      %v4098 = vsub.f32 %v3923, %v4021
      %v4099 = vsub.f32 %v3926, %v4021
      %v4100 = vsub.f32 %v3931, %v4021
      %v4101 = vsub.f32 %v3934, %v4021
      %v4102 = vmul.f32 %v4022, 1.442695
      %v4103 = vpow.pop %v4102
      %v4104 = vmul.f32 %v4023, 1.442695
      %v4105 = vpow.pop %v4104
      %v4106 = vmul.f32 %v4024, 1.442695
      %v4107 = vpow.pop %v4106
      %v4108 = vmul.f32 %v4025, 1.442695
      %v4109 = vpow.pop %v4108
      %v4110 = vmul.f32 %v4026, 1.442695
      %v4111 = vpow.pop %v4110
      %v4112 = vmul.f32 %v4027, 1.442695
      %v4113 = vpow.pop %v4112
      %v4114 = vmul.f32 %v4028, 1.442695
      %v4115 = vpow.pop %v4114
      %v4116 = vmul.f32 %v4029, 1.442695
      %v4117 = vpow.pop %v4116
      %v4118 = vmul.f32 %v4030, 1.442695
      %v4119 = vpow.pop %v4118
      %v4120 = vmul.f32 %v4031, 1.442695
      %v4121 = vpow.pop %v4120
      %v4122 = vmul.f32 %v4032, 1.442695
      %v4123 = vpow.pop %v4122
      %v4124 = vmul.f32 %v4033, 1.442695
      %v4125 = vpow.pop %v4124
      %v4126 = vmul.f32 %v4034, 1.442695
      %v4127 = vpow.pop %v4126
      %v4128 = vmul.f32 %v4035, 1.442695
      %v4129 = vpow.pop %v4128
      %v4130 = vmul.f32 %v4036, 1.442695
      %v4131 = vpow.pop %v4130
      %v4132 = vmul.f32 %v4037, 1.442695
      %v4133 = vpow.pop %v4132
      %v4134 = vmul.f32 %v4038, 1.442695
      %v4135 = vpow.pop %v4134
      %v4136 = vmul.f32 %v4039, 1.442695
      %v4137 = vpow.pop %v4136
      %v4138 = vmul.f32 %v4040, 1.442695
      %v4139 = vpow.pop %v4138
      %v4140 = vmul.f32 %v4041, 1.442695
      %v4141 = vpow.pop %v4140
      %v4142 = vmul.f32 %v4042, 1.442695
      %v4143 = vpow.pop %v4142
      %v4144 = vmul.f32 %v4043, 1.442695
      %v4145 = vpow.pop %v4144
      %v4146 = vmul.f32 %v4044, 1.442695
      %v4147 = vpow.pop %v4146
      %v4148 = vmul.f32 %v4045, 1.442695
      %v4149 = vpow.pop %v4148
      %v4150 = vmul.f32 %v4046, 1.442695
      %v4151 = vpow.pop %v4150
      %v4152 = vmul.f32 %v4047, 1.442695
      %v4153 = vpow.pop %v4152
      %v4154 = vmul.f32 %v4048, 1.442695
      %v4155 = vpow.pop %v4154
      %v4156 = vmul.f32 %v4049, 1.442695
      %v4157 = vpow.pop %v4156
      %v4158 = vmul.f32 %v4050, 1.442695
      %v4159 = vpow.pop %v4158
      %v4160 = vmul.f32 %v4051, 1.442695
      %v4161 = vpow.pop %v4160
      %v4162 = vmul.f32 %v4052, 1.442695
      %v4163 = vpow.pop %v4162
      %v4164 = vmul.f32 %v4053, 1.442695
      %v4165 = vpow.pop %v4164
      %v4166 = vmul.f32 %v4054, 1.442695
      %v4167 = vpow.pop %v4166
      %v4168 = vmul.f32 %v4055, 1.442695
      %v4169 = vpow.pop %v4168
      %v4170 = vmul.f32 %v4056, 1.442695
      %v4171 = vpow.pop %v4170
      %v4172 = vmul.f32 %v4057, 1.442695
      %v4173 = vpow.pop %v4172
      %v4174 = vmul.f32 %v4058, 1.442695
      %v4175 = vpow.pop %v4174
      %v4176 = vmul.f32 %v4059, 1.442695
      %v4177 = vpow.pop %v4176
      %v4178 = vmul.f32 %v4060, 1.442695
      %v4179 = vpow.pop %v4178
      %v4180 = vmul.f32 %v4061, 1.442695
      %v4181 = vpow.pop %v4180
      %v4182 = vmul.f32 %v4062, 1.442695
      %v4183 = vpow.pop %v4182
      %v4184 = vmul.f32 %v4063, 1.442695
      %v4185 = vpow.pop %v4184
      %v4186 = vmul.f32 %v4064, 1.442695
      %v4187 = vpow.pop %v4186
      %v4188 = vmul.f32 %v4065, 1.442695
      %v4189 = vpow.pop %v4188
      %v4190 = vmul.f32 %v4066, 1.442695
      %v4191 = vpow.pop %v4190
      %v4192 = vmul.f32 %v4067, 1.442695
      %v4193 = vpow.pop %v4192
      %v4194 = vmul.f32 %v4068, 1.442695
      %v4195 = vpow.pop %v4194
      %v4196 = vmul.f32 %v4069, 1.442695
      %v4197 = vpow.pop %v4196
      %v4198 = vmul.f32 %v4070, 1.442695
      %v4199 = vpow.pop %v4198
      %v4200 = vmul.f32 %v4071, 1.442695
      %v4201 = vpow.pop %v4200
      %v4202 = vmul.f32 %v4072, 1.442695
      %v4203 = vpow.pop %v4202
      %v4204 = vmul.f32 %v4073, 1.442695
      %v4205 = vpow.pop %v4204
      %v4206 = vmul.f32 %v4074, 1.442695
      %v4207 = vpow.pop %v4206
      %v4208 = vmul.f32 %v4075, 1.442695
      %v4209 = vpow.pop %v4208
      %v4210 = vmul.f32 %v4076, 1.442695
      %v4211 = vpow.pop %v4210
      %v4212 = vmul.f32 %v4077, 1.442695
      %v4213 = vpow.pop %v4212
      %v4214 = vmul.f32 %v4078, 1.442695
      %v4215 = vpow.pop %v4214
      %v4216 = vmul.f32 %v4079, 1.442695
      %v4217 = vpow.pop %v4216
      %v4218 = vmul.f32 %v4080, 1.442695
      %v4219 = vpow.pop %v4218
      %v4220 = vmul.f32 %v4081, 1.442695
      %v4221 = vpow.pop %v4220
      %v4222 = vmul.f32 %v4082, 1.442695
      %v4223 = vpow.pop %v4222
      %v4224 = vmul.f32 %v4083, 1.442695
      %v4225 = vpow.pop %v4224
      %v4226 = vmul.f32 %v4084, 1.442695
      %v4227 = vpow.pop %v4226
      %v4228 = vmul.f32 %v4085, 1.442695
      %v4229 = vpow.pop %v4228
      %v4230 = vmul.f32 %v4086, 1.442695
      %v4231 = vpow.pop %v4230
      %v4232 = vmul.f32 %v4087, 1.442695
      %v4233 = vpow.pop %v4232
      %v4234 = vmul.f32 %v4088, 1.442695
      %v4235 = vpow.pop %v4234
      %v4236 = vmul.f32 %v4089, 1.442695
      %v4237 = vpow.pop %v4236
      %v4238 = vmul.f32 %v4090, 1.442695
      %v4239 = vpow.pop %v4238
      %v4240 = vmul.f32 %v4091, 1.442695
      %v4241 = vpow.pop %v4240
      %v4242 = vmul.f32 %v4092, 1.442695
      %v4243 = vpow.pop %v4242
      %v4244 = vmul.f32 %v4093, 1.442695
      %v4245 = vpow.pop %v4244
      %v4246 = vmul.f32 %v4094, 1.442695
      %v4247 = vpow.pop %v4246
      %v4248 = vmul.f32 %v4095, 1.442695
      %v4249 = vpow.pop %v4248
      %v4250 = vmul.f32 %v4096, 1.442695
      %v4251 = vpow.pop %v4250
      %v4252 = vmul.f32 %v4097, 1.442695
      %v4253 = vpow.pop %v4252
      %v4254 = vmul.f32 %v4098, 1.442695
      %v4255 = vpow.pop %v4254
      %v4256 = vmul.f32 %v4099, 1.442695
      %v4257 = vpow.pop %v4256
      %v4258 = vmul.f32 %v4100, 1.442695
      %v4259 = vpow.pop %v4258
      %v4260 = vmul.f32 %v4101, 1.442695
      %v4261 = vpow.pop %v4260
      %v4262 = vadd.f32 %v4103, %v4105
      %v4263 = vadd.f32 %v4262, %v4107
      %v4264 = vadd.f32 %v4263, %v4109
      %v4265 = vadd.f32 %v4264, %v4111
      %v4266 = vadd.f32 %v4265, %v4113
      %v4267 = vadd.f32 %v4266, %v4115
      %v4268 = vadd.f32 %v4267, %v4117
      %v4269 = vadd.f32 %v4268, %v4119
      %v4270 = vadd.f32 %v4269, %v4121
      %v4271 = vadd.f32 %v4270, %v4123
      %v4272 = vadd.f32 %v4271, %v4125
      %v4273 = vadd.f32 %v4272, %v4127
      %v4274 = vadd.f32 %v4273, %v4129
      %v4275 = vadd.f32 %v4274, %v4131
      %v4276 = vadd.f32 %v4275, %v4133
      %v4277 = vadd.f32 %v4276, %v4135
      %v4278 = vadd.f32 %v4277, %v4137
      %v4279 = vadd.f32 %v4278, %v4139
      %v4280 = vadd.f32 %v4279, %v4141
      %v4281 = vadd.f32 %v4280, %v4143
      %v4282 = vadd.f32 %v4281, %v4145
      %v4283 = vadd.f32 %v4282, %v4147
      %v4284 = vadd.f32 %v4283, %v4149
      %v4285 = vadd.f32 %v4284, %v4151
      %v4286 = vadd.f32 %v4285, %v4153
      %v4287 = vadd.f32 %v4286, %v4155
      %v4288 = vadd.f32 %v4287, %v4157
      %v4289 = vadd.f32 %v4288, %v4159
      %v4290 = vadd.f32 %v4289, %v4161
      %v4291 = vadd.f32 %v4290, %v4163
      %v4292 = vadd.f32 %v4291, %v4165
      %v4293 = vadd.f32 %v4292, %v4167
      %v4294 = vadd.f32 %v4293, %v4169
      %v4295 = vadd.f32 %v4294, %v4171
      %v4296 = vadd.f32 %v4295, %v4173
      %v4297 = vadd.f32 %v4296, %v4175
      %v4298 = vadd.f32 %v4297, %v4177
      %v4299 = vadd.f32 %v4298, %v4179
      %v4300 = vadd.f32 %v4299, %v4181
      %v4301 = vadd.f32 %v4300, %v4183
      %v4302 = vadd.f32 %v4301, %v4185
      %v4303 = vadd.f32 %v4302, %v4187
      %v4304 = vadd.f32 %v4303, %v4189
      %v4305 = vadd.f32 %v4304, %v4191
      %v4306 = vadd.f32 %v4305, %v4193
      %v4307 = vadd.f32 %v4306, %v4195
      %v4308 = vadd.f32 %v4307, %v4197
      %v4309 = vadd.f32 %v4308, %v4199
      %v4310 = vadd.f32 %v4309, %v4201
      %v4311 = vadd.f32 %v4310, %v4203
      %v4312 = vadd.f32 %v4311, %v4205
      %v4313 = vadd.f32 %v4312, %v4207
      %v4314 = vadd.f32 %v4313, %v4209
      %v4315 = vadd.f32 %v4314, %v4211
      %v4316 = vadd.f32 %v4315, %v4213
      %v4317 = vadd.f32 %v4316, %v4215
      %v4318 = vadd.f32 %v4317, %v4217
      %v4319 = vadd.f32 %v4318, %v4219
      %v4320 = vadd.f32 %v4319, %v4221
      %v4321 = vadd.f32 %v4320, %v4223
      %v4322 = vadd.f32 %v4321, %v4225
      %v4323 = vadd.f32 %v4322, %v4227
      %v4324 = vadd.f32 %v4323, %v4229
      %v4325 = vadd.f32 %v4324, %v4231
      %v4326 = vadd.f32 %v4325, %v4233
      %v4327 = vadd.f32 %v4326, %v4235
      %v4328 = vadd.f32 %v4327, %v4237
      %v4329 = vadd.f32 %v4328, %v4239
      %v4330 = vadd.f32 %v4329, %v4241
      %v4331 = vadd.f32 %v4330, %v4243
      %v4332 = vadd.f32 %v4331, %v4245
      %v4333 = vadd.f32 %v4332, %v4247
      %v4334 = vadd.f32 %v4333, %v4249
      %v4335 = vadd.f32 %v4334, %v4251
      %v4336 = vadd.f32 %v4335, %v4253
      %v4337 = vadd.f32 %v4336, %v4255
      %v4338 = vadd.f32 %v4337, %v4257
      %v4339 = vadd.f32 %v4338, %v4259
      %v4340 = vadd.f32 %v4339, %v4261
      %v4341 = vrot.slane %v4340, 4
      %v4342 = vadd.f32 %v4340, %v4341
      %v4343 = vrot.slane %v4342, 2
      %v4344 = vadd.f32 %v4342, %v4343
      %v4345 = vrot.slane %v4344, 1
      %v4346 = vadd.f32 %v4344, %v4345
      %v4347 = vlog2.pop %v4346
      %v4348 = vmul.f32 %v4347, 0.6931472
      %v4349 = vadd.f32 %v4021, %v4348
      %v4350 = vlaneseq
      %v4351 = vshrl.u32 %v4350, 7
      %v4352 = vadd.s32 %v4351, 8
      %v4353 = vadd.s32 %v4351, 16
      %v4354 = vadd.s32 %v4351, 24
      %v4355 = vadd.s32 %v4351, 32
      %v4356 = vadd.s32 %v4351, 40
      %v4357 = vadd.s32 %v4351, 48
      %v4358 = vadd.s32 %v4351, 56
      %v4359 = vadd.s32 %v4351, 64
      %v4360 = vadd.s32 %v4351, 72
      %v4361 = vadd.s32 %v4351, 80
      %v4362 = vadd.s32 %v4351, 88
      %v4363 = vadd.s32 %v4351, 96
      %v4364 = vadd.s32 %v4351, 104
      %v4365 = vadd.s32 %v4351, 112
      %v4366 = vadd.s32 %v4351, 120
      %v4367 = vadd.s32 %v4351, 128
      %v4368 = vadd.s32 %v4351, 136
      %v4369 = vadd.s32 %v4351, 144
      %v4370 = vadd.s32 %v4351, 152
      %v4371 = vadd.s32 %v4351, 160
      %v4372 = vadd.s32 %v4351, 168
      %v4373 = vadd.s32 %v4351, 176
      %v4374 = vadd.s32 %v4351, 184
      %v4375 = vadd.s32 %v4351, 192
      %v4376 = vadd.s32 %v4351, 200
      %v4377 = vadd.s32 %v4351, 208
      %v4378 = vadd.s32 %v4351, 216
      %v4379 = vadd.s32 %v4351, 224
      %v4380 = vadd.s32 %v4351, 232
      %v4381 = vadd.s32 %v4351, 240
      %v4382 = vadd.s32 %v4351, 248
      %v4383 = vadd.s32 %v4351, 256
      %v4384 = vadd.s32 %v4351, 264
      %v4385 = vadd.s32 %v4351, 272
      %v4386 = vadd.s32 %v4351, 280
      %v4387 = vadd.s32 %v4351, 288
      %v4388 = vadd.s32 %v4351, 296
      %v4389 = vadd.s32 %v4351, 304
      %v4390 = vadd.s32 %v4351, 312
      %v4391 = vadd.s32 %v4351, 320
      %v4392 = vadd.s32 %v4351, 328
      %v4393 = vadd.s32 %v4351, 336
      %v4394 = vadd.s32 %v4351, 344
      %v4395 = vadd.s32 %v4351, 352
      %v4396 = vadd.s32 %v4351, 360
      %v4397 = vadd.s32 %v4351, 368
      %v4398 = vadd.s32 %v4351, 376
      %v4399 = vadd.s32 %v4351, 384
      %v4400 = vadd.s32 %v4351, 392
      %v4401 = vadd.s32 %v4351, 400
      %v4402 = vadd.s32 %v4351, 408
      %v4403 = vadd.s32 %v4351, 416
      %v4404 = vadd.s32 %v4351, 424
      %v4405 = vadd.s32 %v4351, 432
      %v4406 = vadd.s32 %v4351, 440
      %v4407 = vadd.s32 %v4351, 448
      %v4408 = vadd.s32 %v4351, 456
      %v4409 = vadd.s32 %v4351, 464
      %v4410 = vadd.s32 %v4351, 472
      %v4411 = vadd.s32 %v4351, 480
      %v4412 = vadd.s32 %v4351, 488
      %v4413 = vadd.s32 %v4351, 496
      %v4414 = vadd.s32 %v4351, 504
      %v4415 = vadd.s32 %v4351, 512
      %v4416 = vadd.s32 %v4351, 520
      %v4417 = vadd.s32 %v4351, 528
      %v4418 = vadd.s32 %v4351, 536
      %v4419 = vadd.s32 %v4351, 544
      %v4420 = vadd.s32 %v4351, 552
      %v4421 = vadd.s32 %v4351, 560
      %v4422 = vadd.s32 %v4351, 568
      %v4423 = vadd.s32 %v4351, 576
      %v4424 = vadd.s32 %v4351, 584
      %v4425 = vadd.s32 %v4351, 592
      %v4426 = vadd.s32 %v4351, 600
      %v4427 = vadd.s32 %v4351, 608
      %v4428 = vadd.s32 %v4351, 616
      %v4429 = vadd.s32 %v4351, 624
      %v4430 = vadd.s32 %v4351, 632
      %v4431 = vld [vmem:[%s505] sm:$0x1]
      %v4432 = vlaneseq
      %v4433 = vshrl.u32 %v4432, 7
      %v4434 = vsub.s32 0, %v4433
      %v4435 = vrot.slane %v4431, %v4434
      %vm4436 = vcmp.eq.s32.totalorder %v4351, %v4435
      %vm4437 = vcmp.eq.s32.totalorder %v4352, %v4435
      %vm4438 = vcmp.eq.s32.totalorder %v4353, %v4435
      %vm4439 = vcmp.eq.s32.totalorder %v4354, %v4435
      %vm4440 = vcmp.eq.s32.totalorder %v4355, %v4435
      %vm4441 = vcmp.eq.s32.totalorder %v4356, %v4435
      %vm4442 = vcmp.eq.s32.totalorder %v4357, %v4435
      %vm4443 = vcmp.eq.s32.totalorder %v4358, %v4435
      %vm4444 = vcmp.eq.s32.totalorder %v4359, %v4435
      %vm4445 = vcmp.eq.s32.totalorder %v4360, %v4435
      %vm4446 = vcmp.eq.s32.totalorder %v4361, %v4435
      %vm4447 = vcmp.eq.s32.totalorder %v4362, %v4435
      %vm4448 = vcmp.eq.s32.totalorder %v4363, %v4435
      %vm4449 = vcmp.eq.s32.totalorder %v4364, %v4435
      %vm4450 = vcmp.eq.s32.totalorder %v4365, %v4435
      %vm4451 = vcmp.eq.s32.totalorder %v4366, %v4435
      %vm4452 = vcmp.eq.s32.totalorder %v4367, %v4435
      %vm4453 = vcmp.eq.s32.totalorder %v4368, %v4435
      %vm4454 = vcmp.eq.s32.totalorder %v4369, %v4435
      %vm4455 = vcmp.eq.s32.totalorder %v4370, %v4435
      %vm4456 = vcmp.eq.s32.totalorder %v4371, %v4435
      %vm4457 = vcmp.eq.s32.totalorder %v4372, %v4435
      %vm4458 = vcmp.eq.s32.totalorder %v4373, %v4435
      %vm4459 = vcmp.eq.s32.totalorder %v4374, %v4435
      %vm4460 = vcmp.eq.s32.totalorder %v4375, %v4435
      %vm4461 = vcmp.eq.s32.totalorder %v4376, %v4435
      %vm4462 = vcmp.eq.s32.totalorder %v4377, %v4435
      %vm4463 = vcmp.eq.s32.totalorder %v4378, %v4435
      %vm4464 = vcmp.eq.s32.totalorder %v4379, %v4435
      %vm4465 = vcmp.eq.s32.totalorder %v4380, %v4435
      %vm4466 = vcmp.eq.s32.totalorder %v4381, %v4435
      %vm4467 = vcmp.eq.s32.totalorder %v4382, %v4435
      %vm4468 = vcmp.eq.s32.totalorder %v4383, %v4435
      %vm4469 = vcmp.eq.s32.totalorder %v4384, %v4435
      %vm4470 = vcmp.eq.s32.totalorder %v4385, %v4435
      %vm4471 = vcmp.eq.s32.totalorder %v4386, %v4435
      %vm4472 = vcmp.eq.s32.totalorder %v4387, %v4435
      %vm4473 = vcmp.eq.s32.totalorder %v4388, %v4435
      %vm4474 = vcmp.eq.s32.totalorder %v4389, %v4435
      %vm4475 = vcmp.eq.s32.totalorder %v4390, %v4435
      %vm4476 = vcmp.eq.s32.totalorder %v4391, %v4435
      %vm4477 = vcmp.eq.s32.totalorder %v4392, %v4435
      %vm4478 = vcmp.eq.s32.totalorder %v4393, %v4435
      %vm4479 = vcmp.eq.s32.totalorder %v4394, %v4435
      %vm4480 = vcmp.eq.s32.totalorder %v4395, %v4435
      %vm4481 = vcmp.eq.s32.totalorder %v4396, %v4435
      %vm4482 = vcmp.eq.s32.totalorder %v4397, %v4435
      %vm4483 = vcmp.eq.s32.totalorder %v4398, %v4435
      %vm4484 = vcmp.eq.s32.totalorder %v4399, %v4435
      %vm4485 = vcmp.eq.s32.totalorder %v4400, %v4435
      %vm4486 = vcmp.eq.s32.totalorder %v4401, %v4435
      %vm4487 = vcmp.eq.s32.totalorder %v4402, %v4435
      %vm4488 = vcmp.eq.s32.totalorder %v4403, %v4435
      %vm4489 = vcmp.eq.s32.totalorder %v4404, %v4435
      %vm4490 = vcmp.eq.s32.totalorder %v4405, %v4435
      %vm4491 = vcmp.eq.s32.totalorder %v4406, %v4435
      %vm4492 = vcmp.eq.s32.totalorder %v4407, %v4435
      %vm4493 = vcmp.eq.s32.totalorder %v4408, %v4435
      %vm4494 = vcmp.eq.s32.totalorder %v4409, %v4435
      %vm4495 = vcmp.eq.s32.totalorder %v4410, %v4435
      %vm4496 = vcmp.eq.s32.totalorder %v4411, %v4435
      %vm4497 = vcmp.eq.s32.totalorder %v4412, %v4435
      %vm4498 = vcmp.eq.s32.totalorder %v4413, %v4435
      %vm4499 = vcmp.eq.s32.totalorder %v4414, %v4435
      %vm4500 = vcmp.eq.s32.totalorder %v4415, %v4435
      %vm4501 = vcmp.eq.s32.totalorder %v4416, %v4435
      %vm4502 = vcmp.eq.s32.totalorder %v4417, %v4435
      %vm4503 = vcmp.eq.s32.totalorder %v4418, %v4435
      %vm4504 = vcmp.eq.s32.totalorder %v4419, %v4435
      %vm4505 = vcmp.eq.s32.totalorder %v4420, %v4435
      %vm4506 = vcmp.eq.s32.totalorder %v4421, %v4435
      %vm4507 = vcmp.eq.s32.totalorder %v4422, %v4435
      %vm4508 = vcmp.eq.s32.totalorder %v4423, %v4435
      %vm4509 = vcmp.eq.s32.totalorder %v4424, %v4435
      %vm4510 = vcmp.eq.s32.totalorder %v4425, %v4435
      %vm4511 = vcmp.eq.s32.totalorder %v4426, %v4435
      %vm4512 = vcmp.eq.s32.totalorder %v4427, %v4435
      %vm4513 = vcmp.eq.s32.totalorder %v4428, %v4435
      %vm4514 = vcmp.eq.s32.totalorder %v4429, %v4435
      %vm4515 = vcmp.eq.s32.totalorder %v4430, %v4435
      %v4516 = vsel %vm4436, %v3619, 0.0
      %v4517 = vsel %vm4437, %v3622, 0.0
      %v4518 = vsel %vm4438, %v3627, 0.0
      %v4519 = vsel %vm4439, %v3630, 0.0
      %v4520 = vsel %vm4440, %v3635, 0.0
      %v4521 = vsel %vm4441, %v3638, 0.0
      %v4522 = vsel %vm4442, %v3643, 0.0
      %v4523 = vsel %vm4443, %v3646, 0.0
      %v4524 = vsel %vm4444, %v3651, 0.0
      %v4525 = vsel %vm4445, %v3654, 0.0
      %v4526 = vsel %vm4446, %v3659, 0.0
      %v4527 = vsel %vm4447, %v3662, 0.0
      %v4528 = vsel %vm4448, %v3667, 0.0
      %v4529 = vsel %vm4449, %v3670, 0.0
      %v4530 = vsel %vm4450, %v3675, 0.0
      %v4531 = vsel %vm4451, %v3678, 0.0
      %v4532 = vsel %vm4452, %v3683, 0.0
      %v4533 = vsel %vm4453, %v3686, 0.0
      %v4534 = vsel %vm4454, %v3691, 0.0
      %v4535 = vsel %vm4455, %v3694, 0.0
      %v4536 = vsel %vm4456, %v3699, 0.0
      %v4537 = vsel %vm4457, %v3702, 0.0
      %v4538 = vsel %vm4458, %v3707, 0.0
      %v4539 = vsel %vm4459, %v3710, 0.0
      %v4540 = vsel %vm4460, %v3715, 0.0
      %v4541 = vsel %vm4461, %v3718, 0.0
      %v4542 = vsel %vm4462, %v3723, 0.0
      %v4543 = vsel %vm4463, %v3726, 0.0
      %v4544 = vsel %vm4464, %v3731, 0.0
      %v4545 = vsel %vm4465, %v3734, 0.0
      %v4546 = vsel %vm4466, %v3739, 0.0
      %v4547 = vsel %vm4467, %v3742, 0.0
      %v4548 = vsel %vm4468, %v3747, 0.0
      %v4549 = vsel %vm4469, %v3750, 0.0
      %v4550 = vsel %vm4470, %v3755, 0.0
      %v4551 = vsel %vm4471, %v3758, 0.0
      %v4552 = vsel %vm4472, %v3763, 0.0
      %v4553 = vsel %vm4473, %v3766, 0.0
      %v4554 = vsel %vm4474, %v3771, 0.0
      %v4555 = vsel %vm4475, %v3774, 0.0
      %v4556 = vsel %vm4476, %v3779, 0.0
      %v4557 = vsel %vm4477, %v3782, 0.0
      %v4558 = vsel %vm4478, %v3787, 0.0
      %v4559 = vsel %vm4479, %v3790, 0.0
      %v4560 = vsel %vm4480, %v3795, 0.0
      %v4561 = vsel %vm4481, %v3798, 0.0
      %v4562 = vsel %vm4482, %v3803, 0.0
      %v4563 = vsel %vm4483, %v3806, 0.0
      %v4564 = vsel %vm4484, %v3811, 0.0
      %v4565 = vsel %vm4485, %v3814, 0.0
      %v4566 = vsel %vm4486, %v3819, 0.0
      %v4567 = vsel %vm4487, %v3822, 0.0
      %v4568 = vsel %vm4488, %v3827, 0.0
      %v4569 = vsel %vm4489, %v3830, 0.0
      %v4570 = vsel %vm4490, %v3835, 0.0
      %v4571 = vsel %vm4491, %v3838, 0.0
      %v4572 = vsel %vm4492, %v3843, 0.0
      %v4573 = vsel %vm4493, %v3846, 0.0
      %v4574 = vsel %vm4494, %v3851, 0.0
      %v4575 = vsel %vm4495, %v3854, 0.0
      %v4576 = vsel %vm4496, %v3859, 0.0
      %v4577 = vsel %vm4497, %v3862, 0.0
      %v4578 = vsel %vm4498, %v3867, 0.0
      %v4579 = vsel %vm4499, %v3870, 0.0
      %v4580 = vsel %vm4500, %v3875, 0.0
      %v4581 = vsel %vm4501, %v3878, 0.0
      %v4582 = vsel %vm4502, %v3883, 0.0
      %v4583 = vsel %vm4503, %v3886, 0.0
      %v4584 = vsel %vm4504, %v3891, 0.0
      %v4585 = vsel %vm4505, %v3894, 0.0
      %v4586 = vsel %vm4506, %v3899, 0.0
      %v4587 = vsel %vm4507, %v3902, 0.0
      %v4588 = vsel %vm4508, %v3907, 0.0
      %v4589 = vsel %vm4509, %v3910, 0.0
      %v4590 = vsel %vm4510, %v3915, 0.0
      %v4591 = vsel %vm4511, %v3918, 0.0
      %v4592 = vsel %vm4512, %v3923, 0.0
      %v4593 = vsel %vm4513, %v3926, 0.0
      %v4594 = vsel %vm4514, %v3931, 0.0
      %v4595 = vsel %vm4515, %v3934, 0.0
      %v4596 = vadd.f32 %v4516, %v4517
      %v4597 = vadd.f32 %v4596, %v4518
      %v4598 = vadd.f32 %v4597, %v4519
      %v4599 = vadd.f32 %v4598, %v4520
      %v4600 = vadd.f32 %v4599, %v4521
      %v4601 = vadd.f32 %v4600, %v4522
      %v4602 = vadd.f32 %v4601, %v4523
      %v4603 = vadd.f32 %v4602, %v4524
      %v4604 = vadd.f32 %v4603, %v4525
      %v4605 = vadd.f32 %v4604, %v4526
      %v4606 = vadd.f32 %v4605, %v4527
      %v4607 = vadd.f32 %v4606, %v4528
      %v4608 = vadd.f32 %v4607, %v4529
      %v4609 = vadd.f32 %v4608, %v4530
      %v4610 = vadd.f32 %v4609, %v4531
      %v4611 = vadd.f32 %v4610, %v4532
      %v4612 = vadd.f32 %v4611, %v4533
      %v4613 = vadd.f32 %v4612, %v4534
      %v4614 = vadd.f32 %v4613, %v4535
      %v4615 = vadd.f32 %v4614, %v4536
      %v4616 = vadd.f32 %v4615, %v4537
      %v4617 = vadd.f32 %v4616, %v4538
      %v4618 = vadd.f32 %v4617, %v4539
      %v4619 = vadd.f32 %v4618, %v4540
      %v4620 = vadd.f32 %v4619, %v4541
      %v4621 = vadd.f32 %v4620, %v4542
      %v4622 = vadd.f32 %v4621, %v4543
      %v4623 = vadd.f32 %v4622, %v4544
      %v4624 = vadd.f32 %v4623, %v4545
      %v4625 = vadd.f32 %v4624, %v4546
      %v4626 = vadd.f32 %v4625, %v4547
      %v4627 = vadd.f32 %v4626, %v4548
      %v4628 = vadd.f32 %v4627, %v4549
      %v4629 = vadd.f32 %v4628, %v4550
      %v4630 = vadd.f32 %v4629, %v4551
      %v4631 = vadd.f32 %v4630, %v4552
      %v4632 = vadd.f32 %v4631, %v4553
      %v4633 = vadd.f32 %v4632, %v4554
      %v4634 = vadd.f32 %v4633, %v4555
      %v4635 = vadd.f32 %v4634, %v4556
      %v4636 = vadd.f32 %v4635, %v4557
      %v4637 = vadd.f32 %v4636, %v4558
      %v4638 = vadd.f32 %v4637, %v4559
      %v4639 = vadd.f32 %v4638, %v4560
      %v4640 = vadd.f32 %v4639, %v4561
      %v4641 = vadd.f32 %v4640, %v4562
      %v4642 = vadd.f32 %v4641, %v4563
      %v4643 = vadd.f32 %v4642, %v4564
      %v4644 = vadd.f32 %v4643, %v4565
      %v4645 = vadd.f32 %v4644, %v4566
      %v4646 = vadd.f32 %v4645, %v4567
      %v4647 = vadd.f32 %v4646, %v4568
      %v4648 = vadd.f32 %v4647, %v4569
      %v4649 = vadd.f32 %v4648, %v4570
      %v4650 = vadd.f32 %v4649, %v4571
      %v4651 = vadd.f32 %v4650, %v4572
      %v4652 = vadd.f32 %v4651, %v4573
      %v4653 = vadd.f32 %v4652, %v4574
      %v4654 = vadd.f32 %v4653, %v4575
      %v4655 = vadd.f32 %v4654, %v4576
      %v4656 = vadd.f32 %v4655, %v4577
      %v4657 = vadd.f32 %v4656, %v4578
      %v4658 = vadd.f32 %v4657, %v4579
      %v4659 = vadd.f32 %v4658, %v4580
      %v4660 = vadd.f32 %v4659, %v4581
      %v4661 = vadd.f32 %v4660, %v4582
      %v4662 = vadd.f32 %v4661, %v4583
      %v4663 = vadd.f32 %v4662, %v4584
      %v4664 = vadd.f32 %v4663, %v4585
      %v4665 = vadd.f32 %v4664, %v4586
      %v4666 = vadd.f32 %v4665, %v4587
      %v4667 = vadd.f32 %v4666, %v4588
      %v4668 = vadd.f32 %v4667, %v4589
      %v4669 = vadd.f32 %v4668, %v4590
      %v4670 = vadd.f32 %v4669, %v4591
      %v4671 = vadd.f32 %v4670, %v4592
      %v4672 = vadd.f32 %v4671, %v4593
      %v4673 = vadd.f32 %v4672, %v4594
      %v4674 = vadd.f32 %v4673, %v4595
      %v4675 = vrot.slane %v4674, 4
      %v4676 = vadd.f32 %v4674, %v4675
      %v4677 = vrot.slane %v4676, 2
      %v4678 = vadd.f32 %v4676, %v4677
      %v4679 = vrot.slane %v4678, 1
      %v4680 = vadd.f32 %v4678, %v4679
      %v4681 = vsub.f32 %v4349, %v4680
      %v4682 = vmul.f32 %v2453, %v4681
      %v4683 = vsel %vm2400, %v4682, 0.0
      %4684 = vadd.xlane.f32.xlu0 %v4683
      %v4685 = vpop.xlane.xlu0 %4684
      %v4686 = vrot.slane %v4685, 4
      %v4687 = vadd.f32 %v4685, %v4686
      %v4688 = vrot.slane %v4687, 2
      %v4689 = vadd.f32 %v4687, %v4688
      %v4690 = vrot.slane %v4689, 1
      %v4691 = vadd.f32 %v4689, %v4690
      %s4692 = vtos %v4691
      %s4693 = smax.f32 %s2410, 1.0
      %v4694 = vstv %s4693
      %v4695 = vrcp.pop %v4694
      %s4696 = vtos %v4695
      %s4697 = smul.f32 %s4692, %s4696
      %v4698 = vlaneseq
      %v4699 = vand.u32 %v4698, 127
      %vm4700 = vcmp.eq.s32.totalorder %v4699, 0
      %v4701 = vstv %s2398
      %v4702 = vsel %vm4700, %v4701, 0.0
      %vm4703 = vcmp.eq.s32.totalorder %v4699, 1
      %v4704 = vstv %s2441
      %v4705 = vsel %vm4703, %v4704, 0.0
      %v4706 = vadd.f32 %v4702, %v4705
      %vm4707 = vcmp.eq.s32.totalorder %v4699, 2
      %v4708 = vstv %s2471
      %v4709 = vsel %vm4707, %v4708, 0.0
      %v4710 = vadd.f32 %v4706, %v4709
      %vm4711 = vcmp.eq.s32.totalorder %v4699, 3
      %v4712 = vstv %s4697
      %v4713 = vsel %vm4711, %v4712, 0.0
      %v4714 = vadd.f32 %v4710, %v4713
      %4715 = vst [vmem:[%s514] sm:$0xff] %v4714
      %p4716 = scmp.lt.s32.totalorder %s22, 1
      %s4717 = scalar_select %p4716, %s22, 1
      %s4718 = smul.addr %s4717, 8
      %s4719 = scalar_lea.vmem %s11, %s4718
      // Predicated region
      $region65: #{_device_loss.1} parent=63 // pred_check
        %p4720 = pneg %p316
      $region66: #{_device_loss.1} parent=63 // pred_check_branch
        %4722 = sbr.rel (%p4720) target = $region68
      $region67: #{_device_loss.1} parent=63 // pred_region
        _
      $region68: #{_device_loss.1} parent=63 // pred_fallthru
        _
    $region64: #{_device_loss.1} parent=5 // pred_fallthru
      _
    %p4723 = scmp.le.s32.totalorder 2, %s17
    // Predicated region
    $region69: #{_device_loss.1} parent=5 // pred_check
      %p4724 = pneg %p4723
    $region70: #{_device_loss.1} parent=5 // pred_check_branch
      %4726 = sbr.rel (%p4724) target = $region72
    $region71: #{_device_loss.1} parent=5 // pred_region
      %s4727 = ssub.s32 %s17, 2
      // Predicated region
      $region73: #{_device_loss.1} parent=71 // pred_check
        %p4728 = pneg %p322
      $region74: #{_device_loss.1} parent=71 // pred_check_branch
        %4730 = sbr.rel (%p4728) target = $region76
      $region75: #{_device_loss.1} parent=71 // pred_region
        %p4731 = scmp.lt.s32.totalorder %s23, 1
        %s4732 = scalar_select %p4731, %s23, 1
        %s4733 = smul.addr %s4732, 8
        %s4734 = scalar_lea.vmem %s11, %s4733
      $region76: #{_device_loss.1} parent=71 // pred_fallthru
        _
    $region72: #{_device_loss.1} parent=5 // pred_fallthru
      _
  $region6: #{_device_loss.1} parent=0 // loop_footer
    %s21 = sadd.s32 1, %s17
  $region7: #{_device_loss.1} parent=0 // loop_footer_branch
    %16 = sbr.rel target = $region3
  $region8: #{_device_loss.1} parent=0 // loop_exit
    _

</llo_original>
